<compile_context>
chip_gen: v7x
topology: tpu7x:2x2x1
jax: 0.10.0
libtpu: 0.0.40
codegen_flags: <defaults>
</compile_context>

<pallas_src>
import jax
import jax.numpy as jnp
from jax.experimental import pallas as pl
from jax.experimental.pallas import tpu as pltpu

_VMEM_BUDGET = 12 * 1024 * 1024   # budget for block data (conservative for v7x 64 MiB)
_VMEM_LIMIT = 32 * 1024 * 1024    # scoped VMEM limit (raises v5e's 16 MiB default)


def _largest_tile(total_rows, row_bytes, fixed_bytes=0, budget=_VMEM_BUDGET):
    """Largest row tile: full extent if it fits VMEM budget, else the largest
    divisor of total_rows that is a multiple of 8 and fits."""
    if fixed_bytes + total_rows * row_bytes <= budget:
        return total_rows
    if total_rows % 8 != 0:
        return total_rows            # can't tile cleanly; rely on vmem_limit
    cap = max(8, (budget - fixed_bytes) // max(row_bytes, 1))
    best = 8
    t = 8
    while t <= min(cap, total_rows):
        if total_rows % t == 0:
            best = t
        t += 8
    return best


# ---------------------------------------------------------------------------
# Kernel 1: matmul + fused bias + LeakyReLU (non-BN layer).
# ---------------------------------------------------------------------------
def _conv_bias_leaky_kernel(a_ref, w_ref, b_ref, o_ref):
    y = jnp.dot(a_ref[...], w_ref[...], preferred_element_type=jnp.float32)
    y = y + b_ref[...]
    o_ref[...] = jnp.where(y > 0, y, 0.2 * y).astype(o_ref.dtype)


def _conv_matmul_bias_act(a, w_mat, bias):
    M, K = a.shape
    C = w_mat.shape[1]
    row_bytes = 2 * K * 2 + 2 * C * 2          # dbl-buffered bf16 A + bf16 out
    fixed = 2 * K * C * 2                      # resident bf16 W
    tm = _largest_tile(M, row_bytes, fixed)
    return pl.pallas_call(
        _conv_bias_leaky_kernel,
        out_shape=jax.ShapeDtypeStruct((M, C), jnp.bfloat16),
        grid=(M // tm,),
        in_specs=[
            pl.BlockSpec((tm, K), lambda i: (i, 0)),
            pl.BlockSpec((K, C), lambda i: (0, 0)),
            pl.BlockSpec((1, C), lambda i: (0, 0)),
        ],
        out_specs=pl.BlockSpec((tm, C), lambda i: (i, 0)),
        compiler_params=pltpu.CompilerParams(
            dimension_semantics=("parallel",),
            vmem_limit_bytes=_VMEM_LIMIT),
    )(a, w_mat, bias.reshape(1, C).astype(jnp.float32))


# ---------------------------------------------------------------------------
# Kernel 2: matmul + per-tile partial sum / sum-of-squares (BN layers).
# Partial stats are per-tile outputs (no resident accumulator), so the grid
# axis stays "parallel" and can be sharded across v7x's two TensorCores.
# ---------------------------------------------------------------------------
def _conv_stats_kernel(a_ref, w_ref, y_ref, sum_ref, sq_ref):
    y = jnp.dot(a_ref[...], w_ref[...], preferred_element_type=jnp.float32)
    y_ref[...] = y.astype(y_ref.dtype)
    C = y.shape[-1]
    sum_ref[...] = jnp.sum(y, axis=0, keepdims=True).reshape(1, 1, C)
    sq_ref[...] = jnp.sum(y * y, axis=0, keepdims=True).reshape(1, 1, C)


def _conv_matmul_stats(a, w_mat):
    M, K = a.shape
    C = w_mat.shape[1]
    row_bytes = 2 * K * 2 + 2 * C * 2
    fixed = 2 * K * C * 2
    tm = _largest_tile(M, row_bytes, fixed)
    nt = M // tm
    y, s, sq = pl.pallas_call(
        _conv_stats_kernel,
        out_shape=(
            jax.ShapeDtypeStruct((M, C), jnp.bfloat16),
            jax.ShapeDtypeStruct((nt, 1, C), jnp.float32),
            jax.ShapeDtypeStruct((nt, 1, C), jnp.float32),
        ),
        grid=(nt,),
        in_specs=[
            pl.BlockSpec((tm, K), lambda i: (i, 0)),
            pl.BlockSpec((K, C), lambda i: (0, 0)),
        ],
        out_specs=(
            pl.BlockSpec((tm, C), lambda i: (i, 0)),
            pl.BlockSpec((1, 1, C), lambda i: (i, 0, 0)),
            pl.BlockSpec((1, 1, C), lambda i: (i, 0, 0)),
        ),
        compiler_params=pltpu.CompilerParams(
            dimension_semantics=("parallel",),
            vmem_limit_bytes=_VMEM_LIMIT),
    )(a, w_mat)
    return y, s.sum(axis=(0, 1)), sq.sum(axis=(0, 1))


# ---------------------------------------------------------------------------
# Kernel 3: fused BatchNorm affine + LeakyReLU on a lane-dense view.
# ---------------------------------------------------------------------------
def _bn_leaky_kernel(y_ref, scale_ref, shift_ref, o_ref):
    y = y_ref[...].astype(jnp.float32) * scale_ref[...] + shift_ref[...]
    o_ref[...] = jnp.where(y > 0, y, 0.2 * y).astype(o_ref.dtype)


def _bn_leaky(y, mean, var, gamma, beta):
    M, C = y.shape
    inv = gamma / jnp.sqrt(var + 1e-5)
    scale = inv
    shift = beta - mean * inv
    # Lane-dense reshape: fold g consecutive rows so the last dim is >= 128.
    g = (128 // C) if C < 128 else 1
    if g < 1 or M % g != 0:
        g = 1
    rows, width = M // g, g * C
    y2 = y.reshape(rows, width)
    scale2 = jnp.tile(scale, g).reshape(1, width).astype(jnp.float32)
    shift2 = jnp.tile(shift, g).reshape(1, width).astype(jnp.float32)
    row_bytes = 2 * width * 2 + 2 * width * 2   # dbl-buffered bf16 in + out
    tr = _largest_tile(rows, row_bytes, 0)
    out = pl.pallas_call(
        _bn_leaky_kernel,
        out_shape=jax.ShapeDtypeStruct((rows, width), jnp.bfloat16),
        grid=(rows // tr,),
        in_specs=[
            pl.BlockSpec((tr, width), lambda i: (i, 0)),
            pl.BlockSpec((1, width), lambda i: (0, 0)),
            pl.BlockSpec((1, width), lambda i: (0, 0)),
        ],
        out_specs=pl.BlockSpec((tr, width), lambda i: (i, 0)),
        compiler_params=pltpu.CompilerParams(
            dimension_semantics=("parallel",),
            vmem_limit_bytes=_VMEM_LIMIT),
    )(y2, scale2, shift2)
    return out.reshape(M, C)


# ---------------------------------------------------------------------------
# Glue: im2col patch extraction (XLA) and the per-layer wrappers.
# ---------------------------------------------------------------------------
def _im2col(x_nhwc, k, stride, pad):
    n, h, w, c = x_nhwc.shape
    xp = jnp.pad(x_nhwc, ((0, 0), (pad, pad), (pad, pad), (0, 0)))
    ho = (h + 2 * pad - k) // stride + 1
    wo = (w + 2 * pad - k) // stride + 1
    cols = []
    for i in range(k):
        for j in range(k):
            cols.append(xp[:, i:i + stride * ho:stride, j:j + stride * wo:stride, :])
    patches = jnp.stack(cols, axis=3)                  # (n, ho, wo, k*k, c)
    return patches.reshape(n * ho * wo, k * k * c), ho, wo


def _weight_matrix(w_oihw, dtype):
    cout, cin, kh, kw = w_oihw.shape
    # (Cout, Cin, kh, kw) -> (kh, kw, Cin, Cout) -> (K, Cout), matching im2col order.
    return jnp.transpose(w_oihw, (2, 3, 1, 0)).reshape(kh * kw * cin, cout).astype(dtype)


def conv_bias_leaky(x_nhwc, w_oihw, bias, stride, pad):
    n = x_nhwc.shape[0]
    cout, _, kh, _ = w_oihw.shape
    a, ho, wo = _im2col(x_nhwc.astype(jnp.bfloat16), kh, stride, pad)
    w_mat = _weight_matrix(w_oihw, jnp.bfloat16)
    y = _conv_matmul_bias_act(a, w_mat, bias)
    return y.reshape(n, ho, wo, cout)


def conv_bn_leaky(x_nhwc, w_oihw, gamma, beta, stride, pad):
    n = x_nhwc.shape[0]
    cout, _, kh, _ = w_oihw.shape
    a, ho, wo = _im2col(x_nhwc.astype(jnp.bfloat16), kh, stride, pad)
    w_mat = _weight_matrix(w_oihw, jnp.bfloat16)
    y, s, sq = _conv_matmul_stats(a, w_mat)
    m = float(a.shape[0])
    # Training-mode BatchNorm: batch mean / biased variance over (N, H, W), f32.
    mean = s / m
    var = jnp.maximum(sq / m - mean * mean, 0.0)
    out = _bn_leaky(y, mean, var, gamma.astype(jnp.float32), beta.astype(jnp.float32))
    return out.reshape(n, ho, wo, cout)


def conv_sigmoid_final(x_nhwc, w_oihw, bias, stride, pad):
    # Cout = 1 and M = batch: plain XLA matvec + sigmoid beats pallas_call overhead.
    n = x_nhwc.shape[0]
    cout, _, kh, _ = w_oihw.shape
    a, ho, wo = _im2col(x_nhwc.astype(jnp.float32), kh, stride, pad)
    w_mat = _weight_matrix(w_oihw, jnp.float32)
    y = jax.nn.sigmoid(a @ w_mat + bias.astype(jnp.float32))
    return y.reshape(n, ho, wo, cout)


# ---------------------------------------------------------------------------
# Discriminator forward (mirrors the PyTorch nn.Sequential).
# ---------------------------------------------------------------------------
def discriminator_forward(x_nchw, p):
    x = jnp.transpose(x_nchw, (0, 2, 3, 1))                               # NCHW -> NHWC
    x = conv_bias_leaky(x, p["w1"], p["b1"], 2, 1)                        # conv + LeakyReLU
    x = conv_bn_leaky(x, p["w2"], p["g2"], p["be2"], 2, 1)                # block 1
    x = conv_bn_leaky(x, p["w3"], p["g3"], p["be3"], 2, 1)                # block 2
    x = conv_bn_leaky(x, p["w4"], p["g4"], p["be4"], 2, 1)                # block 3
    x = conv_sigmoid_final(x, p["w5"], p["b5"], 2, 0)                     # conv + Sigmoid
    return jnp.transpose(x, (0, 3, 1, 2)).astype(jnp.float32)             # back to NCHW


def init_params(key, img_channels, f):
    ks = jax.random.split(key, 8)

    def w(k, cout, cin):
        return 0.05 * jax.random.normal(k, (cout, cin, 4, 4), jnp.float32)

    return {
        "w1": w(ks[0], f, img_channels),
        "b1": 0.05 * jax.random.normal(ks[1], (f,), jnp.float32),
        "w2": w(ks[2], 2 * f, f),
        "g2": jnp.ones((2 * f,), jnp.float32), "be2": jnp.zeros((2 * f,), jnp.float32),
        "w3": w(ks[3], 4 * f, 2 * f),
        "g3": jnp.ones((4 * f,), jnp.float32), "be3": jnp.zeros((4 * f,), jnp.float32),
        "w4": w(ks[4], 8 * f, 4 * f),
        "g4": jnp.ones((8 * f,), jnp.float32), "be4": jnp.zeros((8 * f,), jnp.float32),
        "w5": w(ks[5], 1, 8 * f),
        "b5": 0.05 * jax.random.normal(ks[6], (1,), jnp.float32),
    }


if __name__ == "__main__":
    key = jax.random.PRNGKey(0)
    k_x, k_p = jax.random.split(key)

    batch, img_channels, out_features, spatial = 2, 3, 8, 64   # 64->32->16->8->4->1
    x = jax.random.normal(k_x, (batch, img_channels, spatial, spatial), jnp.float32)
    params = init_params(k_p, img_channels, out_features)

    fwd = jax.jit(discriminator_forward)
    out = jax.block_until_ready(fwd(x, params))
    assert out.shape == (batch, 1, 1, 1)
    print("KERNEL_OK")
</pallas_src>

<mosaic_0001>
module attributes {stable_mosaic.version = 11 : i64} {
  func.func @_conv_bias_leaky_kernel(%arg0: i32, %arg1: memref<2048x48xbf16, #tpu.memory_space<vmem>>, %arg2: memref<48x8xbf16, #tpu.memory_space<vmem>>, %arg3: memref<1x8xf32, #tpu.memory_space<vmem>>, %arg4: memref<2048x8xbf16, #tpu.memory_space<vmem>>) attributes {dimension_semantics = [#tpu.dimension_semantics<parallel>], iteration_bounds = array<i64: 1>, scalar_prefetch = 0 : i64, scratch_operands = 0 : i64, tpu.core_type = #tpu.core_type<tc>, window_params = [{transform_indices = @transform_0, window_bounds = array<i64: 2048, 48>}, {pipeline_mode = #tpu.pipeline_mode<synchronous>, transform_indices = @transform_1, window_bounds = array<i64: 48, 8>}, {pipeline_mode = #tpu.pipeline_mode<synchronous>, transform_indices = @transform_2, window_bounds = array<i64: 1, 8>}, {transform_indices = @transform_3, window_bounds = array<i64: 2048, 8>}]} {
    %c0 = arith.constant 0 : index
    %c0_0 = arith.constant 0 : index
    %0 = vector.load %arg1[%c0, %c0_0] : memref<2048x48xbf16, #tpu.memory_space<vmem>>, vector<2048x48xbf16>
    %c0_1 = arith.constant 0 : index
    %c0_2 = arith.constant 0 : index
    %1 = vector.load %arg2[%c0_1, %c0_2] : memref<48x8xbf16, #tpu.memory_space<vmem>>, vector<48x8xbf16>
    %cst = arith.constant dense<0.000000e+00> : vector<2048x8xf32>
    %2 = tpu.matmul %0, %1, %cst {dimension_numbers = #tpu.dot_dimension_numbers<[1], [0], [0], [1], [0, 0, 1, 1], [], []>} : vector<2048x48xbf16>, vector<48x8xbf16>, vector<2048x8xf32> -> vector<2048x8xf32>
    %c0_3 = arith.constant 0 : index
    %c0_4 = arith.constant 0 : index
    %3 = vector.load %arg3[%c0_3, %c0_4] : memref<1x8xf32, #tpu.memory_space<vmem>>, vector<1x8xf32>
    %4 = vector.broadcast %3 : vector<1x8xf32> to vector<2048x8xf32>
    %5 = arith.addf %2, %4 : vector<2048x8xf32>
    %cst_5 = arith.constant 0.000000e+00 : f32
    %6 = vector.broadcast %cst_5 : f32 to vector<2048x8xf32>
    %7 = arith.cmpf ogt, %5, %6 : vector<2048x8xf32>
    %cst_6 = arith.constant 2.000000e-01 : f32
    %8 = vector.broadcast %cst_6 : f32 to vector<2048x8xf32>
    %9 = arith.mulf %8, %5 : vector<2048x8xf32>
    %10 = arith.select %7, %5, %9 : vector<2048x8xi1>, vector<2048x8xf32>
    %11 = arith.truncf %10 : vector<2048x8xf32> to vector<2048x8xbf16>
    %c0_7 = arith.constant 0 : index
    %c0_8 = arith.constant 0 : index
    %12 = vector.load %arg4[%c0_7, %c0_8] : memref<2048x8xbf16, #tpu.memory_space<vmem>>, vector<2048x8xbf16>
    tpu.vector_store %arg4[%c0_7, %c0_8], %11 {strides = array<i32>} : memref<2048x8xbf16, #tpu.memory_space<vmem>>, vector<2048x8xbf16>,
    return
  }
  func.func @transform_0(%arg0: i32) -> (i32, i32) {
    %c0_i32 = arith.constant 0 : i32
    %c0_i32_0 = arith.constant 0 : i32
    return %arg0, %c0_i32 : i32, i32
  }
  func.func @transform_1(%arg0: i32) -> (i32, i32) {
    %c0_i32 = arith.constant 0 : i32
    %c0_i32_0 = arith.constant 0 : i32
    %c0_i32_1 = arith.constant 0 : i32
    return %c0_i32, %c0_i32_0 : i32, i32
  }
  func.func @transform_2(%arg0: i32) -> (i32, i32) {
    %c0_i32 = arith.constant 0 : i32
    %c0_i32_0 = arith.constant 0 : i32
    %c0_i32_1 = arith.constant 0 : i32
    return %c0_i32, %c0_i32_0 : i32, i32
  }
  func.func @transform_3(%arg0: i32) -> (i32, i32) {
    %c0_i32 = arith.constant 0 : i32
    %c0_i32_0 = arith.constant 0 : i32
    return %arg0, %c0_i32 : i32, i32
  }
}

module attributes {stable_mosaic.version = 11 : i64} {
  func.func @_conv_stats_kernel(%arg0: i32, %arg1: memref<512x128xbf16, #tpu.memory_space<vmem>>, %arg2: memref<128x16xbf16, #tpu.memory_space<vmem>>, %arg3: memref<512x16xbf16, #tpu.memory_space<vmem>>, %arg4: memref<1x1x16xf32, #tpu.memory_space<vmem>>, %arg5: memref<1x1x16xf32, #tpu.memory_space<vmem>>) attributes {dimension_semantics = [#tpu.dimension_semantics<parallel>], iteration_bounds = array<i64: 1>, scalar_prefetch = 0 : i64, scratch_operands = 0 : i64, tpu.core_type = #tpu.core_type<tc>, window_params = [{transform_indices = @transform_0, window_bounds = array<i64: 512, 128>}, {pipeline_mode = #tpu.pipeline_mode<synchronous>, transform_indices = @transform_1, window_bounds = array<i64: 128, 16>}, {transform_indices = @transform_2, window_bounds = array<i64: 512, 16>}, {transform_indices = @transform_3, window_bounds = array<i64: 1, 1, 16>}, {transform_indices = @transform_4, window_bounds = array<i64: 1, 1, 16>}]} {
    %c0 = arith.constant 0 : index
    %c0_0 = arith.constant 0 : index
    %0 = vector.load %arg1[%c0, %c0_0] : memref<512x128xbf16, #tpu.memory_space<vmem>>, vector<512x128xbf16>
    %c0_1 = arith.constant 0 : index
    %c0_2 = arith.constant 0 : index
    %1 = vector.load %arg2[%c0_1, %c0_2] : memref<128x16xbf16, #tpu.memory_space<vmem>>, vector<128x16xbf16>
    %cst = arith.constant dense<0.000000e+00> : vector<512x16xf32>
    %2 = tpu.matmul %0, %1, %cst {dimension_numbers = #tpu.dot_dimension_numbers<[1], [0], [0], [1], [0, 0, 1, 1], [], []>} : vector<512x128xbf16>, vector<128x16xbf16>, vector<512x16xf32> -> vector<512x16xf32>
    %3 = arith.truncf %2 : vector<512x16xf32> to vector<512x16xbf16>
    %c0_3 = arith.constant 0 : index
    %c0_4 = arith.constant 0 : index
    %4 = vector.load %arg3[%c0_3, %c0_4] : memref<512x16xbf16, #tpu.memory_space<vmem>>, vector<512x16xbf16>
    tpu.vector_store %arg3[%c0_3, %c0_4], %3 {strides = array<i32>} : memref<512x16xbf16, #tpu.memory_space<vmem>>, vector<512x16xbf16>,
    %cst_5 = arith.constant dense<0.000000e+00> : vector<16xf32>
    %5 = vector.multi_reduction <add>, %2, %cst_5 [0] : vector<512x16xf32> to vector<16xf32>
    %6 = vector.shape_cast %5 : vector<16xf32> to vector<1x16xf32>
    %7 = vector.shape_cast %6 : vector<1x16xf32> to vector<1x1x16xf32>
    %c0_6 = arith.constant 0 : index
    %c0_7 = arith.constant 0 : index
    %c0_8 = arith.constant 0 : index
    %8 = vector.load %arg4[%c0_6, %c0_7, %c0_8] : memref<1x1x16xf32, #tpu.memory_space<vmem>>, vector<1x1x16xf32>
    tpu.vector_store %arg4[%c0_6, %c0_7, %c0_8], %7 {strides = array<i32>} : memref<1x1x16xf32, #tpu.memory_space<vmem>>, vector<1x1x16xf32>,
    %9 = arith.mulf %2, %2 : vector<512x16xf32>
    %cst_9 = arith.constant dense<0.000000e+00> : vector<16xf32>
    %10 = vector.multi_reduction <add>, %9, %cst_9 [0] : vector<512x16xf32> to vector<16xf32>
    %11 = vector.shape_cast %10 : vector<16xf32> to vector<1x16xf32>
    %12 = vector.shape_cast %11 : vector<1x16xf32> to vector<1x1x16xf32>
    %c0_10 = arith.constant 0 : index
    %c0_11 = arith.constant 0 : index
    %c0_12 = arith.constant 0 : index
    %13 = vector.load %arg5[%c0_10, %c0_11, %c0_12] : memref<1x1x16xf32, #tpu.memory_space<vmem>>, vector<1x1x16xf32>
    tpu.vector_store %arg5[%c0_10, %c0_11, %c0_12], %12 {strides = array<i32>} : memref<1x1x16xf32, #tpu.memory_space<vmem>>, vector<1x1x16xf32>,
    return
  }
  func.func @transform_0(%arg0: i32) -> (i32, i32) {
    %c0_i32 = arith.constant 0 : i32
    %c0_i32_0 = arith.constant 0 : i32
    return %arg0, %c0_i32 : i32, i32
  }
  func.func @transform_1(%arg0: i32) -> (i32, i32) {
    %c0_i32 = arith.constant 0 : i32
    %c0_i32_0 = arith.constant 0 : i32
    %c0_i32_1 = arith.constant 0 : i32
    return %c0_i32, %c0_i32_0 : i32, i32
  }
  func.func @transform_2(%arg0: i32) -> (i32, i32) {
    %c0_i32 = arith.constant 0 : i32
    %c0_i32_0 = arith.constant 0 : i32
    return %arg0, %c0_i32 : i32, i32
  }
  func.func @transform_3(%arg0: i32) -> (i32, i32, i32) {
    %c0_i32 = arith.constant 0 : i32
    %c0_i32_0 = arith.constant 0 : i32
    %c0_i32_1 = arith.constant 0 : i32
    return %arg0, %c0_i32, %c0_i32_0 : i32, i32, i32
  }
  func.func @transform_4(%arg0: i32) -> (i32, i32, i32) {
    %c0_i32 = arith.constant 0 : i32
    %c0_i32_0 = arith.constant 0 : i32
    %c0_i32_1 = arith.constant 0 : i32
    return %arg0, %c0_i32, %c0_i32_0 : i32, i32, i32
  }
}

module attributes {stable_mosaic.version = 11 : i64} {
  func.func @_bn_leaky_kernel(%arg0: i32, %arg1: memref<64x128xbf16, #tpu.memory_space<vmem>>, %arg2: memref<1x128xf32, #tpu.memory_space<vmem>>, %arg3: memref<1x128xf32, #tpu.memory_space<vmem>>, %arg4: memref<64x128xbf16, #tpu.memory_space<vmem>>) attributes {dimension_semantics = [#tpu.dimension_semantics<parallel>], iteration_bounds = array<i64: 1>, scalar_prefetch = 0 : i64, scratch_operands = 0 : i64, tpu.core_type = #tpu.core_type<tc>, window_params = [{transform_indices = @transform_0, window_bounds = array<i64: 64, 128>}, {pipeline_mode = #tpu.pipeline_mode<synchronous>, transform_indices = @transform_1, window_bounds = array<i64: 1, 128>}, {pipeline_mode = #tpu.pipeline_mode<synchronous>, transform_indices = @transform_2, window_bounds = array<i64: 1, 128>}, {transform_indices = @transform_3, window_bounds = array<i64: 64, 128>}]} {
    %c0 = arith.constant 0 : index
    %c0_0 = arith.constant 0 : index
    %0 = vector.load %arg1[%c0, %c0_0] : memref<64x128xbf16, #tpu.memory_space<vmem>>, vector<64x128xbf16>
    %1 = arith.extf %0 : vector<64x128xbf16> to vector<64x128xf32>
    %c0_1 = arith.constant 0 : index
    %c0_2 = arith.constant 0 : index
    %2 = vector.load %arg2[%c0_1, %c0_2] : memref<1x128xf32, #tpu.memory_space<vmem>>, vector<1x128xf32>
    %3 = vector.broadcast %2 : vector<1x128xf32> to vector<64x128xf32>
    %4 = arith.mulf %1, %3 : vector<64x128xf32>
    %c0_3 = arith.constant 0 : index
    %c0_4 = arith.constant 0 : index
    %5 = vector.load %arg3[%c0_3, %c0_4] : memref<1x128xf32, #tpu.memory_space<vmem>>, vector<1x128xf32>
    %6 = vector.broadcast %5 : vector<1x128xf32> to vector<64x128xf32>
    %7 = arith.addf %4, %6 : vector<64x128xf32>
    %cst = arith.constant 0.000000e+00 : f32
    %8 = vector.broadcast %cst : f32 to vector<64x128xf32>
    %9 = arith.cmpf ogt, %7, %8 : vector<64x128xf32>
    %cst_5 = arith.constant 2.000000e-01 : f32
    %10 = vector.broadcast %cst_5 : f32 to vector<64x128xf32>
    %11 = arith.mulf %10, %7 : vector<64x128xf32>
    %12 = arith.select %9, %7, %11 : vector<64x128xi1>, vector<64x128xf32>
    %13 = arith.truncf %12 : vector<64x128xf32> to vector<64x128xbf16>
    %c0_6 = arith.constant 0 : index
    %c0_7 = arith.constant 0 : index
    %14 = vector.load %arg4[%c0_6, %c0_7] : memref<64x128xbf16, #tpu.memory_space<vmem>>, vector<64x128xbf16>
    tpu.vector_store %arg4[%c0_6, %c0_7], %13 {strides = array<i32>} : memref<64x128xbf16, #tpu.memory_space<vmem>>, vector<64x128xbf16>,
    return
  }
  func.func @transform_0(%arg0: i32) -> (i32, i32) {
    %c0_i32 = arith.constant 0 : i32
    %c0_i32_0 = arith.constant 0 : i32
    return %arg0, %c0_i32 : i32, i32
  }
  func.func @transform_1(%arg0: i32) -> (i32, i32) {
    %c0_i32 = arith.constant 0 : i32
    %c0_i32_0 = arith.constant 0 : i32
    %c0_i32_1 = arith.constant 0 : i32
    return %c0_i32, %c0_i32_0 : i32, i32
  }
  func.func @transform_2(%arg0: i32) -> (i32, i32) {
    %c0_i32 = arith.constant 0 : i32
    %c0_i32_0 = arith.constant 0 : i32
    %c0_i32_1 = arith.constant 0 : i32
    return %c0_i32, %c0_i32_0 : i32, i32
  }
  func.func @transform_3(%arg0: i32) -> (i32, i32) {
    %c0_i32 = arith.constant 0 : i32
    %c0_i32_0 = arith.constant 0 : i32
    return %arg0, %c0_i32 : i32, i32
  }
}

module attributes {stable_mosaic.version = 11 : i64} {
  func.func @_conv_stats_kernel(%arg0: i32, %arg1: memref<128x256xbf16, #tpu.memory_space<vmem>>, %arg2: memref<256x32xbf16, #tpu.memory_space<vmem>>, %arg3: memref<128x32xbf16, #tpu.memory_space<vmem>>, %arg4: memref<1x1x32xf32, #tpu.memory_space<vmem>>, %arg5: memref<1x1x32xf32, #tpu.memory_space<vmem>>) attributes {dimension_semantics = [#tpu.dimension_semantics<parallel>], iteration_bounds = array<i64: 1>, scalar_prefetch = 0 : i64, scratch_operands = 0 : i64, tpu.core_type = #tpu.core_type<tc>, window_params = [{transform_indices = @transform_0, window_bounds = array<i64: 128, 256>}, {pipeline_mode = #tpu.pipeline_mode<synchronous>, transform_indices = @transform_1, window_bounds = array<i64: 256, 32>}, {transform_indices = @transform_2, window_bounds = array<i64: 128, 32>}, {transform_indices = @transform_3, window_bounds = array<i64: 1, 1, 32>}, {transform_indices = @transform_4, window_bounds = array<i64: 1, 1, 32>}]} {
    %c0 = arith.constant 0 : index
    %c0_0 = arith.constant 0 : index
    %0 = vector.load %arg1[%c0, %c0_0] : memref<128x256xbf16, #tpu.memory_space<vmem>>, vector<128x256xbf16>
    %c0_1 = arith.constant 0 : index
    %c0_2 = arith.constant 0 : index
    %1 = vector.load %arg2[%c0_1, %c0_2] : memref<256x32xbf16, #tpu.memory_space<vmem>>, vector<256x32xbf16>
    %cst = arith.constant dense<0.000000e+00> : vector<128x32xf32>
    %2 = tpu.matmul %0, %1, %cst {dimension_numbers = #tpu.dot_dimension_numbers<[1], [0], [0], [1], [0, 0, 1, 1], [], []>} : vector<128x256xbf16>, vector<256x32xbf16>, vector<128x32xf32> -> vector<128x32xf32>
    %3 = arith.truncf %2 : vector<128x32xf32> to vector<128x32xbf16>
    %c0_3 = arith.constant 0 : index
    %c0_4 = arith.constant 0 : index
    %4 = vector.load %arg3[%c0_3, %c0_4] : memref<128x32xbf16, #tpu.memory_space<vmem>>, vector<128x32xbf16>
    tpu.vector_store %arg3[%c0_3, %c0_4], %3 {strides = array<i32>} : memref<128x32xbf16, #tpu.memory_space<vmem>>, vector<128x32xbf16>,
    %cst_5 = arith.constant dense<0.000000e+00> : vector<32xf32>
    %5 = vector.multi_reduction <add>, %2, %cst_5 [0] : vector<128x32xf32> to vector<32xf32>
    %6 = vector.shape_cast %5 : vector<32xf32> to vector<1x32xf32>
    %7 = vector.shape_cast %6 : vector<1x32xf32> to vector<1x1x32xf32>
    %c0_6 = arith.constant 0 : index
    %c0_7 = arith.constant 0 : index
    %c0_8 = arith.constant 0 : index
    %8 = vector.load %arg4[%c0_6, %c0_7, %c0_8] : memref<1x1x32xf32, #tpu.memory_space<vmem>>, vector<1x1x32xf32>
    tpu.vector_store %arg4[%c0_6, %c0_7, %c0_8], %7 {strides = array<i32>} : memref<1x1x32xf32, #tpu.memory_space<vmem>>, vector<1x1x32xf32>,
    %9 = arith.mulf %2, %2 : vector<128x32xf32>
    %cst_9 = arith.constant dense<0.000000e+00> : vector<32xf32>
    %10 = vector.multi_reduction <add>, %9, %cst_9 [0] : vector<128x32xf32> to vector<32xf32>
    %11 = vector.shape_cast %10 : vector<32xf32> to vector<1x32xf32>
    %12 = vector.shape_cast %11 : vector<1x32xf32> to vector<1x1x32xf32>
    %c0_10 = arith.constant 0 : index
    %c0_11 = arith.constant 0 : index
    %c0_12 = arith.constant 0 : index
    %13 = vector.load %arg5[%c0_10, %c0_11, %c0_12] : memref<1x1x32xf32, #tpu.memory_space<vmem>>, vector<1x1x32xf32>
    tpu.vector_store %arg5[%c0_10, %c0_11, %c0_12], %12 {strides = array<i32>} : memref<1x1x32xf32, #tpu.memory_space<vmem>>, vector<1x1x32xf32>,
    return
  }
  func.func @transform_0(%arg0: i32) -> (i32, i32) {
    %c0_i32 = arith.constant 0 : i32
    %c0_i32_0 = arith.constant 0 : i32
    return %arg0, %c0_i32 : i32, i32
  }
  func.func @transform_1(%arg0: i32) -> (i32, i32) {
    %c0_i32 = arith.constant 0 : i32
    %c0_i32_0 = arith.constant 0 : i32
    %c0_i32_1 = arith.constant 0 : i32
    return %c0_i32, %c0_i32_0 : i32, i32
  }
  func.func @transform_2(%arg0: i32) -> (i32, i32) {
    %c0_i32 = arith.constant 0 : i32
    %c0_i32_0 = arith.constant 0 : i32
    return %arg0, %c0_i32 : i32, i32
  }
  func.func @transform_3(%arg0: i32) -> (i32, i32, i32) {
    %c0_i32 = arith.constant 0 : i32
    %c0_i32_0 = arith.constant 0 : i32
    %c0_i32_1 = arith.constant 0 : i32
    return %arg0, %c0_i32, %c0_i32_0 : i32, i32, i32
  }
  func.func @transform_4(%arg0: i32) -> (i32, i32, i32) {
    %c0_i32 = arith.constant 0 : i32
    %c0_i32_0 = arith.constant 0 : i32
    %c0_i32_1 = arith.constant 0 : i32
    return %arg0, %c0_i32, %c0_i32_0 : i32, i32, i32
  }
}

module attributes {stable_mosaic.version = 11 : i64} {
  func.func @_bn_leaky_kernel(%arg0: i32, %arg1: memref<32x128xbf16, #tpu.memory_space<vmem>>, %arg2: memref<1x128xf32, #tpu.memory_space<vmem>>, %arg3: memref<1x128xf32, #tpu.memory_space<vmem>>, %arg4: memref<32x128xbf16, #tpu.memory_space<vmem>>) attributes {dimension_semantics = [#tpu.dimension_semantics<parallel>], iteration_bounds = array<i64: 1>, scalar_prefetch = 0 : i64, scratch_operands = 0 : i64, tpu.core_type = #tpu.core_type<tc>, window_params = [{transform_indices = @transform_0, window_bounds = array<i64: 32, 128>}, {pipeline_mode = #tpu.pipeline_mode<synchronous>, transform_indices = @transform_1, window_bounds = array<i64: 1, 128>}, {pipeline_mode = #tpu.pipeline_mode<synchronous>, transform_indices = @transform_2, window_bounds = array<i64: 1, 128>}, {transform_indices = @transform_3, window_bounds = array<i64: 32, 128>}]} {
    %c0 = arith.constant 0 : index
    %c0_0 = arith.constant 0 : index
    %0 = vector.load %arg1[%c0, %c0_0] : memref<32x128xbf16, #tpu.memory_space<vmem>>, vector<32x128xbf16>
    %1 = arith.extf %0 : vector<32x128xbf16> to vector<32x128xf32>
    %c0_1 = arith.constant 0 : index
    %c0_2 = arith.constant 0 : index
    %2 = vector.load %arg2[%c0_1, %c0_2] : memref<1x128xf32, #tpu.memory_space<vmem>>, vector<1x128xf32>
    %3 = vector.broadcast %2 : vector<1x128xf32> to vector<32x128xf32>
    %4 = arith.mulf %1, %3 : vector<32x128xf32>
    %c0_3 = arith.constant 0 : index
    %c0_4 = arith.constant 0 : index
    %5 = vector.load %arg3[%c0_3, %c0_4] : memref<1x128xf32, #tpu.memory_space<vmem>>, vector<1x128xf32>
    %6 = vector.broadcast %5 : vector<1x128xf32> to vector<32x128xf32>
    %7 = arith.addf %4, %6 : vector<32x128xf32>
    %cst = arith.constant 0.000000e+00 : f32
    %8 = vector.broadcast %cst : f32 to vector<32x128xf32>
    %9 = arith.cmpf ogt, %7, %8 : vector<32x128xf32>
    %cst_5 = arith.constant 2.000000e-01 : f32
    %10 = vector.broadcast %cst_5 : f32 to vector<32x128xf32>
    %11 = arith.mulf %10, %7 : vector<32x128xf32>
    %12 = arith.select %9, %7, %11 : vector<32x128xi1>, vector<32x128xf32>
    %13 = arith.truncf %12 : vector<32x128xf32> to vector<32x128xbf16>
    %c0_6 = arith.constant 0 : index
    %c0_7 = arith.constant 0 : index
    %14 = vector.load %arg4[%c0_6, %c0_7] : memref<32x128xbf16, #tpu.memory_space<vmem>>, vector<32x128xbf16>
    tpu.vector_store %arg4[%c0_6, %c0_7], %13 {strides = array<i32>} : memref<32x128xbf16, #tpu.memory_space<vmem>>, vector<32x128xbf16>,
    return
  }
  func.func @transform_0(%arg0: i32) -> (i32, i32) {
    %c0_i32 = arith.constant 0 : i32
    %c0_i32_0 = arith.constant 0 : i32
    return %arg0, %c0_i32 : i32, i32
  }
  func.func @transform_1(%arg0: i32) -> (i32, i32) {
    %c0_i32 = arith.constant 0 : i32
    %c0_i32_0 = arith.constant 0 : i32
    %c0_i32_1 = arith.constant 0 : i32
    return %c0_i32, %c0_i32_0 : i32, i32
  }
  func.func @transform_2(%arg0: i32) -> (i32, i32) {
    %c0_i32 = arith.constant 0 : i32
    %c0_i32_0 = arith.constant 0 : i32
    %c0_i32_1 = arith.constant 0 : i32
    return %c0_i32, %c0_i32_0 : i32, i32
  }
  func.func @transform_3(%arg0: i32) -> (i32, i32) {
    %c0_i32 = arith.constant 0 : i32
    %c0_i32_0 = arith.constant 0 : i32
    return %arg0, %c0_i32 : i32, i32
  }
}

module attributes {stable_mosaic.version = 11 : i64} {
  func.func @_conv_stats_kernel(%arg0: i32, %arg1: memref<32x512xbf16, #tpu.memory_space<vmem>>, %arg2: memref<512x64xbf16, #tpu.memory_space<vmem>>, %arg3: memref<32x64xbf16, #tpu.memory_space<vmem>>, %arg4: memref<1x1x64xf32, #tpu.memory_space<vmem>>, %arg5: memref<1x1x64xf32, #tpu.memory_space<vmem>>) attributes {dimension_semantics = [#tpu.dimension_semantics<parallel>], iteration_bounds = array<i64: 1>, scalar_prefetch = 0 : i64, scratch_operands = 0 : i64, tpu.core_type = #tpu.core_type<tc>, window_params = [{transform_indices = @transform_0, window_bounds = array<i64: 32, 512>}, {pipeline_mode = #tpu.pipeline_mode<synchronous>, transform_indices = @transform_1, window_bounds = array<i64: 512, 64>}, {transform_indices = @transform_2, window_bounds = array<i64: 32, 64>}, {transform_indices = @transform_3, window_bounds = array<i64: 1, 1, 64>}, {transform_indices = @transform_4, window_bounds = array<i64: 1, 1, 64>}]} {
    %c0 = arith.constant 0 : index
    %c0_0 = arith.constant 0 : index
    %0 = vector.load %arg1[%c0, %c0_0] : memref<32x512xbf16, #tpu.memory_space<vmem>>, vector<32x512xbf16>
    %c0_1 = arith.constant 0 : index
    %c0_2 = arith.constant 0 : index
    %1 = vector.load %arg2[%c0_1, %c0_2] : memref<512x64xbf16, #tpu.memory_space<vmem>>, vector<512x64xbf16>
    %cst = arith.constant dense<0.000000e+00> : vector<32x64xf32>
    %2 = tpu.matmul %0, %1, %cst {dimension_numbers = #tpu.dot_dimension_numbers<[1], [0], [0], [1], [0, 0, 1, 1], [], []>} : vector<32x512xbf16>, vector<512x64xbf16>, vector<32x64xf32> -> vector<32x64xf32>
    %3 = arith.truncf %2 : vector<32x64xf32> to vector<32x64xbf16>
    %c0_3 = arith.constant 0 : index
    %c0_4 = arith.constant 0 : index
    %4 = vector.load %arg3[%c0_3, %c0_4] : memref<32x64xbf16, #tpu.memory_space<vmem>>, vector<32x64xbf16>
    tpu.vector_store %arg3[%c0_3, %c0_4], %3 {strides = array<i32>} : memref<32x64xbf16, #tpu.memory_space<vmem>>, vector<32x64xbf16>,
    %cst_5 = arith.constant dense<0.000000e+00> : vector<64xf32>
    %5 = vector.multi_reduction <add>, %2, %cst_5 [0] : vector<32x64xf32> to vector<64xf32>
    %6 = vector.shape_cast %5 : vector<64xf32> to vector<1x64xf32>
    %7 = vector.shape_cast %6 : vector<1x64xf32> to vector<1x1x64xf32>
    %c0_6 = arith.constant 0 : index
    %c0_7 = arith.constant 0 : index
    %c0_8 = arith.constant 0 : index
    %8 = vector.load %arg4[%c0_6, %c0_7, %c0_8] : memref<1x1x64xf32, #tpu.memory_space<vmem>>, vector<1x1x64xf32>
    tpu.vector_store %arg4[%c0_6, %c0_7, %c0_8], %7 {strides = array<i32>} : memref<1x1x64xf32, #tpu.memory_space<vmem>>, vector<1x1x64xf32>,
    %9 = arith.mulf %2, %2 : vector<32x64xf32>
    %cst_9 = arith.constant dense<0.000000e+00> : vector<64xf32>
    %10 = vector.multi_reduction <add>, %9, %cst_9 [0] : vector<32x64xf32> to vector<64xf32>
    %11 = vector.shape_cast %10 : vector<64xf32> to vector<1x64xf32>
    %12 = vector.shape_cast %11 : vector<1x64xf32> to vector<1x1x64xf32>
    %c0_10 = arith.constant 0 : index
    %c0_11 = arith.constant 0 : index
    %c0_12 = arith.constant 0 : index
    %13 = vector.load %arg5[%c0_10, %c0_11, %c0_12] : memref<1x1x64xf32, #tpu.memory_space<vmem>>, vector<1x1x64xf32>
    tpu.vector_store %arg5[%c0_10, %c0_11, %c0_12], %12 {strides = array<i32>} : memref<1x1x64xf32, #tpu.memory_space<vmem>>, vector<1x1x64xf32>,
    return
  }
  func.func @transform_0(%arg0: i32) -> (i32, i32) {
    %c0_i32 = arith.constant 0 : i32
    %c0_i32_0 = arith.constant 0 : i32
    return %arg0, %c0_i32 : i32, i32
  }
  func.func @transform_1(%arg0: i32) -> (i32, i32) {
    %c0_i32 = arith.constant 0 : i32
    %c0_i32_0 = arith.constant 0 : i32
    %c0_i32_1 = arith.constant 0 : i32
    return %c0_i32, %c0_i32_0 : i32, i32
  }
  func.func @transform_2(%arg0: i32) -> (i32, i32) {
    %c0_i32 = arith.constant 0 : i32
    %c0_i32_0 = arith.constant 0 : i32
    return %arg0, %c0_i32 : i32, i32
  }
  func.func @transform_3(%arg0: i32) -> (i32, i32, i32) {
    %c0_i32 = arith.constant 0 : i32
    %c0_i32_0 = arith.constant 0 : i32
    %c0_i32_1 = arith.constant 0 : i32
    return %arg0, %c0_i32, %c0_i32_0 : i32, i32, i32
  }
  func.func @transform_4(%arg0: i32) -> (i32, i32, i32) {
    %c0_i32 = arith.constant 0 : i32
    %c0_i32_0 = arith.constant 0 : i32
    %c0_i32_1 = arith.constant 0 : i32
    return %arg0, %c0_i32, %c0_i32_0 : i32, i32, i32
  }
}

module attributes {stable_mosaic.version = 11 : i64} {
  func.func @_bn_leaky_kernel(%arg0: i32, %arg1: memref<16x128xbf16, #tpu.memory_space<vmem>>, %arg2: memref<1x128xf32, #tpu.memory_space<vmem>>, %arg3: memref<1x128xf32, #tpu.memory_space<vmem>>, %arg4: memref<16x128xbf16, #tpu.memory_space<vmem>>) attributes {dimension_semantics = [#tpu.dimension_semantics<parallel>], iteration_bounds = array<i64: 1>, scalar_prefetch = 0 : i64, scratch_operands = 0 : i64, tpu.core_type = #tpu.core_type<tc>, window_params = [{transform_indices = @transform_0, window_bounds = array<i64: 16, 128>}, {pipeline_mode = #tpu.pipeline_mode<synchronous>, transform_indices = @transform_1, window_bounds = array<i64: 1, 128>}, {pipeline_mode = #tpu.pipeline_mode<synchronous>, transform_indices = @transform_2, window_bounds = array<i64: 1, 128>}, {transform_indices = @transform_3, window_bounds = array<i64: 16, 128>}]} {
    %c0 = arith.constant 0 : index
    %c0_0 = arith.constant 0 : index
    %0 = vector.load %arg1[%c0, %c0_0] : memref<16x128xbf16, #tpu.memory_space<vmem>>, vector<16x128xbf16>
    %1 = arith.extf %0 : vector<16x128xbf16> to vector<16x128xf32>
    %c0_1 = arith.constant 0 : index
    %c0_2 = arith.constant 0 : index
    %2 = vector.load %arg2[%c0_1, %c0_2] : memref<1x128xf32, #tpu.memory_space<vmem>>, vector<1x128xf32>
    %3 = vector.broadcast %2 : vector<1x128xf32> to vector<16x128xf32>
    %4 = arith.mulf %1, %3 : vector<16x128xf32>
    %c0_3 = arith.constant 0 : index
    %c0_4 = arith.constant 0 : index
    %5 = vector.load %arg3[%c0_3, %c0_4] : memref<1x128xf32, #tpu.memory_space<vmem>>, vector<1x128xf32>
    %6 = vector.broadcast %5 : vector<1x128xf32> to vector<16x128xf32>
    %7 = arith.addf %4, %6 : vector<16x128xf32>
    %cst = arith.constant 0.000000e+00 : f32
    %8 = vector.broadcast %cst : f32 to vector<16x128xf32>
    %9 = arith.cmpf ogt, %7, %8 : vector<16x128xf32>
    %cst_5 = arith.constant 2.000000e-01 : f32
    %10 = vector.broadcast %cst_5 : f32 to vector<16x128xf32>
    %11 = arith.mulf %10, %7 : vector<16x128xf32>
    %12 = arith.select %9, %7, %11 : vector<16x128xi1>, vector<16x128xf32>
    %13 = arith.truncf %12 : vector<16x128xf32> to vector<16x128xbf16>
    %c0_6 = arith.constant 0 : index
    %c0_7 = arith.constant 0 : index
    %14 = vector.load %arg4[%c0_6, %c0_7] : memref<16x128xbf16, #tpu.memory_space<vmem>>, vector<16x128xbf16>
    tpu.vector_store %arg4[%c0_6, %c0_7], %13 {strides = array<i32>} : memref<16x128xbf16, #tpu.memory_space<vmem>>, vector<16x128xbf16>,
    return
  }
  func.func @transform_0(%arg0: i32) -> (i32, i32) {
    %c0_i32 = arith.constant 0 : i32
    %c0_i32_0 = arith.constant 0 : i32
    return %arg0, %c0_i32 : i32, i32
  }
  func.func @transform_1(%arg0: i32) -> (i32, i32) {
    %c0_i32 = arith.constant 0 : i32
    %c0_i32_0 = arith.constant 0 : i32
    %c0_i32_1 = arith.constant 0 : i32
    return %c0_i32, %c0_i32_0 : i32, i32
  }
  func.func @transform_2(%arg0: i32) -> (i32, i32) {
    %c0_i32 = arith.constant 0 : i32
    %c0_i32_0 = arith.constant 0 : i32
    %c0_i32_1 = arith.constant 0 : i32
    return %c0_i32, %c0_i32_0 : i32, i32
  }
  func.func @transform_3(%arg0: i32) -> (i32, i32) {
    %c0_i32 = arith.constant 0 : i32
    %c0_i32_0 = arith.constant 0 : i32
    return %arg0, %c0_i32 : i32, i32
  }
}

</mosaic_0001>

<llo_original>
// kernel: discriminator_forward.7
$region0: #{discriminator_forward.7}
  #allocation0 [shape = 'u32[]', space=smem, size = 0x4, offset = 0x4, fixed_abs, tag = 'smem constant byte address 0x4 - core index']
  #allocation1 [shape = 'u32[144,128]{1,0:T(1,128)}', space=vmem, size = 0x12000, scoped, tag = 'internal scratch']
  %s0 = inlined_call_operand.vmem [shape: bf16[2048,48], index: 0, kind: input, shape index: {}]
  %s1 = inlined_call_operand.vmem [shape: bf16[48,8], index: 1, kind: input, shape index: {}]
  %s2 = inlined_call_operand.vmem [shape: f32[1,8], index: 2, kind: input, shape index: {}]
  %s3 = inlined_call_operand.vmem [shape: bf16[2048,8], index: 3, kind: output, shape index: {}]
  %s4 = sld [smem:[#allocation0]]
  $region22: #{discriminator_forward.7} parent=0
    _
  %s6 = ssub.s32 1, %s4
  %s7 = scalar_select 0, %s6, %s4
  // Predicated region
  $region2: #{discriminator_forward.7} parent=0 // pred_check
    _
  $region3: #{discriminator_forward.7} parent=0 // pred_check_branch
    %9 = sbr.rel (0) target = $region5
  $region4: #{discriminator_forward.7} parent=0 // pred_region
    _
  $region5: #{discriminator_forward.7} parent=0 // pred_fallthru
    _
  // Predicated region
  $region6: #{discriminator_forward.7} parent=0 // pred_check
    _
  $region7: #{discriminator_forward.7} parent=0 // pred_check_branch
    %11 = sbr.rel (0) target = $region9
  $region8: #{discriminator_forward.7} parent=0 // pred_region
    _
  $region9: #{discriminator_forward.7} parent=0 // pred_fallthru
    _
  // Predicated region
  $region10: #{discriminator_forward.7} parent=0 // pred_check
    _
  $region11: #{discriminator_forward.7} parent=0 // pred_check_branch
    %13 = sbr.rel (0) target = $region13
  $region12: #{discriminator_forward.7} parent=0 // pred_region
    _
  $region13: #{discriminator_forward.7} parent=0 // pred_fallthru
    _
  %v15 = vld [vmem:[%s0] sm:$0xf]
  %v16 = vld [vmem:[%s0 + $0x4] sm:$0xf]
  %v17 = vld [vmem:[%s0 + $0x8] sm:$0xf]
  %v18 = vld [vmem:[%s0 + $0xc] sm:$0xf]
  %v19 = vld [vmem:[%s0 + $0x10] sm:$0xf]
  %v20 = vld [vmem:[%s0 + $0x14] sm:$0xf]
  %v21 = vld [vmem:[%s0 + $0x18] sm:$0xf]
  %v22 = vld [vmem:[%s0 + $0x1c] sm:$0xf]
  %v23 = vld [vmem:[%s0 + $0x20] sm:$0xf]
  %v24 = vld [vmem:[%s0 + $0x24] sm:$0xf]
  %v25 = vld [vmem:[%s0 + $0x28] sm:$0xf]
  %v26 = vld [vmem:[%s0 + $0x2c] sm:$0xf]
  %v27 = vld [vmem:[%s0 + $0x30] sm:$0xf]
  %v28 = vld [vmem:[%s0 + $0x34] sm:$0xf]
  %v29 = vld [vmem:[%s0 + $0x38] sm:$0xf]
  %v30 = vld [vmem:[%s0 + $0x3c] sm:$0xf]
  %v31 = vld [vmem:[%s0 + $0x40] sm:$0xf]
  %v32 = vld [vmem:[%s0 + $0x44] sm:$0xf]
  %v33 = vld [vmem:[%s0 + $0x48] sm:$0xf]
  %v34 = vld [vmem:[%s0 + $0x4c] sm:$0xf]
  %v35 = vld [vmem:[%s0 + $0x50] sm:$0xf]
  %v36 = vld [vmem:[%s0 + $0x54] sm:$0xf]
  %v37 = vld [vmem:[%s0 + $0x58] sm:$0xf]
  %v38 = vld [vmem:[%s0 + $0x5c] sm:$0xf]
  %v39 = vld [vmem:[%s0 + $0x60] sm:$0xf]
  %v40 = vld [vmem:[%s0 + $0x64] sm:$0xf]
  %v41 = vld [vmem:[%s0 + $0x68] sm:$0xf]
  %v42 = vld [vmem:[%s0 + $0x6c] sm:$0xf]
  %v43 = vld [vmem:[%s0 + $0x70] sm:$0xf]
  %v44 = vld [vmem:[%s0 + $0x74] sm:$0xf]
  %v45 = vld [vmem:[%s0 + $0x78] sm:$0xf]
  %v46 = vld [vmem:[%s0 + $0x7c] sm:$0xf]
  %v47 = vld [vmem:[%s0 + $0x80] sm:$0xf]
  %v48 = vld [vmem:[%s0 + $0x84] sm:$0xf]
  %v49 = vld [vmem:[%s0 + $0x88] sm:$0xf]
  %v50 = vld [vmem:[%s0 + $0x8c] sm:$0xf]
  %v51 = vld [vmem:[%s0 + $0x90] sm:$0xf]
  %v52 = vld [vmem:[%s0 + $0x94] sm:$0xf]
  %v53 = vld [vmem:[%s0 + $0x98] sm:$0xf]
  %v54 = vld [vmem:[%s0 + $0x9c] sm:$0xf]
  %v55 = vld [vmem:[%s0 + $0xa0] sm:$0xf]
  %v56 = vld [vmem:[%s0 + $0xa4] sm:$0xf]
  %v57 = vld [vmem:[%s0 + $0xa8] sm:$0xf]
  %v58 = vld [vmem:[%s0 + $0xac] sm:$0xf]
  %v59 = vld [vmem:[%s0 + $0xb0] sm:$0xf]
  %v60 = vld [vmem:[%s0 + $0xb4] sm:$0xf]
  %v61 = vld [vmem:[%s0 + $0xb8] sm:$0xf]
  %v62 = vld [vmem:[%s0 + $0xbc] sm:$0xf]
  %v63 = vld [vmem:[%s0 + $0xc0] sm:$0xf]
  %v64 = vld [vmem:[%s0 + $0xc4] sm:$0xf]
  %v65 = vld [vmem:[%s0 + $0xc8] sm:$0xf]
  %v66 = vld [vmem:[%s0 + $0xcc] sm:$0xf]
  %v67 = vld [vmem:[%s0 + $0xd0] sm:$0xf]
  %v68 = vld [vmem:[%s0 + $0xd4] sm:$0xf]
  %v69 = vld [vmem:[%s0 + $0xd8] sm:$0xf]
  %v70 = vld [vmem:[%s0 + $0xdc] sm:$0xf]
  %v71 = vld [vmem:[%s0 + $0xe0] sm:$0xf]
  %v72 = vld [vmem:[%s0 + $0xe4] sm:$0xf]
  %v73 = vld [vmem:[%s0 + $0xe8] sm:$0xf]
  %v74 = vld [vmem:[%s0 + $0xec] sm:$0xf]
  %v75 = vld [vmem:[%s0 + $0xf0] sm:$0xf]
  %v76 = vld [vmem:[%s0 + $0xf4] sm:$0xf]
  %v77 = vld [vmem:[%s0 + $0xf8] sm:$0xf]
  %v78 = vld [vmem:[%s0 + $0xfc] sm:$0xf]
  %v79 = vld [vmem:[%s0 + $0x100] sm:$0xf]
  %v80 = vld [vmem:[%s0 + $0x104] sm:$0xf]
  %v81 = vld [vmem:[%s0 + $0x108] sm:$0xf]
  %v82 = vld [vmem:[%s0 + $0x10c] sm:$0xf]
  %v83 = vld [vmem:[%s0 + $0x110] sm:$0xf]
  %v84 = vld [vmem:[%s0 + $0x114] sm:$0xf]
  %v85 = vld [vmem:[%s0 + $0x118] sm:$0xf]
  %v86 = vld [vmem:[%s0 + $0x11c] sm:$0xf]
  %v87 = vld [vmem:[%s0 + $0x120] sm:$0xf]
  %v88 = vld [vmem:[%s0 + $0x124] sm:$0xf]
  %v89 = vld [vmem:[%s0 + $0x128] sm:$0xf]
  %v90 = vld [vmem:[%s0 + $0x12c] sm:$0xf]
  %v91 = vld [vmem:[%s0 + $0x130] sm:$0xf]
  %v92 = vld [vmem:[%s0 + $0x134] sm:$0xf]
  %v93 = vld [vmem:[%s0 + $0x138] sm:$0xf]
  %v94 = vld [vmem:[%s0 + $0x13c] sm:$0xf]
  %v95 = vld [vmem:[%s0 + $0x140] sm:$0xf]
  %v96 = vld [vmem:[%s0 + $0x144] sm:$0xf]
  %v97 = vld [vmem:[%s0 + $0x148] sm:$0xf]
  %v98 = vld [vmem:[%s0 + $0x14c] sm:$0xf]
  %v99 = vld [vmem:[%s0 + $0x150] sm:$0xf]
  %v100 = vld [vmem:[%s0 + $0x154] sm:$0xf]
  %v101 = vld [vmem:[%s0 + $0x158] sm:$0xf]
  %v102 = vld [vmem:[%s0 + $0x15c] sm:$0xf]
  %v103 = vld [vmem:[%s0 + $0x160] sm:$0xf]
  %v104 = vld [vmem:[%s0 + $0x164] sm:$0xf]
  %v105 = vld [vmem:[%s0 + $0x168] sm:$0xf]
  %v106 = vld [vmem:[%s0 + $0x16c] sm:$0xf]
  %v107 = vld [vmem:[%s0 + $0x170] sm:$0xf]
  %v108 = vld [vmem:[%s0 + $0x174] sm:$0xf]
  %v109 = vld [vmem:[%s0 + $0x178] sm:$0xf]
  %v110 = vld [vmem:[%s0 + $0x17c] sm:$0xf]
  %v111 = vld [vmem:[%s0 + $0x180] sm:$0xf]
  %v112 = vld [vmem:[%s0 + $0x184] sm:$0xf]
  %v113 = vld [vmem:[%s0 + $0x188] sm:$0xf]
  %v114 = vld [vmem:[%s0 + $0x18c] sm:$0xf]
  %v115 = vld [vmem:[%s0 + $0x190] sm:$0xf]
  %v116 = vld [vmem:[%s0 + $0x194] sm:$0xf]
  %v117 = vld [vmem:[%s0 + $0x198] sm:$0xf]
  %v118 = vld [vmem:[%s0 + $0x19c] sm:$0xf]
  %v119 = vld [vmem:[%s0 + $0x1a0] sm:$0xf]
  %v120 = vld [vmem:[%s0 + $0x1a4] sm:$0xf]
  %v121 = vld [vmem:[%s0 + $0x1a8] sm:$0xf]
  %v122 = vld [vmem:[%s0 + $0x1ac] sm:$0xf]
  %v123 = vld [vmem:[%s0 + $0x1b0] sm:$0xf]
  %v124 = vld [vmem:[%s0 + $0x1b4] sm:$0xf]
  %v125 = vld [vmem:[%s0 + $0x1b8] sm:$0xf]
  %v126 = vld [vmem:[%s0 + $0x1bc] sm:$0xf]
  %v127 = vld [vmem:[%s0 + $0x1c0] sm:$0xf]
  %v128 = vld [vmem:[%s0 + $0x1c4] sm:$0xf]
  %v129 = vld [vmem:[%s0 + $0x1c8] sm:$0xf]
  %v130 = vld [vmem:[%s0 + $0x1cc] sm:$0xf]
  %v131 = vld [vmem:[%s0 + $0x1d0] sm:$0xf]
  %v132 = vld [vmem:[%s0 + $0x1d4] sm:$0xf]
  %v133 = vld [vmem:[%s0 + $0x1d8] sm:$0xf]
  %v134 = vld [vmem:[%s0 + $0x1dc] sm:$0xf]
  %v135 = vld [vmem:[%s0 + $0x1e0] sm:$0xf]
  %v136 = vld [vmem:[%s0 + $0x1e4] sm:$0xf]
  %v137 = vld [vmem:[%s0 + $0x1e8] sm:$0xf]
  %v138 = vld [vmem:[%s0 + $0x1ec] sm:$0xf]
  %v139 = vld [vmem:[%s0 + $0x1f0] sm:$0xf]
  %v140 = vld [vmem:[%s0 + $0x1f4] sm:$0xf]
  %v141 = vld [vmem:[%s0 + $0x1f8] sm:$0xf]
  %v142 = vld [vmem:[%s0 + $0x1fc] sm:$0xf]
  %v143 = vld [vmem:[%s0 + $0x200] sm:$0xf]
  %v144 = vld [vmem:[%s0 + $0x204] sm:$0xf]
  %v145 = vld [vmem:[%s0 + $0x208] sm:$0xf]
  %v146 = vld [vmem:[%s0 + $0x20c] sm:$0xf]
  %v147 = vld [vmem:[%s0 + $0x210] sm:$0xf]
  %v148 = vld [vmem:[%s0 + $0x214] sm:$0xf]
  %v149 = vld [vmem:[%s0 + $0x218] sm:$0xf]
  %v150 = vld [vmem:[%s0 + $0x21c] sm:$0xf]
  %v151 = vld [vmem:[%s0 + $0x220] sm:$0xf]
  %v152 = vld [vmem:[%s0 + $0x224] sm:$0xf]
  %v153 = vld [vmem:[%s0 + $0x228] sm:$0xf]
  %v154 = vld [vmem:[%s0 + $0x22c] sm:$0xf]
  %v155 = vld [vmem:[%s0 + $0x230] sm:$0xf]
  %v156 = vld [vmem:[%s0 + $0x234] sm:$0xf]
  %v157 = vld [vmem:[%s0 + $0x238] sm:$0xf]
  %v158 = vld [vmem:[%s0 + $0x23c] sm:$0xf]
  %v159 = vld [vmem:[%s0 + $0x240] sm:$0xf]
  %v160 = vld [vmem:[%s0 + $0x244] sm:$0xf]
  %v161 = vld [vmem:[%s0 + $0x248] sm:$0xf]
  %v162 = vld [vmem:[%s0 + $0x24c] sm:$0xf]
  %v163 = vld [vmem:[%s0 + $0x250] sm:$0xf]
  %v164 = vld [vmem:[%s0 + $0x254] sm:$0xf]
  %v165 = vld [vmem:[%s0 + $0x258] sm:$0xf]
  %v166 = vld [vmem:[%s0 + $0x25c] sm:$0xf]
  %v167 = vld [vmem:[%s0 + $0x260] sm:$0xf]
  %v168 = vld [vmem:[%s0 + $0x264] sm:$0xf]
  %v169 = vld [vmem:[%s0 + $0x268] sm:$0xf]
  %v170 = vld [vmem:[%s0 + $0x26c] sm:$0xf]
  %v171 = vld [vmem:[%s0 + $0x270] sm:$0xf]
  %v172 = vld [vmem:[%s0 + $0x274] sm:$0xf]
  %v173 = vld [vmem:[%s0 + $0x278] sm:$0xf]
  %v174 = vld [vmem:[%s0 + $0x27c] sm:$0xf]
  %v175 = vld [vmem:[%s0 + $0x280] sm:$0xf]
  %v176 = vld [vmem:[%s0 + $0x284] sm:$0xf]
  %v177 = vld [vmem:[%s0 + $0x288] sm:$0xf]
  %v178 = vld [vmem:[%s0 + $0x28c] sm:$0xf]
  %v179 = vld [vmem:[%s0 + $0x290] sm:$0xf]
  %v180 = vld [vmem:[%s0 + $0x294] sm:$0xf]
  %v181 = vld [vmem:[%s0 + $0x298] sm:$0xf]
  %v182 = vld [vmem:[%s0 + $0x29c] sm:$0xf]
  %v183 = vld [vmem:[%s0 + $0x2a0] sm:$0xf]
  %v184 = vld [vmem:[%s0 + $0x2a4] sm:$0xf]
  %v185 = vld [vmem:[%s0 + $0x2a8] sm:$0xf]
  %v186 = vld [vmem:[%s0 + $0x2ac] sm:$0xf]
  %v187 = vld [vmem:[%s0 + $0x2b0] sm:$0xf]
  %v188 = vld [vmem:[%s0 + $0x2b4] sm:$0xf]
  %v189 = vld [vmem:[%s0 + $0x2b8] sm:$0xf]
  %v190 = vld [vmem:[%s0 + $0x2bc] sm:$0xf]
  %v191 = vld [vmem:[%s0 + $0x2c0] sm:$0xf]
  %v192 = vld [vmem:[%s0 + $0x2c4] sm:$0xf]
  %v193 = vld [vmem:[%s0 + $0x2c8] sm:$0xf]
  %v194 = vld [vmem:[%s0 + $0x2cc] sm:$0xf]
  %v195 = vld [vmem:[%s0 + $0x2d0] sm:$0xf]
  %v196 = vld [vmem:[%s0 + $0x2d4] sm:$0xf]
  %v197 = vld [vmem:[%s0 + $0x2d8] sm:$0xf]
  %v198 = vld [vmem:[%s0 + $0x2dc] sm:$0xf]
  %v199 = vld [vmem:[%s0 + $0x2e0] sm:$0xf]
  %v200 = vld [vmem:[%s0 + $0x2e4] sm:$0xf]
  %v201 = vld [vmem:[%s0 + $0x2e8] sm:$0xf]
  %v202 = vld [vmem:[%s0 + $0x2ec] sm:$0xf]
  %v203 = vld [vmem:[%s0 + $0x2f0] sm:$0xf]
  %v204 = vld [vmem:[%s0 + $0x2f4] sm:$0xf]
  %v205 = vld [vmem:[%s0 + $0x2f8] sm:$0xf]
  %v206 = vld [vmem:[%s0 + $0x2fc] sm:$0xf]
  %v207 = vld [vmem:[%s0 + $0x300] sm:$0xf]
  %v208 = vld [vmem:[%s0 + $0x304] sm:$0xf]
  %v209 = vld [vmem:[%s0 + $0x308] sm:$0xf]
  %v210 = vld [vmem:[%s0 + $0x30c] sm:$0xf]
  %v211 = vld [vmem:[%s0 + $0x310] sm:$0xf]
  %v212 = vld [vmem:[%s0 + $0x314] sm:$0xf]
  %v213 = vld [vmem:[%s0 + $0x318] sm:$0xf]
  %v214 = vld [vmem:[%s0 + $0x31c] sm:$0xf]
  %v215 = vld [vmem:[%s0 + $0x320] sm:$0xf]
  %v216 = vld [vmem:[%s0 + $0x324] sm:$0xf]
  %v217 = vld [vmem:[%s0 + $0x328] sm:$0xf]
  %v218 = vld [vmem:[%s0 + $0x32c] sm:$0xf]
  %v219 = vld [vmem:[%s0 + $0x330] sm:$0xf]
  %v220 = vld [vmem:[%s0 + $0x334] sm:$0xf]
  %v221 = vld [vmem:[%s0 + $0x338] sm:$0xf]
  %v222 = vld [vmem:[%s0 + $0x33c] sm:$0xf]
  %v223 = vld [vmem:[%s0 + $0x340] sm:$0xf]
  %v224 = vld [vmem:[%s0 + $0x344] sm:$0xf]
  %v225 = vld [vmem:[%s0 + $0x348] sm:$0xf]
  %v226 = vld [vmem:[%s0 + $0x34c] sm:$0xf]
  %v227 = vld [vmem:[%s0 + $0x350] sm:$0xf]
  %v228 = vld [vmem:[%s0 + $0x354] sm:$0xf]
  %v229 = vld [vmem:[%s0 + $0x358] sm:$0xf]
  %v230 = vld [vmem:[%s0 + $0x35c] sm:$0xf]
  %v231 = vld [vmem:[%s0 + $0x360] sm:$0xf]
  %v232 = vld [vmem:[%s0 + $0x364] sm:$0xf]
  %v233 = vld [vmem:[%s0 + $0x368] sm:$0xf]
  %v234 = vld [vmem:[%s0 + $0x36c] sm:$0xf]
  %v235 = vld [vmem:[%s0 + $0x370] sm:$0xf]
  %v236 = vld [vmem:[%s0 + $0x374] sm:$0xf]
  %v237 = vld [vmem:[%s0 + $0x378] sm:$0xf]
  %v238 = vld [vmem:[%s0 + $0x37c] sm:$0xf]
  %v239 = vld [vmem:[%s0 + $0x380] sm:$0xf]
  %v240 = vld [vmem:[%s0 + $0x384] sm:$0xf]
  %v241 = vld [vmem:[%s0 + $0x388] sm:$0xf]
  %v242 = vld [vmem:[%s0 + $0x38c] sm:$0xf]
  %v243 = vld [vmem:[%s0 + $0x390] sm:$0xf]
  %v244 = vld [vmem:[%s0 + $0x394] sm:$0xf]
  %v245 = vld [vmem:[%s0 + $0x398] sm:$0xf]
  %v246 = vld [vmem:[%s0 + $0x39c] sm:$0xf]
  %v247 = vld [vmem:[%s0 + $0x3a0] sm:$0xf]
  %v248 = vld [vmem:[%s0 + $0x3a4] sm:$0xf]
  %v249 = vld [vmem:[%s0 + $0x3a8] sm:$0xf]
  %v250 = vld [vmem:[%s0 + $0x3ac] sm:$0xf]
  %v251 = vld [vmem:[%s0 + $0x3b0] sm:$0xf]
  %v252 = vld [vmem:[%s0 + $0x3b4] sm:$0xf]
  %v253 = vld [vmem:[%s0 + $0x3b8] sm:$0xf]
  %v254 = vld [vmem:[%s0 + $0x3bc] sm:$0xf]
  %v255 = vld [vmem:[%s0 + $0x3c0] sm:$0xf]
  %v256 = vld [vmem:[%s0 + $0x3c4] sm:$0xf]
  %v257 = vld [vmem:[%s0 + $0x3c8] sm:$0xf]
  %v258 = vld [vmem:[%s0 + $0x3cc] sm:$0xf]
  %v259 = vld [vmem:[%s0 + $0x3d0] sm:$0xf]
  %v260 = vld [vmem:[%s0 + $0x3d4] sm:$0xf]
  %v261 = vld [vmem:[%s0 + $0x3d8] sm:$0xf]
  %v262 = vld [vmem:[%s0 + $0x3dc] sm:$0xf]
  %v263 = vld [vmem:[%s0 + $0x3e0] sm:$0xf]
  %v264 = vld [vmem:[%s0 + $0x3e4] sm:$0xf]
  %v265 = vld [vmem:[%s0 + $0x3e8] sm:$0xf]
  %v266 = vld [vmem:[%s0 + $0x3ec] sm:$0xf]
  %v267 = vld [vmem:[%s0 + $0x3f0] sm:$0xf]
  %v268 = vld [vmem:[%s0 + $0x3f4] sm:$0xf]
  %v269 = vld [vmem:[%s0 + $0x3f8] sm:$0xf]
  %v270 = vld [vmem:[%s0 + $0x3fc] sm:$0xf]
  %v271 = vld [vmem:[%s1] sm:$0xf]
  %v272 = vld [vmem:[%s1 + $0x4] sm:$0xf]
  %v273 = vld [vmem:[%s1 + $0x8] sm:$0xf]
  %v274 = vld [vmem:[%s1 + $0xc] sm:$0xf]
  %v275 = vld [vmem:[%s1 + $0x10] sm:$0xf]
  %v276 = vld [vmem:[%s1 + $0x14] sm:$0xf]
  %v277 = vld [vmem:[%s2] sm:$0x1]
  %v279 = vlaneseq
  %v280 = vshrl.u32 %v279, 7
  %v281 = vsub.s32 0, %v280
  %v282 = vrot.slane %v277, %v281
  %v540 = vunpack.c.l.b16 %v15
  %v541 = vunpack.c.l.b16 %v16
  %v542 = vunpack.c.l.b16 %v17
  %v543 = vunpack.c.l.b16 %v18
  %v544 = vunpack.c.l.b16 %v19
  %v545 = vunpack.c.l.b16 %v20
  %v546 = vunpack.c.l.b16 %v21
  %v547 = vunpack.c.l.b16 %v22
  %v548 = vunpack.c.l.b16 %v23
  %v549 = vunpack.c.l.b16 %v24
  %v550 = vunpack.c.l.b16 %v25
  %v551 = vunpack.c.l.b16 %v26
  %v552 = vunpack.c.l.b16 %v27
  %v553 = vunpack.c.l.b16 %v28
  %v554 = vunpack.c.l.b16 %v29
  %v555 = vunpack.c.l.b16 %v30
  %v556 = vunpack.c.l.b16 %v31
  %v557 = vunpack.c.l.b16 %v32
  %v558 = vunpack.c.l.b16 %v33
  %v559 = vunpack.c.l.b16 %v34
  %v560 = vunpack.c.l.b16 %v35
  %v561 = vunpack.c.l.b16 %v36
  %v562 = vunpack.c.l.b16 %v37
  %v563 = vunpack.c.l.b16 %v38
  %v564 = vunpack.c.l.b16 %v39
  %v565 = vunpack.c.l.b16 %v40
  %v566 = vunpack.c.l.b16 %v41
  %v567 = vunpack.c.l.b16 %v42
  %v568 = vunpack.c.l.b16 %v43
  %v569 = vunpack.c.l.b16 %v44
  %v570 = vunpack.c.l.b16 %v45
  %v571 = vunpack.c.l.b16 %v46
  %v572 = vunpack.c.l.b16 %v47
  %v573 = vunpack.c.l.b16 %v48
  %v574 = vunpack.c.l.b16 %v49
  %v575 = vunpack.c.l.b16 %v50
  %v576 = vunpack.c.l.b16 %v51
  %v577 = vunpack.c.l.b16 %v52
  %v578 = vunpack.c.l.b16 %v53
  %v579 = vunpack.c.l.b16 %v54
  %v580 = vunpack.c.l.b16 %v55
  %v581 = vunpack.c.l.b16 %v56
  %v582 = vunpack.c.l.b16 %v57
  %v583 = vunpack.c.l.b16 %v58
  %v584 = vunpack.c.l.b16 %v59
  %v585 = vunpack.c.l.b16 %v60
  %v586 = vunpack.c.l.b16 %v61
  %v587 = vunpack.c.l.b16 %v62
  %v588 = vunpack.c.l.b16 %v63
  %v589 = vunpack.c.l.b16 %v64
  %v590 = vunpack.c.l.b16 %v65
  %v591 = vunpack.c.l.b16 %v66
  %v592 = vunpack.c.l.b16 %v67
  %v593 = vunpack.c.l.b16 %v68
  %v594 = vunpack.c.l.b16 %v69
  %v595 = vunpack.c.l.b16 %v70
  %v596 = vunpack.c.l.b16 %v71
  %v597 = vunpack.c.l.b16 %v72
  %v598 = vunpack.c.l.b16 %v73
  %v599 = vunpack.c.l.b16 %v74
  %v600 = vunpack.c.l.b16 %v75
  %v601 = vunpack.c.l.b16 %v76
  %v602 = vunpack.c.l.b16 %v77
  %v603 = vunpack.c.l.b16 %v78
  %v604 = vunpack.c.l.b16 %v79
  %v605 = vunpack.c.l.b16 %v80
  %v606 = vunpack.c.l.b16 %v81
  %v607 = vunpack.c.l.b16 %v82
  %v608 = vunpack.c.l.b16 %v83
  %v609 = vunpack.c.l.b16 %v84
  %v610 = vunpack.c.l.b16 %v85
  %v611 = vunpack.c.l.b16 %v86
  %v612 = vunpack.c.l.b16 %v87
  %v613 = vunpack.c.l.b16 %v88
  %v614 = vunpack.c.l.b16 %v89
  %v615 = vunpack.c.l.b16 %v90
  %v616 = vunpack.c.l.b16 %v91
  %v617 = vunpack.c.l.b16 %v92
  %v618 = vunpack.c.l.b16 %v93
  %v619 = vunpack.c.l.b16 %v94
  %v620 = vunpack.c.l.b16 %v95
  %v621 = vunpack.c.l.b16 %v96
  %v622 = vunpack.c.l.b16 %v97
  %v623 = vunpack.c.l.b16 %v98
  %v624 = vunpack.c.l.b16 %v99
  %v625 = vunpack.c.l.b16 %v100
  %v626 = vunpack.c.l.b16 %v101
  %v627 = vunpack.c.l.b16 %v102
  %v628 = vunpack.c.l.b16 %v103
  %v629 = vunpack.c.l.b16 %v104
  %v630 = vunpack.c.l.b16 %v105
  %v631 = vunpack.c.l.b16 %v106
  %v632 = vunpack.c.l.b16 %v107
  %v633 = vunpack.c.l.b16 %v108
  %v634 = vunpack.c.l.b16 %v109
  %v635 = vunpack.c.l.b16 %v110
  %v636 = vunpack.c.l.b16 %v111
  %v637 = vunpack.c.l.b16 %v112
  %v638 = vunpack.c.l.b16 %v113
  %v639 = vunpack.c.l.b16 %v114
  %v640 = vunpack.c.l.b16 %v115
  %v641 = vunpack.c.l.b16 %v116
  %v642 = vunpack.c.l.b16 %v117
  %v643 = vunpack.c.l.b16 %v118
  %v644 = vunpack.c.l.b16 %v119
  %v645 = vunpack.c.l.b16 %v120
  %v646 = vunpack.c.l.b16 %v121
  %v647 = vunpack.c.l.b16 %v122
  %v648 = vunpack.c.l.b16 %v123
  %v649 = vunpack.c.l.b16 %v124
  %v650 = vunpack.c.l.b16 %v125
  %v651 = vunpack.c.l.b16 %v126
  %v652 = vunpack.c.l.b16 %v127
  %v653 = vunpack.c.l.b16 %v128
  %v654 = vunpack.c.l.b16 %v129
  %v655 = vunpack.c.l.b16 %v130
  %v656 = vunpack.c.l.b16 %v131
  %v657 = vunpack.c.l.b16 %v132
  %v658 = vunpack.c.l.b16 %v133
  %v659 = vunpack.c.l.b16 %v134
  %v660 = vunpack.c.l.b16 %v135
  %v661 = vunpack.c.l.b16 %v136
  %v662 = vunpack.c.l.b16 %v137
  %v663 = vunpack.c.l.b16 %v138
  %v664 = vunpack.c.l.b16 %v139
  %v665 = vunpack.c.l.b16 %v140
  %v666 = vunpack.c.l.b16 %v141
  %v667 = vunpack.c.l.b16 %v142
  %v668 = vunpack.c.l.b16 %v143
  %v669 = vunpack.c.l.b16 %v144
  %v670 = vunpack.c.l.b16 %v145
  %v671 = vunpack.c.l.b16 %v146
  %v672 = vunpack.c.l.b16 %v147
  %v673 = vunpack.c.l.b16 %v148
  %v674 = vunpack.c.l.b16 %v149
  %v675 = vunpack.c.l.b16 %v150
  %v676 = vunpack.c.l.b16 %v151
  %v677 = vunpack.c.l.b16 %v152
  %v678 = vunpack.c.l.b16 %v153
  %v679 = vunpack.c.l.b16 %v154
  %v680 = vunpack.c.l.b16 %v155
  %v681 = vunpack.c.l.b16 %v156
  %v682 = vunpack.c.l.b16 %v157
  %v683 = vunpack.c.l.b16 %v158
  %v684 = vunpack.c.l.b16 %v159
  %v685 = vunpack.c.l.b16 %v160
  %v686 = vunpack.c.l.b16 %v161
  %v687 = vunpack.c.l.b16 %v162
  %v688 = vunpack.c.l.b16 %v163
  %v689 = vunpack.c.l.b16 %v164
  %v690 = vunpack.c.l.b16 %v165
  %v691 = vunpack.c.l.b16 %v166
  %v692 = vunpack.c.l.b16 %v167
  %v693 = vunpack.c.l.b16 %v168
  %v694 = vunpack.c.l.b16 %v169
  %v695 = vunpack.c.l.b16 %v170
  %v696 = vunpack.c.l.b16 %v171
  %v697 = vunpack.c.l.b16 %v172
  %v698 = vunpack.c.l.b16 %v173
  %v699 = vunpack.c.l.b16 %v174
  %v700 = vunpack.c.l.b16 %v175
  %v701 = vunpack.c.l.b16 %v176
  %v702 = vunpack.c.l.b16 %v177
  %v703 = vunpack.c.l.b16 %v178
  %v704 = vunpack.c.l.b16 %v179
  %v705 = vunpack.c.l.b16 %v180
  %v706 = vunpack.c.l.b16 %v181
  %v707 = vunpack.c.l.b16 %v182
  %v708 = vunpack.c.l.b16 %v183
  %v709 = vunpack.c.l.b16 %v184
  %v710 = vunpack.c.l.b16 %v185
  %v711 = vunpack.c.l.b16 %v186
  %v712 = vunpack.c.l.b16 %v187
  %v713 = vunpack.c.l.b16 %v188
  %v714 = vunpack.c.l.b16 %v189
  %v715 = vunpack.c.l.b16 %v190
  %v716 = vunpack.c.l.b16 %v191
  %v717 = vunpack.c.l.b16 %v192
  %v718 = vunpack.c.l.b16 %v193
  %v719 = vunpack.c.l.b16 %v194
  %v720 = vunpack.c.l.b16 %v195
  %v721 = vunpack.c.l.b16 %v196
  %v722 = vunpack.c.l.b16 %v197
  %v723 = vunpack.c.l.b16 %v198
  %v724 = vunpack.c.l.b16 %v199
  %v725 = vunpack.c.l.b16 %v200
  %v726 = vunpack.c.l.b16 %v201
  %v727 = vunpack.c.l.b16 %v202
  %v728 = vunpack.c.l.b16 %v203
  %v729 = vunpack.c.l.b16 %v204
  %v730 = vunpack.c.l.b16 %v205
  %v731 = vunpack.c.l.b16 %v206
  %v732 = vunpack.c.l.b16 %v207
  %v733 = vunpack.c.l.b16 %v208
  %v734 = vunpack.c.l.b16 %v209
  %v735 = vunpack.c.l.b16 %v210
  %v736 = vunpack.c.l.b16 %v211
  %v737 = vunpack.c.l.b16 %v212
  %v738 = vunpack.c.l.b16 %v213
  %v739 = vunpack.c.l.b16 %v214
  %v740 = vunpack.c.l.b16 %v215
  %v741 = vunpack.c.l.b16 %v216
  %v742 = vunpack.c.l.b16 %v217
  %v743 = vunpack.c.l.b16 %v218
  %v744 = vunpack.c.l.b16 %v219
  %v745 = vunpack.c.l.b16 %v220
  %v746 = vunpack.c.l.b16 %v221
  %v747 = vunpack.c.l.b16 %v222
  %v748 = vunpack.c.l.b16 %v223
  %v749 = vunpack.c.l.b16 %v224
  %v750 = vunpack.c.l.b16 %v225
  %v751 = vunpack.c.l.b16 %v226
  %v752 = vunpack.c.l.b16 %v227
  %v753 = vunpack.c.l.b16 %v228
  %v754 = vunpack.c.l.b16 %v229
  %v755 = vunpack.c.l.b16 %v230
  %v756 = vunpack.c.l.b16 %v231
  %v757 = vunpack.c.l.b16 %v232
  %v758 = vunpack.c.l.b16 %v233
  %v759 = vunpack.c.l.b16 %v234
  %v760 = vunpack.c.l.b16 %v235
  %v761 = vunpack.c.l.b16 %v236
  %v762 = vunpack.c.l.b16 %v237
  %v763 = vunpack.c.l.b16 %v238
  %v764 = vunpack.c.l.b16 %v239
  %v765 = vunpack.c.l.b16 %v240
  %v766 = vunpack.c.l.b16 %v241
  %v767 = vunpack.c.l.b16 %v242
  %v768 = vunpack.c.l.b16 %v243
  %v769 = vunpack.c.l.b16 %v244
  %v770 = vunpack.c.l.b16 %v245
  %v771 = vunpack.c.l.b16 %v246
  %v772 = vunpack.c.l.b16 %v247
  %v773 = vunpack.c.l.b16 %v248
  %v774 = vunpack.c.l.b16 %v249
  %v775 = vunpack.c.l.b16 %v250
  %v776 = vunpack.c.l.b16 %v251
  %v777 = vunpack.c.l.b16 %v252
  %v778 = vunpack.c.l.b16 %v253
  %v779 = vunpack.c.l.b16 %v254
  %v780 = vunpack.c.l.b16 %v255
  %v781 = vunpack.c.l.b16 %v256
  %v782 = vunpack.c.l.b16 %v257
  %v783 = vunpack.c.l.b16 %v258
  %v784 = vunpack.c.l.b16 %v259
  %v785 = vunpack.c.l.b16 %v260
  %v786 = vunpack.c.l.b16 %v261
  %v787 = vunpack.c.l.b16 %v262
  %v788 = vunpack.c.l.b16 %v263
  %v789 = vunpack.c.l.b16 %v264
  %v790 = vunpack.c.l.b16 %v265
  %v791 = vunpack.c.l.b16 %v266
  %v792 = vunpack.c.l.b16 %v267
  %v793 = vunpack.c.l.b16 %v268
  %v794 = vunpack.c.l.b16 %v269
  %v795 = vunpack.c.l.b16 %v270
  %v796 = vpack.c.b16 %v541, %v540
  %v797 = vpack.c.b16 %v543, %v542
  %v798 = vpack.c.b16 %v545, %v544
  %v799 = vpack.c.b16 %v547, %v546
  %v800 = vpack.c.b16 %v549, %v548
  %v801 = vpack.c.b16 %v551, %v550
  %v802 = vpack.c.b16 %v553, %v552
  %v803 = vpack.c.b16 %v555, %v554
  %v804 = vpack.c.b16 %v557, %v556
  %v805 = vpack.c.b16 %v559, %v558
  %v806 = vpack.c.b16 %v561, %v560
  %v807 = vpack.c.b16 %v563, %v562
  %v808 = vpack.c.b16 %v565, %v564
  %v809 = vpack.c.b16 %v567, %v566
  %v810 = vpack.c.b16 %v569, %v568
  %v811 = vpack.c.b16 %v571, %v570
  %v812 = vpack.c.b16 %v573, %v572
  %v813 = vpack.c.b16 %v575, %v574
  %v814 = vpack.c.b16 %v577, %v576
  %v815 = vpack.c.b16 %v579, %v578
  %v816 = vpack.c.b16 %v581, %v580
  %v817 = vpack.c.b16 %v583, %v582
  %v818 = vpack.c.b16 %v585, %v584
  %v819 = vpack.c.b16 %v587, %v586
  %v820 = vpack.c.b16 %v589, %v588
  %v821 = vpack.c.b16 %v591, %v590
  %v822 = vpack.c.b16 %v593, %v592
  %v823 = vpack.c.b16 %v595, %v594
  %v824 = vpack.c.b16 %v597, %v596
  %v825 = vpack.c.b16 %v599, %v598
  %v826 = vpack.c.b16 %v601, %v600
  %v827 = vpack.c.b16 %v603, %v602
  %v828 = vpack.c.b16 %v605, %v604
  %v829 = vpack.c.b16 %v607, %v606
  %v830 = vpack.c.b16 %v609, %v608
  %v831 = vpack.c.b16 %v611, %v610
  %v832 = vpack.c.b16 %v613, %v612
  %v833 = vpack.c.b16 %v615, %v614
  %v834 = vpack.c.b16 %v617, %v616
  %v835 = vpack.c.b16 %v619, %v618
  %v836 = vpack.c.b16 %v621, %v620
  %v837 = vpack.c.b16 %v623, %v622
  %v838 = vpack.c.b16 %v625, %v624
  %v839 = vpack.c.b16 %v627, %v626
  %v840 = vpack.c.b16 %v629, %v628
  %v841 = vpack.c.b16 %v631, %v630
  %v842 = vpack.c.b16 %v633, %v632
  %v843 = vpack.c.b16 %v635, %v634
  %v844 = vpack.c.b16 %v637, %v636
  %v845 = vpack.c.b16 %v639, %v638
  %v846 = vpack.c.b16 %v641, %v640
  %v847 = vpack.c.b16 %v643, %v642
  %v848 = vpack.c.b16 %v645, %v644
  %v849 = vpack.c.b16 %v647, %v646
  %v850 = vpack.c.b16 %v649, %v648
  %v851 = vpack.c.b16 %v651, %v650
  %v852 = vpack.c.b16 %v653, %v652
  %v853 = vpack.c.b16 %v655, %v654
  %v854 = vpack.c.b16 %v657, %v656
  %v855 = vpack.c.b16 %v659, %v658
  %v856 = vpack.c.b16 %v661, %v660
  %v857 = vpack.c.b16 %v663, %v662
  %v858 = vpack.c.b16 %v665, %v664
  %v859 = vpack.c.b16 %v667, %v666
  %v860 = vpack.c.b16 %v669, %v668
  %v861 = vpack.c.b16 %v671, %v670
  %v862 = vpack.c.b16 %v673, %v672
  %v863 = vpack.c.b16 %v675, %v674
  %v864 = vpack.c.b16 %v677, %v676
  %v865 = vpack.c.b16 %v679, %v678
  %v866 = vpack.c.b16 %v681, %v680
  %v867 = vpack.c.b16 %v683, %v682
  %v868 = vpack.c.b16 %v685, %v684
  %v869 = vpack.c.b16 %v687, %v686
  %v870 = vpack.c.b16 %v689, %v688
  %v871 = vpack.c.b16 %v691, %v690
  %v872 = vpack.c.b16 %v693, %v692
  %v873 = vpack.c.b16 %v695, %v694
  %v874 = vpack.c.b16 %v697, %v696
  %v875 = vpack.c.b16 %v699, %v698
  %v876 = vpack.c.b16 %v701, %v700
  %v877 = vpack.c.b16 %v703, %v702
  %v878 = vpack.c.b16 %v705, %v704
  %v879 = vpack.c.b16 %v707, %v706
  %v880 = vpack.c.b16 %v709, %v708
  %v881 = vpack.c.b16 %v711, %v710
  %v882 = vpack.c.b16 %v713, %v712
  %v883 = vpack.c.b16 %v715, %v714
  %v884 = vpack.c.b16 %v717, %v716
  %v885 = vpack.c.b16 %v719, %v718
  %v886 = vpack.c.b16 %v721, %v720
  %v887 = vpack.c.b16 %v723, %v722
  %v888 = vpack.c.b16 %v725, %v724
  %v889 = vpack.c.b16 %v727, %v726
  %v890 = vpack.c.b16 %v729, %v728
  %v891 = vpack.c.b16 %v731, %v730
  %v892 = vpack.c.b16 %v733, %v732
  %v893 = vpack.c.b16 %v735, %v734
  %v894 = vpack.c.b16 %v737, %v736
  %v895 = vpack.c.b16 %v739, %v738
  %v896 = vpack.c.b16 %v741, %v740
  %v897 = vpack.c.b16 %v743, %v742
  %v898 = vpack.c.b16 %v745, %v744
  %v899 = vpack.c.b16 %v747, %v746
  %v900 = vpack.c.b16 %v749, %v748
  %v901 = vpack.c.b16 %v751, %v750
  %v902 = vpack.c.b16 %v753, %v752
  %v903 = vpack.c.b16 %v755, %v754
  %v904 = vpack.c.b16 %v757, %v756
  %v905 = vpack.c.b16 %v759, %v758
  %v906 = vpack.c.b16 %v761, %v760
  %v907 = vpack.c.b16 %v763, %v762
  %v908 = vpack.c.b16 %v765, %v764
  %v909 = vpack.c.b16 %v767, %v766
  %v910 = vpack.c.b16 %v769, %v768
  %v911 = vpack.c.b16 %v771, %v770
  %v912 = vpack.c.b16 %v773, %v772
  %v913 = vpack.c.b16 %v775, %v774
  %v914 = vpack.c.b16 %v777, %v776
  %v915 = vpack.c.b16 %v779, %v778
  %v916 = vpack.c.b16 %v781, %v780
  %v917 = vpack.c.b16 %v783, %v782
  %v918 = vpack.c.b16 %v785, %v784
  %v919 = vpack.c.b16 %v787, %v786
  %v920 = vpack.c.b16 %v789, %v788
  %v921 = vpack.c.b16 %v791, %v790
  %v922 = vpack.c.b16 %v793, %v792
  %v923 = vpack.c.b16 %v795, %v794
  %v930 = vunpack.c.l.b16 %v271
  %v931 = vunpack.c.l.b16 %v272
  %v932 = vunpack.c.l.b16 %v273
  %v933 = vunpack.c.l.b16 %v274
  %v934 = vunpack.c.l.b16 %v275
  %v935 = vunpack.c.l.b16 %v276
  %v936 = vpack.c.b16 %v931, %v930
  %v937 = vpack.c.b16 %v933, %v932
  %v938 = vpack.c.b16 %v935, %v934
  %vm942 = vcmask 392192
  %v944 = vsel %vm942, %v796, 0
  %v947 = vsel %vm942, %v797, 0
  %v950 = vsel %vm942, %v798, 0
  %v953 = vsel %vm942, %v799, 0
  %v956 = vsel %vm942, %v800, 0
  %v959 = vsel %vm942, %v801, 0
  %v962 = vsel %vm942, %v802, 0
  %v965 = vsel %vm942, %v803, 0
  %v968 = vsel %vm942, %v804, 0
  %v971 = vsel %vm942, %v805, 0
  %v974 = vsel %vm942, %v806, 0
  %v977 = vsel %vm942, %v807, 0
  %v980 = vsel %vm942, %v808, 0
  %v983 = vsel %vm942, %v809, 0
  %v986 = vsel %vm942, %v810, 0
  %v989 = vsel %vm942, %v811, 0
  %v992 = vsel %vm942, %v812, 0
  %v995 = vsel %vm942, %v813, 0
  %v998 = vsel %vm942, %v814, 0
  %v1001 = vsel %vm942, %v815, 0
  %v1004 = vsel %vm942, %v816, 0
  %v1007 = vsel %vm942, %v817, 0
  %v1010 = vsel %vm942, %v818, 0
  %v1013 = vsel %vm942, %v819, 0
  %v1016 = vsel %vm942, %v820, 0
  %v1019 = vsel %vm942, %v821, 0
  %v1022 = vsel %vm942, %v822, 0
  %v1025 = vsel %vm942, %v823, 0
  %v1028 = vsel %vm942, %v824, 0
  %v1031 = vsel %vm942, %v825, 0
  %v1034 = vsel %vm942, %v826, 0
  %v1037 = vsel %vm942, %v827, 0
  %v1040 = vsel %vm942, %v828, 0
  %v1043 = vsel %vm942, %v829, 0
  %v1046 = vsel %vm942, %v830, 0
  %v1049 = vsel %vm942, %v831, 0
  %v1052 = vsel %vm942, %v832, 0
  %v1055 = vsel %vm942, %v833, 0
  %v1058 = vsel %vm942, %v834, 0
  %v1061 = vsel %vm942, %v835, 0
  %v1064 = vsel %vm942, %v836, 0
  %v1067 = vsel %vm942, %v837, 0
  %v1070 = vsel %vm942, %v838, 0
  %v1073 = vsel %vm942, %v839, 0
  %v1076 = vsel %vm942, %v840, 0
  %v1079 = vsel %vm942, %v841, 0
  %v1082 = vsel %vm942, %v842, 0
  %v1085 = vsel %vm942, %v843, 0
  %v1088 = vsel %vm942, %v844, 0
  %v1091 = vsel %vm942, %v845, 0
  %v1094 = vsel %vm942, %v846, 0
  %v1097 = vsel %vm942, %v847, 0
  %v1100 = vsel %vm942, %v848, 0
  %v1103 = vsel %vm942, %v849, 0
  %v1106 = vsel %vm942, %v850, 0
  %v1109 = vsel %vm942, %v851, 0
  %v1112 = vsel %vm942, %v852, 0
  %v1115 = vsel %vm942, %v853, 0
  %v1118 = vsel %vm942, %v854, 0
  %v1121 = vsel %vm942, %v855, 0
  %v1124 = vsel %vm942, %v856, 0
  %v1127 = vsel %vm942, %v857, 0
  %v1130 = vsel %vm942, %v858, 0
  %v1133 = vsel %vm942, %v859, 0
  %v1136 = vsel %vm942, %v860, 0
  %v1139 = vsel %vm942, %v861, 0
  %v1142 = vsel %vm942, %v862, 0
  %v1145 = vsel %vm942, %v863, 0
  %v1148 = vsel %vm942, %v864, 0
  %v1151 = vsel %vm942, %v865, 0
  %v1154 = vsel %vm942, %v866, 0
  %v1157 = vsel %vm942, %v867, 0
  %v1160 = vsel %vm942, %v868, 0
  %v1163 = vsel %vm942, %v869, 0
  %v1166 = vsel %vm942, %v870, 0
  %v1169 = vsel %vm942, %v871, 0
  %v1172 = vsel %vm942, %v872, 0
  %v1175 = vsel %vm942, %v873, 0
  %v1178 = vsel %vm942, %v874, 0
  %v1181 = vsel %vm942, %v875, 0
  %v1184 = vsel %vm942, %v876, 0
  %v1187 = vsel %vm942, %v877, 0
  %v1190 = vsel %vm942, %v878, 0
  %v1193 = vsel %vm942, %v879, 0
  %v1196 = vsel %vm942, %v880, 0
  %v1199 = vsel %vm942, %v881, 0
  %v1202 = vsel %vm942, %v882, 0
  %v1205 = vsel %vm942, %v883, 0
  %v1208 = vsel %vm942, %v884, 0
  %v1211 = vsel %vm942, %v885, 0
  %v1214 = vsel %vm942, %v886, 0
  %v1217 = vsel %vm942, %v887, 0
  %v1220 = vsel %vm942, %v888, 0
  %v1223 = vsel %vm942, %v889, 0
  %v1226 = vsel %vm942, %v890, 0
  %v1229 = vsel %vm942, %v891, 0
  %v1232 = vsel %vm942, %v892, 0
  %v1235 = vsel %vm942, %v893, 0
  %v1238 = vsel %vm942, %v894, 0
  %v1241 = vsel %vm942, %v895, 0
  %v1244 = vsel %vm942, %v896, 0
  %v1247 = vsel %vm942, %v897, 0
  %v1250 = vsel %vm942, %v898, 0
  %v1253 = vsel %vm942, %v899, 0
  %v1256 = vsel %vm942, %v900, 0
  %v1259 = vsel %vm942, %v901, 0
  %v1262 = vsel %vm942, %v902, 0
  %v1265 = vsel %vm942, %v903, 0
  %v1268 = vsel %vm942, %v904, 0
  %v1271 = vsel %vm942, %v905, 0
  %v1274 = vsel %vm942, %v906, 0
  %v1277 = vsel %vm942, %v907, 0
  %v1280 = vsel %vm942, %v908, 0
  %v1283 = vsel %vm942, %v909, 0
  %v1286 = vsel %vm942, %v910, 0
  %v1289 = vsel %vm942, %v911, 0
  %v1292 = vsel %vm942, %v912, 0
  %v1295 = vsel %vm942, %v913, 0
  %v1298 = vsel %vm942, %v914, 0
  %v1301 = vsel %vm942, %v915, 0
  %v1304 = vsel %vm942, %v916, 0
  %v1307 = vsel %vm942, %v917, 0
  %v1310 = vsel %vm942, %v918, 0
  %v1313 = vsel %vm942, %v919, 0
  %v1316 = vsel %vm942, %v920, 0
  %v1319 = vsel %vm942, %v921, 0
  %v1322 = vsel %vm942, %v922, 0
  %v1325 = vsel %vm942, %v923, 0
  %1327 = vmatprep.subr.bf16.mxu0 0
  %1328 = vmatpush1.bf16.msra.mxu0 %v936
  %1329 = vmatprep.subr.bf16.mxu0 0
  %1330 = vmatpush1.bf16.msra.mxu0 %v937
  %1331 = vmatprep.subr.bf16.mxu0 0
  %1332 = vmatpush1.bf16.msra.mxu0 %v938
  %1333 = vmatprep.subr.bf16.mxu0 0
  %1334 = vmatpush1.bf16.msra.mxu0 0
  %1335 = vmatprep.subr.bf16.mxu0 0
  %1336 = vmatpush1.bf16.msra.mxu0 0
  %1337 = vmatprep.subr.bf16.mxu0 0
  %1338 = vmatpush1.bf16.msra.mxu0 0
  %1339 = vmatprep.subr.bf16.mxu0 0
  %1340 = vmatpush1.bf16.msra.mxu0 0
  %1341 = vmatprep.subr.bf16.mxu0 0
  %1342 = vmatpush1.bf16.msra.mxu0 0
  %1343 = vmatprep.subr.bf16.mxu0 0
  %1344 = vmatpush1.bf16.msra.mxu0 0
  %1345 = vmatprep.subr.bf16.mxu0 0
  %1346 = vmatpush1.bf16.msra.mxu0 0
  %1347 = vmatprep.subr.bf16.mxu0 0
  %1348 = vmatpush1.bf16.msra.mxu0 0
  %1349 = vmatprep.subr.bf16.mxu0 0
  %1350 = vmatpush1.bf16.msra.mxu0 0
  %1351 = vmatprep.subr.bf16.mxu0 0
  %1352 = vmatpush1.bf16.msra.mxu0 0
  %1353 = vmatprep.subr.bf16.mxu0 0
  %1354 = vmatpush1.bf16.msra.mxu0 0
  %1355 = vmatprep.subr.bf16.mxu0 0
  %1356 = vmatpush1.bf16.msra.mxu0 0
  %1357 = vmatprep.subr.bf16.mxu0 0
  %1358 = vmatpush1.bf16.msra.mxu0 0
  %1359 = vmatprep.mubr.bf16.mxu0 0
  %1360 = vmatmul.mubr.bf16.gmra.mrb[0].mxu0 %v944
  %v1361 = vpop.f32.mrb[0].mxu0
  %v1362 = vadd.f32 %v282, %v1361
  %v1363 = vpop.f32.mrb[0].mxu0
  %v1364 = vpop.f32.mrb[0].mxu0
  %v1365 = vadd.f32 %v282, %v1364
  %v1366 = vpop.f32.mrb[0].mxu0
  %1367 = vmatprep.mubr.bf16.mxu0 0
  %1368 = vmatmul.mubr.bf16.gmra.mrb[0].mxu0 %v947
  %v1369 = vpop.f32.mrb[0].mxu0
  %v1370 = vadd.f32 %v282, %v1369
  %v1371 = vpop.f32.mrb[0].mxu0
  %v1372 = vpop.f32.mrb[0].mxu0
  %v1373 = vadd.f32 %v282, %v1372
  %v1374 = vpop.f32.mrb[0].mxu0
  %1375 = vmatprep.mubr.bf16.mxu0 0
  %1376 = vmatmul.mubr.bf16.gmra.mrb[0].mxu0 %v950
  %v1377 = vpop.f32.mrb[0].mxu0
  %v1378 = vadd.f32 %v282, %v1377
  %v1379 = vpop.f32.mrb[0].mxu0
  %v1380 = vpop.f32.mrb[0].mxu0
  %v1381 = vadd.f32 %v282, %v1380
  %v1382 = vpop.f32.mrb[0].mxu0
  %1383 = vmatprep.mubr.bf16.mxu0 0
  %1384 = vmatmul.mubr.bf16.gmra.mrb[0].mxu0 %v953
  %v1385 = vpop.f32.mrb[0].mxu0
  %v1386 = vadd.f32 %v282, %v1385
  %v1387 = vpop.f32.mrb[0].mxu0
  %v1388 = vpop.f32.mrb[0].mxu0
  %v1389 = vadd.f32 %v282, %v1388
  %v1390 = vpop.f32.mrb[0].mxu0
  %1391 = vmatprep.mubr.bf16.mxu0 0
  %1392 = vmatmul.mubr.bf16.gmra.mrb[0].mxu0 %v956
  %v1393 = vpop.f32.mrb[0].mxu0
  %v1394 = vadd.f32 %v282, %v1393
  %v1395 = vpop.f32.mrb[0].mxu0
  %v1396 = vpop.f32.mrb[0].mxu0
  %v1397 = vadd.f32 %v282, %v1396
  %v1398 = vpop.f32.mrb[0].mxu0
  %1399 = vmatprep.mubr.bf16.mxu0 0
  %1400 = vmatmul.mubr.bf16.gmra.mrb[0].mxu0 %v959
  %v1401 = vpop.f32.mrb[0].mxu0
  %v1402 = vadd.f32 %v282, %v1401
  %v1403 = vpop.f32.mrb[0].mxu0
  %v1404 = vpop.f32.mrb[0].mxu0
  %v1405 = vadd.f32 %v282, %v1404
  %v1406 = vpop.f32.mrb[0].mxu0
  %1407 = vmatprep.mubr.bf16.mxu0 0
  %1408 = vmatmul.mubr.bf16.gmra.mrb[0].mxu0 %v962
  %v1409 = vpop.f32.mrb[0].mxu0
  %v1410 = vadd.f32 %v282, %v1409
  %v1411 = vpop.f32.mrb[0].mxu0
  %v1412 = vpop.f32.mrb[0].mxu0
  %v1413 = vadd.f32 %v282, %v1412
  %v1414 = vpop.f32.mrb[0].mxu0
  %1415 = vmatprep.mubr.bf16.mxu0 0
  %1416 = vmatmul.mubr.bf16.gmra.mrb[0].mxu0 %v965
  %v1417 = vpop.f32.mrb[0].mxu0
  %v1418 = vadd.f32 %v282, %v1417
  %v1419 = vpop.f32.mrb[0].mxu0
  %v1420 = vpop.f32.mrb[0].mxu0
  %v1421 = vadd.f32 %v282, %v1420
  %v1422 = vpop.f32.mrb[0].mxu0
  %1423 = vmatprep.mubr.bf16.mxu0 0
  %1424 = vmatmul.mubr.bf16.gmra.mrb[0].mxu0 %v968
  %v1425 = vpop.f32.mrb[0].mxu0
  %v1426 = vadd.f32 %v282, %v1425
  %v1427 = vpop.f32.mrb[0].mxu0
  %v1428 = vpop.f32.mrb[0].mxu0
  %v1429 = vadd.f32 %v282, %v1428
  %v1430 = vpop.f32.mrb[0].mxu0
  %1431 = vmatprep.mubr.bf16.mxu0 0
  %1432 = vmatmul.mubr.bf16.gmra.mrb[0].mxu0 %v971
  %v1433 = vpop.f32.mrb[0].mxu0
  %v1434 = vadd.f32 %v282, %v1433
  %v1435 = vpop.f32.mrb[0].mxu0
  %v1436 = vpop.f32.mrb[0].mxu0
  %v1437 = vadd.f32 %v282, %v1436
  %v1438 = vpop.f32.mrb[0].mxu0
  %1439 = vmatprep.mubr.bf16.mxu0 0
  %1440 = vmatmul.mubr.bf16.gmra.mrb[0].mxu0 %v974
  %v1441 = vpop.f32.mrb[0].mxu0
  %v1442 = vadd.f32 %v282, %v1441
  %v1443 = vpop.f32.mrb[0].mxu0
  %v1444 = vpop.f32.mrb[0].mxu0
  %v1445 = vadd.f32 %v282, %v1444
  %v1446 = vpop.f32.mrb[0].mxu0
  %1447 = vmatprep.mubr.bf16.mxu0 0
  %1448 = vmatmul.mubr.bf16.gmra.mrb[0].mxu0 %v977
  %v1449 = vpop.f32.mrb[0].mxu0
  %v1450 = vadd.f32 %v282, %v1449
  %v1451 = vpop.f32.mrb[0].mxu0
  %v1452 = vpop.f32.mrb[0].mxu0
  %v1453 = vadd.f32 %v282, %v1452
  %v1454 = vpop.f32.mrb[0].mxu0
  %1455 = vmatprep.mubr.bf16.mxu0 0
  %1456 = vmatmul.mubr.bf16.gmra.mrb[0].mxu0 %v980
  %v1457 = vpop.f32.mrb[0].mxu0
  %v1458 = vadd.f32 %v282, %v1457
  %v1459 = vpop.f32.mrb[0].mxu0
  %v1460 = vpop.f32.mrb[0].mxu0
  %v1461 = vadd.f32 %v282, %v1460
  %v1462 = vpop.f32.mrb[0].mxu0
  %1463 = vmatprep.mubr.bf16.mxu0 0
  %1464 = vmatmul.mubr.bf16.gmra.mrb[0].mxu0 %v983
  %v1465 = vpop.f32.mrb[0].mxu0
  %v1466 = vadd.f32 %v282, %v1465
  %v1467 = vpop.f32.mrb[0].mxu0
  %v1468 = vpop.f32.mrb[0].mxu0
  %v1469 = vadd.f32 %v282, %v1468
  %v1470 = vpop.f32.mrb[0].mxu0
  %1471 = vmatprep.mubr.bf16.mxu0 0
  %1472 = vmatmul.mubr.bf16.gmra.mrb[0].mxu0 %v986
  %v1473 = vpop.f32.mrb[0].mxu0
  %v1474 = vadd.f32 %v282, %v1473
  %v1475 = vpop.f32.mrb[0].mxu0
  %v1476 = vpop.f32.mrb[0].mxu0
  %v1477 = vadd.f32 %v282, %v1476
  %v1478 = vpop.f32.mrb[0].mxu0
  %1479 = vmatprep.mubr.bf16.mxu0 0
  %1480 = vmatmul.mubr.bf16.gmra.mrb[0].mxu0 %v989
  %v1481 = vpop.f32.mrb[0].mxu0
  %v1482 = vadd.f32 %v282, %v1481
  %v1483 = vpop.f32.mrb[0].mxu0
  %v1484 = vpop.f32.mrb[0].mxu0
  %v1485 = vadd.f32 %v282, %v1484
  %v1486 = vpop.f32.mrb[0].mxu0
  %1487 = vmatprep.mubr.bf16.mxu0 0
  %1488 = vmatmul.mubr.bf16.gmra.mrb[0].mxu0 %v992
  %v1489 = vpop.f32.mrb[0].mxu0
  %v1490 = vadd.f32 %v282, %v1489
  %v1491 = vpop.f32.mrb[0].mxu0
  %v1492 = vpop.f32.mrb[0].mxu0
  %v1493 = vadd.f32 %v282, %v1492
  %v1494 = vpop.f32.mrb[0].mxu0
  %1495 = vmatprep.mubr.bf16.mxu0 0
  %1496 = vmatmul.mubr.bf16.gmra.mrb[0].mxu0 %v995
  %v1497 = vpop.f32.mrb[0].mxu0
  %v1498 = vadd.f32 %v282, %v1497
  %v1499 = vpop.f32.mrb[0].mxu0
  %v1500 = vpop.f32.mrb[0].mxu0
  %v1501 = vadd.f32 %v282, %v1500
  %v1502 = vpop.f32.mrb[0].mxu0
  %1503 = vmatprep.mubr.bf16.mxu0 0
  %1504 = vmatmul.mubr.bf16.gmra.mrb[0].mxu0 %v998
  %v1505 = vpop.f32.mrb[0].mxu0
  %v1506 = vadd.f32 %v282, %v1505
  %v1507 = vpop.f32.mrb[0].mxu0
  %v1508 = vpop.f32.mrb[0].mxu0
  %v1509 = vadd.f32 %v282, %v1508
  %v1510 = vpop.f32.mrb[0].mxu0
  %1511 = vmatprep.mubr.bf16.mxu0 0
  %1512 = vmatmul.mubr.bf16.gmra.mrb[0].mxu0 %v1001
  %v1513 = vpop.f32.mrb[0].mxu0
  %v1514 = vadd.f32 %v282, %v1513
  %v1515 = vpop.f32.mrb[0].mxu0
  %v1516 = vpop.f32.mrb[0].mxu0
  %v1517 = vadd.f32 %v282, %v1516
  %v1518 = vpop.f32.mrb[0].mxu0
  %1519 = vmatprep.mubr.bf16.mxu0 0
  %1520 = vmatmul.mubr.bf16.gmra.mrb[0].mxu0 %v1004
  %v1521 = vpop.f32.mrb[0].mxu0
  %v1522 = vadd.f32 %v282, %v1521
  %v1523 = vpop.f32.mrb[0].mxu0
  %v1524 = vpop.f32.mrb[0].mxu0
  %v1525 = vadd.f32 %v282, %v1524
  %v1526 = vpop.f32.mrb[0].mxu0
  %1527 = vmatprep.mubr.bf16.mxu0 0
  %1528 = vmatmul.mubr.bf16.gmra.mrb[0].mxu0 %v1007
  %v1529 = vpop.f32.mrb[0].mxu0
  %v1530 = vadd.f32 %v282, %v1529
  %v1531 = vpop.f32.mrb[0].mxu0
  %v1532 = vpop.f32.mrb[0].mxu0
  %v1533 = vadd.f32 %v282, %v1532
  %v1534 = vpop.f32.mrb[0].mxu0
  %1535 = vmatprep.mubr.bf16.mxu0 0
  %1536 = vmatmul.mubr.bf16.gmra.mrb[0].mxu0 %v1010
  %v1537 = vpop.f32.mrb[0].mxu0
  %v1538 = vadd.f32 %v282, %v1537
  %v1539 = vpop.f32.mrb[0].mxu0
  %v1540 = vpop.f32.mrb[0].mxu0
  %v1541 = vadd.f32 %v282, %v1540
  %v1542 = vpop.f32.mrb[0].mxu0
  %1543 = vmatprep.mubr.bf16.mxu0 0
  %1544 = vmatmul.mubr.bf16.gmra.mrb[0].mxu0 %v1013
  %v1545 = vpop.f32.mrb[0].mxu0
  %v1546 = vadd.f32 %v282, %v1545
  %v1547 = vpop.f32.mrb[0].mxu0
  %v1548 = vpop.f32.mrb[0].mxu0
  %v1549 = vadd.f32 %v282, %v1548
  %v1550 = vpop.f32.mrb[0].mxu0
  %1551 = vmatprep.mubr.bf16.mxu0 0
  %1552 = vmatmul.mubr.bf16.gmra.mrb[0].mxu0 %v1016
  %v1553 = vpop.f32.mrb[0].mxu0
  %v1554 = vadd.f32 %v282, %v1553
  %v1555 = vpop.f32.mrb[0].mxu0
  %v1556 = vpop.f32.mrb[0].mxu0
  %v1557 = vadd.f32 %v282, %v1556
  %v1558 = vpop.f32.mrb[0].mxu0
  %1559 = vmatprep.mubr.bf16.mxu0 0
  %1560 = vmatmul.mubr.bf16.gmra.mrb[0].mxu0 %v1019
  %v1561 = vpop.f32.mrb[0].mxu0
  %v1562 = vadd.f32 %v282, %v1561
  %v1563 = vpop.f32.mrb[0].mxu0
  %v1564 = vpop.f32.mrb[0].mxu0
  %v1565 = vadd.f32 %v282, %v1564
  %v1566 = vpop.f32.mrb[0].mxu0
  %1567 = vmatprep.mubr.bf16.mxu0 0
  %1568 = vmatmul.mubr.bf16.gmra.mrb[0].mxu0 %v1022
  %v1569 = vpop.f32.mrb[0].mxu0
  %v1570 = vadd.f32 %v282, %v1569
  %v1571 = vpop.f32.mrb[0].mxu0
  %v1572 = vpop.f32.mrb[0].mxu0
  %v1573 = vadd.f32 %v282, %v1572
  %v1574 = vpop.f32.mrb[0].mxu0
  %1575 = vmatprep.mubr.bf16.mxu0 0
  %1576 = vmatmul.mubr.bf16.gmra.mrb[0].mxu0 %v1025
  %v1577 = vpop.f32.mrb[0].mxu0
  %v1578 = vadd.f32 %v282, %v1577
  %v1579 = vpop.f32.mrb[0].mxu0
  %v1580 = vpop.f32.mrb[0].mxu0
  %v1581 = vadd.f32 %v282, %v1580
  %v1582 = vpop.f32.mrb[0].mxu0
  %1583 = vmatprep.mubr.bf16.mxu0 0
  %1584 = vmatmul.mubr.bf16.gmra.mrb[0].mxu0 %v1028
  %v1585 = vpop.f32.mrb[0].mxu0
  %v1586 = vadd.f32 %v282, %v1585
  %v1587 = vpop.f32.mrb[0].mxu0
  %v1588 = vpop.f32.mrb[0].mxu0
  %v1589 = vadd.f32 %v282, %v1588
  %v1590 = vpop.f32.mrb[0].mxu0
  %1591 = vmatprep.mubr.bf16.mxu0 0
  %1592 = vmatmul.mubr.bf16.gmra.mrb[0].mxu0 %v1031
  %v1593 = vpop.f32.mrb[0].mxu0
  %v1594 = vadd.f32 %v282, %v1593
  %v1595 = vpop.f32.mrb[0].mxu0
  %v1596 = vpop.f32.mrb[0].mxu0
  %v1597 = vadd.f32 %v282, %v1596
  %v1598 = vpop.f32.mrb[0].mxu0
  %1599 = vmatprep.mubr.bf16.mxu0 0
  %1600 = vmatmul.mubr.bf16.gmra.mrb[0].mxu0 %v1034
  %v1601 = vpop.f32.mrb[0].mxu0
  %v1602 = vadd.f32 %v282, %v1601
  %v1603 = vpop.f32.mrb[0].mxu0
  %v1604 = vpop.f32.mrb[0].mxu0
  %v1605 = vadd.f32 %v282, %v1604
  %v1606 = vpop.f32.mrb[0].mxu0
  %1607 = vmatprep.mubr.bf16.mxu0 0
  %1608 = vmatmul.mubr.bf16.gmra.mrb[0].mxu0 %v1037
  %v1609 = vpop.f32.mrb[0].mxu0
  %v1610 = vadd.f32 %v282, %v1609
  %v1611 = vpop.f32.mrb[0].mxu0
  %v1612 = vpop.f32.mrb[0].mxu0
  %v1613 = vadd.f32 %v282, %v1612
  %v1614 = vpop.f32.mrb[0].mxu0
  %1615 = vmatprep.mubr.bf16.mxu0 0
  %1616 = vmatmul.mubr.bf16.gmra.mrb[0].mxu0 %v1040
  %v1617 = vpop.f32.mrb[0].mxu0
  %v1618 = vadd.f32 %v282, %v1617
  %v1619 = vpop.f32.mrb[0].mxu0
  %v1620 = vpop.f32.mrb[0].mxu0
  %v1621 = vadd.f32 %v282, %v1620
  %v1622 = vpop.f32.mrb[0].mxu0
  %1623 = vmatprep.mubr.bf16.mxu0 0
  %1624 = vmatmul.mubr.bf16.gmra.mrb[0].mxu0 %v1043
  %v1625 = vpop.f32.mrb[0].mxu0
  %v1626 = vadd.f32 %v282, %v1625
  %v1627 = vpop.f32.mrb[0].mxu0
  %v1628 = vpop.f32.mrb[0].mxu0
  %v1629 = vadd.f32 %v282, %v1628
  %v1630 = vpop.f32.mrb[0].mxu0
  %1631 = vmatprep.mubr.bf16.mxu0 0
  %1632 = vmatmul.mubr.bf16.gmra.mrb[0].mxu0 %v1046
  %v1633 = vpop.f32.mrb[0].mxu0
  %v1634 = vadd.f32 %v282, %v1633
  %v1635 = vpop.f32.mrb[0].mxu0
  %v1636 = vpop.f32.mrb[0].mxu0
  %v1637 = vadd.f32 %v282, %v1636
  %v1638 = vpop.f32.mrb[0].mxu0
  %1639 = vmatprep.mubr.bf16.mxu0 0
  %1640 = vmatmul.mubr.bf16.gmra.mrb[0].mxu0 %v1049
  %v1641 = vpop.f32.mrb[0].mxu0
  %v1642 = vadd.f32 %v282, %v1641
  %v1643 = vpop.f32.mrb[0].mxu0
  %v1644 = vpop.f32.mrb[0].mxu0
  %v1645 = vadd.f32 %v282, %v1644
  %v1646 = vpop.f32.mrb[0].mxu0
  %1647 = vmatprep.mubr.bf16.mxu0 0
  %1648 = vmatmul.mubr.bf16.gmra.mrb[0].mxu0 %v1052
  %v1649 = vpop.f32.mrb[0].mxu0
  %v1650 = vadd.f32 %v282, %v1649
  %v1651 = vpop.f32.mrb[0].mxu0
  %v1652 = vpop.f32.mrb[0].mxu0
  %v1653 = vadd.f32 %v282, %v1652
  %v1654 = vpop.f32.mrb[0].mxu0
  %1655 = vmatprep.mubr.bf16.mxu0 0
  %1656 = vmatmul.mubr.bf16.gmra.mrb[0].mxu0 %v1055
  %v1657 = vpop.f32.mrb[0].mxu0
  %v1658 = vadd.f32 %v282, %v1657
  %v1659 = vpop.f32.mrb[0].mxu0
  %v1660 = vpop.f32.mrb[0].mxu0
  %v1661 = vadd.f32 %v282, %v1660
  %v1662 = vpop.f32.mrb[0].mxu0
  %1663 = vmatprep.mubr.bf16.mxu0 0
  %1664 = vmatmul.mubr.bf16.gmra.mrb[0].mxu0 %v1058
  %v1665 = vpop.f32.mrb[0].mxu0
  %v1666 = vadd.f32 %v282, %v1665
  %v1667 = vpop.f32.mrb[0].mxu0
  %v1668 = vpop.f32.mrb[0].mxu0
  %v1669 = vadd.f32 %v282, %v1668
  %v1670 = vpop.f32.mrb[0].mxu0
  %1671 = vmatprep.mubr.bf16.mxu0 0
  %1672 = vmatmul.mubr.bf16.gmra.mrb[0].mxu0 %v1061
  %v1673 = vpop.f32.mrb[0].mxu0
  %v1674 = vadd.f32 %v282, %v1673
  %v1675 = vpop.f32.mrb[0].mxu0
  %v1676 = vpop.f32.mrb[0].mxu0
  %v1677 = vadd.f32 %v282, %v1676
  %v1678 = vpop.f32.mrb[0].mxu0
  %1679 = vmatprep.mubr.bf16.mxu0 0
  %1680 = vmatmul.mubr.bf16.gmra.mrb[0].mxu0 %v1064
  %v1681 = vpop.f32.mrb[0].mxu0
  %v1682 = vadd.f32 %v282, %v1681
  %v1683 = vpop.f32.mrb[0].mxu0
  %v1684 = vpop.f32.mrb[0].mxu0
  %v1685 = vadd.f32 %v282, %v1684
  %v1686 = vpop.f32.mrb[0].mxu0
  %1687 = vmatprep.mubr.bf16.mxu0 0
  %1688 = vmatmul.mubr.bf16.gmra.mrb[0].mxu0 %v1067
  %v1689 = vpop.f32.mrb[0].mxu0
  %v1690 = vadd.f32 %v282, %v1689
  %v1691 = vpop.f32.mrb[0].mxu0
  %v1692 = vpop.f32.mrb[0].mxu0
  %v1693 = vadd.f32 %v282, %v1692
  %v1694 = vpop.f32.mrb[0].mxu0
  %1695 = vmatprep.mubr.bf16.mxu0 0
  %1696 = vmatmul.mubr.bf16.gmra.mrb[0].mxu0 %v1070
  %v1697 = vpop.f32.mrb[0].mxu0
  %v1698 = vadd.f32 %v282, %v1697
  %v1699 = vpop.f32.mrb[0].mxu0
  %v1700 = vpop.f32.mrb[0].mxu0
  %v1701 = vadd.f32 %v282, %v1700
  %v1702 = vpop.f32.mrb[0].mxu0
  %1703 = vmatprep.mubr.bf16.mxu0 0
  %1704 = vmatmul.mubr.bf16.gmra.mrb[0].mxu0 %v1073
  %v1705 = vpop.f32.mrb[0].mxu0
  %v1706 = vadd.f32 %v282, %v1705
  %v1707 = vpop.f32.mrb[0].mxu0
  %v1708 = vpop.f32.mrb[0].mxu0
  %v1709 = vadd.f32 %v282, %v1708
  %v1710 = vpop.f32.mrb[0].mxu0
  %1711 = vmatprep.mubr.bf16.mxu0 0
  %1712 = vmatmul.mubr.bf16.gmra.mrb[0].mxu0 %v1076
  %v1713 = vpop.f32.mrb[0].mxu0
  %v1714 = vadd.f32 %v282, %v1713
  %v1715 = vpop.f32.mrb[0].mxu0
  %v1716 = vpop.f32.mrb[0].mxu0
  %v1717 = vadd.f32 %v282, %v1716
  %v1718 = vpop.f32.mrb[0].mxu0
  %1719 = vmatprep.mubr.bf16.mxu0 0
  %1720 = vmatmul.mubr.bf16.gmra.mrb[0].mxu0 %v1079
  %v1721 = vpop.f32.mrb[0].mxu0
  %v1722 = vadd.f32 %v282, %v1721
  %v1723 = vpop.f32.mrb[0].mxu0
  %v1724 = vpop.f32.mrb[0].mxu0
  %v1725 = vadd.f32 %v282, %v1724
  %v1726 = vpop.f32.mrb[0].mxu0
  %1727 = vmatprep.mubr.bf16.mxu0 0
  %1728 = vmatmul.mubr.bf16.gmra.mrb[0].mxu0 %v1082
  %v1729 = vpop.f32.mrb[0].mxu0
  %v1730 = vadd.f32 %v282, %v1729
  %v1731 = vpop.f32.mrb[0].mxu0
  %v1732 = vpop.f32.mrb[0].mxu0
  %v1733 = vadd.f32 %v282, %v1732
  %v1734 = vpop.f32.mrb[0].mxu0
  %1735 = vmatprep.mubr.bf16.mxu0 0
  %1736 = vmatmul.mubr.bf16.gmra.mrb[0].mxu0 %v1085
  %v1737 = vpop.f32.mrb[0].mxu0
  %v1738 = vadd.f32 %v282, %v1737
  %v1739 = vpop.f32.mrb[0].mxu0
  %v1740 = vpop.f32.mrb[0].mxu0
  %v1741 = vadd.f32 %v282, %v1740
  %v1742 = vpop.f32.mrb[0].mxu0
  %1743 = vmatprep.mubr.bf16.mxu0 0
  %1744 = vmatmul.mubr.bf16.gmra.mrb[0].mxu0 %v1088
  %v1745 = vpop.f32.mrb[0].mxu0
  %v1746 = vadd.f32 %v282, %v1745
  %v1747 = vpop.f32.mrb[0].mxu0
  %v1748 = vpop.f32.mrb[0].mxu0
  %v1749 = vadd.f32 %v282, %v1748
  %v1750 = vpop.f32.mrb[0].mxu0
  %1751 = vmatprep.mubr.bf16.mxu0 0
  %1752 = vmatmul.mubr.bf16.gmra.mrb[0].mxu0 %v1091
  %v1753 = vpop.f32.mrb[0].mxu0
  %v1754 = vadd.f32 %v282, %v1753
  %v1755 = vpop.f32.mrb[0].mxu0
  %v1756 = vpop.f32.mrb[0].mxu0
  %v1757 = vadd.f32 %v282, %v1756
  %v1758 = vpop.f32.mrb[0].mxu0
  %1759 = vmatprep.mubr.bf16.mxu0 0
  %1760 = vmatmul.mubr.bf16.gmra.mrb[0].mxu0 %v1094
  %v1761 = vpop.f32.mrb[0].mxu0
  %v1762 = vadd.f32 %v282, %v1761
  %v1763 = vpop.f32.mrb[0].mxu0
  %v1764 = vpop.f32.mrb[0].mxu0
  %v1765 = vadd.f32 %v282, %v1764
  %v1766 = vpop.f32.mrb[0].mxu0
  %1767 = vmatprep.mubr.bf16.mxu0 0
  %1768 = vmatmul.mubr.bf16.gmra.mrb[0].mxu0 %v1097
  %v1769 = vpop.f32.mrb[0].mxu0
  %v1770 = vadd.f32 %v282, %v1769
  %v1771 = vpop.f32.mrb[0].mxu0
  %v1772 = vpop.f32.mrb[0].mxu0
  %v1773 = vadd.f32 %v282, %v1772
  %v1774 = vpop.f32.mrb[0].mxu0
  %1775 = vmatprep.mubr.bf16.mxu0 0
  %1776 = vmatmul.mubr.bf16.gmra.mrb[0].mxu0 %v1100
  %v1777 = vpop.f32.mrb[0].mxu0
  %v1778 = vadd.f32 %v282, %v1777
  %v1779 = vpop.f32.mrb[0].mxu0
  %v1780 = vpop.f32.mrb[0].mxu0
  %v1781 = vadd.f32 %v282, %v1780
  %v1782 = vpop.f32.mrb[0].mxu0
  %1783 = vmatprep.mubr.bf16.mxu0 0
  %1784 = vmatmul.mubr.bf16.gmra.mrb[0].mxu0 %v1103
  %v1785 = vpop.f32.mrb[0].mxu0
  %v1786 = vadd.f32 %v282, %v1785
  %v1787 = vpop.f32.mrb[0].mxu0
  %v1788 = vpop.f32.mrb[0].mxu0
  %v1789 = vadd.f32 %v282, %v1788
  %v1790 = vpop.f32.mrb[0].mxu0
  %1791 = vmatprep.mubr.bf16.mxu0 0
  %1792 = vmatmul.mubr.bf16.gmra.mrb[0].mxu0 %v1106
  %v1793 = vpop.f32.mrb[0].mxu0
  %v1794 = vadd.f32 %v282, %v1793
  %v1795 = vpop.f32.mrb[0].mxu0
  %v1796 = vpop.f32.mrb[0].mxu0
  %v1797 = vadd.f32 %v282, %v1796
  %v1798 = vpop.f32.mrb[0].mxu0
  %1799 = vmatprep.mubr.bf16.mxu0 0
  %1800 = vmatmul.mubr.bf16.gmra.mrb[0].mxu0 %v1109
  %v1801 = vpop.f32.mrb[0].mxu0
  %v1802 = vadd.f32 %v282, %v1801
  %v1803 = vpop.f32.mrb[0].mxu0
  %v1804 = vpop.f32.mrb[0].mxu0
  %v1805 = vadd.f32 %v282, %v1804
  %v1806 = vpop.f32.mrb[0].mxu0
  %1807 = vmatprep.mubr.bf16.mxu0 0
  %1808 = vmatmul.mubr.bf16.gmra.mrb[0].mxu0 %v1112
  %v1809 = vpop.f32.mrb[0].mxu0
  %v1810 = vadd.f32 %v282, %v1809
  %v1811 = vpop.f32.mrb[0].mxu0
  %v1812 = vpop.f32.mrb[0].mxu0
  %v1813 = vadd.f32 %v282, %v1812
  %v1814 = vpop.f32.mrb[0].mxu0
  %1815 = vmatprep.mubr.bf16.mxu0 0
  %1816 = vmatmul.mubr.bf16.gmra.mrb[0].mxu0 %v1115
  %v1817 = vpop.f32.mrb[0].mxu0
  %v1818 = vadd.f32 %v282, %v1817
  %v1819 = vpop.f32.mrb[0].mxu0
  %v1820 = vpop.f32.mrb[0].mxu0
  %v1821 = vadd.f32 %v282, %v1820
  %v1822 = vpop.f32.mrb[0].mxu0
  %1823 = vmatprep.mubr.bf16.mxu0 0
  %1824 = vmatmul.mubr.bf16.gmra.mrb[0].mxu0 %v1118
  %v1825 = vpop.f32.mrb[0].mxu0
  %v1826 = vadd.f32 %v282, %v1825
  %v1827 = vpop.f32.mrb[0].mxu0
  %v1828 = vpop.f32.mrb[0].mxu0
  %v1829 = vadd.f32 %v282, %v1828
  %v1830 = vpop.f32.mrb[0].mxu0
  %1831 = vmatprep.mubr.bf16.mxu0 0
  %1832 = vmatmul.mubr.bf16.gmra.mrb[0].mxu0 %v1121
  %v1833 = vpop.f32.mrb[0].mxu0
  %v1834 = vadd.f32 %v282, %v1833
  %v1835 = vpop.f32.mrb[0].mxu0
  %v1836 = vpop.f32.mrb[0].mxu0
  %v1837 = vadd.f32 %v282, %v1836
  %v1838 = vpop.f32.mrb[0].mxu0
  %1839 = vmatprep.mubr.bf16.mxu0 0
  %1840 = vmatmul.mubr.bf16.gmra.mrb[0].mxu0 %v1124
  %v1841 = vpop.f32.mrb[0].mxu0
  %v1842 = vadd.f32 %v282, %v1841
  %v1843 = vpop.f32.mrb[0].mxu0
  %v1844 = vpop.f32.mrb[0].mxu0
  %v1845 = vadd.f32 %v282, %v1844
  %v1846 = vpop.f32.mrb[0].mxu0
  %1847 = vmatprep.mubr.bf16.mxu0 0
  %1848 = vmatmul.mubr.bf16.gmra.mrb[0].mxu0 %v1127
  %v1849 = vpop.f32.mrb[0].mxu0
  %v1850 = vadd.f32 %v282, %v1849
  %v1851 = vpop.f32.mrb[0].mxu0
  %v1852 = vpop.f32.mrb[0].mxu0
  %v1853 = vadd.f32 %v282, %v1852
  %v1854 = vpop.f32.mrb[0].mxu0
  %1855 = vmatprep.mubr.bf16.mxu0 0
  %1856 = vmatmul.mubr.bf16.gmra.mrb[0].mxu0 %v1130
  %v1857 = vpop.f32.mrb[0].mxu0
  %v1858 = vadd.f32 %v282, %v1857
  %v1859 = vpop.f32.mrb[0].mxu0
  %v1860 = vpop.f32.mrb[0].mxu0
  %v1861 = vadd.f32 %v282, %v1860
  %v1862 = vpop.f32.mrb[0].mxu0
  %1863 = vmatprep.mubr.bf16.mxu0 0
  %1864 = vmatmul.mubr.bf16.gmra.mrb[0].mxu0 %v1133
  %v1865 = vpop.f32.mrb[0].mxu0
  %v1866 = vadd.f32 %v282, %v1865
  %v1867 = vpop.f32.mrb[0].mxu0
  %v1868 = vpop.f32.mrb[0].mxu0
  %v1869 = vadd.f32 %v282, %v1868
  %v1870 = vpop.f32.mrb[0].mxu0
  %1871 = vmatprep.mubr.bf16.mxu0 0
  %1872 = vmatmul.mubr.bf16.gmra.mrb[0].mxu0 %v1136
  %v1873 = vpop.f32.mrb[0].mxu0
  %v1874 = vadd.f32 %v282, %v1873
  %v1875 = vpop.f32.mrb[0].mxu0
  %v1876 = vpop.f32.mrb[0].mxu0
  %v1877 = vadd.f32 %v282, %v1876
  %v1878 = vpop.f32.mrb[0].mxu0
  %1879 = vmatprep.mubr.bf16.mxu0 0
  %1880 = vmatmul.mubr.bf16.gmra.mrb[0].mxu0 %v1139
  %v1881 = vpop.f32.mrb[0].mxu0
  %v1882 = vadd.f32 %v282, %v1881
  %v1883 = vpop.f32.mrb[0].mxu0
  %v1884 = vpop.f32.mrb[0].mxu0
  %v1885 = vadd.f32 %v282, %v1884
  %v1886 = vpop.f32.mrb[0].mxu0
  %1887 = vmatprep.mubr.bf16.mxu0 0
  %1888 = vmatmul.mubr.bf16.gmra.mrb[0].mxu0 %v1142
  %v1889 = vpop.f32.mrb[0].mxu0
  %v1890 = vadd.f32 %v282, %v1889
  %v1891 = vpop.f32.mrb[0].mxu0
  %v1892 = vpop.f32.mrb[0].mxu0
  %v1893 = vadd.f32 %v282, %v1892
  %v1894 = vpop.f32.mrb[0].mxu0
  %1895 = vmatprep.mubr.bf16.mxu0 0
  %1896 = vmatmul.mubr.bf16.gmra.mrb[0].mxu0 %v1145
  %v1897 = vpop.f32.mrb[0].mxu0
  %v1898 = vadd.f32 %v282, %v1897
  %v1899 = vpop.f32.mrb[0].mxu0
  %v1900 = vpop.f32.mrb[0].mxu0
  %v1901 = vadd.f32 %v282, %v1900
  %v1902 = vpop.f32.mrb[0].mxu0
  %1903 = vmatprep.mubr.bf16.mxu0 0
  %1904 = vmatmul.mubr.bf16.gmra.mrb[0].mxu0 %v1148
  %v1905 = vpop.f32.mrb[0].mxu0
  %v1906 = vadd.f32 %v282, %v1905
  %v1907 = vpop.f32.mrb[0].mxu0
  %v1908 = vpop.f32.mrb[0].mxu0
  %v1909 = vadd.f32 %v282, %v1908
  %v1910 = vpop.f32.mrb[0].mxu0
  %1911 = vmatprep.mubr.bf16.mxu0 0
  %1912 = vmatmul.mubr.bf16.gmra.mrb[0].mxu0 %v1151
  %v1913 = vpop.f32.mrb[0].mxu0
  %v1914 = vadd.f32 %v282, %v1913
  %v1915 = vpop.f32.mrb[0].mxu0
  %v1916 = vpop.f32.mrb[0].mxu0
  %v1917 = vadd.f32 %v282, %v1916
  %v1918 = vpop.f32.mrb[0].mxu0
  %1919 = vmatprep.mubr.bf16.mxu0 0
  %1920 = vmatmul.mubr.bf16.gmra.mrb[0].mxu0 %v1154
  %v1921 = vpop.f32.mrb[0].mxu0
  %v1922 = vadd.f32 %v282, %v1921
  %v1923 = vpop.f32.mrb[0].mxu0
  %v1924 = vpop.f32.mrb[0].mxu0
  %v1925 = vadd.f32 %v282, %v1924
  %v1926 = vpop.f32.mrb[0].mxu0
  %1927 = vmatprep.mubr.bf16.mxu0 0
  %1928 = vmatmul.mubr.bf16.gmra.mrb[0].mxu0 %v1157
  %v1929 = vpop.f32.mrb[0].mxu0
  %v1930 = vadd.f32 %v282, %v1929
  %v1931 = vpop.f32.mrb[0].mxu0
  %v1932 = vpop.f32.mrb[0].mxu0
  %v1933 = vadd.f32 %v282, %v1932
  %v1934 = vpop.f32.mrb[0].mxu0
  %1935 = vmatprep.mubr.bf16.mxu0 0
  %1936 = vmatmul.mubr.bf16.gmra.mrb[0].mxu0 %v1160
  %v1937 = vpop.f32.mrb[0].mxu0
  %v1938 = vadd.f32 %v282, %v1937
  %v1939 = vpop.f32.mrb[0].mxu0
  %v1940 = vpop.f32.mrb[0].mxu0
  %v1941 = vadd.f32 %v282, %v1940
  %v1942 = vpop.f32.mrb[0].mxu0
  %1943 = vmatprep.mubr.bf16.mxu0 0
  %1944 = vmatmul.mubr.bf16.gmra.mrb[0].mxu0 %v1163
  %v1945 = vpop.f32.mrb[0].mxu0
  %v1946 = vadd.f32 %v282, %v1945
  %v1947 = vpop.f32.mrb[0].mxu0
  %v1948 = vpop.f32.mrb[0].mxu0
  %v1949 = vadd.f32 %v282, %v1948
  %v1950 = vpop.f32.mrb[0].mxu0
  %1951 = vmatprep.mubr.bf16.mxu0 0
  %1952 = vmatmul.mubr.bf16.gmra.mrb[0].mxu0 %v1166
  %v1953 = vpop.f32.mrb[0].mxu0
  %v1954 = vadd.f32 %v282, %v1953
  %v1955 = vpop.f32.mrb[0].mxu0
  %v1956 = vpop.f32.mrb[0].mxu0
  %v1957 = vadd.f32 %v282, %v1956
  %v1958 = vpop.f32.mrb[0].mxu0
  %1959 = vmatprep.mubr.bf16.mxu0 0
  %1960 = vmatmul.mubr.bf16.gmra.mrb[0].mxu0 %v1169
  %v1961 = vpop.f32.mrb[0].mxu0
  %v1962 = vadd.f32 %v282, %v1961
  %v1963 = vpop.f32.mrb[0].mxu0
  %v1964 = vpop.f32.mrb[0].mxu0
  %v1965 = vadd.f32 %v282, %v1964
  %v1966 = vpop.f32.mrb[0].mxu0
  %1967 = vmatprep.mubr.bf16.mxu0 0
  %1968 = vmatmul.mubr.bf16.gmra.mrb[0].mxu0 %v1172
  %v1969 = vpop.f32.mrb[0].mxu0
  %v1970 = vadd.f32 %v282, %v1969
  %v1971 = vpop.f32.mrb[0].mxu0
  %v1972 = vpop.f32.mrb[0].mxu0
  %v1973 = vadd.f32 %v282, %v1972
  %v1974 = vpop.f32.mrb[0].mxu0
  %1975 = vmatprep.mubr.bf16.mxu0 0
  %1976 = vmatmul.mubr.bf16.gmra.mrb[0].mxu0 %v1175
  %v1977 = vpop.f32.mrb[0].mxu0
  %v1978 = vadd.f32 %v282, %v1977
  %v1979 = vpop.f32.mrb[0].mxu0
  %v1980 = vpop.f32.mrb[0].mxu0
  %v1981 = vadd.f32 %v282, %v1980
  %v1982 = vpop.f32.mrb[0].mxu0
  %1983 = vmatprep.mubr.bf16.mxu0 0
  %1984 = vmatmul.mubr.bf16.gmra.mrb[0].mxu0 %v1178
  %v1985 = vpop.f32.mrb[0].mxu0
  %v1986 = vadd.f32 %v282, %v1985
  %v1987 = vpop.f32.mrb[0].mxu0
  %v1988 = vpop.f32.mrb[0].mxu0
  %v1989 = vadd.f32 %v282, %v1988
  %v1990 = vpop.f32.mrb[0].mxu0
  %1991 = vmatprep.mubr.bf16.mxu0 0
  %1992 = vmatmul.mubr.bf16.gmra.mrb[0].mxu0 %v1181
  %v1993 = vpop.f32.mrb[0].mxu0
  %v1994 = vadd.f32 %v282, %v1993
  %v1995 = vpop.f32.mrb[0].mxu0
  %v1996 = vpop.f32.mrb[0].mxu0
  %v1997 = vadd.f32 %v282, %v1996
  %v1998 = vpop.f32.mrb[0].mxu0
  %1999 = vmatprep.mubr.bf16.mxu0 0
  %2000 = vmatmul.mubr.bf16.gmra.mrb[0].mxu0 %v1184
  %v2001 = vpop.f32.mrb[0].mxu0
  %v2002 = vadd.f32 %v282, %v2001
  %v2003 = vpop.f32.mrb[0].mxu0
  %v2004 = vpop.f32.mrb[0].mxu0
  %v2005 = vadd.f32 %v282, %v2004
  %v2006 = vpop.f32.mrb[0].mxu0
  %2007 = vmatprep.mubr.bf16.mxu0 0
  %2008 = vmatmul.mubr.bf16.gmra.mrb[0].mxu0 %v1187
  %v2009 = vpop.f32.mrb[0].mxu0
  %v2010 = vadd.f32 %v282, %v2009
  %v2011 = vpop.f32.mrb[0].mxu0
  %v2012 = vpop.f32.mrb[0].mxu0
  %v2013 = vadd.f32 %v282, %v2012
  %v2014 = vpop.f32.mrb[0].mxu0
  %2015 = vmatprep.mubr.bf16.mxu0 0
  %2016 = vmatmul.mubr.bf16.gmra.mrb[0].mxu0 %v1190
  %v2017 = vpop.f32.mrb[0].mxu0
  %v2018 = vadd.f32 %v282, %v2017
  %v2019 = vpop.f32.mrb[0].mxu0
  %v2020 = vpop.f32.mrb[0].mxu0
  %v2021 = vadd.f32 %v282, %v2020
  %v2022 = vpop.f32.mrb[0].mxu0
  %2023 = vmatprep.mubr.bf16.mxu0 0
  %2024 = vmatmul.mubr.bf16.gmra.mrb[0].mxu0 %v1193
  %v2025 = vpop.f32.mrb[0].mxu0
  %v2026 = vadd.f32 %v282, %v2025
  %v2027 = vpop.f32.mrb[0].mxu0
  %v2028 = vpop.f32.mrb[0].mxu0
  %v2029 = vadd.f32 %v282, %v2028
  %v2030 = vpop.f32.mrb[0].mxu0
  %2031 = vmatprep.mubr.bf16.mxu0 0
  %2032 = vmatmul.mubr.bf16.gmra.mrb[0].mxu0 %v1196
  %v2033 = vpop.f32.mrb[0].mxu0
  %v2034 = vadd.f32 %v282, %v2033
  %v2035 = vpop.f32.mrb[0].mxu0
  %v2036 = vpop.f32.mrb[0].mxu0
  %v2037 = vadd.f32 %v282, %v2036
  %v2038 = vpop.f32.mrb[0].mxu0
  %2039 = vmatprep.mubr.bf16.mxu0 0
  %2040 = vmatmul.mubr.bf16.gmra.mrb[0].mxu0 %v1199
  %v2041 = vpop.f32.mrb[0].mxu0
  %v2042 = vadd.f32 %v282, %v2041
  %v2043 = vpop.f32.mrb[0].mxu0
  %v2044 = vpop.f32.mrb[0].mxu0
  %v2045 = vadd.f32 %v282, %v2044
  %v2046 = vpop.f32.mrb[0].mxu0
  %2047 = vmatprep.mubr.bf16.mxu0 0
  %2048 = vmatmul.mubr.bf16.gmra.mrb[0].mxu0 %v1202
  %v2049 = vpop.f32.mrb[0].mxu0
  %v2050 = vadd.f32 %v282, %v2049
  %v2051 = vpop.f32.mrb[0].mxu0
  %v2052 = vpop.f32.mrb[0].mxu0
  %v2053 = vadd.f32 %v282, %v2052
  %v2054 = vpop.f32.mrb[0].mxu0
  %2055 = vmatprep.mubr.bf16.mxu0 0
  %2056 = vmatmul.mubr.bf16.gmra.mrb[0].mxu0 %v1205
  %v2057 = vpop.f32.mrb[0].mxu0
  %v2058 = vadd.f32 %v282, %v2057
  %v2059 = vpop.f32.mrb[0].mxu0
  %v2060 = vpop.f32.mrb[0].mxu0
  %v2061 = vadd.f32 %v282, %v2060
  %v2062 = vpop.f32.mrb[0].mxu0
  %2063 = vmatprep.mubr.bf16.mxu0 0
  %2064 = vmatmul.mubr.bf16.gmra.mrb[0].mxu0 %v1208
  %v2065 = vpop.f32.mrb[0].mxu0
  %v2066 = vadd.f32 %v282, %v2065
  %v2067 = vpop.f32.mrb[0].mxu0
  %v2068 = vpop.f32.mrb[0].mxu0
  %v2069 = vadd.f32 %v282, %v2068
  %v2070 = vpop.f32.mrb[0].mxu0
  %2071 = vmatprep.mubr.bf16.mxu0 0
  %2072 = vmatmul.mubr.bf16.gmra.mrb[0].mxu0 %v1211
  %v2073 = vpop.f32.mrb[0].mxu0
  %v2074 = vadd.f32 %v282, %v2073
  %v2075 = vpop.f32.mrb[0].mxu0
  %v2076 = vpop.f32.mrb[0].mxu0
  %v2077 = vadd.f32 %v282, %v2076
  %v2078 = vpop.f32.mrb[0].mxu0
  %2079 = vmatprep.mubr.bf16.mxu0 0
  %2080 = vmatmul.mubr.bf16.gmra.mrb[0].mxu0 %v1214
  %v2081 = vpop.f32.mrb[0].mxu0
  %v2082 = vadd.f32 %v282, %v2081
  %v2083 = vpop.f32.mrb[0].mxu0
  %v2084 = vpop.f32.mrb[0].mxu0
  %v2085 = vadd.f32 %v282, %v2084
  %v2086 = vpop.f32.mrb[0].mxu0
  %2087 = vmatprep.mubr.bf16.mxu0 0
  %2088 = vmatmul.mubr.bf16.gmra.mrb[0].mxu0 %v1217
  %v2089 = vpop.f32.mrb[0].mxu0
  %v2090 = vadd.f32 %v282, %v2089
  %v2091 = vpop.f32.mrb[0].mxu0
  %v2092 = vpop.f32.mrb[0].mxu0
  %v2093 = vadd.f32 %v282, %v2092
  %v2094 = vpop.f32.mrb[0].mxu0
  %2095 = vmatprep.mubr.bf16.mxu0 0
  %2096 = vmatmul.mubr.bf16.gmra.mrb[0].mxu0 %v1220
  %v2097 = vpop.f32.mrb[0].mxu0
  %v2098 = vadd.f32 %v282, %v2097
  %v2099 = vpop.f32.mrb[0].mxu0
  %v2100 = vpop.f32.mrb[0].mxu0
  %v2101 = vadd.f32 %v282, %v2100
  %v2102 = vpop.f32.mrb[0].mxu0
  %2103 = vmatprep.mubr.bf16.mxu0 0
  %2104 = vmatmul.mubr.bf16.gmra.mrb[0].mxu0 %v1223
  %v2105 = vpop.f32.mrb[0].mxu0
  %v2106 = vadd.f32 %v282, %v2105
  %v2107 = vpop.f32.mrb[0].mxu0
  %v2108 = vpop.f32.mrb[0].mxu0
  %v2109 = vadd.f32 %v282, %v2108
  %v2110 = vpop.f32.mrb[0].mxu0
  %2111 = vmatprep.mubr.bf16.mxu0 0
  %2112 = vmatmul.mubr.bf16.gmra.mrb[0].mxu0 %v1226
  %v2113 = vpop.f32.mrb[0].mxu0
  %v2114 = vadd.f32 %v282, %v2113
  %v2115 = vpop.f32.mrb[0].mxu0
  %v2116 = vpop.f32.mrb[0].mxu0
  %v2117 = vadd.f32 %v282, %v2116
  %v2118 = vpop.f32.mrb[0].mxu0
  %2119 = vmatprep.mubr.bf16.mxu0 0
  %2120 = vmatmul.mubr.bf16.gmra.mrb[0].mxu0 %v1229
  %v2121 = vpop.f32.mrb[0].mxu0
  %v2122 = vadd.f32 %v282, %v2121
  %v2123 = vpop.f32.mrb[0].mxu0
  %v2124 = vpop.f32.mrb[0].mxu0
  %v2125 = vadd.f32 %v282, %v2124
  %v2126 = vpop.f32.mrb[0].mxu0
  %2127 = vmatprep.mubr.bf16.mxu0 0
  %2128 = vmatmul.mubr.bf16.gmra.mrb[0].mxu0 %v1232
  %v2129 = vpop.f32.mrb[0].mxu0
  %v2130 = vadd.f32 %v282, %v2129
  %v2131 = vpop.f32.mrb[0].mxu0
  %v2132 = vpop.f32.mrb[0].mxu0
  %v2133 = vadd.f32 %v282, %v2132
  %v2134 = vpop.f32.mrb[0].mxu0
  %2135 = vmatprep.mubr.bf16.mxu0 0
  %2136 = vmatmul.mubr.bf16.gmra.mrb[0].mxu0 %v1235
  %v2137 = vpop.f32.mrb[0].mxu0
  %v2138 = vadd.f32 %v282, %v2137
  %v2139 = vpop.f32.mrb[0].mxu0
  %v2140 = vpop.f32.mrb[0].mxu0
  %v2141 = vadd.f32 %v282, %v2140
  %v2142 = vpop.f32.mrb[0].mxu0
  %2143 = vmatprep.mubr.bf16.mxu0 0
  %2144 = vmatmul.mubr.bf16.gmra.mrb[0].mxu0 %v1238
  %v2145 = vpop.f32.mrb[0].mxu0
  %v2146 = vadd.f32 %v282, %v2145
  %v2147 = vpop.f32.mrb[0].mxu0
  %v2148 = vpop.f32.mrb[0].mxu0
  %v2149 = vadd.f32 %v282, %v2148
  %v2150 = vpop.f32.mrb[0].mxu0
  %2151 = vmatprep.mubr.bf16.mxu0 0
  %2152 = vmatmul.mubr.bf16.gmra.mrb[0].mxu0 %v1241
  %v2153 = vpop.f32.mrb[0].mxu0
  %v2154 = vadd.f32 %v282, %v2153
  %v2155 = vpop.f32.mrb[0].mxu0
  %v2156 = vpop.f32.mrb[0].mxu0
  %v2157 = vadd.f32 %v282, %v2156
  %v2158 = vpop.f32.mrb[0].mxu0
  %2159 = vmatprep.mubr.bf16.mxu0 0
  %2160 = vmatmul.mubr.bf16.gmra.mrb[0].mxu0 %v1244
  %v2161 = vpop.f32.mrb[0].mxu0
  %v2162 = vadd.f32 %v282, %v2161
  %v2163 = vpop.f32.mrb[0].mxu0
  %v2164 = vpop.f32.mrb[0].mxu0
  %v2165 = vadd.f32 %v282, %v2164
  %v2166 = vpop.f32.mrb[0].mxu0
  %2167 = vmatprep.mubr.bf16.mxu0 0
  %2168 = vmatmul.mubr.bf16.gmra.mrb[0].mxu0 %v1247
  %v2169 = vpop.f32.mrb[0].mxu0
  %v2170 = vadd.f32 %v282, %v2169
  %v2171 = vpop.f32.mrb[0].mxu0
  %v2172 = vpop.f32.mrb[0].mxu0
  %v2173 = vadd.f32 %v282, %v2172
  %v2174 = vpop.f32.mrb[0].mxu0
  %2175 = vmatprep.mubr.bf16.mxu0 0
  %2176 = vmatmul.mubr.bf16.gmra.mrb[0].mxu0 %v1250
  %v2177 = vpop.f32.mrb[0].mxu0
  %v2178 = vadd.f32 %v282, %v2177
  %v2179 = vpop.f32.mrb[0].mxu0
  %v2180 = vpop.f32.mrb[0].mxu0
  %v2181 = vadd.f32 %v282, %v2180
  %v2182 = vpop.f32.mrb[0].mxu0
  %2183 = vmatprep.mubr.bf16.mxu0 0
  %2184 = vmatmul.mubr.bf16.gmra.mrb[0].mxu0 %v1253
  %v2185 = vpop.f32.mrb[0].mxu0
  %v2186 = vadd.f32 %v282, %v2185
  %v2187 = vpop.f32.mrb[0].mxu0
  %v2188 = vpop.f32.mrb[0].mxu0
  %v2189 = vadd.f32 %v282, %v2188
  %v2190 = vpop.f32.mrb[0].mxu0
  %2191 = vmatprep.mubr.bf16.mxu0 0
  %2192 = vmatmul.mubr.bf16.gmra.mrb[0].mxu0 %v1256
  %v2193 = vpop.f32.mrb[0].mxu0
  %v2194 = vadd.f32 %v282, %v2193
  %v2195 = vpop.f32.mrb[0].mxu0
  %v2196 = vpop.f32.mrb[0].mxu0
  %v2197 = vadd.f32 %v282, %v2196
  %v2198 = vpop.f32.mrb[0].mxu0
  %2199 = vmatprep.mubr.bf16.mxu0 0
  %2200 = vmatmul.mubr.bf16.gmra.mrb[0].mxu0 %v1259
  %v2201 = vpop.f32.mrb[0].mxu0
  %v2202 = vadd.f32 %v282, %v2201
  %v2203 = vpop.f32.mrb[0].mxu0
  %v2204 = vpop.f32.mrb[0].mxu0
  %v2205 = vadd.f32 %v282, %v2204
  %v2206 = vpop.f32.mrb[0].mxu0
  %2207 = vmatprep.mubr.bf16.mxu0 0
  %2208 = vmatmul.mubr.bf16.gmra.mrb[0].mxu0 %v1262
  %v2209 = vpop.f32.mrb[0].mxu0
  %v2210 = vadd.f32 %v282, %v2209
  %v2211 = vpop.f32.mrb[0].mxu0
  %v2212 = vpop.f32.mrb[0].mxu0
  %v2213 = vadd.f32 %v282, %v2212
  %v2214 = vpop.f32.mrb[0].mxu0
  %2215 = vmatprep.mubr.bf16.mxu0 0
  %2216 = vmatmul.mubr.bf16.gmra.mrb[0].mxu0 %v1265
  %v2217 = vpop.f32.mrb[0].mxu0
  %v2218 = vadd.f32 %v282, %v2217
  %v2219 = vpop.f32.mrb[0].mxu0
  %v2220 = vpop.f32.mrb[0].mxu0
  %v2221 = vadd.f32 %v282, %v2220
  %v2222 = vpop.f32.mrb[0].mxu0
  %2223 = vmatprep.mubr.bf16.mxu0 0
  %2224 = vmatmul.mubr.bf16.gmra.mrb[0].mxu0 %v1268
  %v2225 = vpop.f32.mrb[0].mxu0
  %v2226 = vadd.f32 %v282, %v2225
  %v2227 = vpop.f32.mrb[0].mxu0
  %v2228 = vpop.f32.mrb[0].mxu0
  %v2229 = vadd.f32 %v282, %v2228
  %v2230 = vpop.f32.mrb[0].mxu0
  %2231 = vmatprep.mubr.bf16.mxu0 0
  %2232 = vmatmul.mubr.bf16.gmra.mrb[0].mxu0 %v1271
  %v2233 = vpop.f32.mrb[0].mxu0
  %v2234 = vadd.f32 %v282, %v2233
  %v2235 = vpop.f32.mrb[0].mxu0
  %v2236 = vpop.f32.mrb[0].mxu0
  %v2237 = vadd.f32 %v282, %v2236
  %v2238 = vpop.f32.mrb[0].mxu0
  %2239 = vmatprep.mubr.bf16.mxu0 0
  %2240 = vmatmul.mubr.bf16.gmra.mrb[0].mxu0 %v1274
  %v2241 = vpop.f32.mrb[0].mxu0
  %v2242 = vadd.f32 %v282, %v2241
  %v2243 = vpop.f32.mrb[0].mxu0
  %v2244 = vpop.f32.mrb[0].mxu0
  %v2245 = vadd.f32 %v282, %v2244
  %v2246 = vpop.f32.mrb[0].mxu0
  %2247 = vmatprep.mubr.bf16.mxu0 0
  %2248 = vmatmul.mubr.bf16.gmra.mrb[0].mxu0 %v1277
  %v2249 = vpop.f32.mrb[0].mxu0
  %v2250 = vadd.f32 %v282, %v2249
  %v2251 = vpop.f32.mrb[0].mxu0
  %v2252 = vpop.f32.mrb[0].mxu0
  %v2253 = vadd.f32 %v282, %v2252
  %v2254 = vpop.f32.mrb[0].mxu0
  %2255 = vmatprep.mubr.bf16.mxu0 0
  %2256 = vmatmul.mubr.bf16.gmra.mrb[0].mxu0 %v1280
  %v2257 = vpop.f32.mrb[0].mxu0
  %v2258 = vadd.f32 %v282, %v2257
  %v2259 = vpop.f32.mrb[0].mxu0
  %v2260 = vpop.f32.mrb[0].mxu0
  %v2261 = vadd.f32 %v282, %v2260
  %v2262 = vpop.f32.mrb[0].mxu0
  %2263 = vmatprep.mubr.bf16.mxu0 0
  %2264 = vmatmul.mubr.bf16.gmra.mrb[0].mxu0 %v1283
  %v2265 = vpop.f32.mrb[0].mxu0
  %v2266 = vadd.f32 %v282, %v2265
  %v2267 = vpop.f32.mrb[0].mxu0
  %v2268 = vpop.f32.mrb[0].mxu0
  %v2269 = vadd.f32 %v282, %v2268
  %v2270 = vpop.f32.mrb[0].mxu0
  %2271 = vmatprep.mubr.bf16.mxu0 0
  %2272 = vmatmul.mubr.bf16.gmra.mrb[0].mxu0 %v1286
  %v2273 = vpop.f32.mrb[0].mxu0
  %v2274 = vadd.f32 %v282, %v2273
  %v2275 = vpop.f32.mrb[0].mxu0
  %v2276 = vpop.f32.mrb[0].mxu0
  %v2277 = vadd.f32 %v282, %v2276
  %v2278 = vpop.f32.mrb[0].mxu0
  %2279 = vmatprep.mubr.bf16.mxu0 0
  %2280 = vmatmul.mubr.bf16.gmra.mrb[0].mxu0 %v1289
  %v2281 = vpop.f32.mrb[0].mxu0
  %v2282 = vadd.f32 %v282, %v2281
  %v2283 = vpop.f32.mrb[0].mxu0
  %v2284 = vpop.f32.mrb[0].mxu0
  %v2285 = vadd.f32 %v282, %v2284
  %v2286 = vpop.f32.mrb[0].mxu0
  %2287 = vmatprep.mubr.bf16.mxu0 0
  %2288 = vmatmul.mubr.bf16.gmra.mrb[0].mxu0 %v1292
  %v2289 = vpop.f32.mrb[0].mxu0
  %v2290 = vadd.f32 %v282, %v2289
  %v2291 = vpop.f32.mrb[0].mxu0
  %v2292 = vpop.f32.mrb[0].mxu0
  %v2293 = vadd.f32 %v282, %v2292
  %v2294 = vpop.f32.mrb[0].mxu0
  %2295 = vmatprep.mubr.bf16.mxu0 0
  %2296 = vmatmul.mubr.bf16.gmra.mrb[0].mxu0 %v1295
  %v2297 = vpop.f32.mrb[0].mxu0
  %v2298 = vadd.f32 %v282, %v2297
  %v2299 = vpop.f32.mrb[0].mxu0
  %v2300 = vpop.f32.mrb[0].mxu0
  %v2301 = vadd.f32 %v282, %v2300
  %v2302 = vpop.f32.mrb[0].mxu0
  %2303 = vmatprep.mubr.bf16.mxu0 0
  %2304 = vmatmul.mubr.bf16.gmra.mrb[0].mxu0 %v1298
  %v2305 = vpop.f32.mrb[0].mxu0
  %v2306 = vadd.f32 %v282, %v2305
  %v2307 = vpop.f32.mrb[0].mxu0
  %v2308 = vpop.f32.mrb[0].mxu0
  %v2309 = vadd.f32 %v282, %v2308
  %v2310 = vpop.f32.mrb[0].mxu0
  %2311 = vmatprep.mubr.bf16.mxu0 0
  %2312 = vmatmul.mubr.bf16.gmra.mrb[0].mxu0 %v1301
  %v2313 = vpop.f32.mrb[0].mxu0
  %v2314 = vadd.f32 %v282, %v2313
  %v2315 = vpop.f32.mrb[0].mxu0
  %v2316 = vpop.f32.mrb[0].mxu0
  %v2317 = vadd.f32 %v282, %v2316
  %v2318 = vpop.f32.mrb[0].mxu0
  %2319 = vmatprep.mubr.bf16.mxu0 0
  %2320 = vmatmul.mubr.bf16.gmra.mrb[0].mxu0 %v1304
  %v2321 = vpop.f32.mrb[0].mxu0
  %v2322 = vadd.f32 %v282, %v2321
  %v2323 = vpop.f32.mrb[0].mxu0
  %v2324 = vpop.f32.mrb[0].mxu0
  %v2325 = vadd.f32 %v282, %v2324
  %v2326 = vpop.f32.mrb[0].mxu0
  %2327 = vmatprep.mubr.bf16.mxu0 0
  %2328 = vmatmul.mubr.bf16.gmra.mrb[0].mxu0 %v1307
  %v2329 = vpop.f32.mrb[0].mxu0
  %v2330 = vadd.f32 %v282, %v2329
  %v2331 = vpop.f32.mrb[0].mxu0
  %v2332 = vpop.f32.mrb[0].mxu0
  %v2333 = vadd.f32 %v282, %v2332
  %v2334 = vpop.f32.mrb[0].mxu0
  %2335 = vmatprep.mubr.bf16.mxu0 0
  %2336 = vmatmul.mubr.bf16.gmra.mrb[0].mxu0 %v1310
  %v2337 = vpop.f32.mrb[0].mxu0
  %v2338 = vadd.f32 %v282, %v2337
  %v2339 = vpop.f32.mrb[0].mxu0
  %v2340 = vpop.f32.mrb[0].mxu0
  %v2341 = vadd.f32 %v282, %v2340
  %v2342 = vpop.f32.mrb[0].mxu0
  %2343 = vmatprep.mubr.bf16.mxu0 0
  %2344 = vmatmul.mubr.bf16.gmra.mrb[0].mxu0 %v1313
  %v2345 = vpop.f32.mrb[0].mxu0
  %v2346 = vadd.f32 %v282, %v2345
  %v2347 = vpop.f32.mrb[0].mxu0
  %v2348 = vpop.f32.mrb[0].mxu0
  %v2349 = vadd.f32 %v282, %v2348
  %v2350 = vpop.f32.mrb[0].mxu0
  %2351 = vmatprep.mubr.bf16.mxu0 0
  %2352 = vmatmul.mubr.bf16.gmra.mrb[0].mxu0 %v1316
  %v2353 = vpop.f32.mrb[0].mxu0
  %v2354 = vadd.f32 %v282, %v2353
  %v2355 = vpop.f32.mrb[0].mxu0
  %v2356 = vpop.f32.mrb[0].mxu0
  %v2357 = vadd.f32 %v282, %v2356
  %v2358 = vpop.f32.mrb[0].mxu0
  %2359 = vmatprep.mubr.bf16.mxu0 0
  %2360 = vmatmul.mubr.bf16.gmra.mrb[0].mxu0 %v1319
  %v2361 = vpop.f32.mrb[0].mxu0
  %v2362 = vadd.f32 %v282, %v2361
  %v2363 = vpop.f32.mrb[0].mxu0
  %v2364 = vpop.f32.mrb[0].mxu0
  %v2365 = vadd.f32 %v282, %v2364
  %v2366 = vpop.f32.mrb[0].mxu0
  %2367 = vmatprep.mubr.bf16.mxu0 0
  %2368 = vmatmul.mubr.bf16.gmra.mrb[0].mxu0 %v1322
  %v2369 = vpop.f32.mrb[0].mxu0
  %v2370 = vadd.f32 %v282, %v2369
  %v2371 = vpop.f32.mrb[0].mxu0
  %v2372 = vpop.f32.mrb[0].mxu0
  %v2373 = vadd.f32 %v282, %v2372
  %v2374 = vpop.f32.mrb[0].mxu0
  %2375 = vmatprep.mubr.bf16.mxu0 0
  %2376 = vmatmul.mubr.bf16.gmra.mrb[0].mxu0 %v1325
  %v2377 = vpop.f32.mrb[0].mxu0
  %v2378 = vadd.f32 %v282, %v2377
  %v2379 = vpop.f32.mrb[0].mxu0
  %v2380 = vpop.f32.mrb[0].mxu0
  %v2381 = vadd.f32 %v282, %v2380
  %v2382 = vpop.f32.mrb[0].mxu0
  %2383 = vdwg.mxu0
  %vm2384 = vcmp.gt.f32.partialorder %v1362, 0.0
  %vm2385 = vcmp.gt.f32.partialorder %v1365, 0.0
  %vm2386 = vcmp.gt.f32.partialorder %v1370, 0.0
  %vm2387 = vcmp.gt.f32.partialorder %v1373, 0.0
  %vm2388 = vcmp.gt.f32.partialorder %v1378, 0.0
  %vm2389 = vcmp.gt.f32.partialorder %v1381, 0.0
  %vm2390 = vcmp.gt.f32.partialorder %v1386, 0.0
  %vm2391 = vcmp.gt.f32.partialorder %v1389, 0.0
  %vm2392 = vcmp.gt.f32.partialorder %v1394, 0.0
  %vm2393 = vcmp.gt.f32.partialorder %v1397, 0.0
  %vm2394 = vcmp.gt.f32.partialorder %v1402, 0.0
  %vm2395 = vcmp.gt.f32.partialorder %v1405, 0.0
  %vm2396 = vcmp.gt.f32.partialorder %v1410, 0.0
  %vm2397 = vcmp.gt.f32.partialorder %v1413, 0.0
  %vm2398 = vcmp.gt.f32.partialorder %v1418, 0.0
  %vm2399 = vcmp.gt.f32.partialorder %v1421, 0.0
  %vm2400 = vcmp.gt.f32.partialorder %v1426, 0.0
  %vm2401 = vcmp.gt.f32.partialorder %v1429, 0.0
  %vm2402 = vcmp.gt.f32.partialorder %v1434, 0.0
  %vm2403 = vcmp.gt.f32.partialorder %v1437, 0.0
  %vm2404 = vcmp.gt.f32.partialorder %v1442, 0.0
  %vm2405 = vcmp.gt.f32.partialorder %v1445, 0.0
  %vm2406 = vcmp.gt.f32.partialorder %v1450, 0.0
  %vm2407 = vcmp.gt.f32.partialorder %v1453, 0.0
  %vm2408 = vcmp.gt.f32.partialorder %v1458, 0.0
  %vm2409 = vcmp.gt.f32.partialorder %v1461, 0.0
  %vm2410 = vcmp.gt.f32.partialorder %v1466, 0.0
  %vm2411 = vcmp.gt.f32.partialorder %v1469, 0.0
  %vm2412 = vcmp.gt.f32.partialorder %v1474, 0.0
  %vm2413 = vcmp.gt.f32.partialorder %v1477, 0.0
  %vm2414 = vcmp.gt.f32.partialorder %v1482, 0.0
  %vm2415 = vcmp.gt.f32.partialorder %v1485, 0.0
  %vm2416 = vcmp.gt.f32.partialorder %v1490, 0.0
  %vm2417 = vcmp.gt.f32.partialorder %v1493, 0.0
  %vm2418 = vcmp.gt.f32.partialorder %v1498, 0.0
  %vm2419 = vcmp.gt.f32.partialorder %v1501, 0.0
  %vm2420 = vcmp.gt.f32.partialorder %v1506, 0.0
  %vm2421 = vcmp.gt.f32.partialorder %v1509, 0.0
  %vm2422 = vcmp.gt.f32.partialorder %v1514, 0.0
  %vm2423 = vcmp.gt.f32.partialorder %v1517, 0.0
  %vm2424 = vcmp.gt.f32.partialorder %v1522, 0.0
  %vm2425 = vcmp.gt.f32.partialorder %v1525, 0.0
  %vm2426 = vcmp.gt.f32.partialorder %v1530, 0.0
  %vm2427 = vcmp.gt.f32.partialorder %v1533, 0.0
  %vm2428 = vcmp.gt.f32.partialorder %v1538, 0.0
  %vm2429 = vcmp.gt.f32.partialorder %v1541, 0.0
  %vm2430 = vcmp.gt.f32.partialorder %v1546, 0.0
  %vm2431 = vcmp.gt.f32.partialorder %v1549, 0.0
  %vm2432 = vcmp.gt.f32.partialorder %v1554, 0.0
  %vm2433 = vcmp.gt.f32.partialorder %v1557, 0.0
  %vm2434 = vcmp.gt.f32.partialorder %v1562, 0.0
  %vm2435 = vcmp.gt.f32.partialorder %v1565, 0.0
  %vm2436 = vcmp.gt.f32.partialorder %v1570, 0.0
  %vm2437 = vcmp.gt.f32.partialorder %v1573, 0.0
  %vm2438 = vcmp.gt.f32.partialorder %v1578, 0.0
  %vm2439 = vcmp.gt.f32.partialorder %v1581, 0.0
  %vm2440 = vcmp.gt.f32.partialorder %v1586, 0.0
  %vm2441 = vcmp.gt.f32.partialorder %v1589, 0.0
  %vm2442 = vcmp.gt.f32.partialorder %v1594, 0.0
  %vm2443 = vcmp.gt.f32.partialorder %v1597, 0.0
  %vm2444 = vcmp.gt.f32.partialorder %v1602, 0.0
  %vm2445 = vcmp.gt.f32.partialorder %v1605, 0.0
  %vm2446 = vcmp.gt.f32.partialorder %v1610, 0.0
  %vm2447 = vcmp.gt.f32.partialorder %v1613, 0.0
  %vm2448 = vcmp.gt.f32.partialorder %v1618, 0.0
  %vm2449 = vcmp.gt.f32.partialorder %v1621, 0.0
  %vm2450 = vcmp.gt.f32.partialorder %v1626, 0.0
  %vm2451 = vcmp.gt.f32.partialorder %v1629, 0.0
  %vm2452 = vcmp.gt.f32.partialorder %v1634, 0.0
  %vm2453 = vcmp.gt.f32.partialorder %v1637, 0.0
  %vm2454 = vcmp.gt.f32.partialorder %v1642, 0.0
  %vm2455 = vcmp.gt.f32.partialorder %v1645, 0.0
  %vm2456 = vcmp.gt.f32.partialorder %v1650, 0.0
  %vm2457 = vcmp.gt.f32.partialorder %v1653, 0.0
  %vm2458 = vcmp.gt.f32.partialorder %v1658, 0.0
  %vm2459 = vcmp.gt.f32.partialorder %v1661, 0.0
  %vm2460 = vcmp.gt.f32.partialorder %v1666, 0.0
  %vm2461 = vcmp.gt.f32.partialorder %v1669, 0.0
  %vm2462 = vcmp.gt.f32.partialorder %v1674, 0.0
  %vm2463 = vcmp.gt.f32.partialorder %v1677, 0.0
  %vm2464 = vcmp.gt.f32.partialorder %v1682, 0.0
  %vm2465 = vcmp.gt.f32.partialorder %v1685, 0.0
  %vm2466 = vcmp.gt.f32.partialorder %v1690, 0.0
  %vm2467 = vcmp.gt.f32.partialorder %v1693, 0.0
  %vm2468 = vcmp.gt.f32.partialorder %v1698, 0.0
  %vm2469 = vcmp.gt.f32.partialorder %v1701, 0.0
  %vm2470 = vcmp.gt.f32.partialorder %v1706, 0.0
  %vm2471 = vcmp.gt.f32.partialorder %v1709, 0.0
  %vm2472 = vcmp.gt.f32.partialorder %v1714, 0.0
  %vm2473 = vcmp.gt.f32.partialorder %v1717, 0.0
  %vm2474 = vcmp.gt.f32.partialorder %v1722, 0.0
  %vm2475 = vcmp.gt.f32.partialorder %v1725, 0.0
  %vm2476 = vcmp.gt.f32.partialorder %v1730, 0.0
  %vm2477 = vcmp.gt.f32.partialorder %v1733, 0.0
  %vm2478 = vcmp.gt.f32.partialorder %v1738, 0.0
  %vm2479 = vcmp.gt.f32.partialorder %v1741, 0.0
  %vm2480 = vcmp.gt.f32.partialorder %v1746, 0.0
  %vm2481 = vcmp.gt.f32.partialorder %v1749, 0.0
  %vm2482 = vcmp.gt.f32.partialorder %v1754, 0.0
  %vm2483 = vcmp.gt.f32.partialorder %v1757, 0.0
  %vm2484 = vcmp.gt.f32.partialorder %v1762, 0.0
  %vm2485 = vcmp.gt.f32.partialorder %v1765, 0.0
  %vm2486 = vcmp.gt.f32.partialorder %v1770, 0.0
  %vm2487 = vcmp.gt.f32.partialorder %v1773, 0.0
  %vm2488 = vcmp.gt.f32.partialorder %v1778, 0.0
  %vm2489 = vcmp.gt.f32.partialorder %v1781, 0.0
  %vm2490 = vcmp.gt.f32.partialorder %v1786, 0.0
  %vm2491 = vcmp.gt.f32.partialorder %v1789, 0.0
  %vm2492 = vcmp.gt.f32.partialorder %v1794, 0.0
  %vm2493 = vcmp.gt.f32.partialorder %v1797, 0.0
  %vm2494 = vcmp.gt.f32.partialorder %v1802, 0.0
  %vm2495 = vcmp.gt.f32.partialorder %v1805, 0.0
  %vm2496 = vcmp.gt.f32.partialorder %v1810, 0.0
  %vm2497 = vcmp.gt.f32.partialorder %v1813, 0.0
  %vm2498 = vcmp.gt.f32.partialorder %v1818, 0.0
  %vm2499 = vcmp.gt.f32.partialorder %v1821, 0.0
  %vm2500 = vcmp.gt.f32.partialorder %v1826, 0.0
  %vm2501 = vcmp.gt.f32.partialorder %v1829, 0.0
  %vm2502 = vcmp.gt.f32.partialorder %v1834, 0.0
  %vm2503 = vcmp.gt.f32.partialorder %v1837, 0.0
  %vm2504 = vcmp.gt.f32.partialorder %v1842, 0.0
  %vm2505 = vcmp.gt.f32.partialorder %v1845, 0.0
  %vm2506 = vcmp.gt.f32.partialorder %v1850, 0.0
  %vm2507 = vcmp.gt.f32.partialorder %v1853, 0.0
  %vm2508 = vcmp.gt.f32.partialorder %v1858, 0.0
  %vm2509 = vcmp.gt.f32.partialorder %v1861, 0.0
  %vm2510 = vcmp.gt.f32.partialorder %v1866, 0.0
  %vm2511 = vcmp.gt.f32.partialorder %v1869, 0.0
  %vm2512 = vcmp.gt.f32.partialorder %v1874, 0.0
  %vm2513 = vcmp.gt.f32.partialorder %v1877, 0.0
  %vm2514 = vcmp.gt.f32.partialorder %v1882, 0.0
  %vm2515 = vcmp.gt.f32.partialorder %v1885, 0.0
  %vm2516 = vcmp.gt.f32.partialorder %v1890, 0.0
  %vm2517 = vcmp.gt.f32.partialorder %v1893, 0.0
  %vm2518 = vcmp.gt.f32.partialorder %v1898, 0.0
  %vm2519 = vcmp.gt.f32.partialorder %v1901, 0.0
  %vm2520 = vcmp.gt.f32.partialorder %v1906, 0.0
  %vm2521 = vcmp.gt.f32.partialorder %v1909, 0.0
  %vm2522 = vcmp.gt.f32.partialorder %v1914, 0.0
  %vm2523 = vcmp.gt.f32.partialorder %v1917, 0.0
  %vm2524 = vcmp.gt.f32.partialorder %v1922, 0.0
  %vm2525 = vcmp.gt.f32.partialorder %v1925, 0.0
  %vm2526 = vcmp.gt.f32.partialorder %v1930, 0.0
  %vm2527 = vcmp.gt.f32.partialorder %v1933, 0.0
  %vm2528 = vcmp.gt.f32.partialorder %v1938, 0.0
  %vm2529 = vcmp.gt.f32.partialorder %v1941, 0.0
  %vm2530 = vcmp.gt.f32.partialorder %v1946, 0.0
  %vm2531 = vcmp.gt.f32.partialorder %v1949, 0.0
  %vm2532 = vcmp.gt.f32.partialorder %v1954, 0.0
  %vm2533 = vcmp.gt.f32.partialorder %v1957, 0.0
  %vm2534 = vcmp.gt.f32.partialorder %v1962, 0.0
  %vm2535 = vcmp.gt.f32.partialorder %v1965, 0.0
  %vm2536 = vcmp.gt.f32.partialorder %v1970, 0.0
  %vm2537 = vcmp.gt.f32.partialorder %v1973, 0.0
  %vm2538 = vcmp.gt.f32.partialorder %v1978, 0.0
  %vm2539 = vcmp.gt.f32.partialorder %v1981, 0.0
  %vm2540 = vcmp.gt.f32.partialorder %v1986, 0.0
  %vm2541 = vcmp.gt.f32.partialorder %v1989, 0.0
  %vm2542 = vcmp.gt.f32.partialorder %v1994, 0.0
  %vm2543 = vcmp.gt.f32.partialorder %v1997, 0.0
  %vm2544 = vcmp.gt.f32.partialorder %v2002, 0.0
  %vm2545 = vcmp.gt.f32.partialorder %v2005, 0.0
  %vm2546 = vcmp.gt.f32.partialorder %v2010, 0.0
  %vm2547 = vcmp.gt.f32.partialorder %v2013, 0.0
  %vm2548 = vcmp.gt.f32.partialorder %v2018, 0.0
  %vm2549 = vcmp.gt.f32.partialorder %v2021, 0.0
  %vm2550 = vcmp.gt.f32.partialorder %v2026, 0.0
  %vm2551 = vcmp.gt.f32.partialorder %v2029, 0.0
  %vm2552 = vcmp.gt.f32.partialorder %v2034, 0.0
  %vm2553 = vcmp.gt.f32.partialorder %v2037, 0.0
  %vm2554 = vcmp.gt.f32.partialorder %v2042, 0.0
  %vm2555 = vcmp.gt.f32.partialorder %v2045, 0.0
  %vm2556 = vcmp.gt.f32.partialorder %v2050, 0.0
  %vm2557 = vcmp.gt.f32.partialorder %v2053, 0.0
  %vm2558 = vcmp.gt.f32.partialorder %v2058, 0.0
  %vm2559 = vcmp.gt.f32.partialorder %v2061, 0.0
  %vm2560 = vcmp.gt.f32.partialorder %v2066, 0.0
  %vm2561 = vcmp.gt.f32.partialorder %v2069, 0.0
  %vm2562 = vcmp.gt.f32.partialorder %v2074, 0.0
  %vm2563 = vcmp.gt.f32.partialorder %v2077, 0.0
  %vm2564 = vcmp.gt.f32.partialorder %v2082, 0.0
  %vm2565 = vcmp.gt.f32.partialorder %v2085, 0.0
  %vm2566 = vcmp.gt.f32.partialorder %v2090, 0.0
  %vm2567 = vcmp.gt.f32.partialorder %v2093, 0.0
  %vm2568 = vcmp.gt.f32.partialorder %v2098, 0.0
  %vm2569 = vcmp.gt.f32.partialorder %v2101, 0.0
  %vm2570 = vcmp.gt.f32.partialorder %v2106, 0.0
  %vm2571 = vcmp.gt.f32.partialorder %v2109, 0.0
  %vm2572 = vcmp.gt.f32.partialorder %v2114, 0.0
  %vm2573 = vcmp.gt.f32.partialorder %v2117, 0.0
  %vm2574 = vcmp.gt.f32.partialorder %v2122, 0.0
  %vm2575 = vcmp.gt.f32.partialorder %v2125, 0.0
  %vm2576 = vcmp.gt.f32.partialorder %v2130, 0.0
  %vm2577 = vcmp.gt.f32.partialorder %v2133, 0.0
  %vm2578 = vcmp.gt.f32.partialorder %v2138, 0.0
  %vm2579 = vcmp.gt.f32.partialorder %v2141, 0.0
  %vm2580 = vcmp.gt.f32.partialorder %v2146, 0.0
  %vm2581 = vcmp.gt.f32.partialorder %v2149, 0.0
  %vm2582 = vcmp.gt.f32.partialorder %v2154, 0.0
  %vm2583 = vcmp.gt.f32.partialorder %v2157, 0.0
  %vm2584 = vcmp.gt.f32.partialorder %v2162, 0.0
  %vm2585 = vcmp.gt.f32.partialorder %v2165, 0.0
  %vm2586 = vcmp.gt.f32.partialorder %v2170, 0.0
  %vm2587 = vcmp.gt.f32.partialorder %v2173, 0.0
  %vm2588 = vcmp.gt.f32.partialorder %v2178, 0.0
  %vm2589 = vcmp.gt.f32.partialorder %v2181, 0.0
  %vm2590 = vcmp.gt.f32.partialorder %v2186, 0.0
  %vm2591 = vcmp.gt.f32.partialorder %v2189, 0.0
  %vm2592 = vcmp.gt.f32.partialorder %v2194, 0.0
  %vm2593 = vcmp.gt.f32.partialorder %v2197, 0.0
  %vm2594 = vcmp.gt.f32.partialorder %v2202, 0.0
  %vm2595 = vcmp.gt.f32.partialorder %v2205, 0.0
  %vm2596 = vcmp.gt.f32.partialorder %v2210, 0.0
  %vm2597 = vcmp.gt.f32.partialorder %v2213, 0.0
  %vm2598 = vcmp.gt.f32.partialorder %v2218, 0.0
  %vm2599 = vcmp.gt.f32.partialorder %v2221, 0.0
  %vm2600 = vcmp.gt.f32.partialorder %v2226, 0.0
  %vm2601 = vcmp.gt.f32.partialorder %v2229, 0.0
  %vm2602 = vcmp.gt.f32.partialorder %v2234, 0.0
  %vm2603 = vcmp.gt.f32.partialorder %v2237, 0.0
  %vm2604 = vcmp.gt.f32.partialorder %v2242, 0.0
  %vm2605 = vcmp.gt.f32.partialorder %v2245, 0.0
  %vm2606 = vcmp.gt.f32.partialorder %v2250, 0.0
  %vm2607 = vcmp.gt.f32.partialorder %v2253, 0.0
  %vm2608 = vcmp.gt.f32.partialorder %v2258, 0.0
  %vm2609 = vcmp.gt.f32.partialorder %v2261, 0.0
  %vm2610 = vcmp.gt.f32.partialorder %v2266, 0.0
  %vm2611 = vcmp.gt.f32.partialorder %v2269, 0.0
  %vm2612 = vcmp.gt.f32.partialorder %v2274, 0.0
  %vm2613 = vcmp.gt.f32.partialorder %v2277, 0.0
  %vm2614 = vcmp.gt.f32.partialorder %v2282, 0.0
  %vm2615 = vcmp.gt.f32.partialorder %v2285, 0.0
  %vm2616 = vcmp.gt.f32.partialorder %v2290, 0.0
  %vm2617 = vcmp.gt.f32.partialorder %v2293, 0.0
  %vm2618 = vcmp.gt.f32.partialorder %v2298, 0.0
  %vm2619 = vcmp.gt.f32.partialorder %v2301, 0.0
  %vm2620 = vcmp.gt.f32.partialorder %v2306, 0.0
  %vm2621 = vcmp.gt.f32.partialorder %v2309, 0.0
  %vm2622 = vcmp.gt.f32.partialorder %v2314, 0.0
  %vm2623 = vcmp.gt.f32.partialorder %v2317, 0.0
  %vm2624 = vcmp.gt.f32.partialorder %v2322, 0.0
  %vm2625 = vcmp.gt.f32.partialorder %v2325, 0.0
  %vm2626 = vcmp.gt.f32.partialorder %v2330, 0.0
  %vm2627 = vcmp.gt.f32.partialorder %v2333, 0.0
  %vm2628 = vcmp.gt.f32.partialorder %v2338, 0.0
  %vm2629 = vcmp.gt.f32.partialorder %v2341, 0.0
  %vm2630 = vcmp.gt.f32.partialorder %v2346, 0.0
  %vm2631 = vcmp.gt.f32.partialorder %v2349, 0.0
  %vm2632 = vcmp.gt.f32.partialorder %v2354, 0.0
  %vm2633 = vcmp.gt.f32.partialorder %v2357, 0.0
  %vm2634 = vcmp.gt.f32.partialorder %v2362, 0.0
  %vm2635 = vcmp.gt.f32.partialorder %v2365, 0.0
  %vm2636 = vcmp.gt.f32.partialorder %v2370, 0.0
  %vm2637 = vcmp.gt.f32.partialorder %v2373, 0.0
  %vm2638 = vcmp.gt.f32.partialorder %v2378, 0.0
  %vm2639 = vcmp.gt.f32.partialorder %v2381, 0.0
  %v2640 = vmul.f32 %v1362, 0.2
  %v2641 = vmul.f32 %v1365, 0.2
  %v2642 = vmul.f32 %v1370, 0.2
  %v2643 = vmul.f32 %v1373, 0.2
  %v2644 = vmul.f32 %v1378, 0.2
  %v2645 = vmul.f32 %v1381, 0.2
  %v2646 = vmul.f32 %v1386, 0.2
  %v2647 = vmul.f32 %v1389, 0.2
  %v2648 = vmul.f32 %v1394, 0.2
  %v2649 = vmul.f32 %v1397, 0.2
  %v2650 = vmul.f32 %v1402, 0.2
  %v2651 = vmul.f32 %v1405, 0.2
  %v2652 = vmul.f32 %v1410, 0.2
  %v2653 = vmul.f32 %v1413, 0.2
  %v2654 = vmul.f32 %v1418, 0.2
  %v2655 = vmul.f32 %v1421, 0.2
  %v2656 = vmul.f32 %v1426, 0.2
  %v2657 = vmul.f32 %v1429, 0.2
  %v2658 = vmul.f32 %v1434, 0.2
  %v2659 = vmul.f32 %v1437, 0.2
  %v2660 = vmul.f32 %v1442, 0.2
  %v2661 = vmul.f32 %v1445, 0.2
  %v2662 = vmul.f32 %v1450, 0.2
  %v2663 = vmul.f32 %v1453, 0.2
  %v2664 = vmul.f32 %v1458, 0.2
  %v2665 = vmul.f32 %v1461, 0.2
  %v2666 = vmul.f32 %v1466, 0.2
  %v2667 = vmul.f32 %v1469, 0.2
  %v2668 = vmul.f32 %v1474, 0.2
  %v2669 = vmul.f32 %v1477, 0.2
  %v2670 = vmul.f32 %v1482, 0.2
  %v2671 = vmul.f32 %v1485, 0.2
  %v2672 = vmul.f32 %v1490, 0.2
  %v2673 = vmul.f32 %v1493, 0.2
  %v2674 = vmul.f32 %v1498, 0.2
  %v2675 = vmul.f32 %v1501, 0.2
  %v2676 = vmul.f32 %v1506, 0.2
  %v2677 = vmul.f32 %v1509, 0.2
  %v2678 = vmul.f32 %v1514, 0.2
  %v2679 = vmul.f32 %v1517, 0.2
  %v2680 = vmul.f32 %v1522, 0.2
  %v2681 = vmul.f32 %v1525, 0.2
  %v2682 = vmul.f32 %v1530, 0.2
  %v2683 = vmul.f32 %v1533, 0.2
  %v2684 = vmul.f32 %v1538, 0.2
  %v2685 = vmul.f32 %v1541, 0.2
  %v2686 = vmul.f32 %v1546, 0.2
  %v2687 = vmul.f32 %v1549, 0.2
  %v2688 = vmul.f32 %v1554, 0.2
  %v2689 = vmul.f32 %v1557, 0.2
  %v2690 = vmul.f32 %v1562, 0.2
  %v2691 = vmul.f32 %v1565, 0.2
  %v2692 = vmul.f32 %v1570, 0.2
  %v2693 = vmul.f32 %v1573, 0.2
  %v2694 = vmul.f32 %v1578, 0.2
  %v2695 = vmul.f32 %v1581, 0.2
  %v2696 = vmul.f32 %v1586, 0.2
  %v2697 = vmul.f32 %v1589, 0.2
  %v2698 = vmul.f32 %v1594, 0.2
  %v2699 = vmul.f32 %v1597, 0.2
  %v2700 = vmul.f32 %v1602, 0.2
  %v2701 = vmul.f32 %v1605, 0.2
  %v2702 = vmul.f32 %v1610, 0.2
  %v2703 = vmul.f32 %v1613, 0.2
  %v2704 = vmul.f32 %v1618, 0.2
  %v2705 = vmul.f32 %v1621, 0.2
  %v2706 = vmul.f32 %v1626, 0.2
  %v2707 = vmul.f32 %v1629, 0.2
  %v2708 = vmul.f32 %v1634, 0.2
  %v2709 = vmul.f32 %v1637, 0.2
  %v2710 = vmul.f32 %v1642, 0.2
  %v2711 = vmul.f32 %v1645, 0.2
  %v2712 = vmul.f32 %v1650, 0.2
  %v2713 = vmul.f32 %v1653, 0.2
  %v2714 = vmul.f32 %v1658, 0.2
  %v2715 = vmul.f32 %v1661, 0.2
  %v2716 = vmul.f32 %v1666, 0.2
  %v2717 = vmul.f32 %v1669, 0.2
  %v2718 = vmul.f32 %v1674, 0.2
  %v2719 = vmul.f32 %v1677, 0.2
  %v2720 = vmul.f32 %v1682, 0.2
  %v2721 = vmul.f32 %v1685, 0.2
  %v2722 = vmul.f32 %v1690, 0.2
  %v2723 = vmul.f32 %v1693, 0.2
  %v2724 = vmul.f32 %v1698, 0.2
  %v2725 = vmul.f32 %v1701, 0.2
  %v2726 = vmul.f32 %v1706, 0.2
  %v2727 = vmul.f32 %v1709, 0.2
  %v2728 = vmul.f32 %v1714, 0.2
  %v2729 = vmul.f32 %v1717, 0.2
  %v2730 = vmul.f32 %v1722, 0.2
  %v2731 = vmul.f32 %v1725, 0.2
  %v2732 = vmul.f32 %v1730, 0.2
  %v2733 = vmul.f32 %v1733, 0.2
  %v2734 = vmul.f32 %v1738, 0.2
  %v2735 = vmul.f32 %v1741, 0.2
  %v2736 = vmul.f32 %v1746, 0.2
  %v2737 = vmul.f32 %v1749, 0.2
  %v2738 = vmul.f32 %v1754, 0.2
  %v2739 = vmul.f32 %v1757, 0.2
  %v2740 = vmul.f32 %v1762, 0.2
  %v2741 = vmul.f32 %v1765, 0.2
  %v2742 = vmul.f32 %v1770, 0.2
  %v2743 = vmul.f32 %v1773, 0.2
  %v2744 = vmul.f32 %v1778, 0.2
  %v2745 = vmul.f32 %v1781, 0.2
  %v2746 = vmul.f32 %v1786, 0.2
  %v2747 = vmul.f32 %v1789, 0.2
  %v2748 = vmul.f32 %v1794, 0.2
  %v2749 = vmul.f32 %v1797, 0.2
  %v2750 = vmul.f32 %v1802, 0.2
  %v2751 = vmul.f32 %v1805, 0.2
  %v2752 = vmul.f32 %v1810, 0.2
  %v2753 = vmul.f32 %v1813, 0.2
  %v2754 = vmul.f32 %v1818, 0.2
  %v2755 = vmul.f32 %v1821, 0.2
  %v2756 = vmul.f32 %v1826, 0.2
  %v2757 = vmul.f32 %v1829, 0.2
  %v2758 = vmul.f32 %v1834, 0.2
  %v2759 = vmul.f32 %v1837, 0.2
  %v2760 = vmul.f32 %v1842, 0.2
  %v2761 = vmul.f32 %v1845, 0.2
  %v2762 = vmul.f32 %v1850, 0.2
  %v2763 = vmul.f32 %v1853, 0.2
  %v2764 = vmul.f32 %v1858, 0.2
  %v2765 = vmul.f32 %v1861, 0.2
  %v2766 = vmul.f32 %v1866, 0.2
  %v2767 = vmul.f32 %v1869, 0.2
  %v2768 = vmul.f32 %v1874, 0.2
  %v2769 = vmul.f32 %v1877, 0.2
  %v2770 = vmul.f32 %v1882, 0.2
  %v2771 = vmul.f32 %v1885, 0.2
  %v2772 = vmul.f32 %v1890, 0.2
  %v2773 = vmul.f32 %v1893, 0.2
  %v2774 = vmul.f32 %v1898, 0.2
  %v2775 = vmul.f32 %v1901, 0.2
  %v2776 = vmul.f32 %v1906, 0.2
  %v2777 = vmul.f32 %v1909, 0.2
  %v2778 = vmul.f32 %v1914, 0.2
  %v2779 = vmul.f32 %v1917, 0.2
  %v2780 = vmul.f32 %v1922, 0.2
  %v2781 = vmul.f32 %v1925, 0.2
  %v2782 = vmul.f32 %v1930, 0.2
  %v2783 = vmul.f32 %v1933, 0.2
  %v2784 = vmul.f32 %v1938, 0.2
  %v2785 = vmul.f32 %v1941, 0.2
  %v2786 = vmul.f32 %v1946, 0.2
  %v2787 = vmul.f32 %v1949, 0.2
  %v2788 = vmul.f32 %v1954, 0.2
  %v2789 = vmul.f32 %v1957, 0.2
  %v2790 = vmul.f32 %v1962, 0.2
  %v2791 = vmul.f32 %v1965, 0.2
  %v2792 = vmul.f32 %v1970, 0.2
  %v2793 = vmul.f32 %v1973, 0.2
  %v2794 = vmul.f32 %v1978, 0.2
  %v2795 = vmul.f32 %v1981, 0.2
  %v2796 = vmul.f32 %v1986, 0.2
  %v2797 = vmul.f32 %v1989, 0.2
  %v2798 = vmul.f32 %v1994, 0.2
  %v2799 = vmul.f32 %v1997, 0.2
  %v2800 = vmul.f32 %v2002, 0.2
  %v2801 = vmul.f32 %v2005, 0.2
  %v2802 = vmul.f32 %v2010, 0.2
  %v2803 = vmul.f32 %v2013, 0.2
  %v2804 = vmul.f32 %v2018, 0.2
  %v2805 = vmul.f32 %v2021, 0.2
  %v2806 = vmul.f32 %v2026, 0.2
  %v2807 = vmul.f32 %v2029, 0.2
  %v2808 = vmul.f32 %v2034, 0.2
  %v2809 = vmul.f32 %v2037, 0.2
  %v2810 = vmul.f32 %v2042, 0.2
  %v2811 = vmul.f32 %v2045, 0.2
  %v2812 = vmul.f32 %v2050, 0.2
  %v2813 = vmul.f32 %v2053, 0.2
  %v2814 = vmul.f32 %v2058, 0.2
  %v2815 = vmul.f32 %v2061, 0.2
  %v2816 = vmul.f32 %v2066, 0.2
  %v2817 = vmul.f32 %v2069, 0.2
  %v2818 = vmul.f32 %v2074, 0.2
  %v2819 = vmul.f32 %v2077, 0.2
  %v2820 = vmul.f32 %v2082, 0.2
  %v2821 = vmul.f32 %v2085, 0.2
  %v2822 = vmul.f32 %v2090, 0.2
  %v2823 = vmul.f32 %v2093, 0.2
  %v2824 = vmul.f32 %v2098, 0.2
  %v2825 = vmul.f32 %v2101, 0.2
  %v2826 = vmul.f32 %v2106, 0.2
  %v2827 = vmul.f32 %v2109, 0.2
  %v2828 = vmul.f32 %v2114, 0.2
  %v2829 = vmul.f32 %v2117, 0.2
  %v2830 = vmul.f32 %v2122, 0.2
  %v2831 = vmul.f32 %v2125, 0.2
  %v2832 = vmul.f32 %v2130, 0.2
  %v2833 = vmul.f32 %v2133, 0.2
  %v2834 = vmul.f32 %v2138, 0.2
  %v2835 = vmul.f32 %v2141, 0.2
  %v2836 = vmul.f32 %v2146, 0.2
  %v2837 = vmul.f32 %v2149, 0.2
  %v2838 = vmul.f32 %v2154, 0.2
  %v2839 = vmul.f32 %v2157, 0.2
  %v2840 = vmul.f32 %v2162, 0.2
  %v2841 = vmul.f32 %v2165, 0.2
  %v2842 = vmul.f32 %v2170, 0.2
  %v2843 = vmul.f32 %v2173, 0.2
  %v2844 = vmul.f32 %v2178, 0.2
  %v2845 = vmul.f32 %v2181, 0.2
  %v2846 = vmul.f32 %v2186, 0.2
  %v2847 = vmul.f32 %v2189, 0.2
  %v2848 = vmul.f32 %v2194, 0.2
  %v2849 = vmul.f32 %v2197, 0.2
  %v2850 = vmul.f32 %v2202, 0.2
  %v2851 = vmul.f32 %v2205, 0.2
  %v2852 = vmul.f32 %v2210, 0.2
  %v2853 = vmul.f32 %v2213, 0.2
  %v2854 = vmul.f32 %v2218, 0.2
  %v2855 = vmul.f32 %v2221, 0.2
  %v2856 = vmul.f32 %v2226, 0.2
  %v2857 = vmul.f32 %v2229, 0.2
  %v2858 = vmul.f32 %v2234, 0.2
  %v2859 = vmul.f32 %v2237, 0.2
  %v2860 = vmul.f32 %v2242, 0.2
  %v2861 = vmul.f32 %v2245, 0.2
  %v2862 = vmul.f32 %v2250, 0.2
  %v2863 = vmul.f32 %v2253, 0.2
  %v2864 = vmul.f32 %v2258, 0.2
  %v2865 = vmul.f32 %v2261, 0.2
  %v2866 = vmul.f32 %v2266, 0.2
  %v2867 = vmul.f32 %v2269, 0.2
  %v2868 = vmul.f32 %v2274, 0.2
  %v2869 = vmul.f32 %v2277, 0.2
  %v2870 = vmul.f32 %v2282, 0.2
  %v2871 = vmul.f32 %v2285, 0.2
  %v2872 = vmul.f32 %v2290, 0.2
  %v2873 = vmul.f32 %v2293, 0.2
  %v2874 = vmul.f32 %v2298, 0.2
  %v2875 = vmul.f32 %v2301, 0.2
  %v2876 = vmul.f32 %v2306, 0.2
  %v2877 = vmul.f32 %v2309, 0.2
  %v2878 = vmul.f32 %v2314, 0.2
  %v2879 = vmul.f32 %v2317, 0.2
  %v2880 = vmul.f32 %v2322, 0.2
  %v2881 = vmul.f32 %v2325, 0.2
  %v2882 = vmul.f32 %v2330, 0.2
  %v2883 = vmul.f32 %v2333, 0.2
  %v2884 = vmul.f32 %v2338, 0.2
  %v2885 = vmul.f32 %v2341, 0.2
  %v2886 = vmul.f32 %v2346, 0.2
  %v2887 = vmul.f32 %v2349, 0.2
  %v2888 = vmul.f32 %v2354, 0.2
  %v2889 = vmul.f32 %v2357, 0.2
  %v2890 = vmul.f32 %v2362, 0.2
  %v2891 = vmul.f32 %v2365, 0.2
  %v2892 = vmul.f32 %v2370, 0.2
  %v2893 = vmul.f32 %v2373, 0.2
  %v2894 = vmul.f32 %v2378, 0.2
  %v2895 = vmul.f32 %v2381, 0.2
  %v2896 = vsel %vm2384, %v1362, %v2640
  %v2897 = vsel %vm2385, %v1365, %v2641
  %v2898 = vsel %vm2386, %v1370, %v2642
  %v2899 = vsel %vm2387, %v1373, %v2643
  %v2900 = vsel %vm2388, %v1378, %v2644
  %v2901 = vsel %vm2389, %v1381, %v2645
  %v2902 = vsel %vm2390, %v1386, %v2646
  %v2903 = vsel %vm2391, %v1389, %v2647
  %v2904 = vsel %vm2392, %v1394, %v2648
  %v2905 = vsel %vm2393, %v1397, %v2649
  %v2906 = vsel %vm2394, %v1402, %v2650
  %v2907 = vsel %vm2395, %v1405, %v2651
  %v2908 = vsel %vm2396, %v1410, %v2652
  %v2909 = vsel %vm2397, %v1413, %v2653
  %v2910 = vsel %vm2398, %v1418, %v2654
  %v2911 = vsel %vm2399, %v1421, %v2655
  %v2912 = vsel %vm2400, %v1426, %v2656
  %v2913 = vsel %vm2401, %v1429, %v2657
  %v2914 = vsel %vm2402, %v1434, %v2658
  %v2915 = vsel %vm2403, %v1437, %v2659
  %v2916 = vsel %vm2404, %v1442, %v2660
  %v2917 = vsel %vm2405, %v1445, %v2661
  %v2918 = vsel %vm2406, %v1450, %v2662
  %v2919 = vsel %vm2407, %v1453, %v2663
  %v2920 = vsel %vm2408, %v1458, %v2664
  %v2921 = vsel %vm2409, %v1461, %v2665
  %v2922 = vsel %vm2410, %v1466, %v2666
  %v2923 = vsel %vm2411, %v1469, %v2667
  %v2924 = vsel %vm2412, %v1474, %v2668
  %v2925 = vsel %vm2413, %v1477, %v2669
  %v2926 = vsel %vm2414, %v1482, %v2670
  %v2927 = vsel %vm2415, %v1485, %v2671
  %v2928 = vsel %vm2416, %v1490, %v2672
  %v2929 = vsel %vm2417, %v1493, %v2673
  %v2930 = vsel %vm2418, %v1498, %v2674
  %v2931 = vsel %vm2419, %v1501, %v2675
  %v2932 = vsel %vm2420, %v1506, %v2676
  %v2933 = vsel %vm2421, %v1509, %v2677
  %v2934 = vsel %vm2422, %v1514, %v2678
  %v2935 = vsel %vm2423, %v1517, %v2679
  %v2936 = vsel %vm2424, %v1522, %v2680
  %v2937 = vsel %vm2425, %v1525, %v2681
  %v2938 = vsel %vm2426, %v1530, %v2682
  %v2939 = vsel %vm2427, %v1533, %v2683
  %v2940 = vsel %vm2428, %v1538, %v2684
  %v2941 = vsel %vm2429, %v1541, %v2685
  %v2942 = vsel %vm2430, %v1546, %v2686
  %v2943 = vsel %vm2431, %v1549, %v2687
  %v2944 = vsel %vm2432, %v1554, %v2688
  %v2945 = vsel %vm2433, %v1557, %v2689
  %v2946 = vsel %vm2434, %v1562, %v2690
  %v2947 = vsel %vm2435, %v1565, %v2691
  %v2948 = vsel %vm2436, %v1570, %v2692
  %v2949 = vsel %vm2437, %v1573, %v2693
  %v2950 = vsel %vm2438, %v1578, %v2694
  %v2951 = vsel %vm2439, %v1581, %v2695
  %v2952 = vsel %vm2440, %v1586, %v2696
  %v2953 = vsel %vm2441, %v1589, %v2697
  %v2954 = vsel %vm2442, %v1594, %v2698
  %v2955 = vsel %vm2443, %v1597, %v2699
  %v2956 = vsel %vm2444, %v1602, %v2700
  %v2957 = vsel %vm2445, %v1605, %v2701
  %v2958 = vsel %vm2446, %v1610, %v2702
  %v2959 = vsel %vm2447, %v1613, %v2703
  %v2960 = vsel %vm2448, %v1618, %v2704
  %v2961 = vsel %vm2449, %v1621, %v2705
  %v2962 = vsel %vm2450, %v1626, %v2706
  %v2963 = vsel %vm2451, %v1629, %v2707
  %v2964 = vsel %vm2452, %v1634, %v2708
  %v2965 = vsel %vm2453, %v1637, %v2709
  %v2966 = vsel %vm2454, %v1642, %v2710
  %v2967 = vsel %vm2455, %v1645, %v2711
  %v2968 = vsel %vm2456, %v1650, %v2712
  %v2969 = vsel %vm2457, %v1653, %v2713
  %v2970 = vsel %vm2458, %v1658, %v2714
  %v2971 = vsel %vm2459, %v1661, %v2715
  %v2972 = vsel %vm2460, %v1666, %v2716
  %v2973 = vsel %vm2461, %v1669, %v2717
  %v2974 = vsel %vm2462, %v1674, %v2718
  %v2975 = vsel %vm2463, %v1677, %v2719
  %v2976 = vsel %vm2464, %v1682, %v2720
  %v2977 = vsel %vm2465, %v1685, %v2721
  %v2978 = vsel %vm2466, %v1690, %v2722
  %v2979 = vsel %vm2467, %v1693, %v2723
  %v2980 = vsel %vm2468, %v1698, %v2724
  %v2981 = vsel %vm2469, %v1701, %v2725
  %v2982 = vsel %vm2470, %v1706, %v2726
  %v2983 = vsel %vm2471, %v1709, %v2727
  %v2984 = vsel %vm2472, %v1714, %v2728
  %v2985 = vsel %vm2473, %v1717, %v2729
  %v2986 = vsel %vm2474, %v1722, %v2730
  %v2987 = vsel %vm2475, %v1725, %v2731
  %v2988 = vsel %vm2476, %v1730, %v2732
  %v2989 = vsel %vm2477, %v1733, %v2733
  %v2990 = vsel %vm2478, %v1738, %v2734
  %v2991 = vsel %vm2479, %v1741, %v2735
  %v2992 = vsel %vm2480, %v1746, %v2736
  %v2993 = vsel %vm2481, %v1749, %v2737
  %v2994 = vsel %vm2482, %v1754, %v2738
  %v2995 = vsel %vm2483, %v1757, %v2739
  %v2996 = vsel %vm2484, %v1762, %v2740
  %v2997 = vsel %vm2485, %v1765, %v2741
  %v2998 = vsel %vm2486, %v1770, %v2742
  %v2999 = vsel %vm2487, %v1773, %v2743
  %v3000 = vsel %vm2488, %v1778, %v2744
  %v3001 = vsel %vm2489, %v1781, %v2745
  %v3002 = vsel %vm2490, %v1786, %v2746
  %v3003 = vsel %vm2491, %v1789, %v2747
  %v3004 = vsel %vm2492, %v1794, %v2748
  %v3005 = vsel %vm2493, %v1797, %v2749
  %v3006 = vsel %vm2494, %v1802, %v2750
  %v3007 = vsel %vm2495, %v1805, %v2751
  %v3008 = vsel %vm2496, %v1810, %v2752
  %v3009 = vsel %vm2497, %v1813, %v2753
  %v3010 = vsel %vm2498, %v1818, %v2754
  %v3011 = vsel %vm2499, %v1821, %v2755
  %v3012 = vsel %vm2500, %v1826, %v2756
  %v3013 = vsel %vm2501, %v1829, %v2757
  %v3014 = vsel %vm2502, %v1834, %v2758
  %v3015 = vsel %vm2503, %v1837, %v2759
  %v3016 = vsel %vm2504, %v1842, %v2760
  %v3017 = vsel %vm2505, %v1845, %v2761
  %v3018 = vsel %vm2506, %v1850, %v2762
  %v3019 = vsel %vm2507, %v1853, %v2763
  %v3020 = vsel %vm2508, %v1858, %v2764
  %v3021 = vsel %vm2509, %v1861, %v2765
  %v3022 = vsel %vm2510, %v1866, %v2766
  %v3023 = vsel %vm2511, %v1869, %v2767
  %v3024 = vsel %vm2512, %v1874, %v2768
  %v3025 = vsel %vm2513, %v1877, %v2769
  %v3026 = vsel %vm2514, %v1882, %v2770
  %v3027 = vsel %vm2515, %v1885, %v2771
  %v3028 = vsel %vm2516, %v1890, %v2772
  %v3029 = vsel %vm2517, %v1893, %v2773
  %v3030 = vsel %vm2518, %v1898, %v2774
  %v3031 = vsel %vm2519, %v1901, %v2775
  %v3032 = vsel %vm2520, %v1906, %v2776
  %v3033 = vsel %vm2521, %v1909, %v2777
  %v3034 = vsel %vm2522, %v1914, %v2778
  %v3035 = vsel %vm2523, %v1917, %v2779
  %v3036 = vsel %vm2524, %v1922, %v2780
  %v3037 = vsel %vm2525, %v1925, %v2781
  %v3038 = vsel %vm2526, %v1930, %v2782
  %v3039 = vsel %vm2527, %v1933, %v2783
  %v3040 = vsel %vm2528, %v1938, %v2784
  %v3041 = vsel %vm2529, %v1941, %v2785
  %v3042 = vsel %vm2530, %v1946, %v2786
  %v3043 = vsel %vm2531, %v1949, %v2787
  %v3044 = vsel %vm2532, %v1954, %v2788
  %v3045 = vsel %vm2533, %v1957, %v2789
  %v3046 = vsel %vm2534, %v1962, %v2790
  %v3047 = vsel %vm2535, %v1965, %v2791
  %v3048 = vsel %vm2536, %v1970, %v2792
  %v3049 = vsel %vm2537, %v1973, %v2793
  %v3050 = vsel %vm2538, %v1978, %v2794
  %v3051 = vsel %vm2539, %v1981, %v2795
  %v3052 = vsel %vm2540, %v1986, %v2796
  %v3053 = vsel %vm2541, %v1989, %v2797
  %v3054 = vsel %vm2542, %v1994, %v2798
  %v3055 = vsel %vm2543, %v1997, %v2799
  %v3056 = vsel %vm2544, %v2002, %v2800
  %v3057 = vsel %vm2545, %v2005, %v2801
  %v3058 = vsel %vm2546, %v2010, %v2802
  %v3059 = vsel %vm2547, %v2013, %v2803
  %v3060 = vsel %vm2548, %v2018, %v2804
  %v3061 = vsel %vm2549, %v2021, %v2805
  %v3062 = vsel %vm2550, %v2026, %v2806
  %v3063 = vsel %vm2551, %v2029, %v2807
  %v3064 = vsel %vm2552, %v2034, %v2808
  %v3065 = vsel %vm2553, %v2037, %v2809
  %v3066 = vsel %vm2554, %v2042, %v2810
  %v3067 = vsel %vm2555, %v2045, %v2811
  %v3068 = vsel %vm2556, %v2050, %v2812
  %v3069 = vsel %vm2557, %v2053, %v2813
  %v3070 = vsel %vm2558, %v2058, %v2814
  %v3071 = vsel %vm2559, %v2061, %v2815
  %v3072 = vsel %vm2560, %v2066, %v2816
  %v3073 = vsel %vm2561, %v2069, %v2817
  %v3074 = vsel %vm2562, %v2074, %v2818
  %v3075 = vsel %vm2563, %v2077, %v2819
  %v3076 = vsel %vm2564, %v2082, %v2820
  %v3077 = vsel %vm2565, %v2085, %v2821
  %v3078 = vsel %vm2566, %v2090, %v2822
  %v3079 = vsel %vm2567, %v2093, %v2823
  %v3080 = vsel %vm2568, %v2098, %v2824
  %v3081 = vsel %vm2569, %v2101, %v2825
  %v3082 = vsel %vm2570, %v2106, %v2826
  %v3083 = vsel %vm2571, %v2109, %v2827
  %v3084 = vsel %vm2572, %v2114, %v2828
  %v3085 = vsel %vm2573, %v2117, %v2829
  %v3086 = vsel %vm2574, %v2122, %v2830
  %v3087 = vsel %vm2575, %v2125, %v2831
  %v3088 = vsel %vm2576, %v2130, %v2832
  %v3089 = vsel %vm2577, %v2133, %v2833
  %v3090 = vsel %vm2578, %v2138, %v2834
  %v3091 = vsel %vm2579, %v2141, %v2835
  %v3092 = vsel %vm2580, %v2146, %v2836
  %v3093 = vsel %vm2581, %v2149, %v2837
  %v3094 = vsel %vm2582, %v2154, %v2838
  %v3095 = vsel %vm2583, %v2157, %v2839
  %v3096 = vsel %vm2584, %v2162, %v2840
  %v3097 = vsel %vm2585, %v2165, %v2841
  %v3098 = vsel %vm2586, %v2170, %v2842
  %v3099 = vsel %vm2587, %v2173, %v2843
  %v3100 = vsel %vm2588, %v2178, %v2844
  %v3101 = vsel %vm2589, %v2181, %v2845
  %v3102 = vsel %vm2590, %v2186, %v2846
  %v3103 = vsel %vm2591, %v2189, %v2847
  %v3104 = vsel %vm2592, %v2194, %v2848
  %v3105 = vsel %vm2593, %v2197, %v2849
  %v3106 = vsel %vm2594, %v2202, %v2850
  %v3107 = vsel %vm2595, %v2205, %v2851
  %v3108 = vsel %vm2596, %v2210, %v2852
  %v3109 = vsel %vm2597, %v2213, %v2853
  %v3110 = vsel %vm2598, %v2218, %v2854
  %v3111 = vsel %vm2599, %v2221, %v2855
  %v3112 = vsel %vm2600, %v2226, %v2856
  %v3113 = vsel %vm2601, %v2229, %v2857
  %v3114 = vsel %vm2602, %v2234, %v2858
  %v3115 = vsel %vm2603, %v2237, %v2859
  %v3116 = vsel %vm2604, %v2242, %v2860
  %v3117 = vsel %vm2605, %v2245, %v2861
  %v3118 = vsel %vm2606, %v2250, %v2862
  %v3119 = vsel %vm2607, %v2253, %v2863
  %v3120 = vsel %vm2608, %v2258, %v2864
  %v3121 = vsel %vm2609, %v2261, %v2865
  %v3122 = vsel %vm2610, %v2266, %v2866
  %v3123 = vsel %vm2611, %v2269, %v2867
  %v3124 = vsel %vm2612, %v2274, %v2868
  %v3125 = vsel %vm2613, %v2277, %v2869
  %v3126 = vsel %vm2614, %v2282, %v2870
  %v3127 = vsel %vm2615, %v2285, %v2871
  %v3128 = vsel %vm2616, %v2290, %v2872
  %v3129 = vsel %vm2617, %v2293, %v2873
  %v3130 = vsel %vm2618, %v2298, %v2874
  %v3131 = vsel %vm2619, %v2301, %v2875
  %v3132 = vsel %vm2620, %v2306, %v2876
  %v3133 = vsel %vm2621, %v2309, %v2877
  %v3134 = vsel %vm2622, %v2314, %v2878
  %v3135 = vsel %vm2623, %v2317, %v2879
  %v3136 = vsel %vm2624, %v2322, %v2880
  %v3137 = vsel %vm2625, %v2325, %v2881
  %v3138 = vsel %vm2626, %v2330, %v2882
  %v3139 = vsel %vm2627, %v2333, %v2883
  %v3140 = vsel %vm2628, %v2338, %v2884
  %v3141 = vsel %vm2629, %v2341, %v2885
  %v3142 = vsel %vm2630, %v2346, %v2886
  %v3143 = vsel %vm2631, %v2349, %v2887
  %v3144 = vsel %vm2632, %v2354, %v2888
  %v3145 = vsel %vm2633, %v2357, %v2889
  %v3146 = vsel %vm2634, %v2362, %v2890
  %v3147 = vsel %vm2635, %v2365, %v2891
  %v3148 = vsel %vm2636, %v2370, %v2892
  %v3149 = vsel %vm2637, %v2373, %v2893
  %v3150 = vsel %vm2638, %v2378, %v2894
  %v3151 = vsel %vm2639, %v2381, %v2895
  %v3152 = vpack.c.bf16 %v2897, %v2896
  %v3153 = vpack.c.bf16 %v2899, %v2898
  %v3154 = vpack.c.bf16 %v2901, %v2900
  %v3155 = vpack.c.bf16 %v2903, %v2902
  %v3156 = vpack.c.bf16 %v2905, %v2904
  %v3157 = vpack.c.bf16 %v2907, %v2906
  %v3158 = vpack.c.bf16 %v2909, %v2908
  %v3159 = vpack.c.bf16 %v2911, %v2910
  %v3160 = vpack.c.bf16 %v2913, %v2912
  %v3161 = vpack.c.bf16 %v2915, %v2914
  %v3162 = vpack.c.bf16 %v2917, %v2916
  %v3163 = vpack.c.bf16 %v2919, %v2918
  %v3164 = vpack.c.bf16 %v2921, %v2920
  %v3165 = vpack.c.bf16 %v2923, %v2922
  %v3166 = vpack.c.bf16 %v2925, %v2924
  %v3167 = vpack.c.bf16 %v2927, %v2926
  %v3168 = vpack.c.bf16 %v2929, %v2928
  %v3169 = vpack.c.bf16 %v2931, %v2930
  %v3170 = vpack.c.bf16 %v2933, %v2932
  %v3171 = vpack.c.bf16 %v2935, %v2934
  %v3172 = vpack.c.bf16 %v2937, %v2936
  %v3173 = vpack.c.bf16 %v2939, %v2938
  %v3174 = vpack.c.bf16 %v2941, %v2940
  %v3175 = vpack.c.bf16 %v2943, %v2942
  %v3176 = vpack.c.bf16 %v2945, %v2944
  %v3177 = vpack.c.bf16 %v2947, %v2946
  %v3178 = vpack.c.bf16 %v2949, %v2948
  %v3179 = vpack.c.bf16 %v2951, %v2950
  %v3180 = vpack.c.bf16 %v2953, %v2952
  %v3181 = vpack.c.bf16 %v2955, %v2954
  %v3182 = vpack.c.bf16 %v2957, %v2956
  %v3183 = vpack.c.bf16 %v2959, %v2958
  %v3184 = vpack.c.bf16 %v2961, %v2960
  %v3185 = vpack.c.bf16 %v2963, %v2962
  %v3186 = vpack.c.bf16 %v2965, %v2964
  %v3187 = vpack.c.bf16 %v2967, %v2966
  %v3188 = vpack.c.bf16 %v2969, %v2968
  %v3189 = vpack.c.bf16 %v2971, %v2970
  %v3190 = vpack.c.bf16 %v2973, %v2972
  %v3191 = vpack.c.bf16 %v2975, %v2974
  %v3192 = vpack.c.bf16 %v2977, %v2976
  %v3193 = vpack.c.bf16 %v2979, %v2978
  %v3194 = vpack.c.bf16 %v2981, %v2980
  %v3195 = vpack.c.bf16 %v2983, %v2982
  %v3196 = vpack.c.bf16 %v2985, %v2984
  %v3197 = vpack.c.bf16 %v2987, %v2986
  %v3198 = vpack.c.bf16 %v2989, %v2988
  %v3199 = vpack.c.bf16 %v2991, %v2990
  %v3200 = vpack.c.bf16 %v2993, %v2992
  %v3201 = vpack.c.bf16 %v2995, %v2994
  %v3202 = vpack.c.bf16 %v2997, %v2996
  %v3203 = vpack.c.bf16 %v2999, %v2998
  %v3204 = vpack.c.bf16 %v3001, %v3000
  %v3205 = vpack.c.bf16 %v3003, %v3002
  %v3206 = vpack.c.bf16 %v3005, %v3004
  %v3207 = vpack.c.bf16 %v3007, %v3006
  %v3208 = vpack.c.bf16 %v3009, %v3008
  %v3209 = vpack.c.bf16 %v3011, %v3010
  %v3210 = vpack.c.bf16 %v3013, %v3012
  %v3211 = vpack.c.bf16 %v3015, %v3014
  %v3212 = vpack.c.bf16 %v3017, %v3016
  %v3213 = vpack.c.bf16 %v3019, %v3018
  %v3214 = vpack.c.bf16 %v3021, %v3020
  %v3215 = vpack.c.bf16 %v3023, %v3022
  %v3216 = vpack.c.bf16 %v3025, %v3024
  %v3217 = vpack.c.bf16 %v3027, %v3026
  %v3218 = vpack.c.bf16 %v3029, %v3028
  %v3219 = vpack.c.bf16 %v3031, %v3030
  %v3220 = vpack.c.bf16 %v3033, %v3032
  %v3221 = vpack.c.bf16 %v3035, %v3034
  %v3222 = vpack.c.bf16 %v3037, %v3036
  %v3223 = vpack.c.bf16 %v3039, %v3038
  %v3224 = vpack.c.bf16 %v3041, %v3040
  %v3225 = vpack.c.bf16 %v3043, %v3042
  %v3226 = vpack.c.bf16 %v3045, %v3044
  %v3227 = vpack.c.bf16 %v3047, %v3046
  %v3228 = vpack.c.bf16 %v3049, %v3048
  %v3229 = vpack.c.bf16 %v3051, %v3050
  %v3230 = vpack.c.bf16 %v3053, %v3052
  %v3231 = vpack.c.bf16 %v3055, %v3054
  %v3232 = vpack.c.bf16 %v3057, %v3056
  %v3233 = vpack.c.bf16 %v3059, %v3058
  %v3234 = vpack.c.bf16 %v3061, %v3060
  %v3235 = vpack.c.bf16 %v3063, %v3062
  %v3236 = vpack.c.bf16 %v3065, %v3064
  %v3237 = vpack.c.bf16 %v3067, %v3066
  %v3238 = vpack.c.bf16 %v3069, %v3068
  %v3239 = vpack.c.bf16 %v3071, %v3070
  %v3240 = vpack.c.bf16 %v3073, %v3072
  %v3241 = vpack.c.bf16 %v3075, %v3074
  %v3242 = vpack.c.bf16 %v3077, %v3076
  %v3243 = vpack.c.bf16 %v3079, %v3078
  %v3244 = vpack.c.bf16 %v3081, %v3080
  %v3245 = vpack.c.bf16 %v3083, %v3082
  %v3246 = vpack.c.bf16 %v3085, %v3084
  %v3247 = vpack.c.bf16 %v3087, %v3086
  %v3248 = vpack.c.bf16 %v3089, %v3088
  %v3249 = vpack.c.bf16 %v3091, %v3090
  %v3250 = vpack.c.bf16 %v3093, %v3092
  %v3251 = vpack.c.bf16 %v3095, %v3094
  %v3252 = vpack.c.bf16 %v3097, %v3096
  %v3253 = vpack.c.bf16 %v3099, %v3098
  %v3254 = vpack.c.bf16 %v3101, %v3100
  %v3255 = vpack.c.bf16 %v3103, %v3102
  %v3256 = vpack.c.bf16 %v3105, %v3104
  %v3257 = vpack.c.bf16 %v3107, %v3106
  %v3258 = vpack.c.bf16 %v3109, %v3108
  %v3259 = vpack.c.bf16 %v3111, %v3110
  %v3260 = vpack.c.bf16 %v3113, %v3112
  %v3261 = vpack.c.bf16 %v3115, %v3114
  %v3262 = vpack.c.bf16 %v3117, %v3116
  %v3263 = vpack.c.bf16 %v3119, %v3118
  %v3264 = vpack.c.bf16 %v3121, %v3120
  %v3265 = vpack.c.bf16 %v3123, %v3122
  %v3266 = vpack.c.bf16 %v3125, %v3124
  %v3267 = vpack.c.bf16 %v3127, %v3126
  %v3268 = vpack.c.bf16 %v3129, %v3128
  %v3269 = vpack.c.bf16 %v3131, %v3130
  %v3270 = vpack.c.bf16 %v3133, %v3132
  %v3271 = vpack.c.bf16 %v3135, %v3134
  %v3272 = vpack.c.bf16 %v3137, %v3136
  %v3273 = vpack.c.bf16 %v3139, %v3138
  %v3274 = vpack.c.bf16 %v3141, %v3140
  %v3275 = vpack.c.bf16 %v3143, %v3142
  %v3276 = vpack.c.bf16 %v3145, %v3144
  %v3277 = vpack.c.bf16 %v3147, %v3146
  %v3278 = vpack.c.bf16 %v3149, %v3148
  %v3279 = vpack.c.bf16 %v3151, %v3150
  %v3408 = vunpack.c.l.b16 %v3152
  %v3409 = vunpack.c.h.b16 %v3152
  %v3410 = vunpack.c.l.b16 %v3153
  %v3411 = vunpack.c.h.b16 %v3153
  %v3412 = vunpack.c.l.b16 %v3154
  %v3413 = vunpack.c.h.b16 %v3154
  %v3414 = vunpack.c.l.b16 %v3155
  %v3415 = vunpack.c.h.b16 %v3155
  %v3416 = vunpack.c.l.b16 %v3156
  %v3417 = vunpack.c.h.b16 %v3156
  %v3418 = vunpack.c.l.b16 %v3157
  %v3419 = vunpack.c.h.b16 %v3157
  %v3420 = vunpack.c.l.b16 %v3158
  %v3421 = vunpack.c.h.b16 %v3158
  %v3422 = vunpack.c.l.b16 %v3159
  %v3423 = vunpack.c.h.b16 %v3159
  %v3424 = vunpack.c.l.b16 %v3160
  %v3425 = vunpack.c.h.b16 %v3160
  %v3426 = vunpack.c.l.b16 %v3161
  %v3427 = vunpack.c.h.b16 %v3161
  %v3428 = vunpack.c.l.b16 %v3162
  %v3429 = vunpack.c.h.b16 %v3162
  %v3430 = vunpack.c.l.b16 %v3163
  %v3431 = vunpack.c.h.b16 %v3163
  %v3432 = vunpack.c.l.b16 %v3164
  %v3433 = vunpack.c.h.b16 %v3164
  %v3434 = vunpack.c.l.b16 %v3165
  %v3435 = vunpack.c.h.b16 %v3165
  %v3436 = vunpack.c.l.b16 %v3166
  %v3437 = vunpack.c.h.b16 %v3166
  %v3438 = vunpack.c.l.b16 %v3167
  %v3439 = vunpack.c.h.b16 %v3167
  %v3440 = vunpack.c.l.b16 %v3168
  %v3441 = vunpack.c.h.b16 %v3168
  %v3442 = vunpack.c.l.b16 %v3169
  %v3443 = vunpack.c.h.b16 %v3169
  %v3444 = vunpack.c.l.b16 %v3170
  %v3445 = vunpack.c.h.b16 %v3170
  %v3446 = vunpack.c.l.b16 %v3171
  %v3447 = vunpack.c.h.b16 %v3171
  %v3448 = vunpack.c.l.b16 %v3172
  %v3449 = vunpack.c.h.b16 %v3172
  %v3450 = vunpack.c.l.b16 %v3173
  %v3451 = vunpack.c.h.b16 %v3173
  %v3452 = vunpack.c.l.b16 %v3174
  %v3453 = vunpack.c.h.b16 %v3174
  %v3454 = vunpack.c.l.b16 %v3175
  %v3455 = vunpack.c.h.b16 %v3175
  %v3456 = vunpack.c.l.b16 %v3176
  %v3457 = vunpack.c.h.b16 %v3176
  %v3458 = vunpack.c.l.b16 %v3177
  %v3459 = vunpack.c.h.b16 %v3177
  %v3460 = vunpack.c.l.b16 %v3178
  %v3461 = vunpack.c.h.b16 %v3178
  %v3462 = vunpack.c.l.b16 %v3179
  %v3463 = vunpack.c.h.b16 %v3179
  %v3464 = vunpack.c.l.b16 %v3180
  %v3465 = vunpack.c.h.b16 %v3180
  %v3466 = vunpack.c.l.b16 %v3181
  %v3467 = vunpack.c.h.b16 %v3181
  %v3468 = vunpack.c.l.b16 %v3182
  %v3469 = vunpack.c.h.b16 %v3182
  %v3470 = vunpack.c.l.b16 %v3183
  %v3471 = vunpack.c.h.b16 %v3183
  %v3472 = vunpack.c.l.b16 %v3184
  %v3473 = vunpack.c.h.b16 %v3184
  %v3474 = vunpack.c.l.b16 %v3185
  %v3475 = vunpack.c.h.b16 %v3185
  %v3476 = vunpack.c.l.b16 %v3186
  %v3477 = vunpack.c.h.b16 %v3186
  %v3478 = vunpack.c.l.b16 %v3187
  %v3479 = vunpack.c.h.b16 %v3187
  %v3480 = vunpack.c.l.b16 %v3188
  %v3481 = vunpack.c.h.b16 %v3188
  %v3482 = vunpack.c.l.b16 %v3189
  %v3483 = vunpack.c.h.b16 %v3189
  %v3484 = vunpack.c.l.b16 %v3190
  %v3485 = vunpack.c.h.b16 %v3190
  %v3486 = vunpack.c.l.b16 %v3191
  %v3487 = vunpack.c.h.b16 %v3191
  %v3488 = vunpack.c.l.b16 %v3192
  %v3489 = vunpack.c.h.b16 %v3192
  %v3490 = vunpack.c.l.b16 %v3193
  %v3491 = vunpack.c.h.b16 %v3193
  %v3492 = vunpack.c.l.b16 %v3194
  %v3493 = vunpack.c.h.b16 %v3194
  %v3494 = vunpack.c.l.b16 %v3195
  %v3495 = vunpack.c.h.b16 %v3195
  %v3496 = vunpack.c.l.b16 %v3196
  %v3497 = vunpack.c.h.b16 %v3196
  %v3498 = vunpack.c.l.b16 %v3197
  %v3499 = vunpack.c.h.b16 %v3197
  %v3500 = vunpack.c.l.b16 %v3198
  %v3501 = vunpack.c.h.b16 %v3198
  %v3502 = vunpack.c.l.b16 %v3199
  %v3503 = vunpack.c.h.b16 %v3199
  %v3504 = vunpack.c.l.b16 %v3200
  %v3505 = vunpack.c.h.b16 %v3200
  %v3506 = vunpack.c.l.b16 %v3201
  %v3507 = vunpack.c.h.b16 %v3201
  %v3508 = vunpack.c.l.b16 %v3202
  %v3509 = vunpack.c.h.b16 %v3202
  %v3510 = vunpack.c.l.b16 %v3203
  %v3511 = vunpack.c.h.b16 %v3203
  %v3512 = vunpack.c.l.b16 %v3204
  %v3513 = vunpack.c.h.b16 %v3204
  %v3514 = vunpack.c.l.b16 %v3205
  %v3515 = vunpack.c.h.b16 %v3205
  %v3516 = vunpack.c.l.b16 %v3206
  %v3517 = vunpack.c.h.b16 %v3206
  %v3518 = vunpack.c.l.b16 %v3207
  %v3519 = vunpack.c.h.b16 %v3207
  %v3520 = vunpack.c.l.b16 %v3208
  %v3521 = vunpack.c.h.b16 %v3208
  %v3522 = vunpack.c.l.b16 %v3209
  %v3523 = vunpack.c.h.b16 %v3209
  %v3524 = vunpack.c.l.b16 %v3210
  %v3525 = vunpack.c.h.b16 %v3210
  %v3526 = vunpack.c.l.b16 %v3211
  %v3527 = vunpack.c.h.b16 %v3211
  %v3528 = vunpack.c.l.b16 %v3212
  %v3529 = vunpack.c.h.b16 %v3212
  %v3530 = vunpack.c.l.b16 %v3213
  %v3531 = vunpack.c.h.b16 %v3213
  %v3532 = vunpack.c.l.b16 %v3214
  %v3533 = vunpack.c.h.b16 %v3214
  %v3534 = vunpack.c.l.b16 %v3215
  %v3535 = vunpack.c.h.b16 %v3215
  %v3536 = vunpack.c.l.b16 %v3216
  %v3537 = vunpack.c.h.b16 %v3216
  %v3538 = vunpack.c.l.b16 %v3217
  %v3539 = vunpack.c.h.b16 %v3217
  %v3540 = vunpack.c.l.b16 %v3218
  %v3541 = vunpack.c.h.b16 %v3218
  %v3542 = vunpack.c.l.b16 %v3219
  %v3543 = vunpack.c.h.b16 %v3219
  %v3544 = vunpack.c.l.b16 %v3220
  %v3545 = vunpack.c.h.b16 %v3220
  %v3546 = vunpack.c.l.b16 %v3221
  %v3547 = vunpack.c.h.b16 %v3221
  %v3548 = vunpack.c.l.b16 %v3222
  %v3549 = vunpack.c.h.b16 %v3222
  %v3550 = vunpack.c.l.b16 %v3223
  %v3551 = vunpack.c.h.b16 %v3223
  %v3552 = vunpack.c.l.b16 %v3224
  %v3553 = vunpack.c.h.b16 %v3224
  %v3554 = vunpack.c.l.b16 %v3225
  %v3555 = vunpack.c.h.b16 %v3225
  %v3556 = vunpack.c.l.b16 %v3226
  %v3557 = vunpack.c.h.b16 %v3226
  %v3558 = vunpack.c.l.b16 %v3227
  %v3559 = vunpack.c.h.b16 %v3227
  %v3560 = vunpack.c.l.b16 %v3228
  %v3561 = vunpack.c.h.b16 %v3228
  %v3562 = vunpack.c.l.b16 %v3229
  %v3563 = vunpack.c.h.b16 %v3229
  %v3564 = vunpack.c.l.b16 %v3230
  %v3565 = vunpack.c.h.b16 %v3230
  %v3566 = vunpack.c.l.b16 %v3231
  %v3567 = vunpack.c.h.b16 %v3231
  %v3568 = vunpack.c.l.b16 %v3232
  %v3569 = vunpack.c.h.b16 %v3232
  %v3570 = vunpack.c.l.b16 %v3233
  %v3571 = vunpack.c.h.b16 %v3233
  %v3572 = vunpack.c.l.b16 %v3234
  %v3573 = vunpack.c.h.b16 %v3234
  %v3574 = vunpack.c.l.b16 %v3235
  %v3575 = vunpack.c.h.b16 %v3235
  %v3576 = vunpack.c.l.b16 %v3236
  %v3577 = vunpack.c.h.b16 %v3236
  %v3578 = vunpack.c.l.b16 %v3237
  %v3579 = vunpack.c.h.b16 %v3237
  %v3580 = vunpack.c.l.b16 %v3238
  %v3581 = vunpack.c.h.b16 %v3238
  %v3582 = vunpack.c.l.b16 %v3239
  %v3583 = vunpack.c.h.b16 %v3239
  %v3584 = vunpack.c.l.b16 %v3240
  %v3585 = vunpack.c.h.b16 %v3240
  %v3586 = vunpack.c.l.b16 %v3241
  %v3587 = vunpack.c.h.b16 %v3241
  %v3588 = vunpack.c.l.b16 %v3242
  %v3589 = vunpack.c.h.b16 %v3242
  %v3590 = vunpack.c.l.b16 %v3243
  %v3591 = vunpack.c.h.b16 %v3243
  %v3592 = vunpack.c.l.b16 %v3244
  %v3593 = vunpack.c.h.b16 %v3244
  %v3594 = vunpack.c.l.b16 %v3245
  %v3595 = vunpack.c.h.b16 %v3245
  %v3596 = vunpack.c.l.b16 %v3246
  %v3597 = vunpack.c.h.b16 %v3246
  %v3598 = vunpack.c.l.b16 %v3247
  %v3599 = vunpack.c.h.b16 %v3247
  %v3600 = vunpack.c.l.b16 %v3248
  %v3601 = vunpack.c.h.b16 %v3248
  %v3602 = vunpack.c.l.b16 %v3249
  %v3603 = vunpack.c.h.b16 %v3249
  %v3604 = vunpack.c.l.b16 %v3250
  %v3605 = vunpack.c.h.b16 %v3250
  %v3606 = vunpack.c.l.b16 %v3251
  %v3607 = vunpack.c.h.b16 %v3251
  %v3608 = vunpack.c.l.b16 %v3252
  %v3609 = vunpack.c.h.b16 %v3252
  %v3610 = vunpack.c.l.b16 %v3253
  %v3611 = vunpack.c.h.b16 %v3253
  %v3612 = vunpack.c.l.b16 %v3254
  %v3613 = vunpack.c.h.b16 %v3254
  %v3614 = vunpack.c.l.b16 %v3255
  %v3615 = vunpack.c.h.b16 %v3255
  %v3616 = vunpack.c.l.b16 %v3256
  %v3617 = vunpack.c.h.b16 %v3256
  %v3618 = vunpack.c.l.b16 %v3257
  %v3619 = vunpack.c.h.b16 %v3257
  %v3620 = vunpack.c.l.b16 %v3258
  %v3621 = vunpack.c.h.b16 %v3258
  %v3622 = vunpack.c.l.b16 %v3259
  %v3623 = vunpack.c.h.b16 %v3259
  %v3624 = vunpack.c.l.b16 %v3260
  %v3625 = vunpack.c.h.b16 %v3260
  %v3626 = vunpack.c.l.b16 %v3261
  %v3627 = vunpack.c.h.b16 %v3261
  %v3628 = vunpack.c.l.b16 %v3262
  %v3629 = vunpack.c.h.b16 %v3262
  %v3630 = vunpack.c.l.b16 %v3263
  %v3631 = vunpack.c.h.b16 %v3263
  %v3632 = vunpack.c.l.b16 %v3264
  %v3633 = vunpack.c.h.b16 %v3264
  %v3634 = vunpack.c.l.b16 %v3265
  %v3635 = vunpack.c.h.b16 %v3265
  %v3636 = vunpack.c.l.b16 %v3266
  %v3637 = vunpack.c.h.b16 %v3266
  %v3638 = vunpack.c.l.b16 %v3267
  %v3639 = vunpack.c.h.b16 %v3267
  %v3640 = vunpack.c.l.b16 %v3268
  %v3641 = vunpack.c.h.b16 %v3268
  %v3642 = vunpack.c.l.b16 %v3269
  %v3643 = vunpack.c.h.b16 %v3269
  %v3644 = vunpack.c.l.b16 %v3270
  %v3645 = vunpack.c.h.b16 %v3270
  %v3646 = vunpack.c.l.b16 %v3271
  %v3647 = vunpack.c.h.b16 %v3271
  %v3648 = vunpack.c.l.b16 %v3272
  %v3649 = vunpack.c.h.b16 %v3272
  %v3650 = vunpack.c.l.b16 %v3273
  %v3651 = vunpack.c.h.b16 %v3273
  %v3652 = vunpack.c.l.b16 %v3274
  %v3653 = vunpack.c.h.b16 %v3274
  %v3654 = vunpack.c.l.b16 %v3275
  %v3655 = vunpack.c.h.b16 %v3275
  %v3656 = vunpack.c.l.b16 %v3276
  %v3657 = vunpack.c.h.b16 %v3276
  %v3658 = vunpack.c.l.b16 %v3277
  %v3659 = vunpack.c.h.b16 %v3277
  %v3660 = vunpack.c.l.b16 %v3278
  %v3661 = vunpack.c.h.b16 %v3278
  %v3662 = vunpack.c.l.b16 %v3279
  %v3663 = vunpack.c.h.b16 %v3279
  %v3664 = vpack.c.b16 %v3408, %v3408
  %v3665 = vpack.c.b16 %v3409, %v3409
  %v3666 = vpack.c.b16 %v3410, %v3410
  %v3667 = vpack.c.b16 %v3411, %v3411
  %v3668 = vpack.c.b16 %v3412, %v3412
  %v3669 = vpack.c.b16 %v3413, %v3413
  %v3670 = vpack.c.b16 %v3414, %v3414
  %v3671 = vpack.c.b16 %v3415, %v3415
  %v3672 = vpack.c.b16 %v3416, %v3416
  %v3673 = vpack.c.b16 %v3417, %v3417
  %v3674 = vpack.c.b16 %v3418, %v3418
  %v3675 = vpack.c.b16 %v3419, %v3419
  %v3676 = vpack.c.b16 %v3420, %v3420
  %v3677 = vpack.c.b16 %v3421, %v3421
  %v3678 = vpack.c.b16 %v3422, %v3422
  %v3679 = vpack.c.b16 %v3423, %v3423
  %v3680 = vpack.c.b16 %v3424, %v3424
  %v3681 = vpack.c.b16 %v3425, %v3425
  %v3682 = vpack.c.b16 %v3426, %v3426
  %v3683 = vpack.c.b16 %v3427, %v3427
  %v3684 = vpack.c.b16 %v3428, %v3428
  %v3685 = vpack.c.b16 %v3429, %v3429
  %v3686 = vpack.c.b16 %v3430, %v3430
  %v3687 = vpack.c.b16 %v3431, %v3431
  %v3688 = vpack.c.b16 %v3432, %v3432
  %v3689 = vpack.c.b16 %v3433, %v3433
  %v3690 = vpack.c.b16 %v3434, %v3434
  %v3691 = vpack.c.b16 %v3435, %v3435
  %v3692 = vpack.c.b16 %v3436, %v3436
  %v3693 = vpack.c.b16 %v3437, %v3437
  %v3694 = vpack.c.b16 %v3438, %v3438
  %v3695 = vpack.c.b16 %v3439, %v3439
  %v3696 = vpack.c.b16 %v3440, %v3440
  %v3697 = vpack.c.b16 %v3441, %v3441
  %v3698 = vpack.c.b16 %v3442, %v3442
  %v3699 = vpack.c.b16 %v3443, %v3443
  %v3700 = vpack.c.b16 %v3444, %v3444
  %v3701 = vpack.c.b16 %v3445, %v3445
  %v3702 = vpack.c.b16 %v3446, %v3446
  %v3703 = vpack.c.b16 %v3447, %v3447
  %v3704 = vpack.c.b16 %v3448, %v3448
  %v3705 = vpack.c.b16 %v3449, %v3449
  %v3706 = vpack.c.b16 %v3450, %v3450
  %v3707 = vpack.c.b16 %v3451, %v3451
  %v3708 = vpack.c.b16 %v3452, %v3452
  %v3709 = vpack.c.b16 %v3453, %v3453
  %v3710 = vpack.c.b16 %v3454, %v3454
  %v3711 = vpack.c.b16 %v3455, %v3455
  %v3712 = vpack.c.b16 %v3456, %v3456
  %v3713 = vpack.c.b16 %v3457, %v3457
  %v3714 = vpack.c.b16 %v3458, %v3458
  %v3715 = vpack.c.b16 %v3459, %v3459
  %v3716 = vpack.c.b16 %v3460, %v3460
  %v3717 = vpack.c.b16 %v3461, %v3461
  %v3718 = vpack.c.b16 %v3462, %v3462
  %v3719 = vpack.c.b16 %v3463, %v3463
  %v3720 = vpack.c.b16 %v3464, %v3464
  %v3721 = vpack.c.b16 %v3465, %v3465
  %v3722 = vpack.c.b16 %v3466, %v3466
  %v3723 = vpack.c.b16 %v3467, %v3467
  %v3724 = vpack.c.b16 %v3468, %v3468
  %v3725 = vpack.c.b16 %v3469, %v3469
  %v3726 = vpack.c.b16 %v3470, %v3470
  %v3727 = vpack.c.b16 %v3471, %v3471
  %v3728 = vpack.c.b16 %v3472, %v3472
  %v3729 = vpack.c.b16 %v3473, %v3473
  %v3730 = vpack.c.b16 %v3474, %v3474
  %v3731 = vpack.c.b16 %v3475, %v3475
  %v3732 = vpack.c.b16 %v3476, %v3476
  %v3733 = vpack.c.b16 %v3477, %v3477
  %v3734 = vpack.c.b16 %v3478, %v3478
  %v3735 = vpack.c.b16 %v3479, %v3479
  %v3736 = vpack.c.b16 %v3480, %v3480
  %v3737 = vpack.c.b16 %v3481, %v3481
  %v3738 = vpack.c.b16 %v3482, %v3482
  %v3739 = vpack.c.b16 %v3483, %v3483
  %v3740 = vpack.c.b16 %v3484, %v3484
  %v3741 = vpack.c.b16 %v3485, %v3485
  %v3742 = vpack.c.b16 %v3486, %v3486
  %v3743 = vpack.c.b16 %v3487, %v3487
  %v3744 = vpack.c.b16 %v3488, %v3488
  %v3745 = vpack.c.b16 %v3489, %v3489
  %v3746 = vpack.c.b16 %v3490, %v3490
  %v3747 = vpack.c.b16 %v3491, %v3491
  %v3748 = vpack.c.b16 %v3492, %v3492
  %v3749 = vpack.c.b16 %v3493, %v3493
  %v3750 = vpack.c.b16 %v3494, %v3494
  %v3751 = vpack.c.b16 %v3495, %v3495
  %v3752 = vpack.c.b16 %v3496, %v3496
  %v3753 = vpack.c.b16 %v3497, %v3497
  %v3754 = vpack.c.b16 %v3498, %v3498
  %v3755 = vpack.c.b16 %v3499, %v3499
  %v3756 = vpack.c.b16 %v3500, %v3500
  %v3757 = vpack.c.b16 %v3501, %v3501
  %v3758 = vpack.c.b16 %v3502, %v3502
  %v3759 = vpack.c.b16 %v3503, %v3503
  %v3760 = vpack.c.b16 %v3504, %v3504
  %v3761 = vpack.c.b16 %v3505, %v3505
  %v3762 = vpack.c.b16 %v3506, %v3506
  %v3763 = vpack.c.b16 %v3507, %v3507
  %v3764 = vpack.c.b16 %v3508, %v3508
  %v3765 = vpack.c.b16 %v3509, %v3509
  %v3766 = vpack.c.b16 %v3510, %v3510
  %v3767 = vpack.c.b16 %v3511, %v3511
  %v3768 = vpack.c.b16 %v3512, %v3512
  %v3769 = vpack.c.b16 %v3513, %v3513
  %v3770 = vpack.c.b16 %v3514, %v3514
  %v3771 = vpack.c.b16 %v3515, %v3515
  %v3772 = vpack.c.b16 %v3516, %v3516
  %v3773 = vpack.c.b16 %v3517, %v3517
  %v3774 = vpack.c.b16 %v3518, %v3518
  %v3775 = vpack.c.b16 %v3519, %v3519
  %v3776 = vpack.c.b16 %v3520, %v3520
  %v3777 = vpack.c.b16 %v3521, %v3521
  %v3778 = vpack.c.b16 %v3522, %v3522
  %v3779 = vpack.c.b16 %v3523, %v3523
  %v3780 = vpack.c.b16 %v3524, %v3524
  %v3781 = vpack.c.b16 %v3525, %v3525
  %v3782 = vpack.c.b16 %v3526, %v3526
  %v3783 = vpack.c.b16 %v3527, %v3527
  %v3784 = vpack.c.b16 %v3528, %v3528
  %v3785 = vpack.c.b16 %v3529, %v3529
  %v3786 = vpack.c.b16 %v3530, %v3530
  %v3787 = vpack.c.b16 %v3531, %v3531
  %v3788 = vpack.c.b16 %v3532, %v3532
  %v3789 = vpack.c.b16 %v3533, %v3533
  %v3790 = vpack.c.b16 %v3534, %v3534
  %v3791 = vpack.c.b16 %v3535, %v3535
  %v3792 = vpack.c.b16 %v3536, %v3536
  %v3793 = vpack.c.b16 %v3537, %v3537
  %v3794 = vpack.c.b16 %v3538, %v3538
  %v3795 = vpack.c.b16 %v3539, %v3539
  %v3796 = vpack.c.b16 %v3540, %v3540
  %v3797 = vpack.c.b16 %v3541, %v3541
  %v3798 = vpack.c.b16 %v3542, %v3542
  %v3799 = vpack.c.b16 %v3543, %v3543
  %v3800 = vpack.c.b16 %v3544, %v3544
  %v3801 = vpack.c.b16 %v3545, %v3545
  %v3802 = vpack.c.b16 %v3546, %v3546
  %v3803 = vpack.c.b16 %v3547, %v3547
  %v3804 = vpack.c.b16 %v3548, %v3548
  %v3805 = vpack.c.b16 %v3549, %v3549
  %v3806 = vpack.c.b16 %v3550, %v3550
  %v3807 = vpack.c.b16 %v3551, %v3551
  %v3808 = vpack.c.b16 %v3552, %v3552
  %v3809 = vpack.c.b16 %v3553, %v3553
  %v3810 = vpack.c.b16 %v3554, %v3554
  %v3811 = vpack.c.b16 %v3555, %v3555
  %v3812 = vpack.c.b16 %v3556, %v3556
  %v3813 = vpack.c.b16 %v3557, %v3557
  %v3814 = vpack.c.b16 %v3558, %v3558
  %v3815 = vpack.c.b16 %v3559, %v3559
  %v3816 = vpack.c.b16 %v3560, %v3560
  %v3817 = vpack.c.b16 %v3561, %v3561
  %v3818 = vpack.c.b16 %v3562, %v3562
  %v3819 = vpack.c.b16 %v3563, %v3563
  %v3820 = vpack.c.b16 %v3564, %v3564
  %v3821 = vpack.c.b16 %v3565, %v3565
  %v3822 = vpack.c.b16 %v3566, %v3566
  %v3823 = vpack.c.b16 %v3567, %v3567
  %v3824 = vpack.c.b16 %v3568, %v3568
  %v3825 = vpack.c.b16 %v3569, %v3569
  %v3826 = vpack.c.b16 %v3570, %v3570
  %v3827 = vpack.c.b16 %v3571, %v3571
  %v3828 = vpack.c.b16 %v3572, %v3572
  %v3829 = vpack.c.b16 %v3573, %v3573
  %v3830 = vpack.c.b16 %v3574, %v3574
  %v3831 = vpack.c.b16 %v3575, %v3575
  %v3832 = vpack.c.b16 %v3576, %v3576
  %v3833 = vpack.c.b16 %v3577, %v3577
  %v3834 = vpack.c.b16 %v3578, %v3578
  %v3835 = vpack.c.b16 %v3579, %v3579
  %v3836 = vpack.c.b16 %v3580, %v3580
  %v3837 = vpack.c.b16 %v3581, %v3581
  %v3838 = vpack.c.b16 %v3582, %v3582
  %v3839 = vpack.c.b16 %v3583, %v3583
  %v3840 = vpack.c.b16 %v3584, %v3584
  %v3841 = vpack.c.b16 %v3585, %v3585
  %v3842 = vpack.c.b16 %v3586, %v3586
  %v3843 = vpack.c.b16 %v3587, %v3587
  %v3844 = vpack.c.b16 %v3588, %v3588
  %v3845 = vpack.c.b16 %v3589, %v3589
  %v3846 = vpack.c.b16 %v3590, %v3590
  %v3847 = vpack.c.b16 %v3591, %v3591
  %v3848 = vpack.c.b16 %v3592, %v3592
  %v3849 = vpack.c.b16 %v3593, %v3593
  %v3850 = vpack.c.b16 %v3594, %v3594
  %v3851 = vpack.c.b16 %v3595, %v3595
  %v3852 = vpack.c.b16 %v3596, %v3596
  %v3853 = vpack.c.b16 %v3597, %v3597
  %v3854 = vpack.c.b16 %v3598, %v3598
  %v3855 = vpack.c.b16 %v3599, %v3599
  %v3856 = vpack.c.b16 %v3600, %v3600
  %v3857 = vpack.c.b16 %v3601, %v3601
  %v3858 = vpack.c.b16 %v3602, %v3602
  %v3859 = vpack.c.b16 %v3603, %v3603
  %v3860 = vpack.c.b16 %v3604, %v3604
  %v3861 = vpack.c.b16 %v3605, %v3605
  %v3862 = vpack.c.b16 %v3606, %v3606
  %v3863 = vpack.c.b16 %v3607, %v3607
  %v3864 = vpack.c.b16 %v3608, %v3608
  %v3865 = vpack.c.b16 %v3609, %v3609
  %v3866 = vpack.c.b16 %v3610, %v3610
  %v3867 = vpack.c.b16 %v3611, %v3611
  %v3868 = vpack.c.b16 %v3612, %v3612
  %v3869 = vpack.c.b16 %v3613, %v3613
  %v3870 = vpack.c.b16 %v3614, %v3614
  %v3871 = vpack.c.b16 %v3615, %v3615
  %v3872 = vpack.c.b16 %v3616, %v3616
  %v3873 = vpack.c.b16 %v3617, %v3617
  %v3874 = vpack.c.b16 %v3618, %v3618
  %v3875 = vpack.c.b16 %v3619, %v3619
  %v3876 = vpack.c.b16 %v3620, %v3620
  %v3877 = vpack.c.b16 %v3621, %v3621
  %v3878 = vpack.c.b16 %v3622, %v3622
  %v3879 = vpack.c.b16 %v3623, %v3623
  %v3880 = vpack.c.b16 %v3624, %v3624
  %v3881 = vpack.c.b16 %v3625, %v3625
  %v3882 = vpack.c.b16 %v3626, %v3626
  %v3883 = vpack.c.b16 %v3627, %v3627
  %v3884 = vpack.c.b16 %v3628, %v3628
  %v3885 = vpack.c.b16 %v3629, %v3629
  %v3886 = vpack.c.b16 %v3630, %v3630
  %v3887 = vpack.c.b16 %v3631, %v3631
  %v3888 = vpack.c.b16 %v3632, %v3632
  %v3889 = vpack.c.b16 %v3633, %v3633
  %v3890 = vpack.c.b16 %v3634, %v3634
  %v3891 = vpack.c.b16 %v3635, %v3635
  %v3892 = vpack.c.b16 %v3636, %v3636
  %v3893 = vpack.c.b16 %v3637, %v3637
  %v3894 = vpack.c.b16 %v3638, %v3638
  %v3895 = vpack.c.b16 %v3639, %v3639
  %v3896 = vpack.c.b16 %v3640, %v3640
  %v3897 = vpack.c.b16 %v3641, %v3641
  %v3898 = vpack.c.b16 %v3642, %v3642
  %v3899 = vpack.c.b16 %v3643, %v3643
  %v3900 = vpack.c.b16 %v3644, %v3644
  %v3901 = vpack.c.b16 %v3645, %v3645
  %v3902 = vpack.c.b16 %v3646, %v3646
  %v3903 = vpack.c.b16 %v3647, %v3647
  %v3904 = vpack.c.b16 %v3648, %v3648
  %v3905 = vpack.c.b16 %v3649, %v3649
  %v3906 = vpack.c.b16 %v3650, %v3650
  %v3907 = vpack.c.b16 %v3651, %v3651
  %v3908 = vpack.c.b16 %v3652, %v3652
  %v3909 = vpack.c.b16 %v3653, %v3653
  %v3910 = vpack.c.b16 %v3654, %v3654
  %v3911 = vpack.c.b16 %v3655, %v3655
  %v3912 = vpack.c.b16 %v3656, %v3656
  %v3913 = vpack.c.b16 %v3657, %v3657
  %v3914 = vpack.c.b16 %v3658, %v3658
  %v3915 = vpack.c.b16 %v3659, %v3659
  %v3916 = vpack.c.b16 %v3660, %v3660
  %v3917 = vpack.c.b16 %v3661, %v3661
  %v3918 = vpack.c.b16 %v3662, %v3662
  %v3919 = vpack.c.b16 %v3663, %v3663
  %vm4176 = vcmask 60416
  %4177 = vst.msk [vmem:[%s3] sm:$0xf] %vm4176, %v3664
  %4178 = vst.msk [vmem:[%s3 + $0x4] sm:$0xf] %vm4176, %v3665
  %4179 = vst.msk [vmem:[%s3 + $0x8] sm:$0xf] %vm4176, %v3666
  %4180 = vst.msk [vmem:[%s3 + $0xc] sm:$0xf] %vm4176, %v3667
  %4181 = vst.msk [vmem:[%s3 + $0x10] sm:$0xf] %vm4176, %v3668
  %4182 = vst.msk [vmem:[%s3 + $0x14] sm:$0xf] %vm4176, %v3669
  %4183 = vst.msk [vmem:[%s3 + $0x18] sm:$0xf] %vm4176, %v3670
  %4184 = vst.msk [vmem:[%s3 + $0x1c] sm:$0xf] %vm4176, %v3671
  %4185 = vst.msk [vmem:[%s3 + $0x20] sm:$0xf] %vm4176, %v3672
  %4186 = vst.msk [vmem:[%s3 + $0x24] sm:$0xf] %vm4176, %v3673
  %4187 = vst.msk [vmem:[%s3 + $0x28] sm:$0xf] %vm4176, %v3674
  %4188 = vst.msk [vmem:[%s3 + $0x2c] sm:$0xf] %vm4176, %v3675
  %4189 = vst.msk [vmem:[%s3 + $0x30] sm:$0xf] %vm4176, %v3676
  %4190 = vst.msk [vmem:[%s3 + $0x34] sm:$0xf] %vm4176, %v3677
  %4191 = vst.msk [vmem:[%s3 + $0x38] sm:$0xf] %vm4176, %v3678
  %4192 = vst.msk [vmem:[%s3 + $0x3c] sm:$0xf] %vm4176, %v3679
  %4193 = vst.msk [vmem:[%s3 + $0x40] sm:$0xf] %vm4176, %v3680
  %4194 = vst.msk [vmem:[%s3 + $0x44] sm:$0xf] %vm4176, %v3681
  %4195 = vst.msk [vmem:[%s3 + $0x48] sm:$0xf] %vm4176, %v3682
  %4196 = vst.msk [vmem:[%s3 + $0x4c] sm:$0xf] %vm4176, %v3683
  %4197 = vst.msk [vmem:[%s3 + $0x50] sm:$0xf] %vm4176, %v3684
  %4198 = vst.msk [vmem:[%s3 + $0x54] sm:$0xf] %vm4176, %v3685
  %4199 = vst.msk [vmem:[%s3 + $0x58] sm:$0xf] %vm4176, %v3686
  %4200 = vst.msk [vmem:[%s3 + $0x5c] sm:$0xf] %vm4176, %v3687
  %4201 = vst.msk [vmem:[%s3 + $0x60] sm:$0xf] %vm4176, %v3688
  %4202 = vst.msk [vmem:[%s3 + $0x64] sm:$0xf] %vm4176, %v3689
  %4203 = vst.msk [vmem:[%s3 + $0x68] sm:$0xf] %vm4176, %v3690
  %4204 = vst.msk [vmem:[%s3 + $0x6c] sm:$0xf] %vm4176, %v3691
  %4205 = vst.msk [vmem:[%s3 + $0x70] sm:$0xf] %vm4176, %v3692
  %4206 = vst.msk [vmem:[%s3 + $0x74] sm:$0xf] %vm4176, %v3693
  %4207 = vst.msk [vmem:[%s3 + $0x78] sm:$0xf] %vm4176, %v3694
  %4208 = vst.msk [vmem:[%s3 + $0x7c] sm:$0xf] %vm4176, %v3695
  %4209 = vst.msk [vmem:[%s3 + $0x80] sm:$0xf] %vm4176, %v3696
  %4210 = vst.msk [vmem:[%s3 + $0x84] sm:$0xf] %vm4176, %v3697
  %4211 = vst.msk [vmem:[%s3 + $0x88] sm:$0xf] %vm4176, %v3698
  %4212 = vst.msk [vmem:[%s3 + $0x8c] sm:$0xf] %vm4176, %v3699
  %4213 = vst.msk [vmem:[%s3 + $0x90] sm:$0xf] %vm4176, %v3700
  %4214 = vst.msk [vmem:[%s3 + $0x94] sm:$0xf] %vm4176, %v3701
  %4215 = vst.msk [vmem:[%s3 + $0x98] sm:$0xf] %vm4176, %v3702
  %4216 = vst.msk [vmem:[%s3 + $0x9c] sm:$0xf] %vm4176, %v3703
  %4217 = vst.msk [vmem:[%s3 + $0xa0] sm:$0xf] %vm4176, %v3704
  %4218 = vst.msk [vmem:[%s3 + $0xa4] sm:$0xf] %vm4176, %v3705
  %4219 = vst.msk [vmem:[%s3 + $0xa8] sm:$0xf] %vm4176, %v3706
  %4220 = vst.msk [vmem:[%s3 + $0xac] sm:$0xf] %vm4176, %v3707
  %4221 = vst.msk [vmem:[%s3 + $0xb0] sm:$0xf] %vm4176, %v3708
  %4222 = vst.msk [vmem:[%s3 + $0xb4] sm:$0xf] %vm4176, %v3709
  %4223 = vst.msk [vmem:[%s3 + $0xb8] sm:$0xf] %vm4176, %v3710
  %4224 = vst.msk [vmem:[%s3 + $0xbc] sm:$0xf] %vm4176, %v3711
  %4225 = vst.msk [vmem:[%s3 + $0xc0] sm:$0xf] %vm4176, %v3712
  %4226 = vst.msk [vmem:[%s3 + $0xc4] sm:$0xf] %vm4176, %v3713
  %4227 = vst.msk [vmem:[%s3 + $0xc8] sm:$0xf] %vm4176, %v3714
  %4228 = vst.msk [vmem:[%s3 + $0xcc] sm:$0xf] %vm4176, %v3715
  %4229 = vst.msk [vmem:[%s3 + $0xd0] sm:$0xf] %vm4176, %v3716
  %4230 = vst.msk [vmem:[%s3 + $0xd4] sm:$0xf] %vm4176, %v3717
  %4231 = vst.msk [vmem:[%s3 + $0xd8] sm:$0xf] %vm4176, %v3718
  %4232 = vst.msk [vmem:[%s3 + $0xdc] sm:$0xf] %vm4176, %v3719
  %4233 = vst.msk [vmem:[%s3 + $0xe0] sm:$0xf] %vm4176, %v3720
  %4234 = vst.msk [vmem:[%s3 + $0xe4] sm:$0xf] %vm4176, %v3721
  %4235 = vst.msk [vmem:[%s3 + $0xe8] sm:$0xf] %vm4176, %v3722
  %4236 = vst.msk [vmem:[%s3 + $0xec] sm:$0xf] %vm4176, %v3723
  %4237 = vst.msk [vmem:[%s3 + $0xf0] sm:$0xf] %vm4176, %v3724
  %4238 = vst.msk [vmem:[%s3 + $0xf4] sm:$0xf] %vm4176, %v3725
  %4239 = vst.msk [vmem:[%s3 + $0xf8] sm:$0xf] %vm4176, %v3726
  %4240 = vst.msk [vmem:[%s3 + $0xfc] sm:$0xf] %vm4176, %v3727
  %4241 = vst.msk [vmem:[%s3 + $0x100] sm:$0xf] %vm4176, %v3728
  %4242 = vst.msk [vmem:[%s3 + $0x104] sm:$0xf] %vm4176, %v3729
  %4243 = vst.msk [vmem:[%s3 + $0x108] sm:$0xf] %vm4176, %v3730
  %4244 = vst.msk [vmem:[%s3 + $0x10c] sm:$0xf] %vm4176, %v3731
  %4245 = vst.msk [vmem:[%s3 + $0x110] sm:$0xf] %vm4176, %v3732
  %4246 = vst.msk [vmem:[%s3 + $0x114] sm:$0xf] %vm4176, %v3733
  %4247 = vst.msk [vmem:[%s3 + $0x118] sm:$0xf] %vm4176, %v3734
  %4248 = vst.msk [vmem:[%s3 + $0x11c] sm:$0xf] %vm4176, %v3735
  %4249 = vst.msk [vmem:[%s3 + $0x120] sm:$0xf] %vm4176, %v3736
  %4250 = vst.msk [vmem:[%s3 + $0x124] sm:$0xf] %vm4176, %v3737
  %4251 = vst.msk [vmem:[%s3 + $0x128] sm:$0xf] %vm4176, %v3738
  %4252 = vst.msk [vmem:[%s3 + $0x12c] sm:$0xf] %vm4176, %v3739
  %4253 = vst.msk [vmem:[%s3 + $0x130] sm:$0xf] %vm4176, %v3740
  %4254 = vst.msk [vmem:[%s3 + $0x134] sm:$0xf] %vm4176, %v3741
  %4255 = vst.msk [vmem:[%s3 + $0x138] sm:$0xf] %vm4176, %v3742
  %4256 = vst.msk [vmem:[%s3 + $0x13c] sm:$0xf] %vm4176, %v3743
  %4257 = vst.msk [vmem:[%s3 + $0x140] sm:$0xf] %vm4176, %v3744
  %4258 = vst.msk [vmem:[%s3 + $0x144] sm:$0xf] %vm4176, %v3745
  %4259 = vst.msk [vmem:[%s3 + $0x148] sm:$0xf] %vm4176, %v3746
  %4260 = vst.msk [vmem:[%s3 + $0x14c] sm:$0xf] %vm4176, %v3747
  %4261 = vst.msk [vmem:[%s3 + $0x150] sm:$0xf] %vm4176, %v3748
  %4262 = vst.msk [vmem:[%s3 + $0x154] sm:$0xf] %vm4176, %v3749
  %4263 = vst.msk [vmem:[%s3 + $0x158] sm:$0xf] %vm4176, %v3750
  %4264 = vst.msk [vmem:[%s3 + $0x15c] sm:$0xf] %vm4176, %v3751
  %4265 = vst.msk [vmem:[%s3 + $0x160] sm:$0xf] %vm4176, %v3752
  %4266 = vst.msk [vmem:[%s3 + $0x164] sm:$0xf] %vm4176, %v3753
  %4267 = vst.msk [vmem:[%s3 + $0x168] sm:$0xf] %vm4176, %v3754
  %4268 = vst.msk [vmem:[%s3 + $0x16c] sm:$0xf] %vm4176, %v3755
  %4269 = vst.msk [vmem:[%s3 + $0x170] sm:$0xf] %vm4176, %v3756
  %4270 = vst.msk [vmem:[%s3 + $0x174] sm:$0xf] %vm4176, %v3757
  %4271 = vst.msk [vmem:[%s3 + $0x178] sm:$0xf] %vm4176, %v3758
  %4272 = vst.msk [vmem:[%s3 + $0x17c] sm:$0xf] %vm4176, %v3759
  %4273 = vst.msk [vmem:[%s3 + $0x180] sm:$0xf] %vm4176, %v3760
  %4274 = vst.msk [vmem:[%s3 + $0x184] sm:$0xf] %vm4176, %v3761
  %4275 = vst.msk [vmem:[%s3 + $0x188] sm:$0xf] %vm4176, %v3762
  %4276 = vst.msk [vmem:[%s3 + $0x18c] sm:$0xf] %vm4176, %v3763
  %4277 = vst.msk [vmem:[%s3 + $0x190] sm:$0xf] %vm4176, %v3764
  %4278 = vst.msk [vmem:[%s3 + $0x194] sm:$0xf] %vm4176, %v3765
  %4279 = vst.msk [vmem:[%s3 + $0x198] sm:$0xf] %vm4176, %v3766
  %4280 = vst.msk [vmem:[%s3 + $0x19c] sm:$0xf] %vm4176, %v3767
  %4281 = vst.msk [vmem:[%s3 + $0x1a0] sm:$0xf] %vm4176, %v3768
  %4282 = vst.msk [vmem:[%s3 + $0x1a4] sm:$0xf] %vm4176, %v3769
  %4283 = vst.msk [vmem:[%s3 + $0x1a8] sm:$0xf] %vm4176, %v3770
  %4284 = vst.msk [vmem:[%s3 + $0x1ac] sm:$0xf] %vm4176, %v3771
  %4285 = vst.msk [vmem:[%s3 + $0x1b0] sm:$0xf] %vm4176, %v3772
  %4286 = vst.msk [vmem:[%s3 + $0x1b4] sm:$0xf] %vm4176, %v3773
  %4287 = vst.msk [vmem:[%s3 + $0x1b8] sm:$0xf] %vm4176, %v3774
  %4288 = vst.msk [vmem:[%s3 + $0x1bc] sm:$0xf] %vm4176, %v3775
  %4289 = vst.msk [vmem:[%s3 + $0x1c0] sm:$0xf] %vm4176, %v3776
  %4290 = vst.msk [vmem:[%s3 + $0x1c4] sm:$0xf] %vm4176, %v3777
  %4291 = vst.msk [vmem:[%s3 + $0x1c8] sm:$0xf] %vm4176, %v3778
  %4292 = vst.msk [vmem:[%s3 + $0x1cc] sm:$0xf] %vm4176, %v3779
  %4293 = vst.msk [vmem:[%s3 + $0x1d0] sm:$0xf] %vm4176, %v3780
  %4294 = vst.msk [vmem:[%s3 + $0x1d4] sm:$0xf] %vm4176, %v3781
  %4295 = vst.msk [vmem:[%s3 + $0x1d8] sm:$0xf] %vm4176, %v3782
  %4296 = vst.msk [vmem:[%s3 + $0x1dc] sm:$0xf] %vm4176, %v3783
  %4297 = vst.msk [vmem:[%s3 + $0x1e0] sm:$0xf] %vm4176, %v3784
  %4298 = vst.msk [vmem:[%s3 + $0x1e4] sm:$0xf] %vm4176, %v3785
  %4299 = vst.msk [vmem:[%s3 + $0x1e8] sm:$0xf] %vm4176, %v3786
  %4300 = vst.msk [vmem:[%s3 + $0x1ec] sm:$0xf] %vm4176, %v3787
  %4301 = vst.msk [vmem:[%s3 + $0x1f0] sm:$0xf] %vm4176, %v3788
  %4302 = vst.msk [vmem:[%s3 + $0x1f4] sm:$0xf] %vm4176, %v3789
  %4303 = vst.msk [vmem:[%s3 + $0x1f8] sm:$0xf] %vm4176, %v3790
  %4304 = vst.msk [vmem:[%s3 + $0x1fc] sm:$0xf] %vm4176, %v3791
  %4305 = vst.msk [vmem:[%s3 + $0x200] sm:$0xf] %vm4176, %v3792
  %4306 = vst.msk [vmem:[%s3 + $0x204] sm:$0xf] %vm4176, %v3793
  %4307 = vst.msk [vmem:[%s3 + $0x208] sm:$0xf] %vm4176, %v3794
  %4308 = vst.msk [vmem:[%s3 + $0x20c] sm:$0xf] %vm4176, %v3795
  %4309 = vst.msk [vmem:[%s3 + $0x210] sm:$0xf] %vm4176, %v3796
  %4310 = vst.msk [vmem:[%s3 + $0x214] sm:$0xf] %vm4176, %v3797
  %4311 = vst.msk [vmem:[%s3 + $0x218] sm:$0xf] %vm4176, %v3798
  %4312 = vst.msk [vmem:[%s3 + $0x21c] sm:$0xf] %vm4176, %v3799
  %4313 = vst.msk [vmem:[%s3 + $0x220] sm:$0xf] %vm4176, %v3800
  %4314 = vst.msk [vmem:[%s3 + $0x224] sm:$0xf] %vm4176, %v3801
  %4315 = vst.msk [vmem:[%s3 + $0x228] sm:$0xf] %vm4176, %v3802
  %4316 = vst.msk [vmem:[%s3 + $0x22c] sm:$0xf] %vm4176, %v3803
  %4317 = vst.msk [vmem:[%s3 + $0x230] sm:$0xf] %vm4176, %v3804
  %4318 = vst.msk [vmem:[%s3 + $0x234] sm:$0xf] %vm4176, %v3805
  %4319 = vst.msk [vmem:[%s3 + $0x238] sm:$0xf] %vm4176, %v3806
  %4320 = vst.msk [vmem:[%s3 + $0x23c] sm:$0xf] %vm4176, %v3807
  %4321 = vst.msk [vmem:[%s3 + $0x240] sm:$0xf] %vm4176, %v3808
  %4322 = vst.msk [vmem:[%s3 + $0x244] sm:$0xf] %vm4176, %v3809
  %4323 = vst.msk [vmem:[%s3 + $0x248] sm:$0xf] %vm4176, %v3810
  %4324 = vst.msk [vmem:[%s3 + $0x24c] sm:$0xf] %vm4176, %v3811
  %4325 = vst.msk [vmem:[%s3 + $0x250] sm:$0xf] %vm4176, %v3812
  %4326 = vst.msk [vmem:[%s3 + $0x254] sm:$0xf] %vm4176, %v3813
  %4327 = vst.msk [vmem:[%s3 + $0x258] sm:$0xf] %vm4176, %v3814
  %4328 = vst.msk [vmem:[%s3 + $0x25c] sm:$0xf] %vm4176, %v3815
  %4329 = vst.msk [vmem:[%s3 + $0x260] sm:$0xf] %vm4176, %v3816
  %4330 = vst.msk [vmem:[%s3 + $0x264] sm:$0xf] %vm4176, %v3817
  %4331 = vst.msk [vmem:[%s3 + $0x268] sm:$0xf] %vm4176, %v3818
  %4332 = vst.msk [vmem:[%s3 + $0x26c] sm:$0xf] %vm4176, %v3819
  %4333 = vst.msk [vmem:[%s3 + $0x270] sm:$0xf] %vm4176, %v3820
  %4334 = vst.msk [vmem:[%s3 + $0x274] sm:$0xf] %vm4176, %v3821
  %4335 = vst.msk [vmem:[%s3 + $0x278] sm:$0xf] %vm4176, %v3822
  %4336 = vst.msk [vmem:[%s3 + $0x27c] sm:$0xf] %vm4176, %v3823
  %4337 = vst.msk [vmem:[%s3 + $0x280] sm:$0xf] %vm4176, %v3824
  %4338 = vst.msk [vmem:[%s3 + $0x284] sm:$0xf] %vm4176, %v3825
  %4339 = vst.msk [vmem:[%s3 + $0x288] sm:$0xf] %vm4176, %v3826
  %4340 = vst.msk [vmem:[%s3 + $0x28c] sm:$0xf] %vm4176, %v3827
  %4341 = vst.msk [vmem:[%s3 + $0x290] sm:$0xf] %vm4176, %v3828
  %4342 = vst.msk [vmem:[%s3 + $0x294] sm:$0xf] %vm4176, %v3829
  %4343 = vst.msk [vmem:[%s3 + $0x298] sm:$0xf] %vm4176, %v3830
  %4344 = vst.msk [vmem:[%s3 + $0x29c] sm:$0xf] %vm4176, %v3831
  %4345 = vst.msk [vmem:[%s3 + $0x2a0] sm:$0xf] %vm4176, %v3832
  %4346 = vst.msk [vmem:[%s3 + $0x2a4] sm:$0xf] %vm4176, %v3833
  %4347 = vst.msk [vmem:[%s3 + $0x2a8] sm:$0xf] %vm4176, %v3834
  %4348 = vst.msk [vmem:[%s3 + $0x2ac] sm:$0xf] %vm4176, %v3835
  %4349 = vst.msk [vmem:[%s3 + $0x2b0] sm:$0xf] %vm4176, %v3836
  %4350 = vst.msk [vmem:[%s3 + $0x2b4] sm:$0xf] %vm4176, %v3837
  %4351 = vst.msk [vmem:[%s3 + $0x2b8] sm:$0xf] %vm4176, %v3838
  %4352 = vst.msk [vmem:[%s3 + $0x2bc] sm:$0xf] %vm4176, %v3839
  %4353 = vst.msk [vmem:[%s3 + $0x2c0] sm:$0xf] %vm4176, %v3840
  %4354 = vst.msk [vmem:[%s3 + $0x2c4] sm:$0xf] %vm4176, %v3841
  %4355 = vst.msk [vmem:[%s3 + $0x2c8] sm:$0xf] %vm4176, %v3842
  %4356 = vst.msk [vmem:[%s3 + $0x2cc] sm:$0xf] %vm4176, %v3843
  %4357 = vst.msk [vmem:[%s3 + $0x2d0] sm:$0xf] %vm4176, %v3844
  %4358 = vst.msk [vmem:[%s3 + $0x2d4] sm:$0xf] %vm4176, %v3845
  %4359 = vst.msk [vmem:[%s3 + $0x2d8] sm:$0xf] %vm4176, %v3846
  %4360 = vst.msk [vmem:[%s3 + $0x2dc] sm:$0xf] %vm4176, %v3847
  %4361 = vst.msk [vmem:[%s3 + $0x2e0] sm:$0xf] %vm4176, %v3848
  %4362 = vst.msk [vmem:[%s3 + $0x2e4] sm:$0xf] %vm4176, %v3849
  %4363 = vst.msk [vmem:[%s3 + $0x2e8] sm:$0xf] %vm4176, %v3850
  %4364 = vst.msk [vmem:[%s3 + $0x2ec] sm:$0xf] %vm4176, %v3851
  %4365 = vst.msk [vmem:[%s3 + $0x2f0] sm:$0xf] %vm4176, %v3852
  %4366 = vst.msk [vmem:[%s3 + $0x2f4] sm:$0xf] %vm4176, %v3853
  %4367 = vst.msk [vmem:[%s3 + $0x2f8] sm:$0xf] %vm4176, %v3854
  %4368 = vst.msk [vmem:[%s3 + $0x2fc] sm:$0xf] %vm4176, %v3855
  %4369 = vst.msk [vmem:[%s3 + $0x300] sm:$0xf] %vm4176, %v3856
  %4370 = vst.msk [vmem:[%s3 + $0x304] sm:$0xf] %vm4176, %v3857
  %4371 = vst.msk [vmem:[%s3 + $0x308] sm:$0xf] %vm4176, %v3858
  %4372 = vst.msk [vmem:[%s3 + $0x30c] sm:$0xf] %vm4176, %v3859
  %4373 = vst.msk [vmem:[%s3 + $0x310] sm:$0xf] %vm4176, %v3860
  %4374 = vst.msk [vmem:[%s3 + $0x314] sm:$0xf] %vm4176, %v3861
  %4375 = vst.msk [vmem:[%s3 + $0x318] sm:$0xf] %vm4176, %v3862
  %4376 = vst.msk [vmem:[%s3 + $0x31c] sm:$0xf] %vm4176, %v3863
  %4377 = vst.msk [vmem:[%s3 + $0x320] sm:$0xf] %vm4176, %v3864
  %4378 = vst.msk [vmem:[%s3 + $0x324] sm:$0xf] %vm4176, %v3865
  %4379 = vst.msk [vmem:[%s3 + $0x328] sm:$0xf] %vm4176, %v3866
  %4380 = vst.msk [vmem:[%s3 + $0x32c] sm:$0xf] %vm4176, %v3867
  %4381 = vst.msk [vmem:[%s3 + $0x330] sm:$0xf] %vm4176, %v3868
  %4382 = vst.msk [vmem:[%s3 + $0x334] sm:$0xf] %vm4176, %v3869
  %4383 = vst.msk [vmem:[%s3 + $0x338] sm:$0xf] %vm4176, %v3870
  %4384 = vst.msk [vmem:[%s3 + $0x33c] sm:$0xf] %vm4176, %v3871
  %4385 = vst.msk [vmem:[%s3 + $0x340] sm:$0xf] %vm4176, %v3872
  %4386 = vst.msk [vmem:[%s3 + $0x344] sm:$0xf] %vm4176, %v3873
  %4387 = vst.msk [vmem:[%s3 + $0x348] sm:$0xf] %vm4176, %v3874
  %4388 = vst.msk [vmem:[%s3 + $0x34c] sm:$0xf] %vm4176, %v3875
  %4389 = vst.msk [vmem:[%s3 + $0x350] sm:$0xf] %vm4176, %v3876
  %4390 = vst.msk [vmem:[%s3 + $0x354] sm:$0xf] %vm4176, %v3877
  %4391 = vst.msk [vmem:[%s3 + $0x358] sm:$0xf] %vm4176, %v3878
  %4392 = vst.msk [vmem:[%s3 + $0x35c] sm:$0xf] %vm4176, %v3879
  %4393 = vst.msk [vmem:[%s3 + $0x360] sm:$0xf] %vm4176, %v3880
  %4394 = vst.msk [vmem:[%s3 + $0x364] sm:$0xf] %vm4176, %v3881
  %4395 = vst.msk [vmem:[%s3 + $0x368] sm:$0xf] %vm4176, %v3882
  %4396 = vst.msk [vmem:[%s3 + $0x36c] sm:$0xf] %vm4176, %v3883
  %4397 = vst.msk [vmem:[%s3 + $0x370] sm:$0xf] %vm4176, %v3884
  %4398 = vst.msk [vmem:[%s3 + $0x374] sm:$0xf] %vm4176, %v3885
  %4399 = vst.msk [vmem:[%s3 + $0x378] sm:$0xf] %vm4176, %v3886
  %4400 = vst.msk [vmem:[%s3 + $0x37c] sm:$0xf] %vm4176, %v3887
  %4401 = vst.msk [vmem:[%s3 + $0x380] sm:$0xf] %vm4176, %v3888
  %4402 = vst.msk [vmem:[%s3 + $0x384] sm:$0xf] %vm4176, %v3889
  %4403 = vst.msk [vmem:[%s3 + $0x388] sm:$0xf] %vm4176, %v3890
  %4404 = vst.msk [vmem:[%s3 + $0x38c] sm:$0xf] %vm4176, %v3891
  %4405 = vst.msk [vmem:[%s3 + $0x390] sm:$0xf] %vm4176, %v3892
  %4406 = vst.msk [vmem:[%s3 + $0x394] sm:$0xf] %vm4176, %v3893
  %4407 = vst.msk [vmem:[%s3 + $0x398] sm:$0xf] %vm4176, %v3894
  %4408 = vst.msk [vmem:[%s3 + $0x39c] sm:$0xf] %vm4176, %v3895
  %4409 = vst.msk [vmem:[%s3 + $0x3a0] sm:$0xf] %vm4176, %v3896
  %4410 = vst.msk [vmem:[%s3 + $0x3a4] sm:$0xf] %vm4176, %v3897
  %4411 = vst.msk [vmem:[%s3 + $0x3a8] sm:$0xf] %vm4176, %v3898
  %4412 = vst.msk [vmem:[%s3 + $0x3ac] sm:$0xf] %vm4176, %v3899
  %4413 = vst.msk [vmem:[%s3 + $0x3b0] sm:$0xf] %vm4176, %v3900
  %4414 = vst.msk [vmem:[%s3 + $0x3b4] sm:$0xf] %vm4176, %v3901
  %4415 = vst.msk [vmem:[%s3 + $0x3b8] sm:$0xf] %vm4176, %v3902
  %4416 = vst.msk [vmem:[%s3 + $0x3bc] sm:$0xf] %vm4176, %v3903
  %4417 = vst.msk [vmem:[%s3 + $0x3c0] sm:$0xf] %vm4176, %v3904
  %4418 = vst.msk [vmem:[%s3 + $0x3c4] sm:$0xf] %vm4176, %v3905
  %4419 = vst.msk [vmem:[%s3 + $0x3c8] sm:$0xf] %vm4176, %v3906
  %4420 = vst.msk [vmem:[%s3 + $0x3cc] sm:$0xf] %vm4176, %v3907
  %4421 = vst.msk [vmem:[%s3 + $0x3d0] sm:$0xf] %vm4176, %v3908
  %4422 = vst.msk [vmem:[%s3 + $0x3d4] sm:$0xf] %vm4176, %v3909
  %4423 = vst.msk [vmem:[%s3 + $0x3d8] sm:$0xf] %vm4176, %v3910
  %4424 = vst.msk [vmem:[%s3 + $0x3dc] sm:$0xf] %vm4176, %v3911
  %4425 = vst.msk [vmem:[%s3 + $0x3e0] sm:$0xf] %vm4176, %v3912
  %4426 = vst.msk [vmem:[%s3 + $0x3e4] sm:$0xf] %vm4176, %v3913
  %4427 = vst.msk [vmem:[%s3 + $0x3e8] sm:$0xf] %vm4176, %v3914
  %4428 = vst.msk [vmem:[%s3 + $0x3ec] sm:$0xf] %vm4176, %v3915
  %4429 = vst.msk [vmem:[%s3 + $0x3f0] sm:$0xf] %vm4176, %v3916
  %4430 = vst.msk [vmem:[%s3 + $0x3f4] sm:$0xf] %vm4176, %v3917
  %4431 = vst.msk [vmem:[%s3 + $0x3f8] sm:$0xf] %vm4176, %v3918
  %4432 = vst.msk [vmem:[%s3 + $0x3fc] sm:$0xf] %vm4176, %v3919
  // Predicated region
  $region14: #{discriminator_forward.7} parent=0 // pred_check
    _
  $region15: #{discriminator_forward.7} parent=0 // pred_check_branch
    %4434 = sbr.rel (0) target = $region17
  $region16: #{discriminator_forward.7} parent=0 // pred_region
    _
  $region17: #{discriminator_forward.7} parent=0 // pred_fallthru
    _
  // Predicated region
  $region18: #{discriminator_forward.7} parent=0 // pred_check
    _
  $region19: #{discriminator_forward.7} parent=0 // pred_check_branch
    %4436 = sbr.rel (0) target = $region21
  $region20: #{discriminator_forward.7} parent=0 // pred_region
    _
  $region21: #{discriminator_forward.7} parent=0 // pred_fallthru
    _

// kernel: discriminator_forward.8
$region0: #{discriminator_forward.8}
  #allocation0 [shape = 'u32[]', space=smem, size = 0x4, offset = 0x4, fixed_abs, tag = 'smem constant byte address 0x4 - core index']
  #allocation1 [shape = 'u32[144,128]{1,0:T(1,128)}', space=vmem, size = 0x12000, scoped, tag = 'internal scratch']
  %s0 = inlined_call_operand.vmem [shape: bf16[512,128], index: 0, kind: input, shape index: {}]
  %s1 = inlined_call_operand.vmem [shape: bf16[128,16], index: 1, kind: input, shape index: {}]
  %s2 = inlined_call_operand.vmem [shape: bf16[512,16], index: 2, kind: output, shape index: {0}]
  %s3 = inlined_call_operand.vmem [shape: f32[1,1,16], index: 3, kind: output, shape index: {1}]
  %s4 = inlined_call_operand.vmem [shape: f32[1,1,16], index: 4, kind: output, shape index: {2}]
  %5 = xla_tuple %s2, %s3, %s4
  %s6 = sld [smem:[#allocation0]]
  $region34: #{discriminator_forward.8} parent=0
    _
  %s8 = ssub.s32 1, %s6
  %s9 = scalar_select 0, %s8, %s6
  // Predicated region
  $region2: #{discriminator_forward.8} parent=0 // pred_check
    _
  $region3: #{discriminator_forward.8} parent=0 // pred_check_branch
    %11 = sbr.rel (0) target = $region5
  $region4: #{discriminator_forward.8} parent=0 // pred_region
    _
  $region5: #{discriminator_forward.8} parent=0 // pred_fallthru
    _
  // Predicated region
  $region6: #{discriminator_forward.8} parent=0 // pred_check
    _
  $region7: #{discriminator_forward.8} parent=0 // pred_check_branch
    %13 = sbr.rel (0) target = $region9
  $region8: #{discriminator_forward.8} parent=0 // pred_region
    _
  $region9: #{discriminator_forward.8} parent=0 // pred_fallthru
    _
  %v15 = vld [vmem:[%s0] sm:$0xf]
  %v16 = vld [vmem:[%s0 + $0x4] sm:$0xf]
  %v17 = vld [vmem:[%s0 + $0x8] sm:$0xf]
  %v18 = vld [vmem:[%s0 + $0xc] sm:$0xf]
  %v19 = vld [vmem:[%s0 + $0x10] sm:$0xf]
  %v20 = vld [vmem:[%s0 + $0x14] sm:$0xf]
  %v21 = vld [vmem:[%s0 + $0x18] sm:$0xf]
  %v22 = vld [vmem:[%s0 + $0x1c] sm:$0xf]
  %v23 = vld [vmem:[%s0 + $0x20] sm:$0xf]
  %v24 = vld [vmem:[%s0 + $0x24] sm:$0xf]
  %v25 = vld [vmem:[%s0 + $0x28] sm:$0xf]
  %v26 = vld [vmem:[%s0 + $0x2c] sm:$0xf]
  %v27 = vld [vmem:[%s0 + $0x30] sm:$0xf]
  %v28 = vld [vmem:[%s0 + $0x34] sm:$0xf]
  %v29 = vld [vmem:[%s0 + $0x38] sm:$0xf]
  %v30 = vld [vmem:[%s0 + $0x3c] sm:$0xf]
  %v31 = vld [vmem:[%s0 + $0x40] sm:$0xf]
  %v32 = vld [vmem:[%s0 + $0x44] sm:$0xf]
  %v33 = vld [vmem:[%s0 + $0x48] sm:$0xf]
  %v34 = vld [vmem:[%s0 + $0x4c] sm:$0xf]
  %v35 = vld [vmem:[%s0 + $0x50] sm:$0xf]
  %v36 = vld [vmem:[%s0 + $0x54] sm:$0xf]
  %v37 = vld [vmem:[%s0 + $0x58] sm:$0xf]
  %v38 = vld [vmem:[%s0 + $0x5c] sm:$0xf]
  %v39 = vld [vmem:[%s0 + $0x60] sm:$0xf]
  %v40 = vld [vmem:[%s0 + $0x64] sm:$0xf]
  %v41 = vld [vmem:[%s0 + $0x68] sm:$0xf]
  %v42 = vld [vmem:[%s0 + $0x6c] sm:$0xf]
  %v43 = vld [vmem:[%s0 + $0x70] sm:$0xf]
  %v44 = vld [vmem:[%s0 + $0x74] sm:$0xf]
  %v45 = vld [vmem:[%s0 + $0x78] sm:$0xf]
  %v46 = vld [vmem:[%s0 + $0x7c] sm:$0xf]
  %v47 = vld [vmem:[%s0 + $0x80] sm:$0xf]
  %v48 = vld [vmem:[%s0 + $0x84] sm:$0xf]
  %v49 = vld [vmem:[%s0 + $0x88] sm:$0xf]
  %v50 = vld [vmem:[%s0 + $0x8c] sm:$0xf]
  %v51 = vld [vmem:[%s0 + $0x90] sm:$0xf]
  %v52 = vld [vmem:[%s0 + $0x94] sm:$0xf]
  %v53 = vld [vmem:[%s0 + $0x98] sm:$0xf]
  %v54 = vld [vmem:[%s0 + $0x9c] sm:$0xf]
  %v55 = vld [vmem:[%s0 + $0xa0] sm:$0xf]
  %v56 = vld [vmem:[%s0 + $0xa4] sm:$0xf]
  %v57 = vld [vmem:[%s0 + $0xa8] sm:$0xf]
  %v58 = vld [vmem:[%s0 + $0xac] sm:$0xf]
  %v59 = vld [vmem:[%s0 + $0xb0] sm:$0xf]
  %v60 = vld [vmem:[%s0 + $0xb4] sm:$0xf]
  %v61 = vld [vmem:[%s0 + $0xb8] sm:$0xf]
  %v62 = vld [vmem:[%s0 + $0xbc] sm:$0xf]
  %v63 = vld [vmem:[%s0 + $0xc0] sm:$0xf]
  %v64 = vld [vmem:[%s0 + $0xc4] sm:$0xf]
  %v65 = vld [vmem:[%s0 + $0xc8] sm:$0xf]
  %v66 = vld [vmem:[%s0 + $0xcc] sm:$0xf]
  %v67 = vld [vmem:[%s0 + $0xd0] sm:$0xf]
  %v68 = vld [vmem:[%s0 + $0xd4] sm:$0xf]
  %v69 = vld [vmem:[%s0 + $0xd8] sm:$0xf]
  %v70 = vld [vmem:[%s0 + $0xdc] sm:$0xf]
  %v71 = vld [vmem:[%s0 + $0xe0] sm:$0xf]
  %v72 = vld [vmem:[%s0 + $0xe4] sm:$0xf]
  %v73 = vld [vmem:[%s0 + $0xe8] sm:$0xf]
  %v74 = vld [vmem:[%s0 + $0xec] sm:$0xf]
  %v75 = vld [vmem:[%s0 + $0xf0] sm:$0xf]
  %v76 = vld [vmem:[%s0 + $0xf4] sm:$0xf]
  %v77 = vld [vmem:[%s0 + $0xf8] sm:$0xf]
  %v78 = vld [vmem:[%s0 + $0xfc] sm:$0xf]
  %v79 = vld [vmem:[%s1] sm:$0xf]
  %v80 = vld [vmem:[%s1 + $0x4] sm:$0xf]
  %v81 = vld [vmem:[%s1 + $0x8] sm:$0xf]
  %v82 = vld [vmem:[%s1 + $0xc] sm:$0xf]
  %v83 = vld [vmem:[%s1 + $0x10] sm:$0xf]
  %v84 = vld [vmem:[%s1 + $0x14] sm:$0xf]
  %v85 = vld [vmem:[%s1 + $0x18] sm:$0xf]
  %v86 = vld [vmem:[%s1 + $0x1c] sm:$0xf]
  %v87 = vld [vmem:[%s1 + $0x20] sm:$0xf]
  %v88 = vld [vmem:[%s1 + $0x24] sm:$0xf]
  %v89 = vld [vmem:[%s1 + $0x28] sm:$0xf]
  %v90 = vld [vmem:[%s1 + $0x2c] sm:$0xf]
  %v91 = vld [vmem:[%s1 + $0x30] sm:$0xf]
  %v92 = vld [vmem:[%s1 + $0x34] sm:$0xf]
  %v93 = vld [vmem:[%s1 + $0x38] sm:$0xf]
  %v94 = vld [vmem:[%s1 + $0x3c] sm:$0xf]
  %v159 = vunpack.c.l.b16 %v15
  %v160 = vunpack.c.l.b16 %v16
  %v161 = vunpack.c.l.b16 %v17
  %v162 = vunpack.c.l.b16 %v18
  %v163 = vunpack.c.l.b16 %v19
  %v164 = vunpack.c.l.b16 %v20
  %v165 = vunpack.c.l.b16 %v21
  %v166 = vunpack.c.l.b16 %v22
  %v167 = vunpack.c.l.b16 %v23
  %v168 = vunpack.c.l.b16 %v24
  %v169 = vunpack.c.l.b16 %v25
  %v170 = vunpack.c.l.b16 %v26
  %v171 = vunpack.c.l.b16 %v27
  %v172 = vunpack.c.l.b16 %v28
  %v173 = vunpack.c.l.b16 %v29
  %v174 = vunpack.c.l.b16 %v30
  %v175 = vunpack.c.l.b16 %v31
  %v176 = vunpack.c.l.b16 %v32
  %v177 = vunpack.c.l.b16 %v33
  %v178 = vunpack.c.l.b16 %v34
  %v179 = vunpack.c.l.b16 %v35
  %v180 = vunpack.c.l.b16 %v36
  %v181 = vunpack.c.l.b16 %v37
  %v182 = vunpack.c.l.b16 %v38
  %v183 = vunpack.c.l.b16 %v39
  %v184 = vunpack.c.l.b16 %v40
  %v185 = vunpack.c.l.b16 %v41
  %v186 = vunpack.c.l.b16 %v42
  %v187 = vunpack.c.l.b16 %v43
  %v188 = vunpack.c.l.b16 %v44
  %v189 = vunpack.c.l.b16 %v45
  %v190 = vunpack.c.l.b16 %v46
  %v191 = vunpack.c.l.b16 %v47
  %v192 = vunpack.c.l.b16 %v48
  %v193 = vunpack.c.l.b16 %v49
  %v194 = vunpack.c.l.b16 %v50
  %v195 = vunpack.c.l.b16 %v51
  %v196 = vunpack.c.l.b16 %v52
  %v197 = vunpack.c.l.b16 %v53
  %v198 = vunpack.c.l.b16 %v54
  %v199 = vunpack.c.l.b16 %v55
  %v200 = vunpack.c.l.b16 %v56
  %v201 = vunpack.c.l.b16 %v57
  %v202 = vunpack.c.l.b16 %v58
  %v203 = vunpack.c.l.b16 %v59
  %v204 = vunpack.c.l.b16 %v60
  %v205 = vunpack.c.l.b16 %v61
  %v206 = vunpack.c.l.b16 %v62
  %v207 = vunpack.c.l.b16 %v63
  %v208 = vunpack.c.l.b16 %v64
  %v209 = vunpack.c.l.b16 %v65
  %v210 = vunpack.c.l.b16 %v66
  %v211 = vunpack.c.l.b16 %v67
  %v212 = vunpack.c.l.b16 %v68
  %v213 = vunpack.c.l.b16 %v69
  %v214 = vunpack.c.l.b16 %v70
  %v215 = vunpack.c.l.b16 %v71
  %v216 = vunpack.c.l.b16 %v72
  %v217 = vunpack.c.l.b16 %v73
  %v218 = vunpack.c.l.b16 %v74
  %v219 = vunpack.c.l.b16 %v75
  %v220 = vunpack.c.l.b16 %v76
  %v221 = vunpack.c.l.b16 %v77
  %v222 = vunpack.c.l.b16 %v78
  %v223 = vpack.c.b16 %v160, %v159
  %v224 = vpack.c.b16 %v162, %v161
  %v225 = vpack.c.b16 %v164, %v163
  %v226 = vpack.c.b16 %v166, %v165
  %v227 = vpack.c.b16 %v168, %v167
  %v228 = vpack.c.b16 %v170, %v169
  %v229 = vpack.c.b16 %v172, %v171
  %v230 = vpack.c.b16 %v174, %v173
  %v231 = vpack.c.b16 %v176, %v175
  %v232 = vpack.c.b16 %v178, %v177
  %v233 = vpack.c.b16 %v180, %v179
  %v234 = vpack.c.b16 %v182, %v181
  %v235 = vpack.c.b16 %v184, %v183
  %v236 = vpack.c.b16 %v186, %v185
  %v237 = vpack.c.b16 %v188, %v187
  %v238 = vpack.c.b16 %v190, %v189
  %v239 = vpack.c.b16 %v192, %v191
  %v240 = vpack.c.b16 %v194, %v193
  %v241 = vpack.c.b16 %v196, %v195
  %v242 = vpack.c.b16 %v198, %v197
  %v243 = vpack.c.b16 %v200, %v199
  %v244 = vpack.c.b16 %v202, %v201
  %v245 = vpack.c.b16 %v204, %v203
  %v246 = vpack.c.b16 %v206, %v205
  %v247 = vpack.c.b16 %v208, %v207
  %v248 = vpack.c.b16 %v210, %v209
  %v249 = vpack.c.b16 %v212, %v211
  %v250 = vpack.c.b16 %v214, %v213
  %v251 = vpack.c.b16 %v216, %v215
  %v252 = vpack.c.b16 %v218, %v217
  %v253 = vpack.c.b16 %v220, %v219
  %v254 = vpack.c.b16 %v222, %v221
  %v303 = vunpack.c.l.b16 %v79
  %v304 = vunpack.c.l.b16 %v80
  %v305 = vunpack.c.l.b16 %v81
  %v306 = vunpack.c.l.b16 %v82
  %v307 = vunpack.c.l.b16 %v83
  %v308 = vunpack.c.l.b16 %v84
  %v309 = vunpack.c.l.b16 %v85
  %v310 = vunpack.c.l.b16 %v86
  %v311 = vunpack.c.l.b16 %v87
  %v312 = vunpack.c.l.b16 %v88
  %v313 = vunpack.c.l.b16 %v89
  %v314 = vunpack.c.l.b16 %v90
  %v315 = vunpack.c.l.b16 %v91
  %v316 = vunpack.c.l.b16 %v92
  %v317 = vunpack.c.l.b16 %v93
  %v318 = vunpack.c.l.b16 %v94
  %v319 = vpack.c.b16 %v304, %v303
  %v320 = vpack.c.b16 %v306, %v305
  %v321 = vpack.c.b16 %v308, %v307
  %v322 = vpack.c.b16 %v310, %v309
  %v323 = vpack.c.b16 %v312, %v311
  %v324 = vpack.c.b16 %v314, %v313
  %v325 = vpack.c.b16 %v316, %v315
  %v326 = vpack.c.b16 %v318, %v317
  %335 = vmatprep.subr.bf16.mxu0 0
  %336 = vmatpush1.bf16.msra.mxu0 %v319
  %337 = vmatprep.subr.bf16.mxu0 0
  %338 = vmatpush1.bf16.msra.mxu0 %v320
  %339 = vmatprep.subr.bf16.mxu0 0
  %340 = vmatpush1.bf16.msra.mxu0 %v321
  %341 = vmatprep.subr.bf16.mxu0 0
  %342 = vmatpush1.bf16.msra.mxu0 %v322
  %343 = vmatprep.subr.bf16.mxu0 0
  %344 = vmatpush1.bf16.msra.mxu0 %v323
  %345 = vmatprep.subr.bf16.mxu0 0
  %346 = vmatpush1.bf16.msra.mxu0 %v324
  %347 = vmatprep.subr.bf16.mxu0 0
  %348 = vmatpush1.bf16.msra.mxu0 %v325
  %349 = vmatprep.subr.bf16.mxu0 0
  %350 = vmatpush1.bf16.msra.mxu0 %v326
  %351 = vmatprep.subr.bf16.mxu0 0
  %352 = vmatpush1.bf16.msra.mxu0 0
  %353 = vmatprep.subr.bf16.mxu0 0
  %354 = vmatpush1.bf16.msra.mxu0 0
  %355 = vmatprep.subr.bf16.mxu0 0
  %356 = vmatpush1.bf16.msra.mxu0 0
  %357 = vmatprep.subr.bf16.mxu0 0
  %358 = vmatpush1.bf16.msra.mxu0 0
  %359 = vmatprep.subr.bf16.mxu0 0
  %360 = vmatpush1.bf16.msra.mxu0 0
  %361 = vmatprep.subr.bf16.mxu0 0
  %362 = vmatpush1.bf16.msra.mxu0 0
  %363 = vmatprep.subr.bf16.mxu0 0
  %364 = vmatpush1.bf16.msra.mxu0 0
  %365 = vmatprep.subr.bf16.mxu0 0
  %366 = vmatpush1.bf16.msra.mxu0 0
  %367 = vmatprep.mubr.bf16.mxu0 0
  %368 = vmatmul.mubr.bf16.gmra.mrb[0].mxu0 %v223
  %v369 = vpop.f32.mrb[0].mxu0
  %v370 = vadd.f32 0.0, %v369
  %v371 = vpop.f32.mrb[0].mxu0
  %v372 = vpop.f32.mrb[0].mxu0
  %v373 = vadd.f32 0.0, %v372
  %v374 = vpop.f32.mrb[0].mxu0
  %375 = vmatprep.mubr.bf16.mxu0 0
  %376 = vmatmul.mubr.bf16.gmra.mrb[0].mxu0 %v224
  %v377 = vpop.f32.mrb[0].mxu0
  %v378 = vadd.f32 0.0, %v377
  %v379 = vpop.f32.mrb[0].mxu0
  %v380 = vpop.f32.mrb[0].mxu0
  %v381 = vadd.f32 0.0, %v380
  %v382 = vpop.f32.mrb[0].mxu0
  %383 = vmatprep.mubr.bf16.mxu0 0
  %384 = vmatmul.mubr.bf16.gmra.mrb[0].mxu0 %v225
  %v385 = vpop.f32.mrb[0].mxu0
  %v386 = vadd.f32 0.0, %v385
  %v387 = vpop.f32.mrb[0].mxu0
  %v388 = vpop.f32.mrb[0].mxu0
  %v389 = vadd.f32 0.0, %v388
  %v390 = vpop.f32.mrb[0].mxu0
  %391 = vmatprep.mubr.bf16.mxu0 0
  %392 = vmatmul.mubr.bf16.gmra.mrb[0].mxu0 %v226
  %v393 = vpop.f32.mrb[0].mxu0
  %v394 = vadd.f32 0.0, %v393
  %v395 = vpop.f32.mrb[0].mxu0
  %v396 = vpop.f32.mrb[0].mxu0
  %v397 = vadd.f32 0.0, %v396
  %v398 = vpop.f32.mrb[0].mxu0
  %399 = vmatprep.mubr.bf16.mxu0 0
  %400 = vmatmul.mubr.bf16.gmra.mrb[0].mxu0 %v227
  %v401 = vpop.f32.mrb[0].mxu0
  %v402 = vadd.f32 0.0, %v401
  %v403 = vpop.f32.mrb[0].mxu0
  %v404 = vpop.f32.mrb[0].mxu0
  %v405 = vadd.f32 0.0, %v404
  %v406 = vpop.f32.mrb[0].mxu0
  %407 = vmatprep.mubr.bf16.mxu0 0
  %408 = vmatmul.mubr.bf16.gmra.mrb[0].mxu0 %v228
  %v409 = vpop.f32.mrb[0].mxu0
  %v410 = vadd.f32 0.0, %v409
  %v411 = vpop.f32.mrb[0].mxu0
  %v412 = vpop.f32.mrb[0].mxu0
  %v413 = vadd.f32 0.0, %v412
  %v414 = vpop.f32.mrb[0].mxu0
  %415 = vmatprep.mubr.bf16.mxu0 0
  %416 = vmatmul.mubr.bf16.gmra.mrb[0].mxu0 %v229
  %v417 = vpop.f32.mrb[0].mxu0
  %v418 = vadd.f32 0.0, %v417
  %v419 = vpop.f32.mrb[0].mxu0
  %v420 = vpop.f32.mrb[0].mxu0
  %v421 = vadd.f32 0.0, %v420
  %v422 = vpop.f32.mrb[0].mxu0
  %423 = vmatprep.mubr.bf16.mxu0 0
  %424 = vmatmul.mubr.bf16.gmra.mrb[0].mxu0 %v230
  %v425 = vpop.f32.mrb[0].mxu0
  %v426 = vadd.f32 0.0, %v425
  %v427 = vpop.f32.mrb[0].mxu0
  %v428 = vpop.f32.mrb[0].mxu0
  %v429 = vadd.f32 0.0, %v428
  %v430 = vpop.f32.mrb[0].mxu0
  %431 = vmatprep.mubr.bf16.mxu0 0
  %432 = vmatmul.mubr.bf16.gmra.mrb[0].mxu0 %v231
  %v433 = vpop.f32.mrb[0].mxu0
  %v434 = vadd.f32 0.0, %v433
  %v435 = vpop.f32.mrb[0].mxu0
  %v436 = vpop.f32.mrb[0].mxu0
  %v437 = vadd.f32 0.0, %v436
  %v438 = vpop.f32.mrb[0].mxu0
  %439 = vmatprep.mubr.bf16.mxu0 0
  %440 = vmatmul.mubr.bf16.gmra.mrb[0].mxu0 %v232
  %v441 = vpop.f32.mrb[0].mxu0
  %v442 = vadd.f32 0.0, %v441
  %v443 = vpop.f32.mrb[0].mxu0
  %v444 = vpop.f32.mrb[0].mxu0
  %v445 = vadd.f32 0.0, %v444
  %v446 = vpop.f32.mrb[0].mxu0
  %447 = vmatprep.mubr.bf16.mxu0 0
  %448 = vmatmul.mubr.bf16.gmra.mrb[0].mxu0 %v233
  %v449 = vpop.f32.mrb[0].mxu0
  %v450 = vadd.f32 0.0, %v449
  %v451 = vpop.f32.mrb[0].mxu0
  %v452 = vpop.f32.mrb[0].mxu0
  %v453 = vadd.f32 0.0, %v452
  %v454 = vpop.f32.mrb[0].mxu0
  %455 = vmatprep.mubr.bf16.mxu0 0
  %456 = vmatmul.mubr.bf16.gmra.mrb[0].mxu0 %v234
  %v457 = vpop.f32.mrb[0].mxu0
  %v458 = vadd.f32 0.0, %v457
  %v459 = vpop.f32.mrb[0].mxu0
  %v460 = vpop.f32.mrb[0].mxu0
  %v461 = vadd.f32 0.0, %v460
  %v462 = vpop.f32.mrb[0].mxu0
  %463 = vmatprep.mubr.bf16.mxu0 0
  %464 = vmatmul.mubr.bf16.gmra.mrb[0].mxu0 %v235
  %v465 = vpop.f32.mrb[0].mxu0
  %v466 = vadd.f32 0.0, %v465
  %v467 = vpop.f32.mrb[0].mxu0
  %v468 = vpop.f32.mrb[0].mxu0
  %v469 = vadd.f32 0.0, %v468
  %v470 = vpop.f32.mrb[0].mxu0
  %471 = vmatprep.mubr.bf16.mxu0 0
  %472 = vmatmul.mubr.bf16.gmra.mrb[0].mxu0 %v236
  %v473 = vpop.f32.mrb[0].mxu0
  %v474 = vadd.f32 0.0, %v473
  %v475 = vpop.f32.mrb[0].mxu0
  %v476 = vpop.f32.mrb[0].mxu0
  %v477 = vadd.f32 0.0, %v476
  %v478 = vpop.f32.mrb[0].mxu0
  %479 = vmatprep.mubr.bf16.mxu0 0
  %480 = vmatmul.mubr.bf16.gmra.mrb[0].mxu0 %v237
  %v481 = vpop.f32.mrb[0].mxu0
  %v482 = vadd.f32 0.0, %v481
  %v483 = vpop.f32.mrb[0].mxu0
  %v484 = vpop.f32.mrb[0].mxu0
  %v485 = vadd.f32 0.0, %v484
  %v486 = vpop.f32.mrb[0].mxu0
  %487 = vmatprep.mubr.bf16.mxu0 0
  %488 = vmatmul.mubr.bf16.gmra.mrb[0].mxu0 %v238
  %v489 = vpop.f32.mrb[0].mxu0
  %v490 = vadd.f32 0.0, %v489
  %v491 = vpop.f32.mrb[0].mxu0
  %v492 = vpop.f32.mrb[0].mxu0
  %v493 = vadd.f32 0.0, %v492
  %v494 = vpop.f32.mrb[0].mxu0
  %495 = vmatprep.mubr.bf16.mxu0 0
  %496 = vmatmul.mubr.bf16.gmra.mrb[0].mxu0 %v239
  %v497 = vpop.f32.mrb[0].mxu0
  %v498 = vadd.f32 0.0, %v497
  %v499 = vpop.f32.mrb[0].mxu0
  %v500 = vpop.f32.mrb[0].mxu0
  %v501 = vadd.f32 0.0, %v500
  %v502 = vpop.f32.mrb[0].mxu0
  %503 = vmatprep.mubr.bf16.mxu0 0
  %504 = vmatmul.mubr.bf16.gmra.mrb[0].mxu0 %v240
  %v505 = vpop.f32.mrb[0].mxu0
  %v506 = vadd.f32 0.0, %v505
  %v507 = vpop.f32.mrb[0].mxu0
  %v508 = vpop.f32.mrb[0].mxu0
  %v509 = vadd.f32 0.0, %v508
  %v510 = vpop.f32.mrb[0].mxu0
  %511 = vmatprep.mubr.bf16.mxu0 0
  %512 = vmatmul.mubr.bf16.gmra.mrb[0].mxu0 %v241
  %v513 = vpop.f32.mrb[0].mxu0
  %v514 = vadd.f32 0.0, %v513
  %v515 = vpop.f32.mrb[0].mxu0
  %v516 = vpop.f32.mrb[0].mxu0
  %v517 = vadd.f32 0.0, %v516
  %v518 = vpop.f32.mrb[0].mxu0
  %519 = vmatprep.mubr.bf16.mxu0 0
  %520 = vmatmul.mubr.bf16.gmra.mrb[0].mxu0 %v242
  %v521 = vpop.f32.mrb[0].mxu0
  %v522 = vadd.f32 0.0, %v521
  %v523 = vpop.f32.mrb[0].mxu0
  %v524 = vpop.f32.mrb[0].mxu0
  %v525 = vadd.f32 0.0, %v524
  %v526 = vpop.f32.mrb[0].mxu0
  %527 = vmatprep.mubr.bf16.mxu0 0
  %528 = vmatmul.mubr.bf16.gmra.mrb[0].mxu0 %v243
  %v529 = vpop.f32.mrb[0].mxu0
  %v530 = vadd.f32 0.0, %v529
  %v531 = vpop.f32.mrb[0].mxu0
  %v532 = vpop.f32.mrb[0].mxu0
  %v533 = vadd.f32 0.0, %v532
  %v534 = vpop.f32.mrb[0].mxu0
  %535 = vmatprep.mubr.bf16.mxu0 0
  %536 = vmatmul.mubr.bf16.gmra.mrb[0].mxu0 %v244
  %v537 = vpop.f32.mrb[0].mxu0
  %v538 = vadd.f32 0.0, %v537
  %v539 = vpop.f32.mrb[0].mxu0
  %v540 = vpop.f32.mrb[0].mxu0
  %v541 = vadd.f32 0.0, %v540
  %v542 = vpop.f32.mrb[0].mxu0
  %543 = vmatprep.mubr.bf16.mxu0 0
  %544 = vmatmul.mubr.bf16.gmra.mrb[0].mxu0 %v245
  %v545 = vpop.f32.mrb[0].mxu0
  %v546 = vadd.f32 0.0, %v545
  %v547 = vpop.f32.mrb[0].mxu0
  %v548 = vpop.f32.mrb[0].mxu0
  %v549 = vadd.f32 0.0, %v548
  %v550 = vpop.f32.mrb[0].mxu0
  %551 = vmatprep.mubr.bf16.mxu0 0
  %552 = vmatmul.mubr.bf16.gmra.mrb[0].mxu0 %v246
  %v553 = vpop.f32.mrb[0].mxu0
  %v554 = vadd.f32 0.0, %v553
  %v555 = vpop.f32.mrb[0].mxu0
  %v556 = vpop.f32.mrb[0].mxu0
  %v557 = vadd.f32 0.0, %v556
  %v558 = vpop.f32.mrb[0].mxu0
  %559 = vmatprep.mubr.bf16.mxu0 0
  %560 = vmatmul.mubr.bf16.gmra.mrb[0].mxu0 %v247
  %v561 = vpop.f32.mrb[0].mxu0
  %v562 = vadd.f32 0.0, %v561
  %v563 = vpop.f32.mrb[0].mxu0
  %v564 = vpop.f32.mrb[0].mxu0
  %v565 = vadd.f32 0.0, %v564
  %v566 = vpop.f32.mrb[0].mxu0
  %567 = vmatprep.mubr.bf16.mxu0 0
  %568 = vmatmul.mubr.bf16.gmra.mrb[0].mxu0 %v248
  %v569 = vpop.f32.mrb[0].mxu0
  %v570 = vadd.f32 0.0, %v569
  %v571 = vpop.f32.mrb[0].mxu0
  %v572 = vpop.f32.mrb[0].mxu0
  %v573 = vadd.f32 0.0, %v572
  %v574 = vpop.f32.mrb[0].mxu0
  %575 = vmatprep.mubr.bf16.mxu0 0
  %576 = vmatmul.mubr.bf16.gmra.mrb[0].mxu0 %v249
  %v577 = vpop.f32.mrb[0].mxu0
  %v578 = vadd.f32 0.0, %v577
  %v579 = vpop.f32.mrb[0].mxu0
  %v580 = vpop.f32.mrb[0].mxu0
  %v581 = vadd.f32 0.0, %v580
  %v582 = vpop.f32.mrb[0].mxu0
  %583 = vmatprep.mubr.bf16.mxu0 0
  %584 = vmatmul.mubr.bf16.gmra.mrb[0].mxu0 %v250
  %v585 = vpop.f32.mrb[0].mxu0
  %v586 = vadd.f32 0.0, %v585
  %v587 = vpop.f32.mrb[0].mxu0
  %v588 = vpop.f32.mrb[0].mxu0
  %v589 = vadd.f32 0.0, %v588
  %v590 = vpop.f32.mrb[0].mxu0
  %591 = vmatprep.mubr.bf16.mxu0 0
  %592 = vmatmul.mubr.bf16.gmra.mrb[0].mxu0 %v251
  %v593 = vpop.f32.mrb[0].mxu0
  %v594 = vadd.f32 0.0, %v593
  %v595 = vpop.f32.mrb[0].mxu0
  %v596 = vpop.f32.mrb[0].mxu0
  %v597 = vadd.f32 0.0, %v596
  %v598 = vpop.f32.mrb[0].mxu0
  %599 = vmatprep.mubr.bf16.mxu0 0
  %600 = vmatmul.mubr.bf16.gmra.mrb[0].mxu0 %v252
  %v601 = vpop.f32.mrb[0].mxu0
  %v602 = vadd.f32 0.0, %v601
  %v603 = vpop.f32.mrb[0].mxu0
  %v604 = vpop.f32.mrb[0].mxu0
  %v605 = vadd.f32 0.0, %v604
  %v606 = vpop.f32.mrb[0].mxu0
  %607 = vmatprep.mubr.bf16.mxu0 0
  %608 = vmatmul.mubr.bf16.gmra.mrb[0].mxu0 %v253
  %v609 = vpop.f32.mrb[0].mxu0
  %v610 = vadd.f32 0.0, %v609
  %v611 = vpop.f32.mrb[0].mxu0
  %v612 = vpop.f32.mrb[0].mxu0
  %v613 = vadd.f32 0.0, %v612
  %v614 = vpop.f32.mrb[0].mxu0
  %615 = vmatprep.mubr.bf16.mxu0 0
  %616 = vmatmul.mubr.bf16.gmra.mrb[0].mxu0 %v254
  %v617 = vpop.f32.mrb[0].mxu0
  %v618 = vadd.f32 0.0, %v617
  %v619 = vpop.f32.mrb[0].mxu0
  %v620 = vpop.f32.mrb[0].mxu0
  %v621 = vadd.f32 0.0, %v620
  %v622 = vpop.f32.mrb[0].mxu0
  %623 = vdwg.mxu0
  %v624 = vpack.c.bf16 %v373, %v370
  %v625 = vpack.c.bf16 %v381, %v378
  %v626 = vpack.c.bf16 %v389, %v386
  %v627 = vpack.c.bf16 %v397, %v394
  %v628 = vpack.c.bf16 %v405, %v402
  %v629 = vpack.c.bf16 %v413, %v410
  %v630 = vpack.c.bf16 %v421, %v418
  %v631 = vpack.c.bf16 %v429, %v426
  %v632 = vpack.c.bf16 %v437, %v434
  %v633 = vpack.c.bf16 %v445, %v442
  %v634 = vpack.c.bf16 %v453, %v450
  %v635 = vpack.c.bf16 %v461, %v458
  %v636 = vpack.c.bf16 %v469, %v466
  %v637 = vpack.c.bf16 %v477, %v474
  %v638 = vpack.c.bf16 %v485, %v482
  %v639 = vpack.c.bf16 %v493, %v490
  %v640 = vpack.c.bf16 %v501, %v498
  %v641 = vpack.c.bf16 %v509, %v506
  %v642 = vpack.c.bf16 %v517, %v514
  %v643 = vpack.c.bf16 %v525, %v522
  %v644 = vpack.c.bf16 %v533, %v530
  %v645 = vpack.c.bf16 %v541, %v538
  %v646 = vpack.c.bf16 %v549, %v546
  %v647 = vpack.c.bf16 %v557, %v554
  %v648 = vpack.c.bf16 %v565, %v562
  %v649 = vpack.c.bf16 %v573, %v570
  %v650 = vpack.c.bf16 %v581, %v578
  %v651 = vpack.c.bf16 %v589, %v586
  %v652 = vpack.c.bf16 %v597, %v594
  %v653 = vpack.c.bf16 %v605, %v602
  %v654 = vpack.c.bf16 %v613, %v610
  %v655 = vpack.c.bf16 %v621, %v618
  %v688 = vunpack.c.l.b16 %v624
  %v689 = vunpack.c.h.b16 %v624
  %v690 = vunpack.c.l.b16 %v625
  %v691 = vunpack.c.h.b16 %v625
  %v692 = vunpack.c.l.b16 %v626
  %v693 = vunpack.c.h.b16 %v626
  %v694 = vunpack.c.l.b16 %v627
  %v695 = vunpack.c.h.b16 %v627
  %v696 = vunpack.c.l.b16 %v628
  %v697 = vunpack.c.h.b16 %v628
  %v698 = vunpack.c.l.b16 %v629
  %v699 = vunpack.c.h.b16 %v629
  %v700 = vunpack.c.l.b16 %v630
  %v701 = vunpack.c.h.b16 %v630
  %v702 = vunpack.c.l.b16 %v631
  %v703 = vunpack.c.h.b16 %v631
  %v704 = vunpack.c.l.b16 %v632
  %v705 = vunpack.c.h.b16 %v632
  %v706 = vunpack.c.l.b16 %v633
  %v707 = vunpack.c.h.b16 %v633
  %v708 = vunpack.c.l.b16 %v634
  %v709 = vunpack.c.h.b16 %v634
  %v710 = vunpack.c.l.b16 %v635
  %v711 = vunpack.c.h.b16 %v635
  %v712 = vunpack.c.l.b16 %v636
  %v713 = vunpack.c.h.b16 %v636
  %v714 = vunpack.c.l.b16 %v637
  %v715 = vunpack.c.h.b16 %v637
  %v716 = vunpack.c.l.b16 %v638
  %v717 = vunpack.c.h.b16 %v638
  %v718 = vunpack.c.l.b16 %v639
  %v719 = vunpack.c.h.b16 %v639
  %v720 = vunpack.c.l.b16 %v640
  %v721 = vunpack.c.h.b16 %v640
  %v722 = vunpack.c.l.b16 %v641
  %v723 = vunpack.c.h.b16 %v641
  %v724 = vunpack.c.l.b16 %v642
  %v725 = vunpack.c.h.b16 %v642
  %v726 = vunpack.c.l.b16 %v643
  %v727 = vunpack.c.h.b16 %v643
  %v728 = vunpack.c.l.b16 %v644
  %v729 = vunpack.c.h.b16 %v644
  %v730 = vunpack.c.l.b16 %v645
  %v731 = vunpack.c.h.b16 %v645
  %v732 = vunpack.c.l.b16 %v646
  %v733 = vunpack.c.h.b16 %v646
  %v734 = vunpack.c.l.b16 %v647
  %v735 = vunpack.c.h.b16 %v647
  %v736 = vunpack.c.l.b16 %v648
  %v737 = vunpack.c.h.b16 %v648
  %v738 = vunpack.c.l.b16 %v649
  %v739 = vunpack.c.h.b16 %v649
  %v740 = vunpack.c.l.b16 %v650
  %v741 = vunpack.c.h.b16 %v650
  %v742 = vunpack.c.l.b16 %v651
  %v743 = vunpack.c.h.b16 %v651
  %v744 = vunpack.c.l.b16 %v652
  %v745 = vunpack.c.h.b16 %v652
  %v746 = vunpack.c.l.b16 %v653
  %v747 = vunpack.c.h.b16 %v653
  %v748 = vunpack.c.l.b16 %v654
  %v749 = vunpack.c.h.b16 %v654
  %v750 = vunpack.c.l.b16 %v655
  %v751 = vunpack.c.h.b16 %v655
  %v752 = vpack.c.b16 %v688, %v688
  %v753 = vpack.c.b16 %v689, %v689
  %v754 = vpack.c.b16 %v690, %v690
  %v755 = vpack.c.b16 %v691, %v691
  %v756 = vpack.c.b16 %v692, %v692
  %v757 = vpack.c.b16 %v693, %v693
  %v758 = vpack.c.b16 %v694, %v694
  %v759 = vpack.c.b16 %v695, %v695
  %v760 = vpack.c.b16 %v696, %v696
  %v761 = vpack.c.b16 %v697, %v697
  %v762 = vpack.c.b16 %v698, %v698
  %v763 = vpack.c.b16 %v699, %v699
  %v764 = vpack.c.b16 %v700, %v700
  %v765 = vpack.c.b16 %v701, %v701
  %v766 = vpack.c.b16 %v702, %v702
  %v767 = vpack.c.b16 %v703, %v703
  %v768 = vpack.c.b16 %v704, %v704
  %v769 = vpack.c.b16 %v705, %v705
  %v770 = vpack.c.b16 %v706, %v706
  %v771 = vpack.c.b16 %v707, %v707
  %v772 = vpack.c.b16 %v708, %v708
  %v773 = vpack.c.b16 %v709, %v709
  %v774 = vpack.c.b16 %v710, %v710
  %v775 = vpack.c.b16 %v711, %v711
  %v776 = vpack.c.b16 %v712, %v712
  %v777 = vpack.c.b16 %v713, %v713
  %v778 = vpack.c.b16 %v714, %v714
  %v779 = vpack.c.b16 %v715, %v715
  %v780 = vpack.c.b16 %v716, %v716
  %v781 = vpack.c.b16 %v717, %v717
  %v782 = vpack.c.b16 %v718, %v718
  %v783 = vpack.c.b16 %v719, %v719
  %v784 = vpack.c.b16 %v720, %v720
  %v785 = vpack.c.b16 %v721, %v721
  %v786 = vpack.c.b16 %v722, %v722
  %v787 = vpack.c.b16 %v723, %v723
  %v788 = vpack.c.b16 %v724, %v724
  %v789 = vpack.c.b16 %v725, %v725
  %v790 = vpack.c.b16 %v726, %v726
  %v791 = vpack.c.b16 %v727, %v727
  %v792 = vpack.c.b16 %v728, %v728
  %v793 = vpack.c.b16 %v729, %v729
  %v794 = vpack.c.b16 %v730, %v730
  %v795 = vpack.c.b16 %v731, %v731
  %v796 = vpack.c.b16 %v732, %v732
  %v797 = vpack.c.b16 %v733, %v733
  %v798 = vpack.c.b16 %v734, %v734
  %v799 = vpack.c.b16 %v735, %v735
  %v800 = vpack.c.b16 %v736, %v736
  %v801 = vpack.c.b16 %v737, %v737
  %v802 = vpack.c.b16 %v738, %v738
  %v803 = vpack.c.b16 %v739, %v739
  %v804 = vpack.c.b16 %v740, %v740
  %v805 = vpack.c.b16 %v741, %v741
  %v806 = vpack.c.b16 %v742, %v742
  %v807 = vpack.c.b16 %v743, %v743
  %v808 = vpack.c.b16 %v744, %v744
  %v809 = vpack.c.b16 %v745, %v745
  %v810 = vpack.c.b16 %v746, %v746
  %v811 = vpack.c.b16 %v747, %v747
  %v812 = vpack.c.b16 %v748, %v748
  %v813 = vpack.c.b16 %v749, %v749
  %v814 = vpack.c.b16 %v750, %v750
  %v815 = vpack.c.b16 %v751, %v751
  %vm880 = vcmask 125952
  %881 = vst.msk [vmem:[%s2] sm:$0xf] %vm880, %v752
  %882 = vst.msk [vmem:[%s2 + $0x4] sm:$0xf] %vm880, %v753
  %883 = vst.msk [vmem:[%s2 + $0x8] sm:$0xf] %vm880, %v754
  %884 = vst.msk [vmem:[%s2 + $0xc] sm:$0xf] %vm880, %v755
  %885 = vst.msk [vmem:[%s2 + $0x10] sm:$0xf] %vm880, %v756
  %886 = vst.msk [vmem:[%s2 + $0x14] sm:$0xf] %vm880, %v757
  %887 = vst.msk [vmem:[%s2 + $0x18] sm:$0xf] %vm880, %v758
  %888 = vst.msk [vmem:[%s2 + $0x1c] sm:$0xf] %vm880, %v759
  %889 = vst.msk [vmem:[%s2 + $0x20] sm:$0xf] %vm880, %v760
  %890 = vst.msk [vmem:[%s2 + $0x24] sm:$0xf] %vm880, %v761
  %891 = vst.msk [vmem:[%s2 + $0x28] sm:$0xf] %vm880, %v762
  %892 = vst.msk [vmem:[%s2 + $0x2c] sm:$0xf] %vm880, %v763
  %893 = vst.msk [vmem:[%s2 + $0x30] sm:$0xf] %vm880, %v764
  %894 = vst.msk [vmem:[%s2 + $0x34] sm:$0xf] %vm880, %v765
  %895 = vst.msk [vmem:[%s2 + $0x38] sm:$0xf] %vm880, %v766
  %896 = vst.msk [vmem:[%s2 + $0x3c] sm:$0xf] %vm880, %v767
  %897 = vst.msk [vmem:[%s2 + $0x40] sm:$0xf] %vm880, %v768
  %898 = vst.msk [vmem:[%s2 + $0x44] sm:$0xf] %vm880, %v769
  %899 = vst.msk [vmem:[%s2 + $0x48] sm:$0xf] %vm880, %v770
  %900 = vst.msk [vmem:[%s2 + $0x4c] sm:$0xf] %vm880, %v771
  %901 = vst.msk [vmem:[%s2 + $0x50] sm:$0xf] %vm880, %v772
  %902 = vst.msk [vmem:[%s2 + $0x54] sm:$0xf] %vm880, %v773
  %903 = vst.msk [vmem:[%s2 + $0x58] sm:$0xf] %vm880, %v774
  %904 = vst.msk [vmem:[%s2 + $0x5c] sm:$0xf] %vm880, %v775
  %905 = vst.msk [vmem:[%s2 + $0x60] sm:$0xf] %vm880, %v776
  %906 = vst.msk [vmem:[%s2 + $0x64] sm:$0xf] %vm880, %v777
  %907 = vst.msk [vmem:[%s2 + $0x68] sm:$0xf] %vm880, %v778
  %908 = vst.msk [vmem:[%s2 + $0x6c] sm:$0xf] %vm880, %v779
  %909 = vst.msk [vmem:[%s2 + $0x70] sm:$0xf] %vm880, %v780
  %910 = vst.msk [vmem:[%s2 + $0x74] sm:$0xf] %vm880, %v781
  %911 = vst.msk [vmem:[%s2 + $0x78] sm:$0xf] %vm880, %v782
  %912 = vst.msk [vmem:[%s2 + $0x7c] sm:$0xf] %vm880, %v783
  %913 = vst.msk [vmem:[%s2 + $0x80] sm:$0xf] %vm880, %v784
  %914 = vst.msk [vmem:[%s2 + $0x84] sm:$0xf] %vm880, %v785
  %915 = vst.msk [vmem:[%s2 + $0x88] sm:$0xf] %vm880, %v786
  %916 = vst.msk [vmem:[%s2 + $0x8c] sm:$0xf] %vm880, %v787
  %917 = vst.msk [vmem:[%s2 + $0x90] sm:$0xf] %vm880, %v788
  %918 = vst.msk [vmem:[%s2 + $0x94] sm:$0xf] %vm880, %v789
  %919 = vst.msk [vmem:[%s2 + $0x98] sm:$0xf] %vm880, %v790
  %920 = vst.msk [vmem:[%s2 + $0x9c] sm:$0xf] %vm880, %v791
  %921 = vst.msk [vmem:[%s2 + $0xa0] sm:$0xf] %vm880, %v792
  %922 = vst.msk [vmem:[%s2 + $0xa4] sm:$0xf] %vm880, %v793
  %923 = vst.msk [vmem:[%s2 + $0xa8] sm:$0xf] %vm880, %v794
  %924 = vst.msk [vmem:[%s2 + $0xac] sm:$0xf] %vm880, %v795
  %925 = vst.msk [vmem:[%s2 + $0xb0] sm:$0xf] %vm880, %v796
  %926 = vst.msk [vmem:[%s2 + $0xb4] sm:$0xf] %vm880, %v797
  %927 = vst.msk [vmem:[%s2 + $0xb8] sm:$0xf] %vm880, %v798
  %928 = vst.msk [vmem:[%s2 + $0xbc] sm:$0xf] %vm880, %v799
  %929 = vst.msk [vmem:[%s2 + $0xc0] sm:$0xf] %vm880, %v800
  %930 = vst.msk [vmem:[%s2 + $0xc4] sm:$0xf] %vm880, %v801
  %931 = vst.msk [vmem:[%s2 + $0xc8] sm:$0xf] %vm880, %v802
  %932 = vst.msk [vmem:[%s2 + $0xcc] sm:$0xf] %vm880, %v803
  %933 = vst.msk [vmem:[%s2 + $0xd0] sm:$0xf] %vm880, %v804
  %934 = vst.msk [vmem:[%s2 + $0xd4] sm:$0xf] %vm880, %v805
  %935 = vst.msk [vmem:[%s2 + $0xd8] sm:$0xf] %vm880, %v806
  %936 = vst.msk [vmem:[%s2 + $0xdc] sm:$0xf] %vm880, %v807
  %937 = vst.msk [vmem:[%s2 + $0xe0] sm:$0xf] %vm880, %v808
  %938 = vst.msk [vmem:[%s2 + $0xe4] sm:$0xf] %vm880, %v809
  %939 = vst.msk [vmem:[%s2 + $0xe8] sm:$0xf] %vm880, %v810
  %940 = vst.msk [vmem:[%s2 + $0xec] sm:$0xf] %vm880, %v811
  %941 = vst.msk [vmem:[%s2 + $0xf0] sm:$0xf] %vm880, %v812
  %942 = vst.msk [vmem:[%s2 + $0xf4] sm:$0xf] %vm880, %v813
  %943 = vst.msk [vmem:[%s2 + $0xf8] sm:$0xf] %vm880, %v814
  %944 = vst.msk [vmem:[%s2 + $0xfc] sm:$0xf] %vm880, %v815
  %vm945 = vcmask 130048
  %v946 = vsel %vm945, %v370, 0.0
  %v947 = vsel %vm945, %v373, 0.0
  %v948 = vadd.f32 %v946, %v947
  %v949 = vsel %vm945, %v378, 0.0
  %v950 = vadd.f32 %v948, %v949
  %v951 = vsel %vm945, %v381, 0.0
  %v952 = vadd.f32 %v950, %v951
  %v953 = vsel %vm945, %v386, 0.0
  %v954 = vadd.f32 %v952, %v953
  %v955 = vsel %vm945, %v389, 0.0
  %v956 = vadd.f32 %v954, %v955
  %v957 = vsel %vm945, %v394, 0.0
  %v958 = vadd.f32 %v956, %v957
  %v959 = vsel %vm945, %v397, 0.0
  %v960 = vadd.f32 %v958, %v959
  %v961 = vsel %vm945, %v402, 0.0
  %v962 = vadd.f32 %v960, %v961
  %v963 = vsel %vm945, %v405, 0.0
  %v964 = vadd.f32 %v962, %v963
  %v965 = vsel %vm945, %v410, 0.0
  %v966 = vadd.f32 %v964, %v965
  %v967 = vsel %vm945, %v413, 0.0
  %v968 = vadd.f32 %v966, %v967
  %v969 = vsel %vm945, %v418, 0.0
  %v970 = vadd.f32 %v968, %v969
  %v971 = vsel %vm945, %v421, 0.0
  %v972 = vadd.f32 %v970, %v971
  %v973 = vsel %vm945, %v426, 0.0
  %v974 = vadd.f32 %v972, %v973
  %v975 = vsel %vm945, %v429, 0.0
  %v976 = vadd.f32 %v974, %v975
  %v977 = vsel %vm945, %v434, 0.0
  %v978 = vadd.f32 %v976, %v977
  %v979 = vsel %vm945, %v437, 0.0
  %v980 = vadd.f32 %v978, %v979
  %v981 = vsel %vm945, %v442, 0.0
  %v982 = vadd.f32 %v980, %v981
  %v983 = vsel %vm945, %v445, 0.0
  %v984 = vadd.f32 %v982, %v983
  %v985 = vsel %vm945, %v450, 0.0
  %v986 = vadd.f32 %v984, %v985
  %v987 = vsel %vm945, %v453, 0.0
  %v988 = vadd.f32 %v986, %v987
  %v989 = vsel %vm945, %v458, 0.0
  %v990 = vadd.f32 %v988, %v989
  %v991 = vsel %vm945, %v461, 0.0
  %v992 = vadd.f32 %v990, %v991
  %v993 = vsel %vm945, %v466, 0.0
  %v994 = vadd.f32 %v992, %v993
  %v995 = vsel %vm945, %v469, 0.0
  %v996 = vadd.f32 %v994, %v995
  %v997 = vsel %vm945, %v474, 0.0
  %v998 = vadd.f32 %v996, %v997
  %v999 = vsel %vm945, %v477, 0.0
  %v1000 = vadd.f32 %v998, %v999
  %v1001 = vsel %vm945, %v482, 0.0
  %v1002 = vadd.f32 %v1000, %v1001
  %v1003 = vsel %vm945, %v485, 0.0
  %v1004 = vadd.f32 %v1002, %v1003
  %v1005 = vsel %vm945, %v490, 0.0
  %v1006 = vadd.f32 %v1004, %v1005
  %v1007 = vsel %vm945, %v493, 0.0
  %v1008 = vadd.f32 %v1006, %v1007
  %v1009 = vsel %vm945, %v498, 0.0
  %v1010 = vadd.f32 %v1008, %v1009
  %v1011 = vsel %vm945, %v501, 0.0
  %v1012 = vadd.f32 %v1010, %v1011
  %v1013 = vsel %vm945, %v506, 0.0
  %v1014 = vadd.f32 %v1012, %v1013
  %v1015 = vsel %vm945, %v509, 0.0
  %v1016 = vadd.f32 %v1014, %v1015
  %v1017 = vsel %vm945, %v514, 0.0
  %v1018 = vadd.f32 %v1016, %v1017
  %v1019 = vsel %vm945, %v517, 0.0
  %v1020 = vadd.f32 %v1018, %v1019
  %v1021 = vsel %vm945, %v522, 0.0
  %v1022 = vadd.f32 %v1020, %v1021
  %v1023 = vsel %vm945, %v525, 0.0
  %v1024 = vadd.f32 %v1022, %v1023
  %v1025 = vsel %vm945, %v530, 0.0
  %v1026 = vadd.f32 %v1024, %v1025
  %v1027 = vsel %vm945, %v533, 0.0
  %v1028 = vadd.f32 %v1026, %v1027
  %v1029 = vsel %vm945, %v538, 0.0
  %v1030 = vadd.f32 %v1028, %v1029
  %v1031 = vsel %vm945, %v541, 0.0
  %v1032 = vadd.f32 %v1030, %v1031
  %v1033 = vsel %vm945, %v546, 0.0
  %v1034 = vadd.f32 %v1032, %v1033
  %v1035 = vsel %vm945, %v549, 0.0
  %v1036 = vadd.f32 %v1034, %v1035
  %v1037 = vsel %vm945, %v554, 0.0
  %v1038 = vadd.f32 %v1036, %v1037
  %v1039 = vsel %vm945, %v557, 0.0
  %v1040 = vadd.f32 %v1038, %v1039
  %v1041 = vsel %vm945, %v562, 0.0
  %v1042 = vadd.f32 %v1040, %v1041
  %v1043 = vsel %vm945, %v565, 0.0
  %v1044 = vadd.f32 %v1042, %v1043
  %v1045 = vsel %vm945, %v570, 0.0
  %v1046 = vadd.f32 %v1044, %v1045
  %v1047 = vsel %vm945, %v573, 0.0
  %v1048 = vadd.f32 %v1046, %v1047
  %v1049 = vsel %vm945, %v578, 0.0
  %v1050 = vadd.f32 %v1048, %v1049
  %v1051 = vsel %vm945, %v581, 0.0
  %v1052 = vadd.f32 %v1050, %v1051
  %v1053 = vsel %vm945, %v586, 0.0
  %v1054 = vadd.f32 %v1052, %v1053
  %v1055 = vsel %vm945, %v589, 0.0
  %v1056 = vadd.f32 %v1054, %v1055
  %v1057 = vsel %vm945, %v594, 0.0
  %v1058 = vadd.f32 %v1056, %v1057
  %v1059 = vsel %vm945, %v597, 0.0
  %v1060 = vadd.f32 %v1058, %v1059
  %v1061 = vsel %vm945, %v602, 0.0
  %v1062 = vadd.f32 %v1060, %v1061
  %v1063 = vsel %vm945, %v605, 0.0
  %v1064 = vadd.f32 %v1062, %v1063
  %v1065 = vsel %vm945, %v610, 0.0
  %v1066 = vadd.f32 %v1064, %v1065
  %v1067 = vsel %vm945, %v613, 0.0
  %v1068 = vadd.f32 %v1066, %v1067
  %v1069 = vsel %vm945, %v618, 0.0
  %v1070 = vadd.f32 %v1068, %v1069
  %v1071 = vsel %vm945, %v621, 0.0
  %v1072 = vadd.f32 %v1070, %v1071
  %v1073 = vrot.slane %v1072, 4
  %v1074 = vadd.f32 %v1072, %v1073
  %v1075 = vrot.slane %v1074, 2
  %v1076 = vadd.f32 %v1074, %v1075
  %v1077 = vrot.slane %v1076, 1
  %v1078 = vadd.f32 %v1076, %v1077
  %vm1079 = vcmask 122880
  %1080 = vst.msk [vmem:[%s3] sm:$0x1] %vm1079, %v1078
  %v1081 = vmul.f32 %v370, %v370
  %v1082 = vmul.f32 %v373, %v373
  %v1083 = vmul.f32 %v378, %v378
  %v1084 = vmul.f32 %v381, %v381
  %v1085 = vmul.f32 %v386, %v386
  %v1086 = vmul.f32 %v389, %v389
  %v1087 = vmul.f32 %v394, %v394
  %v1088 = vmul.f32 %v397, %v397
  %v1089 = vmul.f32 %v402, %v402
  %v1090 = vmul.f32 %v405, %v405
  %v1091 = vmul.f32 %v410, %v410
  %v1092 = vmul.f32 %v413, %v413
  %v1093 = vmul.f32 %v418, %v418
  %v1094 = vmul.f32 %v421, %v421
  %v1095 = vmul.f32 %v426, %v426
  %v1096 = vmul.f32 %v429, %v429
  %v1097 = vmul.f32 %v434, %v434
  %v1098 = vmul.f32 %v437, %v437
  %v1099 = vmul.f32 %v442, %v442
  %v1100 = vmul.f32 %v445, %v445
  %v1101 = vmul.f32 %v450, %v450
  %v1102 = vmul.f32 %v453, %v453
  %v1103 = vmul.f32 %v458, %v458
  %v1104 = vmul.f32 %v461, %v461
  %v1105 = vmul.f32 %v466, %v466
  %v1106 = vmul.f32 %v469, %v469
  %v1107 = vmul.f32 %v474, %v474
  %v1108 = vmul.f32 %v477, %v477
  %v1109 = vmul.f32 %v482, %v482
  %v1110 = vmul.f32 %v485, %v485
  %v1111 = vmul.f32 %v490, %v490
  %v1112 = vmul.f32 %v493, %v493
  %v1113 = vmul.f32 %v498, %v498
  %v1114 = vmul.f32 %v501, %v501
  %v1115 = vmul.f32 %v506, %v506
  %v1116 = vmul.f32 %v509, %v509
  %v1117 = vmul.f32 %v514, %v514
  %v1118 = vmul.f32 %v517, %v517
  %v1119 = vmul.f32 %v522, %v522
  %v1120 = vmul.f32 %v525, %v525
  %v1121 = vmul.f32 %v530, %v530
  %v1122 = vmul.f32 %v533, %v533
  %v1123 = vmul.f32 %v538, %v538
  %v1124 = vmul.f32 %v541, %v541
  %v1125 = vmul.f32 %v546, %v546
  %v1126 = vmul.f32 %v549, %v549
  %v1127 = vmul.f32 %v554, %v554
  %v1128 = vmul.f32 %v557, %v557
  %v1129 = vmul.f32 %v562, %v562
  %v1130 = vmul.f32 %v565, %v565
  %v1131 = vmul.f32 %v570, %v570
  %v1132 = vmul.f32 %v573, %v573
  %v1133 = vmul.f32 %v578, %v578
  %v1134 = vmul.f32 %v581, %v581
  %v1135 = vmul.f32 %v586, %v586
  %v1136 = vmul.f32 %v589, %v589
  %v1137 = vmul.f32 %v594, %v594
  %v1138 = vmul.f32 %v597, %v597
  %v1139 = vmul.f32 %v602, %v602
  %v1140 = vmul.f32 %v605, %v605
  %v1141 = vmul.f32 %v610, %v610
  %v1142 = vmul.f32 %v613, %v613
  %v1143 = vmul.f32 %v618, %v618
  %v1144 = vmul.f32 %v621, %v621
  %v1145 = vsel %vm945, %v1081, 0.0
  %v1146 = vsel %vm945, %v1082, 0.0
  %v1147 = vadd.f32 %v1145, %v1146
  %v1148 = vsel %vm945, %v1083, 0.0
  %v1149 = vadd.f32 %v1147, %v1148
  %v1150 = vsel %vm945, %v1084, 0.0
  %v1151 = vadd.f32 %v1149, %v1150
  %v1152 = vsel %vm945, %v1085, 0.0
  %v1153 = vadd.f32 %v1151, %v1152
  %v1154 = vsel %vm945, %v1086, 0.0
  %v1155 = vadd.f32 %v1153, %v1154
  %v1156 = vsel %vm945, %v1087, 0.0
  %v1157 = vadd.f32 %v1155, %v1156
  %v1158 = vsel %vm945, %v1088, 0.0
  %v1159 = vadd.f32 %v1157, %v1158
  %v1160 = vsel %vm945, %v1089, 0.0
  %v1161 = vadd.f32 %v1159, %v1160
  %v1162 = vsel %vm945, %v1090, 0.0
  %v1163 = vadd.f32 %v1161, %v1162
  %v1164 = vsel %vm945, %v1091, 0.0
  %v1165 = vadd.f32 %v1163, %v1164
  %v1166 = vsel %vm945, %v1092, 0.0
  %v1167 = vadd.f32 %v1165, %v1166
  %v1168 = vsel %vm945, %v1093, 0.0
  %v1169 = vadd.f32 %v1167, %v1168
  %v1170 = vsel %vm945, %v1094, 0.0
  %v1171 = vadd.f32 %v1169, %v1170
  %v1172 = vsel %vm945, %v1095, 0.0
  %v1173 = vadd.f32 %v1171, %v1172
  %v1174 = vsel %vm945, %v1096, 0.0
  %v1175 = vadd.f32 %v1173, %v1174
  %v1176 = vsel %vm945, %v1097, 0.0
  %v1177 = vadd.f32 %v1175, %v1176
  %v1178 = vsel %vm945, %v1098, 0.0
  %v1179 = vadd.f32 %v1177, %v1178
  %v1180 = vsel %vm945, %v1099, 0.0
  %v1181 = vadd.f32 %v1179, %v1180
  %v1182 = vsel %vm945, %v1100, 0.0
  %v1183 = vadd.f32 %v1181, %v1182
  %v1184 = vsel %vm945, %v1101, 0.0
  %v1185 = vadd.f32 %v1183, %v1184
  %v1186 = vsel %vm945, %v1102, 0.0
  %v1187 = vadd.f32 %v1185, %v1186
  %v1188 = vsel %vm945, %v1103, 0.0
  %v1189 = vadd.f32 %v1187, %v1188
  %v1190 = vsel %vm945, %v1104, 0.0
  %v1191 = vadd.f32 %v1189, %v1190
  %v1192 = vsel %vm945, %v1105, 0.0
  %v1193 = vadd.f32 %v1191, %v1192
  %v1194 = vsel %vm945, %v1106, 0.0
  %v1195 = vadd.f32 %v1193, %v1194
  %v1196 = vsel %vm945, %v1107, 0.0
  %v1197 = vadd.f32 %v1195, %v1196
  %v1198 = vsel %vm945, %v1108, 0.0
  %v1199 = vadd.f32 %v1197, %v1198
  %v1200 = vsel %vm945, %v1109, 0.0
  %v1201 = vadd.f32 %v1199, %v1200
  %v1202 = vsel %vm945, %v1110, 0.0
  %v1203 = vadd.f32 %v1201, %v1202
  %v1204 = vsel %vm945, %v1111, 0.0
  %v1205 = vadd.f32 %v1203, %v1204
  %v1206 = vsel %vm945, %v1112, 0.0
  %v1207 = vadd.f32 %v1205, %v1206
  %v1208 = vsel %vm945, %v1113, 0.0
  %v1209 = vadd.f32 %v1207, %v1208
  %v1210 = vsel %vm945, %v1114, 0.0
  %v1211 = vadd.f32 %v1209, %v1210
  %v1212 = vsel %vm945, %v1115, 0.0
  %v1213 = vadd.f32 %v1211, %v1212
  %v1214 = vsel %vm945, %v1116, 0.0
  %v1215 = vadd.f32 %v1213, %v1214
  %v1216 = vsel %vm945, %v1117, 0.0
  %v1217 = vadd.f32 %v1215, %v1216
  %v1218 = vsel %vm945, %v1118, 0.0
  %v1219 = vadd.f32 %v1217, %v1218
  %v1220 = vsel %vm945, %v1119, 0.0
  %v1221 = vadd.f32 %v1219, %v1220
  %v1222 = vsel %vm945, %v1120, 0.0
  %v1223 = vadd.f32 %v1221, %v1222
  %v1224 = vsel %vm945, %v1121, 0.0
  %v1225 = vadd.f32 %v1223, %v1224
  %v1226 = vsel %vm945, %v1122, 0.0
  %v1227 = vadd.f32 %v1225, %v1226
  %v1228 = vsel %vm945, %v1123, 0.0
  %v1229 = vadd.f32 %v1227, %v1228
  %v1230 = vsel %vm945, %v1124, 0.0
  %v1231 = vadd.f32 %v1229, %v1230
  %v1232 = vsel %vm945, %v1125, 0.0
  %v1233 = vadd.f32 %v1231, %v1232
  %v1234 = vsel %vm945, %v1126, 0.0
  %v1235 = vadd.f32 %v1233, %v1234
  %v1236 = vsel %vm945, %v1127, 0.0
  %v1237 = vadd.f32 %v1235, %v1236
  %v1238 = vsel %vm945, %v1128, 0.0
  %v1239 = vadd.f32 %v1237, %v1238
  %v1240 = vsel %vm945, %v1129, 0.0
  %v1241 = vadd.f32 %v1239, %v1240
  %v1242 = vsel %vm945, %v1130, 0.0
  %v1243 = vadd.f32 %v1241, %v1242
  %v1244 = vsel %vm945, %v1131, 0.0
  %v1245 = vadd.f32 %v1243, %v1244
  %v1246 = vsel %vm945, %v1132, 0.0
  %v1247 = vadd.f32 %v1245, %v1246
  %v1248 = vsel %vm945, %v1133, 0.0
  %v1249 = vadd.f32 %v1247, %v1248
  %v1250 = vsel %vm945, %v1134, 0.0
  %v1251 = vadd.f32 %v1249, %v1250
  %v1252 = vsel %vm945, %v1135, 0.0
  %v1253 = vadd.f32 %v1251, %v1252
  %v1254 = vsel %vm945, %v1136, 0.0
  %v1255 = vadd.f32 %v1253, %v1254
  %v1256 = vsel %vm945, %v1137, 0.0
  %v1257 = vadd.f32 %v1255, %v1256
  %v1258 = vsel %vm945, %v1138, 0.0
  %v1259 = vadd.f32 %v1257, %v1258
  %v1260 = vsel %vm945, %v1139, 0.0
  %v1261 = vadd.f32 %v1259, %v1260
  %v1262 = vsel %vm945, %v1140, 0.0
  %v1263 = vadd.f32 %v1261, %v1262
  %v1264 = vsel %vm945, %v1141, 0.0
  %v1265 = vadd.f32 %v1263, %v1264
  %v1266 = vsel %vm945, %v1142, 0.0
  %v1267 = vadd.f32 %v1265, %v1266
  %v1268 = vsel %vm945, %v1143, 0.0
  %v1269 = vadd.f32 %v1267, %v1268
  %v1270 = vsel %vm945, %v1144, 0.0
  %v1271 = vadd.f32 %v1269, %v1270
  %v1272 = vrot.slane %v1271, 4
  %v1273 = vadd.f32 %v1271, %v1272
  %v1274 = vrot.slane %v1273, 2
  %v1275 = vadd.f32 %v1273, %v1274
  %v1276 = vrot.slane %v1275, 1
  %v1277 = vadd.f32 %v1275, %v1276
  %1278 = vst.msk [vmem:[%s4] sm:$0x1] %vm1079, %v1277
  // Predicated region
  $region10: #{discriminator_forward.8} parent=0 // pred_check
    _
  $region11: #{discriminator_forward.8} parent=0 // pred_check_branch
    %1280 = sbr.rel (0) target = $region13
  $region12: #{discriminator_forward.8} parent=0 // pred_region
    _
  $region13: #{discriminator_forward.8} parent=0 // pred_fallthru
    _
  // Predicated region
  $region14: #{discriminator_forward.8} parent=0 // pred_check
    _
  $region15: #{discriminator_forward.8} parent=0 // pred_check_branch
    %1282 = sbr.rel (0) target = $region17
  $region16: #{discriminator_forward.8} parent=0 // pred_region
    _
  $region17: #{discriminator_forward.8} parent=0 // pred_fallthru
    _
  // Predicated region
  $region18: #{discriminator_forward.8} parent=0 // pred_check
    _
  $region19: #{discriminator_forward.8} parent=0 // pred_check_branch
    %1284 = sbr.rel (0) target = $region21
  $region20: #{discriminator_forward.8} parent=0 // pred_region
    _
  $region21: #{discriminator_forward.8} parent=0 // pred_fallthru
    _
  // Predicated region
  $region22: #{discriminator_forward.8} parent=0 // pred_check
    _
  $region23: #{discriminator_forward.8} parent=0 // pred_check_branch
    %1286 = sbr.rel (0) target = $region25
  $region24: #{discriminator_forward.8} parent=0 // pred_region
    _
  $region25: #{discriminator_forward.8} parent=0 // pred_fallthru
    _
  // Predicated region
  $region26: #{discriminator_forward.8} parent=0 // pred_check
    _
  $region27: #{discriminator_forward.8} parent=0 // pred_check_branch
    %1288 = sbr.rel (0) target = $region29
  $region28: #{discriminator_forward.8} parent=0 // pred_region
    _
  $region29: #{discriminator_forward.8} parent=0 // pred_fallthru
    _
  // Predicated region
  $region30: #{discriminator_forward.8} parent=0 // pred_check
    _
  $region31: #{discriminator_forward.8} parent=0 // pred_check_branch
    %1290 = sbr.rel (0) target = $region33
  $region32: #{discriminator_forward.8} parent=0 // pred_region
    _
  $region33: #{discriminator_forward.8} parent=0 // pred_fallthru
    _

// kernel: tile.33
$region0: #{tile.33}
  #allocation0 [shape = 's32[1]{0}', space=sflag, size = 0x4, scoped, tag = 'scoped memory for tile.33']
  %s0 = inlined_call_operand.vmem [shape: f32[16], index: 0, kind: input, shape index: {}]
  %s1 = inlined_call_operand.vmem [shape: f32[8,16], index: 1, kind: output, shape index: {}]
  // Predicated region
  $region2: #{tile.33} parent=0 // pred_check
    _
  $region3: #{tile.33} parent=0 // pred_check_branch
    %3 = sbr.rel (0) target = $region5
  $region4: #{tile.33} parent=0 // pred_region
    _
  $region5: #{tile.33} parent=0 // pred_fallthru
    _
  %v4 = vld [vmem:[%s0] ss:$0 sm:$0xff]
  %5 = vst [vmem:[%s1] sm:$0xff] %v4

// kernel: tile.34
$region0: #{tile.34}
  %s0 = inlined_call_operand.vmem [shape: f32[8,16], index: 0, kind: input, shape index: {}]
  %s1 = inlined_call_operand.vmem [shape: f32[1,128], index: 1, kind: output, shape index: {}]
  $region1: #{tile.34} parent=0
    #allocation0 [shape = 'u8[4096]{0}', space=vmem, size = 0x1000, scoped, tag = 'scoped mem for output reshape']
    %v2 = vld [vmem:[%s0] sm:$0x1]
    %vm3 = vcmask 130048
    %4 = vst.msk [vmem:[#allocation0] sm:$0x1] %vm3, %v2
    %s5 = scalar_lea.vmem %s0, 7
    %v6 = vld [vmem:[%s5] sm:$0x1]
    %7 = vrot.lane.b32.xlu0 %v6, 112
    %v8 = vpop.permute.xlu0 %7
    %vm9 = vcmask 1048448
    %10 = vst.msk [vmem:[#allocation0] sm:$0x1] %vm9, %v8
    %s11 = scalar_lea.vmem %s0, 6
    %v12 = vld [vmem:[%s11] sm:$0x1]
    %13 = vrot.lane.b32.xlu0 %v12, 96
    %v14 = vpop.permute.xlu0 %13
    %vm15 = vcmask 917248
    %16 = vst.msk [vmem:[#allocation0] sm:$0x1] %vm15, %v14
    %s17 = scalar_lea.vmem %s0, 5
    %v18 = vld [vmem:[%s17] sm:$0x1]
    %19 = vrot.lane.b32.xlu0 %v18, 80
    %v20 = vpop.permute.xlu0 %19
    %vm21 = vcmask 786048
    %22 = vst.msk [vmem:[#allocation0] sm:$0x1] %vm21, %v20
    %s23 = scalar_lea.vmem %s0, 4
    %v24 = vld [vmem:[%s23] sm:$0x1]
    %25 = vrot.lane.b32.xlu0 %v24, 64
    %v26 = vpop.permute.xlu0 %25
    %vm27 = vcmask 654848
    %28 = vst.msk [vmem:[#allocation0] sm:$0x1] %vm27, %v26
    %s29 = scalar_lea.vmem %s0, 3
    %v30 = vld [vmem:[%s29] sm:$0x1]
    %31 = vrot.lane.b32.xlu0 %v30, 48
    %v32 = vpop.permute.xlu0 %31
    %vm33 = vcmask 523648
    %34 = vst.msk [vmem:[#allocation0] sm:$0x1] %vm33, %v32
    %s35 = scalar_lea.vmem %s0, 2
    %v36 = vld [vmem:[%s35] sm:$0x1]
    %37 = vrot.lane.b32.xlu0 %v36, 32
    %v38 = vpop.permute.xlu0 %37
    %vm39 = vcmask 392448
    %40 = vst.msk [vmem:[#allocation0] sm:$0x1] %vm39, %v38
    %s41 = scalar_lea.vmem %s0, 1
    %v42 = vld [vmem:[%s41] sm:$0x1]
    %43 = vrot.lane.b32.xlu0 %v42, 16
    %v44 = vpop.permute.xlu0 %43
    %vm45 = vcmask 261248
    %46 = vst.msk [vmem:[#allocation0] sm:$0x1] %vm45, %v44
    %s48 = sshllo.u32 0, 1
    %v50 = vld [vmem:[#allocation0] sm:%s48]
    %s51 = sshllo.u32 0, 1
    %52 = vst [vmem:[%s1] sm:%s51] %v50

// kernel: discriminator_forward.9
$region0: #{discriminator_forward.9}
  #allocation0 [shape = 'u32[]', space=smem, size = 0x4, offset = 0x4, fixed_abs, tag = 'smem constant byte address 0x4 - core index']
  #allocation1 [shape = 'u32[144,128]{1,0:T(1,128)}', space=vmem, size = 0x12000, scoped, tag = 'internal scratch']
  %s0 = inlined_call_operand.vmem [shape: bf16[64,128], index: 0, kind: input, shape index: {}]
  %s1 = inlined_call_operand.vmem [shape: f32[1,128], index: 1, kind: input, shape index: {}]
  %s2 = inlined_call_operand.vmem [shape: f32[1,128], index: 2, kind: input, shape index: {}]
  %s3 = inlined_call_operand.vmem [shape: bf16[64,128], index: 3, kind: output, shape index: {}]
  %s4 = sld [smem:[#allocation0]]
  $region22: #{discriminator_forward.9} parent=0
    _
  %s6 = ssub.s32 1, %s4
  %s7 = scalar_select 0, %s6, %s4
  // Predicated region
  $region2: #{discriminator_forward.9} parent=0 // pred_check
    _
  $region3: #{discriminator_forward.9} parent=0 // pred_check_branch
    %9 = sbr.rel (0) target = $region5
  $region4: #{discriminator_forward.9} parent=0 // pred_region
    _
  $region5: #{discriminator_forward.9} parent=0 // pred_fallthru
    _
  // Predicated region
  $region6: #{discriminator_forward.9} parent=0 // pred_check
    _
  $region7: #{discriminator_forward.9} parent=0 // pred_check_branch
    %11 = sbr.rel (0) target = $region9
  $region8: #{discriminator_forward.9} parent=0 // pred_region
    _
  $region9: #{discriminator_forward.9} parent=0 // pred_fallthru
    _
  // Predicated region
  $region10: #{discriminator_forward.9} parent=0 // pred_check
    _
  $region11: #{discriminator_forward.9} parent=0 // pred_check_branch
    %13 = sbr.rel (0) target = $region13
  $region12: #{discriminator_forward.9} parent=0 // pred_region
    _
  $region13: #{discriminator_forward.9} parent=0 // pred_fallthru
    _
  %v14 = vld [vmem:[%s0] sm:$0xf]
  %v15 = vld [vmem:[%s0 + $0x4] sm:$0xf]
  %v16 = vld [vmem:[%s0 + $0x8] sm:$0xf]
  %v17 = vld [vmem:[%s0 + $0xc] sm:$0xf]
  %v18 = vld [vmem:[%s0 + $0x10] sm:$0xf]
  %v19 = vld [vmem:[%s0 + $0x14] sm:$0xf]
  %v20 = vld [vmem:[%s0 + $0x18] sm:$0xf]
  %v21 = vld [vmem:[%s0 + $0x1c] sm:$0xf]
  %v22 = vunpack.c.l.bf16 %v14
  %v23 = vunpack.c.l.bf16 %v15
  %v24 = vunpack.c.l.bf16 %v16
  %v25 = vunpack.c.l.bf16 %v17
  %v26 = vunpack.c.l.bf16 %v18
  %v27 = vunpack.c.l.bf16 %v19
  %v28 = vunpack.c.l.bf16 %v20
  %v29 = vunpack.c.l.bf16 %v21
  %v30 = vld [vmem:[%s1] sm:$0x1]
  %v32 = vlaneseq
  %v33 = vshrl.u32 %v32, 7
  %v34 = vsub.s32 0, %v33
  %v35 = vrot.slane %v30, %v34
  %v37 = vmul.f32 %v22, %v35
  %v38 = vmul.f32 %v23, %v35
  %v39 = vmul.f32 %v24, %v35
  %v40 = vmul.f32 %v25, %v35
  %v41 = vmul.f32 %v26, %v35
  %v42 = vmul.f32 %v27, %v35
  %v43 = vmul.f32 %v28, %v35
  %v44 = vmul.f32 %v29, %v35
  %v45 = vld [vmem:[%s2] sm:$0x1]
  %v47 = vlaneseq
  %v48 = vshrl.u32 %v47, 7
  %v49 = vsub.s32 0, %v48
  %v50 = vrot.slane %v45, %v49
  %v52 = vadd.f32 %v37, %v50
  %v53 = vadd.f32 %v38, %v50
  %v54 = vadd.f32 %v39, %v50
  %v55 = vadd.f32 %v40, %v50
  %v56 = vadd.f32 %v41, %v50
  %v57 = vadd.f32 %v42, %v50
  %v58 = vadd.f32 %v43, %v50
  %v59 = vadd.f32 %v44, %v50
  %vm60 = vcmp.gt.f32.partialorder %v52, 0.0
  %vm61 = vcmp.gt.f32.partialorder %v53, 0.0
  %vm62 = vcmp.gt.f32.partialorder %v54, 0.0
  %vm63 = vcmp.gt.f32.partialorder %v55, 0.0
  %vm64 = vcmp.gt.f32.partialorder %v56, 0.0
  %vm65 = vcmp.gt.f32.partialorder %v57, 0.0
  %vm66 = vcmp.gt.f32.partialorder %v58, 0.0
  %vm67 = vcmp.gt.f32.partialorder %v59, 0.0
  %v68 = vmul.f32 %v52, 0.2
  %v69 = vmul.f32 %v53, 0.2
  %v70 = vmul.f32 %v54, 0.2
  %v71 = vmul.f32 %v55, 0.2
  %v72 = vmul.f32 %v56, 0.2
  %v73 = vmul.f32 %v57, 0.2
  %v74 = vmul.f32 %v58, 0.2
  %v75 = vmul.f32 %v59, 0.2
  %v76 = vsel %vm60, %v52, %v68
  %v77 = vsel %vm61, %v53, %v69
  %v78 = vsel %vm62, %v54, %v70
  %v79 = vsel %vm63, %v55, %v71
  %v80 = vsel %vm64, %v56, %v72
  %v81 = vsel %vm65, %v57, %v73
  %v82 = vsel %vm66, %v58, %v74
  %v83 = vsel %vm67, %v59, %v75
  %v84 = vpack.c.bf16 %v77, %v76
  %v85 = vpack.c.bf16 %v79, %v78
  %v86 = vpack.c.bf16 %v81, %v80
  %v87 = vpack.c.bf16 %v83, %v82
  %v92 = vunpack.c.l.b16 %v84
  %v93 = vunpack.c.h.b16 %v84
  %v94 = vunpack.c.l.b16 %v85
  %v95 = vunpack.c.h.b16 %v85
  %v96 = vunpack.c.l.b16 %v86
  %v97 = vunpack.c.h.b16 %v86
  %v98 = vunpack.c.l.b16 %v87
  %v99 = vunpack.c.h.b16 %v87
  %v100 = vpack.c.b16 %v92, %v92
  %v101 = vpack.c.b16 %v93, %v93
  %v102 = vpack.c.b16 %v94, %v94
  %v103 = vpack.c.b16 %v95, %v95
  %v104 = vpack.c.b16 %v96, %v96
  %v105 = vpack.c.b16 %v97, %v97
  %v106 = vpack.c.b16 %v98, %v98
  %v107 = vpack.c.b16 %v99, %v99
  %116 = vst [vmem:[%s3] sm:$0xf] %v100
  %117 = vst [vmem:[%s3 + $0x4] sm:$0xf] %v101
  %118 = vst [vmem:[%s3 + $0x8] sm:$0xf] %v102
  %119 = vst [vmem:[%s3 + $0xc] sm:$0xf] %v103
  %120 = vst [vmem:[%s3 + $0x10] sm:$0xf] %v104
  %121 = vst [vmem:[%s3 + $0x14] sm:$0xf] %v105
  %122 = vst [vmem:[%s3 + $0x18] sm:$0xf] %v106
  %123 = vst [vmem:[%s3 + $0x1c] sm:$0xf] %v107
  // Predicated region
  $region14: #{discriminator_forward.9} parent=0 // pred_check
    _
  $region15: #{discriminator_forward.9} parent=0 // pred_check_branch
    %125 = sbr.rel (0) target = $region17
  $region16: #{discriminator_forward.9} parent=0 // pred_region
    _
  $region17: #{discriminator_forward.9} parent=0 // pred_fallthru
    _
  // Predicated region
  $region18: #{discriminator_forward.9} parent=0 // pred_check
    _
  $region19: #{discriminator_forward.9} parent=0 // pred_check_branch
    %127 = sbr.rel (0) target = $region21
  $region20: #{discriminator_forward.9} parent=0 // pred_region
    _
  $region21: #{discriminator_forward.9} parent=0 // pred_fallthru
    _

// kernel: discriminator_forward.10
$region0: #{discriminator_forward.10}
  #allocation0 [shape = 'u32[]', space=smem, size = 0x4, offset = 0x4, fixed_abs, tag = 'smem constant byte address 0x4 - core index']
  #allocation1 [shape = 'u32[144,128]{1,0:T(1,128)}', space=vmem, size = 0x12000, scoped, tag = 'internal scratch']
  %s0 = inlined_call_operand.vmem [shape: bf16[128,256], index: 0, kind: input, shape index: {}]
  %s1 = inlined_call_operand.vmem [shape: bf16[256,32], index: 1, kind: input, shape index: {}]
  %s2 = inlined_call_operand.vmem [shape: bf16[128,32], index: 2, kind: output, shape index: {0}]
  %s3 = inlined_call_operand.vmem [shape: f32[1,1,32], index: 3, kind: output, shape index: {1}]
  %s4 = inlined_call_operand.vmem [shape: f32[1,1,32], index: 4, kind: output, shape index: {2}]
  %5 = xla_tuple %s2, %s3, %s4
  %s6 = sld [smem:[#allocation0]]
  $region34: #{discriminator_forward.10} parent=0
    _
  %s8 = ssub.s32 1, %s6
  %s9 = scalar_select 0, %s8, %s6
  // Predicated region
  $region2: #{discriminator_forward.10} parent=0 // pred_check
    _
  $region3: #{discriminator_forward.10} parent=0 // pred_check_branch
    %11 = sbr.rel (0) target = $region5
  $region4: #{discriminator_forward.10} parent=0 // pred_region
    _
  $region5: #{discriminator_forward.10} parent=0 // pred_fallthru
    _
  // Predicated region
  $region6: #{discriminator_forward.10} parent=0 // pred_check
    _
  $region7: #{discriminator_forward.10} parent=0 // pred_check_branch
    %13 = sbr.rel (0) target = $region9
  $region8: #{discriminator_forward.10} parent=0 // pred_region
    _
  $region9: #{discriminator_forward.10} parent=0 // pred_fallthru
    _
  %v15 = vld [vmem:[%s0] sm:$0xff]
  %v16 = vld [vmem:[%s0 + $0x8] sm:$0xff]
  %v17 = vld [vmem:[%s0 + $0x10] sm:$0xff]
  %v18 = vld [vmem:[%s0 + $0x18] sm:$0xff]
  %v19 = vld [vmem:[%s0 + $0x20] sm:$0xff]
  %v20 = vld [vmem:[%s0 + $0x28] sm:$0xff]
  %v21 = vld [vmem:[%s0 + $0x30] sm:$0xff]
  %v22 = vld [vmem:[%s0 + $0x38] sm:$0xff]
  %v23 = vld [vmem:[%s0 + $0x40] sm:$0xff]
  %v24 = vld [vmem:[%s0 + $0x48] sm:$0xff]
  %v25 = vld [vmem:[%s0 + $0x50] sm:$0xff]
  %v26 = vld [vmem:[%s0 + $0x58] sm:$0xff]
  %v27 = vld [vmem:[%s0 + $0x60] sm:$0xff]
  %v28 = vld [vmem:[%s0 + $0x68] sm:$0xff]
  %v29 = vld [vmem:[%s0 + $0x70] sm:$0xff]
  %v30 = vld [vmem:[%s0 + $0x78] sm:$0xff]
  %v31 = vld [vmem:[%s1] sm:$0xf]
  %v32 = vld [vmem:[%s1 + $0x4] sm:$0xf]
  %v33 = vld [vmem:[%s1 + $0x8] sm:$0xf]
  %v34 = vld [vmem:[%s1 + $0xc] sm:$0xf]
  %v35 = vld [vmem:[%s1 + $0x10] sm:$0xf]
  %v36 = vld [vmem:[%s1 + $0x14] sm:$0xf]
  %v37 = vld [vmem:[%s1 + $0x18] sm:$0xf]
  %v38 = vld [vmem:[%s1 + $0x1c] sm:$0xf]
  %v39 = vld [vmem:[%s1 + $0x20] sm:$0xf]
  %v40 = vld [vmem:[%s1 + $0x24] sm:$0xf]
  %v41 = vld [vmem:[%s1 + $0x28] sm:$0xf]
  %v42 = vld [vmem:[%s1 + $0x2c] sm:$0xf]
  %v43 = vld [vmem:[%s1 + $0x30] sm:$0xf]
  %v44 = vld [vmem:[%s1 + $0x34] sm:$0xf]
  %v45 = vld [vmem:[%s1 + $0x38] sm:$0xf]
  %v46 = vld [vmem:[%s1 + $0x3c] sm:$0xf]
  %v47 = vld [vmem:[%s1 + $0x40] sm:$0xf]
  %v48 = vld [vmem:[%s1 + $0x44] sm:$0xf]
  %v49 = vld [vmem:[%s1 + $0x48] sm:$0xf]
  %v50 = vld [vmem:[%s1 + $0x4c] sm:$0xf]
  %v51 = vld [vmem:[%s1 + $0x50] sm:$0xf]
  %v52 = vld [vmem:[%s1 + $0x54] sm:$0xf]
  %v53 = vld [vmem:[%s1 + $0x58] sm:$0xf]
  %v54 = vld [vmem:[%s1 + $0x5c] sm:$0xf]
  %v55 = vld [vmem:[%s1 + $0x60] sm:$0xf]
  %v56 = vld [vmem:[%s1 + $0x64] sm:$0xf]
  %v57 = vld [vmem:[%s1 + $0x68] sm:$0xf]
  %v58 = vld [vmem:[%s1 + $0x6c] sm:$0xf]
  %v59 = vld [vmem:[%s1 + $0x70] sm:$0xf]
  %v60 = vld [vmem:[%s1 + $0x74] sm:$0xf]
  %v61 = vld [vmem:[%s1 + $0x78] sm:$0xf]
  %v62 = vld [vmem:[%s1 + $0x7c] sm:$0xf]
  %v79 = vunpack.c.l.b16 %v15
  %v80 = vunpack.c.h.b16 %v15
  %v81 = vunpack.c.l.b16 %v16
  %v82 = vunpack.c.h.b16 %v16
  %v83 = vunpack.c.l.b16 %v17
  %v84 = vunpack.c.h.b16 %v17
  %v85 = vunpack.c.l.b16 %v18
  %v86 = vunpack.c.h.b16 %v18
  %v87 = vunpack.c.l.b16 %v19
  %v88 = vunpack.c.h.b16 %v19
  %v89 = vunpack.c.l.b16 %v20
  %v90 = vunpack.c.h.b16 %v20
  %v91 = vunpack.c.l.b16 %v21
  %v92 = vunpack.c.h.b16 %v21
  %v93 = vunpack.c.l.b16 %v22
  %v94 = vunpack.c.h.b16 %v22
  %v95 = vunpack.c.l.b16 %v23
  %v96 = vunpack.c.h.b16 %v23
  %v97 = vunpack.c.l.b16 %v24
  %v98 = vunpack.c.h.b16 %v24
  %v99 = vunpack.c.l.b16 %v25
  %v100 = vunpack.c.h.b16 %v25
  %v101 = vunpack.c.l.b16 %v26
  %v102 = vunpack.c.h.b16 %v26
  %v103 = vunpack.c.l.b16 %v27
  %v104 = vunpack.c.h.b16 %v27
  %v105 = vunpack.c.l.b16 %v28
  %v106 = vunpack.c.h.b16 %v28
  %v107 = vunpack.c.l.b16 %v29
  %v108 = vunpack.c.h.b16 %v29
  %v109 = vunpack.c.l.b16 %v30
  %v110 = vunpack.c.h.b16 %v30
  %v111 = vpack.c.b16 %v81, %v79
  %v112 = vpack.c.b16 %v82, %v80
  %v113 = vpack.c.b16 %v85, %v83
  %v114 = vpack.c.b16 %v86, %v84
  %v115 = vpack.c.b16 %v89, %v87
  %v116 = vpack.c.b16 %v90, %v88
  %v117 = vpack.c.b16 %v93, %v91
  %v118 = vpack.c.b16 %v94, %v92
  %v119 = vpack.c.b16 %v97, %v95
  %v120 = vpack.c.b16 %v98, %v96
  %v121 = vpack.c.b16 %v101, %v99
  %v122 = vpack.c.b16 %v102, %v100
  %v123 = vpack.c.b16 %v105, %v103
  %v124 = vpack.c.b16 %v106, %v104
  %v125 = vpack.c.b16 %v109, %v107
  %v126 = vpack.c.b16 %v110, %v108
  %v175 = vunpack.c.l.b16 %v31
  %v176 = vunpack.c.l.b16 %v32
  %v177 = vunpack.c.l.b16 %v33
  %v178 = vunpack.c.l.b16 %v34
  %v179 = vunpack.c.l.b16 %v35
  %v180 = vunpack.c.l.b16 %v36
  %v181 = vunpack.c.l.b16 %v37
  %v182 = vunpack.c.l.b16 %v38
  %v183 = vunpack.c.l.b16 %v39
  %v184 = vunpack.c.l.b16 %v40
  %v185 = vunpack.c.l.b16 %v41
  %v186 = vunpack.c.l.b16 %v42
  %v187 = vunpack.c.l.b16 %v43
  %v188 = vunpack.c.l.b16 %v44
  %v189 = vunpack.c.l.b16 %v45
  %v190 = vunpack.c.l.b16 %v46
  %v191 = vunpack.c.l.b16 %v47
  %v192 = vunpack.c.l.b16 %v48
  %v193 = vunpack.c.l.b16 %v49
  %v194 = vunpack.c.l.b16 %v50
  %v195 = vunpack.c.l.b16 %v51
  %v196 = vunpack.c.l.b16 %v52
  %v197 = vunpack.c.l.b16 %v53
  %v198 = vunpack.c.l.b16 %v54
  %v199 = vunpack.c.l.b16 %v55
  %v200 = vunpack.c.l.b16 %v56
  %v201 = vunpack.c.l.b16 %v57
  %v202 = vunpack.c.l.b16 %v58
  %v203 = vunpack.c.l.b16 %v59
  %v204 = vunpack.c.l.b16 %v60
  %v205 = vunpack.c.l.b16 %v61
  %v206 = vunpack.c.l.b16 %v62
  %v207 = vpack.c.b16 %v176, %v175
  %v208 = vpack.c.b16 %v178, %v177
  %v209 = vpack.c.b16 %v180, %v179
  %v210 = vpack.c.b16 %v182, %v181
  %v211 = vpack.c.b16 %v184, %v183
  %v212 = vpack.c.b16 %v186, %v185
  %v213 = vpack.c.b16 %v188, %v187
  %v214 = vpack.c.b16 %v190, %v189
  %v215 = vpack.c.b16 %v192, %v191
  %v216 = vpack.c.b16 %v194, %v193
  %v217 = vpack.c.b16 %v196, %v195
  %v218 = vpack.c.b16 %v198, %v197
  %v219 = vpack.c.b16 %v200, %v199
  %v220 = vpack.c.b16 %v202, %v201
  %v221 = vpack.c.b16 %v204, %v203
  %v222 = vpack.c.b16 %v206, %v205
  %239 = vmatprep.subr.bf16.mxu0 0
  %240 = vmatpush1.bf16.msra.mxu0 %v207
  %241 = vmatprep.subr.bf16.mxu0 0
  %242 = vmatpush1.bf16.msra.mxu0 %v208
  %243 = vmatprep.subr.bf16.mxu0 0
  %244 = vmatpush1.bf16.msra.mxu0 %v209
  %245 = vmatprep.subr.bf16.mxu0 0
  %246 = vmatpush1.bf16.msra.mxu0 %v210
  %247 = vmatprep.subr.bf16.mxu0 0
  %248 = vmatpush1.bf16.msra.mxu0 %v211
  %249 = vmatprep.subr.bf16.mxu0 0
  %250 = vmatpush1.bf16.msra.mxu0 %v212
  %251 = vmatprep.subr.bf16.mxu0 0
  %252 = vmatpush1.bf16.msra.mxu0 %v213
  %253 = vmatprep.subr.bf16.mxu0 0
  %254 = vmatpush1.bf16.msra.mxu0 %v214
  %255 = vmatprep.subr.bf16.mxu0 0
  %256 = vmatpush1.bf16.msra.mxu0 %v215
  %257 = vmatprep.subr.bf16.mxu0 0
  %258 = vmatpush1.bf16.msra.mxu0 %v216
  %259 = vmatprep.subr.bf16.mxu0 0
  %260 = vmatpush1.bf16.msra.mxu0 %v217
  %261 = vmatprep.subr.bf16.mxu0 0
  %262 = vmatpush1.bf16.msra.mxu0 %v218
  %263 = vmatprep.subr.bf16.mxu0 0
  %264 = vmatpush1.bf16.msra.mxu0 %v219
  %265 = vmatprep.subr.bf16.mxu0 0
  %266 = vmatpush1.bf16.msra.mxu0 %v220
  %267 = vmatprep.subr.bf16.mxu0 0
  %268 = vmatpush1.bf16.msra.mxu0 %v221
  %269 = vmatprep.subr.bf16.mxu0 0
  %270 = vmatpush1.bf16.msra.mxu0 %v222
  %271 = vmatprep.mubr.bf16.mxu0 %v112
  %272 = vmatmul.mubr.bf16.gmra.mrb[0].mxu0 %v111
  %v273 = vpop.f32.mrb[0].mxu0
  %v274 = vadd.f32 0.0, %v273
  %v275 = vpop.f32.mrb[0].mxu0
  %v276 = vpop.f32.mrb[0].mxu0
  %v277 = vadd.f32 0.0, %v276
  %v278 = vpop.f32.mrb[0].mxu0
  %279 = vmatprep.mubr.bf16.mxu0 %v114
  %280 = vmatmul.mubr.bf16.gmra.mrb[0].mxu0 %v113
  %v281 = vpop.f32.mrb[0].mxu0
  %v282 = vadd.f32 0.0, %v281
  %v283 = vpop.f32.mrb[0].mxu0
  %v284 = vpop.f32.mrb[0].mxu0
  %v285 = vadd.f32 0.0, %v284
  %v286 = vpop.f32.mrb[0].mxu0
  %287 = vmatprep.mubr.bf16.mxu0 %v116
  %288 = vmatmul.mubr.bf16.gmra.mrb[0].mxu0 %v115
  %v289 = vpop.f32.mrb[0].mxu0
  %v290 = vadd.f32 0.0, %v289
  %v291 = vpop.f32.mrb[0].mxu0
  %v292 = vpop.f32.mrb[0].mxu0
  %v293 = vadd.f32 0.0, %v292
  %v294 = vpop.f32.mrb[0].mxu0
  %295 = vmatprep.mubr.bf16.mxu0 %v118
  %296 = vmatmul.mubr.bf16.gmra.mrb[0].mxu0 %v117
  %v297 = vpop.f32.mrb[0].mxu0
  %v298 = vadd.f32 0.0, %v297
  %v299 = vpop.f32.mrb[0].mxu0
  %v300 = vpop.f32.mrb[0].mxu0
  %v301 = vadd.f32 0.0, %v300
  %v302 = vpop.f32.mrb[0].mxu0
  %303 = vmatprep.mubr.bf16.mxu0 %v120
  %304 = vmatmul.mubr.bf16.gmra.mrb[0].mxu0 %v119
  %v305 = vpop.f32.mrb[0].mxu0
  %v306 = vadd.f32 0.0, %v305
  %v307 = vpop.f32.mrb[0].mxu0
  %v308 = vpop.f32.mrb[0].mxu0
  %v309 = vadd.f32 0.0, %v308
  %v310 = vpop.f32.mrb[0].mxu0
  %311 = vmatprep.mubr.bf16.mxu0 %v122
  %312 = vmatmul.mubr.bf16.gmra.mrb[0].mxu0 %v121
  %v313 = vpop.f32.mrb[0].mxu0
  %v314 = vadd.f32 0.0, %v313
  %v315 = vpop.f32.mrb[0].mxu0
  %v316 = vpop.f32.mrb[0].mxu0
  %v317 = vadd.f32 0.0, %v316
  %v318 = vpop.f32.mrb[0].mxu0
  %319 = vmatprep.mubr.bf16.mxu0 %v124
  %320 = vmatmul.mubr.bf16.gmra.mrb[0].mxu0 %v123
  %v321 = vpop.f32.mrb[0].mxu0
  %v322 = vadd.f32 0.0, %v321
  %v323 = vpop.f32.mrb[0].mxu0
  %v324 = vpop.f32.mrb[0].mxu0
  %v325 = vadd.f32 0.0, %v324
  %v326 = vpop.f32.mrb[0].mxu0
  %327 = vmatprep.mubr.bf16.mxu0 %v126
  %328 = vmatmul.mubr.bf16.gmra.mrb[0].mxu0 %v125
  %v329 = vpop.f32.mrb[0].mxu0
  %v330 = vadd.f32 0.0, %v329
  %v331 = vpop.f32.mrb[0].mxu0
  %v332 = vpop.f32.mrb[0].mxu0
  %v333 = vadd.f32 0.0, %v332
  %v334 = vpop.f32.mrb[0].mxu0
  %335 = vdwg.mxu0
  %v336 = vpack.c.bf16 %v277, %v274
  %v337 = vpack.c.bf16 %v285, %v282
  %v338 = vpack.c.bf16 %v293, %v290
  %v339 = vpack.c.bf16 %v301, %v298
  %v340 = vpack.c.bf16 %v309, %v306
  %v341 = vpack.c.bf16 %v317, %v314
  %v342 = vpack.c.bf16 %v325, %v322
  %v343 = vpack.c.bf16 %v333, %v330
  %v352 = vunpack.c.l.b16 %v336
  %v353 = vunpack.c.h.b16 %v336
  %v354 = vunpack.c.l.b16 %v337
  %v355 = vunpack.c.h.b16 %v337
  %v356 = vunpack.c.l.b16 %v338
  %v357 = vunpack.c.h.b16 %v338
  %v358 = vunpack.c.l.b16 %v339
  %v359 = vunpack.c.h.b16 %v339
  %v360 = vunpack.c.l.b16 %v340
  %v361 = vunpack.c.h.b16 %v340
  %v362 = vunpack.c.l.b16 %v341
  %v363 = vunpack.c.h.b16 %v341
  %v364 = vunpack.c.l.b16 %v342
  %v365 = vunpack.c.h.b16 %v342
  %v366 = vunpack.c.l.b16 %v343
  %v367 = vunpack.c.h.b16 %v343
  %v368 = vpack.c.b16 %v352, %v352
  %v369 = vpack.c.b16 %v353, %v353
  %v370 = vpack.c.b16 %v354, %v354
  %v371 = vpack.c.b16 %v355, %v355
  %v372 = vpack.c.b16 %v356, %v356
  %v373 = vpack.c.b16 %v357, %v357
  %v374 = vpack.c.b16 %v358, %v358
  %v375 = vpack.c.b16 %v359, %v359
  %v376 = vpack.c.b16 %v360, %v360
  %v377 = vpack.c.b16 %v361, %v361
  %v378 = vpack.c.b16 %v362, %v362
  %v379 = vpack.c.b16 %v363, %v363
  %v380 = vpack.c.b16 %v364, %v364
  %v381 = vpack.c.b16 %v365, %v365
  %v382 = vpack.c.b16 %v366, %v366
  %v383 = vpack.c.b16 %v367, %v367
  %vm400 = vcmask 257024
  %401 = vst.msk [vmem:[%s2] sm:$0xf] %vm400, %v368
  %402 = vst.msk [vmem:[%s2 + $0x4] sm:$0xf] %vm400, %v369
  %403 = vst.msk [vmem:[%s2 + $0x8] sm:$0xf] %vm400, %v370
  %404 = vst.msk [vmem:[%s2 + $0xc] sm:$0xf] %vm400, %v371
  %405 = vst.msk [vmem:[%s2 + $0x10] sm:$0xf] %vm400, %v372
  %406 = vst.msk [vmem:[%s2 + $0x14] sm:$0xf] %vm400, %v373
  %407 = vst.msk [vmem:[%s2 + $0x18] sm:$0xf] %vm400, %v374
  %408 = vst.msk [vmem:[%s2 + $0x1c] sm:$0xf] %vm400, %v375
  %409 = vst.msk [vmem:[%s2 + $0x20] sm:$0xf] %vm400, %v376
  %410 = vst.msk [vmem:[%s2 + $0x24] sm:$0xf] %vm400, %v377
  %411 = vst.msk [vmem:[%s2 + $0x28] sm:$0xf] %vm400, %v378
  %412 = vst.msk [vmem:[%s2 + $0x2c] sm:$0xf] %vm400, %v379
  %413 = vst.msk [vmem:[%s2 + $0x30] sm:$0xf] %vm400, %v380
  %414 = vst.msk [vmem:[%s2 + $0x34] sm:$0xf] %vm400, %v381
  %415 = vst.msk [vmem:[%s2 + $0x38] sm:$0xf] %vm400, %v382
  %416 = vst.msk [vmem:[%s2 + $0x3c] sm:$0xf] %vm400, %v383
  %vm417 = vcmask 261120
  %v418 = vsel %vm417, %v274, 0.0
  %v419 = vsel %vm417, %v277, 0.0
  %v420 = vadd.f32 %v418, %v419
  %v421 = vsel %vm417, %v282, 0.0
  %v422 = vadd.f32 %v420, %v421
  %v423 = vsel %vm417, %v285, 0.0
  %v424 = vadd.f32 %v422, %v423
  %v425 = vsel %vm417, %v290, 0.0
  %v426 = vadd.f32 %v424, %v425
  %v427 = vsel %vm417, %v293, 0.0
  %v428 = vadd.f32 %v426, %v427
  %v429 = vsel %vm417, %v298, 0.0
  %v430 = vadd.f32 %v428, %v429
  %v431 = vsel %vm417, %v301, 0.0
  %v432 = vadd.f32 %v430, %v431
  %v433 = vsel %vm417, %v306, 0.0
  %v434 = vadd.f32 %v432, %v433
  %v435 = vsel %vm417, %v309, 0.0
  %v436 = vadd.f32 %v434, %v435
  %v437 = vsel %vm417, %v314, 0.0
  %v438 = vadd.f32 %v436, %v437
  %v439 = vsel %vm417, %v317, 0.0
  %v440 = vadd.f32 %v438, %v439
  %v441 = vsel %vm417, %v322, 0.0
  %v442 = vadd.f32 %v440, %v441
  %v443 = vsel %vm417, %v325, 0.0
  %v444 = vadd.f32 %v442, %v443
  %v445 = vsel %vm417, %v330, 0.0
  %v446 = vadd.f32 %v444, %v445
  %v447 = vsel %vm417, %v333, 0.0
  %v448 = vadd.f32 %v446, %v447
  %v449 = vrot.slane %v448, 4
  %v450 = vadd.f32 %v448, %v449
  %v451 = vrot.slane %v450, 2
  %v452 = vadd.f32 %v450, %v451
  %v453 = vrot.slane %v452, 1
  %v454 = vadd.f32 %v452, %v453
  %vm455 = vcmask 253952
  %456 = vst.msk [vmem:[%s3] sm:$0x1] %vm455, %v454
  %v457 = vmul.f32 %v274, %v274
  %v458 = vmul.f32 %v277, %v277
  %v459 = vmul.f32 %v282, %v282
  %v460 = vmul.f32 %v285, %v285
  %v461 = vmul.f32 %v290, %v290
  %v462 = vmul.f32 %v293, %v293
  %v463 = vmul.f32 %v298, %v298
  %v464 = vmul.f32 %v301, %v301
  %v465 = vmul.f32 %v306, %v306
  %v466 = vmul.f32 %v309, %v309
  %v467 = vmul.f32 %v314, %v314
  %v468 = vmul.f32 %v317, %v317
  %v469 = vmul.f32 %v322, %v322
  %v470 = vmul.f32 %v325, %v325
  %v471 = vmul.f32 %v330, %v330
  %v472 = vmul.f32 %v333, %v333
  %v473 = vsel %vm417, %v457, 0.0
  %v474 = vsel %vm417, %v458, 0.0
  %v475 = vadd.f32 %v473, %v474
  %v476 = vsel %vm417, %v459, 0.0
  %v477 = vadd.f32 %v475, %v476
  %v478 = vsel %vm417, %v460, 0.0
  %v479 = vadd.f32 %v477, %v478
  %v480 = vsel %vm417, %v461, 0.0
  %v481 = vadd.f32 %v479, %v480
  %v482 = vsel %vm417, %v462, 0.0
  %v483 = vadd.f32 %v481, %v482
  %v484 = vsel %vm417, %v463, 0.0
  %v485 = vadd.f32 %v483, %v484
  %v486 = vsel %vm417, %v464, 0.0
  %v487 = vadd.f32 %v485, %v486
  %v488 = vsel %vm417, %v465, 0.0
  %v489 = vadd.f32 %v487, %v488
  %v490 = vsel %vm417, %v466, 0.0
  %v491 = vadd.f32 %v489, %v490
  %v492 = vsel %vm417, %v467, 0.0
  %v493 = vadd.f32 %v491, %v492
  %v494 = vsel %vm417, %v468, 0.0
  %v495 = vadd.f32 %v493, %v494
  %v496 = vsel %vm417, %v469, 0.0
  %v497 = vadd.f32 %v495, %v496
  %v498 = vsel %vm417, %v470, 0.0
  %v499 = vadd.f32 %v497, %v498
  %v500 = vsel %vm417, %v471, 0.0
  %v501 = vadd.f32 %v499, %v500
  %v502 = vsel %vm417, %v472, 0.0
  %v503 = vadd.f32 %v501, %v502
  %v504 = vrot.slane %v503, 4
  %v505 = vadd.f32 %v503, %v504
  %v506 = vrot.slane %v505, 2
  %v507 = vadd.f32 %v505, %v506
  %v508 = vrot.slane %v507, 1
  %v509 = vadd.f32 %v507, %v508
  %510 = vst.msk [vmem:[%s4] sm:$0x1] %vm455, %v509
  // Predicated region
  $region10: #{discriminator_forward.10} parent=0 // pred_check
    _
  $region11: #{discriminator_forward.10} parent=0 // pred_check_branch
    %512 = sbr.rel (0) target = $region13
  $region12: #{discriminator_forward.10} parent=0 // pred_region
    _
  $region13: #{discriminator_forward.10} parent=0 // pred_fallthru
    _
  // Predicated region
  $region14: #{discriminator_forward.10} parent=0 // pred_check
    _
  $region15: #{discriminator_forward.10} parent=0 // pred_check_branch
    %514 = sbr.rel (0) target = $region17
  $region16: #{discriminator_forward.10} parent=0 // pred_region
    _
  $region17: #{discriminator_forward.10} parent=0 // pred_fallthru
    _
  // Predicated region
  $region18: #{discriminator_forward.10} parent=0 // pred_check
    _
  $region19: #{discriminator_forward.10} parent=0 // pred_check_branch
    %516 = sbr.rel (0) target = $region21
  $region20: #{discriminator_forward.10} parent=0 // pred_region
    _
  $region21: #{discriminator_forward.10} parent=0 // pred_fallthru
    _
  // Predicated region
  $region22: #{discriminator_forward.10} parent=0 // pred_check
    _
  $region23: #{discriminator_forward.10} parent=0 // pred_check_branch
    %518 = sbr.rel (0) target = $region25
  $region24: #{discriminator_forward.10} parent=0 // pred_region
    _
  $region25: #{discriminator_forward.10} parent=0 // pred_fallthru
    _
  // Predicated region
  $region26: #{discriminator_forward.10} parent=0 // pred_check
    _
  $region27: #{discriminator_forward.10} parent=0 // pred_check_branch
    %520 = sbr.rel (0) target = $region29
  $region28: #{discriminator_forward.10} parent=0 // pred_region
    _
  $region29: #{discriminator_forward.10} parent=0 // pred_fallthru
    _
  // Predicated region
  $region30: #{discriminator_forward.10} parent=0 // pred_check
    _
  $region31: #{discriminator_forward.10} parent=0 // pred_check_branch
    %522 = sbr.rel (0) target = $region33
  $region32: #{discriminator_forward.10} parent=0 // pred_region
    _
  $region33: #{discriminator_forward.10} parent=0 // pred_fallthru
    _

// kernel: tile.43
$region0: #{tile.43}
  #allocation0 [shape = 's32[1]{0}', space=sflag, size = 0x4, scoped, tag = 'scoped memory for tile.43']
  %s0 = inlined_call_operand.vmem [shape: f32[32], index: 0, kind: input, shape index: {}]
  %s1 = inlined_call_operand.vmem [shape: f32[4,32], index: 1, kind: output, shape index: {}]
  // Predicated region
  $region2: #{tile.43} parent=0 // pred_check
    _
  $region3: #{tile.43} parent=0 // pred_check_branch
    %3 = sbr.rel (0) target = $region5
  $region4: #{tile.43} parent=0 // pred_region
    _
  $region5: #{tile.43} parent=0 // pred_fallthru
    _
  %v4 = vld [vmem:[%s0] ss:$0 sm:$0xff]
  %5 = vst [vmem:[%s1] sm:$0xf] %v4

// kernel: tile.44
$region0: #{tile.44}
  %s0 = inlined_call_operand.vmem [shape: f32[4,32], index: 0, kind: input, shape index: {}]
  %s1 = inlined_call_operand.vmem [shape: f32[1,128], index: 1, kind: output, shape index: {}]
  $region1: #{tile.44} parent=0
    #allocation0 [shape = 'u8[4096]{0}', space=vmem, size = 0x1000, scoped, tag = 'scoped mem for output reshape']
    #allocation1 [shape = 'u8[4096]{0}', space=vmem, size = 0x1000, scoped, tag = 'scoped mem for input reshape']
    %s3 = sshllo.u32 0, 4
    %v4 = vld [vmem:[%s0] sm:%s3]
    %5 = vst [vmem:[#allocation1] sm:%s3] %v4
    %v6 = vld [vmem:[#allocation1] sm:$0x1]
    %vm7 = vcmask 261120
    %8 = vst.msk [vmem:[#allocation0] sm:$0x1] %vm7, %v6
    %s9 = scalar_lea.vmem [#allocation1], 3
    %v10 = vld [vmem:[%s9] sm:$0x1]
    %11 = vrot.lane.b32.xlu0 %v10, 96
    %v12 = vpop.permute.xlu0 %11
    %vm13 = vcmask 1048320
    %14 = vst.msk [vmem:[#allocation0] sm:$0x1] %vm13, %v12
    %s15 = scalar_lea.vmem [#allocation1], 2
    %v16 = vld [vmem:[%s15] sm:$0x1]
    %17 = vrot.lane.b32.xlu0 %v16, 64
    %v18 = vpop.permute.xlu0 %17
    %vm19 = vcmask 785920
    %20 = vst.msk [vmem:[#allocation0] sm:$0x1] %vm19, %v18
    %s21 = scalar_lea.vmem [#allocation1], 1
    %v22 = vld [vmem:[%s21] sm:$0x1]
    %23 = vrot.lane.b32.xlu0 %v22, 32
    %v24 = vpop.permute.xlu0 %23
    %vm25 = vcmask 523520
    %26 = vst.msk [vmem:[#allocation0] sm:$0x1] %vm25, %v24
    %s28 = sshllo.u32 0, 1
    %v30 = vld [vmem:[#allocation0] sm:%s28]
    %s31 = sshllo.u32 0, 1
    %32 = vst [vmem:[%s1] sm:%s31] %v30

// kernel: discriminator_forward.11
$region0: #{discriminator_forward.11}
  #allocation0 [shape = 'u32[]', space=smem, size = 0x4, offset = 0x4, fixed_abs, tag = 'smem constant byte address 0x4 - core index']
  #allocation1 [shape = 'u32[144,128]{1,0:T(1,128)}', space=vmem, size = 0x12000, scoped, tag = 'internal scratch']
  %s0 = inlined_call_operand.vmem [shape: bf16[32,128], index: 0, kind: input, shape index: {}]
  %s1 = inlined_call_operand.vmem [shape: f32[1,128], index: 1, kind: input, shape index: {}]
  %s2 = inlined_call_operand.vmem [shape: f32[1,128], index: 2, kind: input, shape index: {}]
  %s3 = inlined_call_operand.vmem [shape: bf16[32,128], index: 3, kind: output, shape index: {}]
  %s4 = sld [smem:[#allocation0]]
  $region22: #{discriminator_forward.11} parent=0
    _
  %s6 = ssub.s32 1, %s4
  %s7 = scalar_select 0, %s6, %s4
  // Predicated region
  $region2: #{discriminator_forward.11} parent=0 // pred_check
    _
  $region3: #{discriminator_forward.11} parent=0 // pred_check_branch
    %9 = sbr.rel (0) target = $region5
  $region4: #{discriminator_forward.11} parent=0 // pred_region
    _
  $region5: #{discriminator_forward.11} parent=0 // pred_fallthru
    _
  // Predicated region
  $region6: #{discriminator_forward.11} parent=0 // pred_check
    _
  $region7: #{discriminator_forward.11} parent=0 // pred_check_branch
    %11 = sbr.rel (0) target = $region9
  $region8: #{discriminator_forward.11} parent=0 // pred_region
    _
  $region9: #{discriminator_forward.11} parent=0 // pred_fallthru
    _
  // Predicated region
  $region10: #{discriminator_forward.11} parent=0 // pred_check
    _
  $region11: #{discriminator_forward.11} parent=0 // pred_check_branch
    %13 = sbr.rel (0) target = $region13
  $region12: #{discriminator_forward.11} parent=0 // pred_region
    _
  $region13: #{discriminator_forward.11} parent=0 // pred_fallthru
    _
  %v14 = vld [vmem:[%s0] sm:$0xf]
  %v15 = vld [vmem:[%s0 + $0x4] sm:$0xf]
  %v16 = vld [vmem:[%s0 + $0x8] sm:$0xf]
  %v17 = vld [vmem:[%s0 + $0xc] sm:$0xf]
  %v18 = vunpack.c.l.bf16 %v14
  %v19 = vunpack.c.l.bf16 %v15
  %v20 = vunpack.c.l.bf16 %v16
  %v21 = vunpack.c.l.bf16 %v17
  %v22 = vld [vmem:[%s1] sm:$0x1]
  %v24 = vlaneseq
  %v25 = vshrl.u32 %v24, 7
  %v26 = vsub.s32 0, %v25
  %v27 = vrot.slane %v22, %v26
  %v29 = vmul.f32 %v18, %v27
  %v30 = vmul.f32 %v19, %v27
  %v31 = vmul.f32 %v20, %v27
  %v32 = vmul.f32 %v21, %v27
  %v33 = vld [vmem:[%s2] sm:$0x1]
  %v35 = vlaneseq
  %v36 = vshrl.u32 %v35, 7
  %v37 = vsub.s32 0, %v36
  %v38 = vrot.slane %v33, %v37
  %v40 = vadd.f32 %v29, %v38
  %v41 = vadd.f32 %v30, %v38
  %v42 = vadd.f32 %v31, %v38
  %v43 = vadd.f32 %v32, %v38
  %vm44 = vcmp.gt.f32.partialorder %v40, 0.0
  %vm45 = vcmp.gt.f32.partialorder %v41, 0.0
  %vm46 = vcmp.gt.f32.partialorder %v42, 0.0
  %vm47 = vcmp.gt.f32.partialorder %v43, 0.0
  %v48 = vmul.f32 %v40, 0.2
  %v49 = vmul.f32 %v41, 0.2
  %v50 = vmul.f32 %v42, 0.2
  %v51 = vmul.f32 %v43, 0.2
  %v52 = vsel %vm44, %v40, %v48
  %v53 = vsel %vm45, %v41, %v49
  %v54 = vsel %vm46, %v42, %v50
  %v55 = vsel %vm47, %v43, %v51
  %v56 = vpack.c.bf16 %v53, %v52
  %v57 = vpack.c.bf16 %v55, %v54
  %v60 = vunpack.c.l.b16 %v56
  %v61 = vunpack.c.h.b16 %v56
  %v62 = vunpack.c.l.b16 %v57
  %v63 = vunpack.c.h.b16 %v57
  %v64 = vpack.c.b16 %v60, %v60
  %v65 = vpack.c.b16 %v61, %v61
  %v66 = vpack.c.b16 %v62, %v62
  %v67 = vpack.c.b16 %v63, %v63
  %72 = vst [vmem:[%s3] sm:$0xf] %v64
  %73 = vst [vmem:[%s3 + $0x4] sm:$0xf] %v65
  %74 = vst [vmem:[%s3 + $0x8] sm:$0xf] %v66
  %75 = vst [vmem:[%s3 + $0xc] sm:$0xf] %v67
  // Predicated region
  $region14: #{discriminator_forward.11} parent=0 // pred_check
    _
  $region15: #{discriminator_forward.11} parent=0 // pred_check_branch
    %77 = sbr.rel (0) target = $region17
  $region16: #{discriminator_forward.11} parent=0 // pred_region
    _
  $region17: #{discriminator_forward.11} parent=0 // pred_fallthru
    _
  // Predicated region
  $region18: #{discriminator_forward.11} parent=0 // pred_check
    _
  $region19: #{discriminator_forward.11} parent=0 // pred_check_branch
    %79 = sbr.rel (0) target = $region21
  $region20: #{discriminator_forward.11} parent=0 // pred_region
    _
  $region21: #{discriminator_forward.11} parent=0 // pred_fallthru
    _

// kernel: tile.53
$region0: #{tile.53}
  #allocation0 [shape = 's32[1]{0}', space=sflag, size = 0x4, scoped, tag = 'scoped memory for tile.53']
  %s0 = inlined_call_operand.vmem [shape: f32[64], index: 0, kind: input, shape index: {}]
  %s1 = inlined_call_operand.vmem [shape: f32[2,64], index: 1, kind: output, shape index: {}]
  // Predicated region
  $region2: #{tile.53} parent=0 // pred_check
    _
  $region3: #{tile.53} parent=0 // pred_check_branch
    %3 = sbr.rel (0) target = $region5
  $region4: #{tile.53} parent=0 // pred_region
    _
  $region5: #{tile.53} parent=0 // pred_fallthru
    _
  %v4 = vld [vmem:[%s0] ss:$0 sm:$0xff]
  %5 = vst [vmem:[%s1] sm:$0x3] %v4

// kernel: tile.54
$region0: #{tile.54}
  %s0 = inlined_call_operand.vmem [shape: f32[2,64], index: 0, kind: input, shape index: {}]
  %s1 = inlined_call_operand.vmem [shape: f32[1,128], index: 1, kind: output, shape index: {}]
  $region1: #{tile.54} parent=0
    #allocation0 [shape = 'u8[4096]{0}', space=vmem, size = 0x1000, scoped, tag = 'scoped mem for output reshape']
    #allocation1 [shape = 'u8[4096]{0}', space=vmem, size = 0x1000, scoped, tag = 'scoped mem for input reshape']
    %s3 = sshllo.u32 0, 2
    %v4 = vld [vmem:[%s0] sm:%s3]
    %5 = vst [vmem:[#allocation1] sm:%s3] %v4
    %v6 = vld [vmem:[#allocation1] sm:$0x1]
    %vm7 = vcmask 523264
    %8 = vst.msk [vmem:[#allocation0] sm:$0x1] %vm7, %v6
    %s9 = scalar_lea.vmem [#allocation1], 1
    %v10 = vld [vmem:[%s9] sm:$0x1]
    %11 = vrot.lane.b32.xlu0 %v10, 64
    %v12 = vpop.permute.xlu0 %11
    %vm13 = vcmask 1048064
    %14 = vst.msk [vmem:[#allocation0] sm:$0x1] %vm13, %v12
    %s16 = sshllo.u32 0, 1
    %v18 = vld [vmem:[#allocation0] sm:%s16]
    %s19 = sshllo.u32 0, 1
    %20 = vst [vmem:[%s1] sm:%s19] %v18

// kernel: discriminator_forward.12
$region0: #{discriminator_forward.12}
  #allocation0 [shape = 'u32[]', space=smem, size = 0x4, offset = 0x4, fixed_abs, tag = 'smem constant byte address 0x4 - core index']
  #allocation1 [shape = 'u32[144,128]{1,0:T(1,128)}', space=vmem, size = 0x12000, scoped, tag = 'internal scratch']
  %s0 = inlined_call_operand.vmem [shape: bf16[32,512], index: 0, kind: input, shape index: {}]
  %s1 = inlined_call_operand.vmem [shape: bf16[512,64], index: 1, kind: input, shape index: {}]
  %s2 = inlined_call_operand.vmem [shape: bf16[32,64], index: 2, kind: output, shape index: {0}]
  %s3 = inlined_call_operand.vmem [shape: f32[1,1,64], index: 3, kind: output, shape index: {1}]
  %s4 = inlined_call_operand.vmem [shape: f32[1,1,64], index: 4, kind: output, shape index: {2}]
  %5 = xla_tuple %s2, %s3, %s4
  %s6 = sld [smem:[#allocation0]]
  $region34: #{discriminator_forward.12} parent=0
    _
  %s8 = ssub.s32 1, %s6
  %s9 = scalar_select 0, %s8, %s6
  // Predicated region
  $region2: #{discriminator_forward.12} parent=0 // pred_check
    _
  $region3: #{discriminator_forward.12} parent=0 // pred_check_branch
    %11 = sbr.rel (0) target = $region5
  $region4: #{discriminator_forward.12} parent=0 // pred_region
    _
  $region5: #{discriminator_forward.12} parent=0 // pred_fallthru
    _
  // Predicated region
  $region6: #{discriminator_forward.12} parent=0 // pred_check
    _
  $region7: #{discriminator_forward.12} parent=0 // pred_check_branch
    %13 = sbr.rel (0) target = $region9
  $region8: #{discriminator_forward.12} parent=0 // pred_region
    _
  $region9: #{discriminator_forward.12} parent=0 // pred_fallthru
    _
  %v15 = vld [vmem:[%s0] sm:$0xff]
  %v16 = vld [vmem:[%s0 + $0x8] sm:$0xff]
  %v17 = vld [vmem:[%s0 + $0x10] sm:$0xff]
  %v18 = vld [vmem:[%s0 + $0x18] sm:$0xff]
  %v19 = vld [vmem:[%s0 + $0x20] sm:$0xff]
  %v20 = vld [vmem:[%s0 + $0x28] sm:$0xff]
  %v21 = vld [vmem:[%s0 + $0x30] sm:$0xff]
  %v22 = vld [vmem:[%s0 + $0x38] sm:$0xff]
  %v23 = vld [vmem:[%s1] sm:$0xf]
  %v24 = vld [vmem:[%s1 + $0x4] sm:$0xf]
  %v25 = vld [vmem:[%s1 + $0x8] sm:$0xf]
  %v26 = vld [vmem:[%s1 + $0xc] sm:$0xf]
  %v27 = vld [vmem:[%s1 + $0x10] sm:$0xf]
  %v28 = vld [vmem:[%s1 + $0x14] sm:$0xf]
  %v29 = vld [vmem:[%s1 + $0x18] sm:$0xf]
  %v30 = vld [vmem:[%s1 + $0x1c] sm:$0xf]
  %v31 = vld [vmem:[%s1 + $0x20] sm:$0xf]
  %v32 = vld [vmem:[%s1 + $0x24] sm:$0xf]
  %v33 = vld [vmem:[%s1 + $0x28] sm:$0xf]
  %v34 = vld [vmem:[%s1 + $0x2c] sm:$0xf]
  %v35 = vld [vmem:[%s1 + $0x30] sm:$0xf]
  %v36 = vld [vmem:[%s1 + $0x34] sm:$0xf]
  %v37 = vld [vmem:[%s1 + $0x38] sm:$0xf]
  %v38 = vld [vmem:[%s1 + $0x3c] sm:$0xf]
  %v39 = vld [vmem:[%s1 + $0x40] sm:$0xf]
  %v40 = vld [vmem:[%s1 + $0x44] sm:$0xf]
  %v41 = vld [vmem:[%s1 + $0x48] sm:$0xf]
  %v42 = vld [vmem:[%s1 + $0x4c] sm:$0xf]
  %v43 = vld [vmem:[%s1 + $0x50] sm:$0xf]
  %v44 = vld [vmem:[%s1 + $0x54] sm:$0xf]
  %v45 = vld [vmem:[%s1 + $0x58] sm:$0xf]
  %v46 = vld [vmem:[%s1 + $0x5c] sm:$0xf]
  %v47 = vld [vmem:[%s1 + $0x60] sm:$0xf]
  %v48 = vld [vmem:[%s1 + $0x64] sm:$0xf]
  %v49 = vld [vmem:[%s1 + $0x68] sm:$0xf]
  %v50 = vld [vmem:[%s1 + $0x6c] sm:$0xf]
  %v51 = vld [vmem:[%s1 + $0x70] sm:$0xf]
  %v52 = vld [vmem:[%s1 + $0x74] sm:$0xf]
  %v53 = vld [vmem:[%s1 + $0x78] sm:$0xf]
  %v54 = vld [vmem:[%s1 + $0x7c] sm:$0xf]
  %v55 = vld [vmem:[%s1 + $0x80] sm:$0xf]
  %v56 = vld [vmem:[%s1 + $0x84] sm:$0xf]
  %v57 = vld [vmem:[%s1 + $0x88] sm:$0xf]
  %v58 = vld [vmem:[%s1 + $0x8c] sm:$0xf]
  %v59 = vld [vmem:[%s1 + $0x90] sm:$0xf]
  %v60 = vld [vmem:[%s1 + $0x94] sm:$0xf]
  %v61 = vld [vmem:[%s1 + $0x98] sm:$0xf]
  %v62 = vld [vmem:[%s1 + $0x9c] sm:$0xf]
  %v63 = vld [vmem:[%s1 + $0xa0] sm:$0xf]
  %v64 = vld [vmem:[%s1 + $0xa4] sm:$0xf]
  %v65 = vld [vmem:[%s1 + $0xa8] sm:$0xf]
  %v66 = vld [vmem:[%s1 + $0xac] sm:$0xf]
  %v67 = vld [vmem:[%s1 + $0xb0] sm:$0xf]
  %v68 = vld [vmem:[%s1 + $0xb4] sm:$0xf]
  %v69 = vld [vmem:[%s1 + $0xb8] sm:$0xf]
  %v70 = vld [vmem:[%s1 + $0xbc] sm:$0xf]
  %v71 = vld [vmem:[%s1 + $0xc0] sm:$0xf]
  %v72 = vld [vmem:[%s1 + $0xc4] sm:$0xf]
  %v73 = vld [vmem:[%s1 + $0xc8] sm:$0xf]
  %v74 = vld [vmem:[%s1 + $0xcc] sm:$0xf]
  %v75 = vld [vmem:[%s1 + $0xd0] sm:$0xf]
  %v76 = vld [vmem:[%s1 + $0xd4] sm:$0xf]
  %v77 = vld [vmem:[%s1 + $0xd8] sm:$0xf]
  %v78 = vld [vmem:[%s1 + $0xdc] sm:$0xf]
  %v79 = vld [vmem:[%s1 + $0xe0] sm:$0xf]
  %v80 = vld [vmem:[%s1 + $0xe4] sm:$0xf]
  %v81 = vld [vmem:[%s1 + $0xe8] sm:$0xf]
  %v82 = vld [vmem:[%s1 + $0xec] sm:$0xf]
  %v83 = vld [vmem:[%s1 + $0xf0] sm:$0xf]
  %v84 = vld [vmem:[%s1 + $0xf4] sm:$0xf]
  %v85 = vld [vmem:[%s1 + $0xf8] sm:$0xf]
  %v86 = vld [vmem:[%s1 + $0xfc] sm:$0xf]
  %v95 = vunpack.c.l.b16 %v15
  %v96 = vunpack.c.h.b16 %v15
  %v97 = vunpack.c.l.b16 %v16
  %v98 = vunpack.c.h.b16 %v16
  %v99 = vunpack.c.l.b16 %v17
  %v100 = vunpack.c.h.b16 %v17
  %v101 = vunpack.c.l.b16 %v18
  %v102 = vunpack.c.h.b16 %v18
  %v103 = vunpack.c.l.b16 %v19
  %v104 = vunpack.c.h.b16 %v19
  %v105 = vunpack.c.l.b16 %v20
  %v106 = vunpack.c.h.b16 %v20
  %v107 = vunpack.c.l.b16 %v21
  %v108 = vunpack.c.h.b16 %v21
  %v109 = vunpack.c.l.b16 %v22
  %v110 = vunpack.c.h.b16 %v22
  %v111 = vpack.c.b16 %v99, %v95
  %v112 = vpack.c.b16 %v100, %v96
  %v113 = vpack.c.b16 %v101, %v97
  %v114 = vpack.c.b16 %v102, %v98
  %v115 = vpack.c.b16 %v107, %v103
  %v116 = vpack.c.b16 %v108, %v104
  %v117 = vpack.c.b16 %v109, %v105
  %v118 = vpack.c.b16 %v110, %v106
  %v191 = vunpack.c.l.b16 %v23
  %v192 = vunpack.c.l.b16 %v24
  %v193 = vunpack.c.l.b16 %v25
  %v194 = vunpack.c.l.b16 %v26
  %v195 = vunpack.c.l.b16 %v27
  %v196 = vunpack.c.l.b16 %v28
  %v197 = vunpack.c.l.b16 %v29
  %v198 = vunpack.c.l.b16 %v30
  %v199 = vunpack.c.l.b16 %v31
  %v200 = vunpack.c.l.b16 %v32
  %v201 = vunpack.c.l.b16 %v33
  %v202 = vunpack.c.l.b16 %v34
  %v203 = vunpack.c.l.b16 %v35
  %v204 = vunpack.c.l.b16 %v36
  %v205 = vunpack.c.l.b16 %v37
  %v206 = vunpack.c.l.b16 %v38
  %v207 = vunpack.c.l.b16 %v39
  %v208 = vunpack.c.l.b16 %v40
  %v209 = vunpack.c.l.b16 %v41
  %v210 = vunpack.c.l.b16 %v42
  %v211 = vunpack.c.l.b16 %v43
  %v212 = vunpack.c.l.b16 %v44
  %v213 = vunpack.c.l.b16 %v45
  %v214 = vunpack.c.l.b16 %v46
  %v215 = vunpack.c.l.b16 %v47
  %v216 = vunpack.c.l.b16 %v48
  %v217 = vunpack.c.l.b16 %v49
  %v218 = vunpack.c.l.b16 %v50
  %v219 = vunpack.c.l.b16 %v51
  %v220 = vunpack.c.l.b16 %v52
  %v221 = vunpack.c.l.b16 %v53
  %v222 = vunpack.c.l.b16 %v54
  %v223 = vunpack.c.l.b16 %v55
  %v224 = vunpack.c.l.b16 %v56
  %v225 = vunpack.c.l.b16 %v57
  %v226 = vunpack.c.l.b16 %v58
  %v227 = vunpack.c.l.b16 %v59
  %v228 = vunpack.c.l.b16 %v60
  %v229 = vunpack.c.l.b16 %v61
  %v230 = vunpack.c.l.b16 %v62
  %v231 = vunpack.c.l.b16 %v63
  %v232 = vunpack.c.l.b16 %v64
  %v233 = vunpack.c.l.b16 %v65
  %v234 = vunpack.c.l.b16 %v66
  %v235 = vunpack.c.l.b16 %v67
  %v236 = vunpack.c.l.b16 %v68
  %v237 = vunpack.c.l.b16 %v69
  %v238 = vunpack.c.l.b16 %v70
  %v239 = vunpack.c.l.b16 %v71
  %v240 = vunpack.c.l.b16 %v72
  %v241 = vunpack.c.l.b16 %v73
  %v242 = vunpack.c.l.b16 %v74
  %v243 = vunpack.c.l.b16 %v75
  %v244 = vunpack.c.l.b16 %v76
  %v245 = vunpack.c.l.b16 %v77
  %v246 = vunpack.c.l.b16 %v78
  %v247 = vunpack.c.l.b16 %v79
  %v248 = vunpack.c.l.b16 %v80
  %v249 = vunpack.c.l.b16 %v81
  %v250 = vunpack.c.l.b16 %v82
  %v251 = vunpack.c.l.b16 %v83
  %v252 = vunpack.c.l.b16 %v84
  %v253 = vunpack.c.l.b16 %v85
  %v254 = vunpack.c.l.b16 %v86
  %v255 = vpack.c.b16 %v192, %v191
  %v256 = vpack.c.b16 %v194, %v193
  %v257 = vpack.c.b16 %v196, %v195
  %v258 = vpack.c.b16 %v198, %v197
  %v259 = vpack.c.b16 %v200, %v199
  %v260 = vpack.c.b16 %v202, %v201
  %v261 = vpack.c.b16 %v204, %v203
  %v262 = vpack.c.b16 %v206, %v205
  %v263 = vpack.c.b16 %v208, %v207
  %v264 = vpack.c.b16 %v210, %v209
  %v265 = vpack.c.b16 %v212, %v211
  %v266 = vpack.c.b16 %v214, %v213
  %v267 = vpack.c.b16 %v216, %v215
  %v268 = vpack.c.b16 %v218, %v217
  %v269 = vpack.c.b16 %v220, %v219
  %v270 = vpack.c.b16 %v222, %v221
  %v271 = vpack.c.b16 %v224, %v223
  %v272 = vpack.c.b16 %v226, %v225
  %v273 = vpack.c.b16 %v228, %v227
  %v274 = vpack.c.b16 %v230, %v229
  %v275 = vpack.c.b16 %v232, %v231
  %v276 = vpack.c.b16 %v234, %v233
  %v277 = vpack.c.b16 %v236, %v235
  %v278 = vpack.c.b16 %v238, %v237
  %v279 = vpack.c.b16 %v240, %v239
  %v280 = vpack.c.b16 %v242, %v241
  %v281 = vpack.c.b16 %v244, %v243
  %v282 = vpack.c.b16 %v246, %v245
  %v283 = vpack.c.b16 %v248, %v247
  %v284 = vpack.c.b16 %v250, %v249
  %v285 = vpack.c.b16 %v252, %v251
  %v286 = vpack.c.b16 %v254, %v253
  %319 = vmatprep.subr.bf16.mxu0 0
  %320 = vmatpush1.bf16.msra.mxu0 %v255
  %321 = vmatprep.subr.bf16.mxu0 0
  %322 = vmatpush1.bf16.msra.mxu0 %v256
  %323 = vmatprep.subr.bf16.mxu0 0
  %324 = vmatpush1.bf16.msra.mxu0 %v257
  %325 = vmatprep.subr.bf16.mxu0 0
  %326 = vmatpush1.bf16.msra.mxu0 %v258
  %327 = vmatprep.subr.bf16.mxu0 0
  %328 = vmatpush1.bf16.msra.mxu0 %v259
  %329 = vmatprep.subr.bf16.mxu0 0
  %330 = vmatpush1.bf16.msra.mxu0 %v260
  %331 = vmatprep.subr.bf16.mxu0 0
  %332 = vmatpush1.bf16.msra.mxu0 %v261
  %333 = vmatprep.subr.bf16.mxu0 0
  %334 = vmatpush1.bf16.msra.mxu0 %v262
  %335 = vmatprep.subr.bf16.mxu0 0
  %336 = vmatpush1.bf16.msra.mxu0 %v263
  %337 = vmatprep.subr.bf16.mxu0 0
  %338 = vmatpush1.bf16.msra.mxu0 %v264
  %339 = vmatprep.subr.bf16.mxu0 0
  %340 = vmatpush1.bf16.msra.mxu0 %v265
  %341 = vmatprep.subr.bf16.mxu0 0
  %342 = vmatpush1.bf16.msra.mxu0 %v266
  %343 = vmatprep.subr.bf16.mxu0 0
  %344 = vmatpush1.bf16.msra.mxu0 %v267
  %345 = vmatprep.subr.bf16.mxu0 0
  %346 = vmatpush1.bf16.msra.mxu0 %v268
  %347 = vmatprep.subr.bf16.mxu0 0
  %348 = vmatpush1.bf16.msra.mxu0 %v269
  %349 = vmatprep.subr.bf16.mxu0 0
  %350 = vmatpush1.bf16.msra.mxu0 %v270
  %351 = vmatprep.mubr.bf16.mxu0 %v112
  %352 = vmatmul.mubr.bf16.gmra.mrb[0].mxu0 %v111
  %v353 = vpop.f32.mrb[0].mxu0
  %v354 = vadd.f32 0.0, %v353
  %v355 = vpop.f32.mrb[0].mxu0
  %v356 = vpop.f32.mrb[0].mxu0
  %v357 = vadd.f32 0.0, %v356
  %v358 = vpop.f32.mrb[0].mxu0
  %359 = vmatprep.mubr.bf16.mxu0 %v116
  %360 = vmatmul.mubr.bf16.gmra.mrb[0].mxu0 %v115
  %v361 = vpop.f32.mrb[0].mxu0
  %v362 = vadd.f32 0.0, %v361
  %v363 = vpop.f32.mrb[0].mxu0
  %v364 = vpop.f32.mrb[0].mxu0
  %v365 = vadd.f32 0.0, %v364
  %v366 = vpop.f32.mrb[0].mxu0
  %367 = vdwg.mxu0
  %368 = vmatprep.subr.bf16.mxu0 0
  %369 = vmatpush1.bf16.msra.mxu0 %v271
  %370 = vmatprep.subr.bf16.mxu0 0
  %371 = vmatpush1.bf16.msra.mxu0 %v272
  %372 = vmatprep.subr.bf16.mxu0 0
  %373 = vmatpush1.bf16.msra.mxu0 %v273
  %374 = vmatprep.subr.bf16.mxu0 0
  %375 = vmatpush1.bf16.msra.mxu0 %v274
  %376 = vmatprep.subr.bf16.mxu0 0
  %377 = vmatpush1.bf16.msra.mxu0 %v275
  %378 = vmatprep.subr.bf16.mxu0 0
  %379 = vmatpush1.bf16.msra.mxu0 %v276
  %380 = vmatprep.subr.bf16.mxu0 0
  %381 = vmatpush1.bf16.msra.mxu0 %v277
  %382 = vmatprep.subr.bf16.mxu0 0
  %383 = vmatpush1.bf16.msra.mxu0 %v278
  %384 = vmatprep.subr.bf16.mxu0 0
  %385 = vmatpush1.bf16.msra.mxu0 %v279
  %386 = vmatprep.subr.bf16.mxu0 0
  %387 = vmatpush1.bf16.msra.mxu0 %v280
  %388 = vmatprep.subr.bf16.mxu0 0
  %389 = vmatpush1.bf16.msra.mxu0 %v281
  %390 = vmatprep.subr.bf16.mxu0 0
  %391 = vmatpush1.bf16.msra.mxu0 %v282
  %392 = vmatprep.subr.bf16.mxu0 0
  %393 = vmatpush1.bf16.msra.mxu0 %v283
  %394 = vmatprep.subr.bf16.mxu0 0
  %395 = vmatpush1.bf16.msra.mxu0 %v284
  %396 = vmatprep.subr.bf16.mxu0 0
  %397 = vmatpush1.bf16.msra.mxu0 %v285
  %398 = vmatprep.subr.bf16.mxu0 0
  %399 = vmatpush1.bf16.msra.mxu0 %v286
  %400 = vmatprep.mubr.bf16.mxu0 %v114
  %401 = vmatmul.mubr.bf16.gmra.mrb[0].mxu0 %v113
  %v402 = vpop.f32.mrb[0].mxu0
  %v403 = vadd.f32 %v354, %v402
  %v404 = vpop.f32.mrb[0].mxu0
  %v405 = vpop.f32.mrb[0].mxu0
  %v406 = vadd.f32 %v357, %v405
  %v407 = vpop.f32.mrb[0].mxu0
  %408 = vmatprep.mubr.bf16.mxu0 %v118
  %409 = vmatmul.mubr.bf16.gmra.mrb[0].mxu0 %v117
  %v410 = vpop.f32.mrb[0].mxu0
  %v411 = vadd.f32 %v362, %v410
  %v412 = vpop.f32.mrb[0].mxu0
  %v413 = vpop.f32.mrb[0].mxu0
  %v414 = vadd.f32 %v365, %v413
  %v415 = vpop.f32.mrb[0].mxu0
  %416 = vdwg.mxu0
  %v417 = vpack.c.bf16 %v406, %v403
  %v418 = vpack.c.bf16 %v414, %v411
  %v421 = vunpack.c.l.b16 %v417
  %v422 = vunpack.c.h.b16 %v417
  %v423 = vunpack.c.l.b16 %v418
  %v424 = vunpack.c.h.b16 %v418
  %v425 = vpack.c.b16 %v421, %v421
  %v426 = vpack.c.b16 %v422, %v422
  %v427 = vpack.c.b16 %v423, %v423
  %v428 = vpack.c.b16 %v424, %v424
  %vm433 = vcmask 519168
  %434 = vst.msk [vmem:[%s2] sm:$0xf] %vm433, %v425
  %435 = vst.msk [vmem:[%s2 + $0x4] sm:$0xf] %vm433, %v426
  %436 = vst.msk [vmem:[%s2 + $0x8] sm:$0xf] %vm433, %v427
  %437 = vst.msk [vmem:[%s2 + $0xc] sm:$0xf] %vm433, %v428
  %vm438 = vcmask 523264
  %v439 = vsel %vm438, %v403, 0.0
  %v440 = vsel %vm438, %v406, 0.0
  %v441 = vadd.f32 %v439, %v440
  %v442 = vsel %vm438, %v411, 0.0
  %v443 = vadd.f32 %v441, %v442
  %v444 = vsel %vm438, %v414, 0.0
  %v445 = vadd.f32 %v443, %v444
  %v446 = vrot.slane %v445, 4
  %v447 = vadd.f32 %v445, %v446
  %v448 = vrot.slane %v447, 2
  %v449 = vadd.f32 %v447, %v448
  %v450 = vrot.slane %v449, 1
  %v451 = vadd.f32 %v449, %v450
  %vm452 = vcmask 516096
  %453 = vst.msk [vmem:[%s3] sm:$0x1] %vm452, %v451
  %v454 = vmul.f32 %v403, %v403
  %v455 = vmul.f32 %v406, %v406
  %v456 = vmul.f32 %v411, %v411
  %v457 = vmul.f32 %v414, %v414
  %v458 = vsel %vm438, %v454, 0.0
  %v459 = vsel %vm438, %v455, 0.0
  %v460 = vadd.f32 %v458, %v459
  %v461 = vsel %vm438, %v456, 0.0
  %v462 = vadd.f32 %v460, %v461
  %v463 = vsel %vm438, %v457, 0.0
  %v464 = vadd.f32 %v462, %v463
  %v465 = vrot.slane %v464, 4
  %v466 = vadd.f32 %v464, %v465
  %v467 = vrot.slane %v466, 2
  %v468 = vadd.f32 %v466, %v467
  %v469 = vrot.slane %v468, 1
  %v470 = vadd.f32 %v468, %v469
  %471 = vst.msk [vmem:[%s4] sm:$0x1] %vm452, %v470
  // Predicated region
  $region10: #{discriminator_forward.12} parent=0 // pred_check
    _
  $region11: #{discriminator_forward.12} parent=0 // pred_check_branch
    %473 = sbr.rel (0) target = $region13
  $region12: #{discriminator_forward.12} parent=0 // pred_region
    _
  $region13: #{discriminator_forward.12} parent=0 // pred_fallthru
    _
  // Predicated region
  $region14: #{discriminator_forward.12} parent=0 // pred_check
    _
  $region15: #{discriminator_forward.12} parent=0 // pred_check_branch
    %475 = sbr.rel (0) target = $region17
  $region16: #{discriminator_forward.12} parent=0 // pred_region
    _
  $region17: #{discriminator_forward.12} parent=0 // pred_fallthru
    _
  // Predicated region
  $region18: #{discriminator_forward.12} parent=0 // pred_check
    _
  $region19: #{discriminator_forward.12} parent=0 // pred_check_branch
    %477 = sbr.rel (0) target = $region21
  $region20: #{discriminator_forward.12} parent=0 // pred_region
    _
  $region21: #{discriminator_forward.12} parent=0 // pred_fallthru
    _
  // Predicated region
  $region22: #{discriminator_forward.12} parent=0 // pred_check
    _
  $region23: #{discriminator_forward.12} parent=0 // pred_check_branch
    %479 = sbr.rel (0) target = $region25
  $region24: #{discriminator_forward.12} parent=0 // pred_region
    _
  $region25: #{discriminator_forward.12} parent=0 // pred_fallthru
    _
  // Predicated region
  $region26: #{discriminator_forward.12} parent=0 // pred_check
    _
  $region27: #{discriminator_forward.12} parent=0 // pred_check_branch
    %481 = sbr.rel (0) target = $region29
  $region28: #{discriminator_forward.12} parent=0 // pred_region
    _
  $region29: #{discriminator_forward.12} parent=0 // pred_fallthru
    _
  // Predicated region
  $region30: #{discriminator_forward.12} parent=0 // pred_check
    _
  $region31: #{discriminator_forward.12} parent=0 // pred_check_branch
    %483 = sbr.rel (0) target = $region33
  $region32: #{discriminator_forward.12} parent=0 // pred_region
    _
  $region33: #{discriminator_forward.12} parent=0 // pred_fallthru
    _

// kernel: discriminator_forward.13
$region0: #{discriminator_forward.13}
  #allocation0 [shape = 'u32[]', space=smem, size = 0x4, offset = 0x4, fixed_abs, tag = 'smem constant byte address 0x4 - core index']
  #allocation1 [shape = 'u32[144,128]{1,0:T(1,128)}', space=vmem, size = 0x12000, scoped, tag = 'internal scratch']
  %s0 = inlined_call_operand.vmem [shape: bf16[16,128], index: 0, kind: input, shape index: {}]
  %s1 = inlined_call_operand.vmem [shape: f32[1,128], index: 1, kind: input, shape index: {}]
  %s2 = inlined_call_operand.vmem [shape: f32[1,128], index: 2, kind: input, shape index: {}]
  %s3 = inlined_call_operand.vmem [shape: bf16[16,128], index: 3, kind: output, shape index: {}]
  %s4 = sld [smem:[#allocation0]]
  $region22: #{discriminator_forward.13} parent=0
    _
  %s6 = ssub.s32 1, %s4
  %s7 = scalar_select 0, %s6, %s4
  // Predicated region
  $region2: #{discriminator_forward.13} parent=0 // pred_check
    _
  $region3: #{discriminator_forward.13} parent=0 // pred_check_branch
    %9 = sbr.rel (0) target = $region5
  $region4: #{discriminator_forward.13} parent=0 // pred_region
    _
  $region5: #{discriminator_forward.13} parent=0 // pred_fallthru
    _
  // Predicated region
  $region6: #{discriminator_forward.13} parent=0 // pred_check
    _
  $region7: #{discriminator_forward.13} parent=0 // pred_check_branch
    %11 = sbr.rel (0) target = $region9
  $region8: #{discriminator_forward.13} parent=0 // pred_region
    _
  $region9: #{discriminator_forward.13} parent=0 // pred_fallthru
    _
  // Predicated region
  $region10: #{discriminator_forward.13} parent=0 // pred_check
    _
  $region11: #{discriminator_forward.13} parent=0 // pred_check_branch
    %13 = sbr.rel (0) target = $region13
  $region12: #{discriminator_forward.13} parent=0 // pred_region
    _
  $region13: #{discriminator_forward.13} parent=0 // pred_fallthru
    _
  %v14 = vld [vmem:[%s0] sm:$0xf]
  %v15 = vld [vmem:[%s0 + $0x4] sm:$0xf]
  %v16 = vunpack.c.l.bf16 %v14
  %v17 = vunpack.c.l.bf16 %v15
  %v18 = vld [vmem:[%s1] sm:$0x1]
  %v20 = vlaneseq
  %v21 = vshrl.u32 %v20, 7
  %v22 = vsub.s32 0, %v21
  %v23 = vrot.slane %v18, %v22
  %v25 = vmul.f32 %v16, %v23
  %v26 = vmul.f32 %v17, %v23
  %v27 = vld [vmem:[%s2] sm:$0x1]
  %v29 = vlaneseq
  %v30 = vshrl.u32 %v29, 7
  %v31 = vsub.s32 0, %v30
  %v32 = vrot.slane %v27, %v31
  %v34 = vadd.f32 %v25, %v32
  %v35 = vadd.f32 %v26, %v32
  %vm36 = vcmp.gt.f32.partialorder %v34, 0.0
  %vm37 = vcmp.gt.f32.partialorder %v35, 0.0
  %v38 = vmul.f32 %v34, 0.2
  %v39 = vmul.f32 %v35, 0.2
  %v40 = vsel %vm36, %v34, %v38
  %v41 = vsel %vm37, %v35, %v39
  %v42 = vpack.c.bf16 %v41, %v40
  %v44 = vunpack.c.l.b16 %v42
  %v45 = vunpack.c.h.b16 %v42
  %v46 = vpack.c.b16 %v44, %v44
  %v47 = vpack.c.b16 %v45, %v45
  %50 = vst [vmem:[%s3] sm:$0xf] %v46
  %51 = vst [vmem:[%s3 + $0x4] sm:$0xf] %v47
  // Predicated region
  $region14: #{discriminator_forward.13} parent=0 // pred_check
    _
  $region15: #{discriminator_forward.13} parent=0 // pred_check_branch
    %53 = sbr.rel (0) target = $region17
  $region16: #{discriminator_forward.13} parent=0 // pred_region
    _
  $region17: #{discriminator_forward.13} parent=0 // pred_fallthru
    _
  // Predicated region
  $region18: #{discriminator_forward.13} parent=0 // pred_check
    _
  $region19: #{discriminator_forward.13} parent=0 // pred_check_branch
    %55 = sbr.rel (0) target = $region21
  $region20: #{discriminator_forward.13} parent=0 // pred_region
    _
  $region21: #{discriminator_forward.13} parent=0 // pred_fallthru
    _

</llo_original>
